<compile_context>
chip_gen: v7x
topology: tpu7x:2x2x1
jax: 0.10.0
libtpu: 0.0.40
codegen_flags: <defaults>
</compile_context>

<pallas_src>
import functools
import math

import jax
import jax.numpy as jnp
import numpy as np
from jax import lax
from jax.experimental import pallas as pl
from jax.experimental.pallas import tpu as pltpu


# --------------------------------------------------------------------------
# Kernel
# --------------------------------------------------------------------------
def mtl_kernel(H, P, L, NH,
               x_ref, pcaW_ref, pcab_ref,
               vgW_ref, vgb_ref, lnw_ref, lnb_ref, pe_ref,
               wq_ref, bq_ref, wk_ref, bk_ref, wv_ref, bv_ref,
               msum_ref, mexp_ref, outW_ref, outb_ref,
               w1_ref, b1_ref, w2_ref, b2_ref,
               alphaA_ref, alphaM_ref,
               regW_ref, headb_ref, c1W_ref, c1b_ref, c2W_ref,
               out_ref, stage_scr):
    f32 = jnp.float32
    bf16 = jnp.bfloat16
    TB = x_ref.shape[0]
    M = P * TB
    HD = H // NH
    scale = 1.0 / math.sqrt(HD)

    def l2norm(t, eps=1e-12):
        # F.normalize(x, p=2, dim=-1) == x * rsqrt(max(sum(x^2), eps^2))
        ss = jnp.sum(t * t, axis=-1, keepdims=True)
        return t * lax.rsqrt(jnp.maximum(ss, eps * eps))

    def mxm(a_f32, w_bf16):
        # bf16 MXU operands, f32 accumulation; stats/softmax stay f32.
        return jnp.dot(a_f32.astype(bf16), w_bf16, preferred_element_type=f32)

    # ---- pca_projection + l2-normalize ------------------------------------
    h = l2norm(mxm(x_ref[...], pcaW_ref[...]) + pcab_ref[...])         # (TB, H)

    # ---- view_generator: per-view Linear + joint LayerNorm (one pass) -----
    sum1 = jnp.zeros((TB, 1), f32)
    sum2 = jnp.zeros((TB, 1), f32)
    for p in range(P):
        vp = mxm(h, vgW_ref[p]) + vgb_ref[p]                           # (TB, H)
        stage_scr[p * TB:(p + 1) * TB, :] = vp
        sum1 = sum1 + jnp.sum(vp, axis=-1, keepdims=True)
        sum2 = sum2 + jnp.sum(vp * vp, axis=-1, keepdims=True)
    inv_n = 1.0 / float(P * H)
    mu = sum1 * inv_n
    var = jnp.maximum(sum2 * inv_n - mu * mu, 0.0)                     # clamp >=0
    inv_std = lax.rsqrt(var + 1e-5)
    for p in range(P):
        vp = stage_scr[p * TB:(p + 1) * TB, :]
        vp = (vp - mu) * inv_std * lnw_ref[p] + lnb_ref[p]             # LayerNorm
        stage_scr[p * TB:(p + 1) * TB, :] = l2norm(vp) + pe_ref[p]     # norm + PE
    s = stage_scr[...]                                                 # (M, H)

    msum = msum_ref[...]   # (H, NH) bf16 block-diag head-sum (exact 0/1)
    mexp = mexp_ref[...]   # (NH, H) bf16 block-diag head-expand (exact 0/1)

    # ---- normalized transformer blocks -------------------------------------
    for l in range(L):
        sn = l2norm(s)
        q = (mxm(sn, wq_ref[l]) + bq_ref[l]) * scale                   # (M, H)
        k = mxm(sn, wk_ref[l]) + bk_ref[l]
        v = mxm(sn, wv_ref[l]) + bv_ref[l]
        k3 = k.reshape(P, TB, H)
        v3 = v.reshape(P, TB, H)

        for i in range(P):                          # query view (sublane block)
            qi = q[i * TB:(i + 1) * TB, :]                             # (TB, H)
            qk = (k3 * qi[None]).reshape(M, H)      # vs. whole key slab
            sc = mxm(qk, msum).reshape(P, TB, NH)   # one score dot per view
            m = jnp.max(sc, axis=0)                                    # (TB, NH)
            e = jnp.exp(sc - m[None])
            inv = pl.reciprocal(jnp.sum(e, axis=0), approx=True)       # EUP
            pr = (e * inv[None]).reshape(M, NH)
            pw = mxm(pr, mexp).reshape(P, TB, H)    # one expand dot per view
            stage_scr[i * TB:(i + 1) * TB, :] = jnp.sum(pw * v3, axis=0)

        hA = l2norm(mxm(stage_scr[...], outW_ref[l]) + outb_ref[l])    # out proj
        s = l2norm(sn + alphaA_ref[l] * (hA - sn))

        hM = jnp.maximum(mxm(s, w1_ref[l]) + b1_ref[l], 0.0)           # MLP
        hM = l2norm(mxm(hM, w2_ref[l]) + b2_ref[l])
        s = l2norm(s + alphaM_ref[l] * (hM - s))

    # ---- mean pool over views + fused lane-dense heads ---------------------
    pooled = jnp.sum(s.reshape(P, TB, H), axis=0) * (1.0 / float(P))   # (TB, H)
    ch = jnp.maximum(mxm(pooled, c1W_ref[...]) + c1b_ref[...], 0.0)
    out_ref[...] = (mxm(pooled, regW_ref[...]) + mxm(ch, c2W_ref[...])
                    + headb_ref[...])               # (TB, 128) dense store


# --------------------------------------------------------------------------
# One-time weight preparation (re-layout, head padding, bf16 cast)
# --------------------------------------------------------------------------
def _round_up(n, m):
    return ((n + m - 1) // m) * m


def make_pe(P, H):
    position = jnp.arange(P, dtype=jnp.float32)[:, None]
    div_term = jnp.exp(jnp.arange(0, H, 2, dtype=jnp.float32)
                       * (-math.log(10000.0) / H))
    ang = position * div_term
    pe = jnp.zeros((P, H), jnp.float32)
    pe = pe.at[:, 0::2].set(jnp.sin(ang))
    pe = pe.at[:, 1::2].set(jnp.cos(ang))
    return pe


def prepare_params(params, *, H, P, L, NH, C, O, out_pad=128):
    f32, bf16 = jnp.float32, jnp.bfloat16
    HD = H // NH
    assert O + C <= out_pad

    pe = make_pe(P, H).reshape(P, 1, H).astype(f32)

    eye_rep = jnp.repeat(jnp.eye(NH, dtype=f32), HD, axis=0)          # (H, NH)
    msum = eye_rep.astype(bf16)                                       # head-sum
    mexp = eye_rep.T.astype(bf16)                                     # head-expand

    inW, inb = params['inW'], params['inb']                           # (L,3H,H),(L,3H)

    regW_pad = jnp.zeros((H, out_pad), f32).at[:, :O].set(params['regW'].T)
    c2W_pad = jnp.zeros((H, out_pad), f32).at[:, O:O + C].set(params['c2W'].T)
    headb = (jnp.zeros((1, out_pad), f32)
             .at[:, :O].set(params['regb'][None, :])
             .at[:, O:O + C].set(params['c2b'][None, :]))

    def w(a):
        return a.astype(bf16)

    tensors = [
        (w(params['pcaW'].T), 'vmem'),
        (params['pcab'].reshape(1, H).astype(f32), 'vmem'),
        (w(params['vgW'].reshape(P, H, H).transpose(0, 2, 1)), 'vmem'),
        (params['vgb'].reshape(P, 1, H).astype(f32), 'vmem'),
        (params['lnw'].reshape(P, 1, H).astype(f32), 'vmem'),
        (params['lnb'].reshape(P, 1, H).astype(f32), 'vmem'),
        (pe, 'vmem'),
        (w(jnp.transpose(inW[:, 0 * H:1 * H, :], (0, 2, 1))), 'vmem'),
        (inb[:, 0 * H:1 * H].reshape(L, 1, H).astype(f32), 'vmem'),
        (w(jnp.transpose(inW[:, 1 * H:2 * H, :], (0, 2, 1))), 'vmem'),
        (inb[:, 1 * H:2 * H].reshape(L, 1, H).astype(f32), 'vmem'),
        (w(jnp.transpose(inW[:, 2 * H:3 * H, :], (0, 2, 1))), 'vmem'),
        (inb[:, 2 * H:3 * H].reshape(L, 1, H).astype(f32), 'vmem'),
        (msum, 'vmem'),
        (mexp, 'vmem'),
        (w(jnp.transpose(params['outW'], (0, 2, 1))), 'vmem'),
        (params['outb'].reshape(L, 1, H).astype(f32), 'vmem'),
        (w(jnp.transpose(params['w1'], (0, 2, 1))), 'vmem'),
        (params['b1'].reshape(L, 1, 2 * H).astype(f32), 'vmem'),
        (w(jnp.transpose(params['w2'], (0, 2, 1))), 'vmem'),
        (params['b2'].reshape(L, 1, H).astype(f32), 'vmem'),
        (params['alphaA'].astype(f32), 'smem'),
        (params['alphaM'].astype(f32), 'smem'),
        (w(regW_pad), 'vmem'),
        (headb, 'vmem'),
        (w(params['c1W'].T), 'vmem'),
        (params['c1b'].reshape(1, H).astype(f32), 'vmem'),
        (w(c2W_pad), 'vmem'),
    ]
    return {'tensors': tensors, 'out_pad': out_pad}


# --------------------------------------------------------------------------
# Wrapper (BlockSpecs, grid, pallas_call)
# --------------------------------------------------------------------------
def _vmem_budget_bytes():
    try:
        info = pltpu.get_tpu_info()
        cap = int(getattr(info, 'vmem_capacity_bytes', 128 * 1024 * 1024))
    except Exception:
        cap = 128 * 1024 * 1024
    # ~3/4 of physical, capped: -> ~48 MiB on v7x (64 MiB), 96 MiB on v5e/v6e.
    return int(min(96 * 1024 * 1024, max(32 * 1024 * 1024, cap * 3 // 4)))


def _const_spec(shape, single_buffer):
    nd = len(shape)
    imap = lambda b, _nd=nd: (0,) * _nd
    if single_buffer:
        try:
            # Grid-invariant weights: no double buffering needed.
            return pl.BlockSpec(tuple(shape), imap, pipeline_mode=pl.Buffered(1))
        except TypeError:
            pass
    return pl.BlockSpec(tuple(shape), imap)


def mtl_forward_pallas(prepared, x, *, H, P, L, NH, C, O, tb_max=256):
    B, D_in = x.shape
    out_pad = prepared['out_pad']
    tensors = prepared['tensors']

    # Batch tile: multiple of 8; for larger B aim for >=2 tiles so the
    # 'parallel' axis can split across both v7x TensorCores.
    if B <= 8:
        TB = 8
    else:
        TB = min(tb_max, _round_up((B + 1) // 2, 8))
    num_tiles = pl.cdiv(B, TB)
    B_pad = num_tiles * TB
    if B_pad != B:
        x = jnp.pad(x, ((0, B_pad - B), (0, 0)))

    inputs = [x] + [a for a, _ in tensors]

    def make_specs(single_buffer_weights):
        specs = [pl.BlockSpec((TB, D_in), lambda b: (b, 0))]
        for arr, kind in tensors:
            if kind == 'smem':
                specs.append(pl.BlockSpec(memory_space=pltpu.MemorySpace.SMEM))
            else:
                specs.append(_const_spec(arr.shape, single_buffer_weights))
        return specs

    kernel = functools.partial(mtl_kernel, H, P, L, NH)
    out_shape = jax.ShapeDtypeStruct((B_pad, out_pad), jnp.float32)
    out_spec = pl.BlockSpec((TB, out_pad), lambda b: (b, 0))
    scratch = [pltpu.VMEM((P * TB, H), jnp.float32)]
    cparams = pltpu.CompilerParams(dimension_semantics=("parallel",),
                                   vmem_limit_bytes=_vmem_budget_bytes())

    def build(single_buffer_weights):
        return pl.pallas_call(
            kernel,
            out_shape=out_shape,
            grid=(num_tiles,),
            in_specs=make_specs(single_buffer_weights),
            out_specs=out_spec,
            scratch_shapes=scratch,
            compiler_params=cparams)

    try:
        out = build(True)(*inputs)
    except Exception:
        # Fallback: default (double) buffering if pl.Buffered(1) is rejected
        # by this jax/libtpu combination.
        out = build(False)(*inputs)

    return {'regression_output': out[:B, :O],
            'classification_output': out[:B, O:O + C]}


# --------------------------------------------------------------------------
# Pure-JAX reference (faithful f32 forward, for correctness check)
# --------------------------------------------------------------------------
def mtl_forward_ref(params, x, *, H, P, L, NH, C, O):
    def l2n(v):
        n = jnp.sqrt(jnp.sum(v * v, axis=-1, keepdims=True))
        return v / jnp.maximum(n, 1e-12)

    B = x.shape[0]
    h = l2n(x @ params['pcaW'].T + params['pcab'])
    v = h @ params['vgW'].T + params['vgb']
    mu = v.mean(-1, keepdims=True)
    var = ((v - mu) ** 2).mean(-1, keepdims=True)
    v = (v - mu) / jnp.sqrt(var + 1e-5) * params['lnw'] + params['lnb']
    s = l2n(v.reshape(B, P, H)) + make_pe(P, H)[None]
    HD = H // NH
    for l in range(L):
        s = l2n(s)
        qkv = s @ params['inW'][l].T + params['inb'][l]
        q, k, vv = qkv[..., :H], qkv[..., H:2 * H], qkv[..., 2 * H:]
        sh = lambda t: t.reshape(B, P, NH, HD).transpose(0, 2, 1, 3)
        qh, kh, vh = sh(q), sh(k), sh(vv)
        sc = (qh / math.sqrt(HD)) @ kh.transpose(0, 1, 3, 2)
        pr = jax.nn.softmax(sc, axis=-1)
        oh = (pr @ vh).transpose(0, 2, 1, 3).reshape(B, P, H)
        hA = l2n(oh @ params['outW'][l].T + params['outb'][l])
        s = l2n(s + params['alphaA'][l] * (hA - s))
        hM = (jax.nn.relu(s @ params['w1'][l].T + params['b1'][l])
              @ params['w2'][l].T + params['b2'][l])
        hM = l2n(hM)
        s = l2n(s + params['alphaM'][l] * (hM - s))
    pooled = s.mean(axis=1)
    reg = pooled @ params['regW'].T + params['regb']
    cls = (jax.nn.relu(pooled @ params['c1W'].T + params['c1b'])
           @ params['c2W'].T + params['c2b'])
    return {'regression_output': reg, 'classification_output': cls}


# --------------------------------------------------------------------------
# Deterministic parameter init (PyTorch (out, in) layout; synthetic values)
# --------------------------------------------------------------------------
def init_params(key, D_in, H, L, C, O, P):
    ks = jax.random.split(key, 24)
    nrm = lambda k, shape, s=0.1: (s * jax.random.normal(k, shape)).astype(jnp.float32)
    return dict(
        pcaW=nrm(ks[0], (H, D_in)), pcab=nrm(ks[1], (H,)),
        vgW=nrm(ks[2], (P * H, H)), vgb=nrm(ks[3], (P * H,)),
        lnw=jnp.ones((P * H,), jnp.float32) + nrm(ks[4], (P * H,), 0.05),
        lnb=nrm(ks[5], (P * H,), 0.05),
        inW=nrm(ks[6], (L, 3 * H, H)), inb=nrm(ks[7], (L, 3 * H)),
        outW=nrm(ks[8], (L, H, H)), outb=nrm(ks[9], (L, H)),
        w1=nrm(ks[10], (L, 2 * H, H)), b1=nrm(ks[11], (L, 2 * H)),
        w2=nrm(ks[12], (L, H, 2 * H)), b2=nrm(ks[13], (L, H)),
        alphaA=jnp.ones((L,), jnp.float32), alphaM=jnp.ones((L,), jnp.float32),
        regW=nrm(ks[14], (O, H)), regb=nrm(ks[15], (O,)),
        c1W=nrm(ks[16], (H, H)), c1b=nrm(ks[17], (H,)),
        c2W=nrm(ks[18], (C, H)), c2b=nrm(ks[19], (C,)),
    )


if __name__ == "__main__":
    B, D_in, H, L, C, O, P, NH = 2, 16, 32, 2, 3, 1, 4, 4   # num_heads=4 fixed by module
    key = jax.random.PRNGKey(0)
    kx, kp = jax.random.split(key)
    x = jax.random.normal(kx, (B, D_in), jnp.float32)
    params = init_params(kp, D_in, H, L, C, O, P)

    prepared = prepare_params(params, H=H, P=P, L=L, NH=NH, C=C, O=O)
    out = mtl_forward_pallas(prepared, x, H=H, P=P, L=L, NH=NH, C=C, O=O)
    out = jax.block_until_ready(out)

    ref = mtl_forward_ref(params, x, H=H, P=P, L=L, NH=NH, C=C, O=O)
    # Tolerance reflects bf16 MXU operands + approx EUP reciprocal.
    np.testing.assert_allclose(np.asarray(out['regression_output']),
                               np.asarray(ref['regression_output']),
                               rtol=2e-2, atol=2e-2)
    np.testing.assert_allclose(np.asarray(out['classification_output']),
                               np.asarray(ref['classification_output']),
                               rtol=2e-2, atol=2e-2)
    print("KERNEL_OK")
</pallas_src>

<mosaic_0001>
module attributes {stable_mosaic.version = 11 : i64} {
  func.func @mtl_kernel(%arg0: i32, %arg1: memref<8x16xf32, #tpu.memory_space<vmem>>, %arg2: memref<16x32xbf16, #tpu.memory_space<vmem>>, %arg3: memref<1x32xf32, #tpu.memory_space<vmem>>, %arg4: memref<4x32x32xbf16, #tpu.memory_space<vmem>>, %arg5: memref<4x1x32xf32, #tpu.memory_space<vmem>>, %arg6: memref<4x1x32xf32, #tpu.memory_space<vmem>>, %arg7: memref<4x1x32xf32, #tpu.memory_space<vmem>>, %arg8: memref<4x1x32xf32, #tpu.memory_space<vmem>>, %arg9: memref<2x32x32xbf16, #tpu.memory_space<vmem>>, %arg10: memref<2x1x32xf32, #tpu.memory_space<vmem>>, %arg11: memref<2x32x32xbf16, #tpu.memory_space<vmem>>, %arg12: memref<2x1x32xf32, #tpu.memory_space<vmem>>, %arg13: memref<2x32x32xbf16, #tpu.memory_space<vmem>>, %arg14: memref<2x1x32xf32, #tpu.memory_space<vmem>>, %arg15: memref<32x4xbf16, #tpu.memory_space<vmem>>, %arg16: memref<4x32xbf16, #tpu.memory_space<vmem>>, %arg17: memref<2x32x32xbf16, #tpu.memory_space<vmem>>, %arg18: memref<2x1x32xf32, #tpu.memory_space<vmem>>, %arg19: memref<2x32x64xbf16, #tpu.memory_space<vmem>>, %arg20: memref<2x1x64xf32, #tpu.memory_space<vmem>>, %arg21: memref<2x64x32xbf16, #tpu.memory_space<vmem>>, %arg22: memref<2x1x32xf32, #tpu.memory_space<vmem>>, %arg23: memref<2xf32, #tpu.memory_space<smem>>, %arg24: memref<2xf32, #tpu.memory_space<smem>>, %arg25: memref<32x128xbf16, #tpu.memory_space<vmem>>, %arg26: memref<1x128xf32, #tpu.memory_space<vmem>>, %arg27: memref<32x32xbf16, #tpu.memory_space<vmem>>, %arg28: memref<1x32xf32, #tpu.memory_space<vmem>>, %arg29: memref<32x128xbf16, #tpu.memory_space<vmem>>, %arg30: memref<8x128xf32, #tpu.memory_space<vmem>>, %arg31: memref<32x32xf32, #tpu.memory_space<vmem>>) attributes {dimension_semantics = [#tpu.dimension_semantics<parallel>], iteration_bounds = array<i64: 1>, scalar_prefetch = 0 : i64, scratch_operands = 1 : i64, tpu.core_type = #tpu.core_type<tc>, window_params = [{transform_indices = @transform_0, window_bounds = array<i64: 8, 16>}, {pipeline_mode = #tpu.pipeline_mode<synchronous>, transform_indices = @transform_1, window_bounds = array<i64: 16, 32>}, {pipeline_mode = #tpu.pipeline_mode<synchronous>, transform_indices = @transform_2, window_bounds = array<i64: 1, 32>}, {pipeline_mode = #tpu.pipeline_mode<synchronous>, transform_indices = @transform_3, window_bounds = array<i64: 4, 32, 32>}, {pipeline_mode = #tpu.pipeline_mode<synchronous>, transform_indices = @transform_4, window_bounds = array<i64: 4, 1, 32>}, {pipeline_mode = #tpu.pipeline_mode<synchronous>, transform_indices = @transform_5, window_bounds = array<i64: 4, 1, 32>}, {pipeline_mode = #tpu.pipeline_mode<synchronous>, transform_indices = @transform_6, window_bounds = array<i64: 4, 1, 32>}, {pipeline_mode = #tpu.pipeline_mode<synchronous>, transform_indices = @transform_7, window_bounds = array<i64: 4, 1, 32>}, {pipeline_mode = #tpu.pipeline_mode<synchronous>, transform_indices = @transform_8, window_bounds = array<i64: 2, 32, 32>}, {pipeline_mode = #tpu.pipeline_mode<synchronous>, transform_indices = @transform_9, window_bounds = array<i64: 2, 1, 32>}, {pipeline_mode = #tpu.pipeline_mode<synchronous>, transform_indices = @transform_10, window_bounds = array<i64: 2, 32, 32>}, {pipeline_mode = #tpu.pipeline_mode<synchronous>, transform_indices = @transform_11, window_bounds = array<i64: 2, 1, 32>}, {pipeline_mode = #tpu.pipeline_mode<synchronous>, transform_indices = @transform_12, window_bounds = array<i64: 2, 32, 32>}, {pipeline_mode = #tpu.pipeline_mode<synchronous>, transform_indices = @transform_13, window_bounds = array<i64: 2, 1, 32>}, {pipeline_mode = #tpu.pipeline_mode<synchronous>, transform_indices = @transform_14, window_bounds = array<i64: 32, 4>}, {pipeline_mode = #tpu.pipeline_mode<synchronous>, transform_indices = @transform_15, window_bounds = array<i64: 4, 32>}, {pipeline_mode = #tpu.pipeline_mode<synchronous>, transform_indices = @transform_16, window_bounds = array<i64: 2, 32, 32>}, {pipeline_mode = #tpu.pipeline_mode<synchronous>, transform_indices = @transform_17, window_bounds = array<i64: 2, 1, 32>}, {pipeline_mode = #tpu.pipeline_mode<synchronous>, transform_indices = @transform_18, window_bounds = array<i64: 2, 32, 64>}, {pipeline_mode = #tpu.pipeline_mode<synchronous>, transform_indices = @transform_19, window_bounds = array<i64: 2, 1, 64>}, {pipeline_mode = #tpu.pipeline_mode<synchronous>, transform_indices = @transform_20, window_bounds = array<i64: 2, 64, 32>}, {pipeline_mode = #tpu.pipeline_mode<synchronous>, transform_indices = @transform_21, window_bounds = array<i64: 2, 1, 32>}, {transform_indices = @transform_22, window_bounds = array<i64: 2>}, {transform_indices = @transform_23, window_bounds = array<i64: 2>}, {pipeline_mode = #tpu.pipeline_mode<synchronous>, transform_indices = @transform_24, window_bounds = array<i64: 32, 128>}, {pipeline_mode = #tpu.pipeline_mode<synchronous>, transform_indices = @transform_25, window_bounds = array<i64: 1, 128>}, {pipeline_mode = #tpu.pipeline_mode<synchronous>, transform_indices = @transform_26, window_bounds = array<i64: 32, 32>}, {pipeline_mode = #tpu.pipeline_mode<synchronous>, transform_indices = @transform_27, window_bounds = array<i64: 1, 32>}, {pipeline_mode = #tpu.pipeline_mode<synchronous>, transform_indices = @transform_28, window_bounds = array<i64: 32, 128>}, {transform_indices = @transform_29, window_bounds = array<i64: 8, 128>}]} {
    %c0 = arith.constant 0 : index
    %c0_0 = arith.constant 0 : index
    %0 = vector.load %arg1[%c0, %c0_0] : memref<8x16xf32, #tpu.memory_space<vmem>>, vector<8x16xf32>
    %c0_1 = arith.constant 0 : index
    %c0_2 = arith.constant 0 : index
    %1 = vector.load %arg2[%c0_1, %c0_2] : memref<16x32xbf16, #tpu.memory_space<vmem>>, vector<16x32xbf16>
    %2 = arith.truncf %0 : vector<8x16xf32> to vector<8x16xbf16>
    %cst = arith.constant dense<0.000000e+00> : vector<8x32xf32>
    %3 = tpu.matmul %2, %1, %cst {dimension_numbers = #tpu.dot_dimension_numbers<[1], [0], [0], [1], [0, 0, 1, 1], [], []>} : vector<8x16xbf16>, vector<16x32xbf16>, vector<8x32xf32> -> vector<8x32xf32>
    %c0_3 = arith.constant 0 : index
    %c0_4 = arith.constant 0 : index
    %4 = vector.load %arg3[%c0_3, %c0_4] : memref<1x32xf32, #tpu.memory_space<vmem>>, vector<1x32xf32>
    %5 = vector.broadcast %4 : vector<1x32xf32> to vector<8x32xf32>
    %6 = arith.addf %3, %5 : vector<8x32xf32>
    %7 = arith.mulf %6, %6 : vector<8x32xf32>
    %cst_5 = arith.constant dense<0.000000e+00> : vector<8xf32>
    %8 = vector.multi_reduction <add>, %7, %cst_5 [1] : vector<8x32xf32> to vector<8xf32>
    %9 = vector.shape_cast %8 : vector<8xf32> to vector<8x1xf32>
    %cst_6 = arith.constant 1.000000e-24 : f32
    %10 = vector.broadcast %cst_6 : f32 to vector<8x1xf32>
    %11 = arith.maximumf %9, %10 : vector<8x1xf32>
    %12 = math.rsqrt %11 : vector<8x1xf32>
    %13 = vector.broadcast %12 : vector<8x1xf32> to vector<8x32xf32>
    %14 = arith.mulf %6, %13 : vector<8x32xf32>
    %cst_7 = arith.constant 0.000000e+00 : f32
    %15 = vector.broadcast %cst_7 : f32 to vector<8x1xf32>
    %cst_8 = arith.constant 0.000000e+00 : f32
    %16 = vector.broadcast %cst_8 : f32 to vector<8x1xf32>
    %c0_9 = arith.constant 0 : index
    %c0_10 = arith.constant 0 : index
    %c0_11 = arith.constant 0 : index
    %17 = vector.load %arg4[%c0_9, %c0_10, %c0_11] : memref<4x32x32xbf16, #tpu.memory_space<vmem>>, vector<1x32x32xbf16>
    %18 = vector.shape_cast %17 : vector<1x32x32xbf16> to vector<32x32xbf16>
    %19 = arith.truncf %14 : vector<8x32xf32> to vector<8x32xbf16>
    %cst_12 = arith.constant dense<0.000000e+00> : vector<8x32xf32>
    %20 = tpu.matmul %19, %18, %cst_12 {dimension_numbers = #tpu.dot_dimension_numbers<[1], [0], [0], [1], [0, 0, 1, 1], [], []>} : vector<8x32xbf16>, vector<32x32xbf16>, vector<8x32xf32> -> vector<8x32xf32>
    %c0_13 = arith.constant 0 : index
    %c0_14 = arith.constant 0 : index
    %c0_15 = arith.constant 0 : index
    %21 = vector.load %arg5[%c0_13, %c0_14, %c0_15] : memref<4x1x32xf32, #tpu.memory_space<vmem>>, vector<1x1x32xf32>
    %22 = vector.shape_cast %21 : vector<1x1x32xf32> to vector<1x32xf32>
    %23 = vector.broadcast %22 : vector<1x32xf32> to vector<8x32xf32>
    %24 = arith.addf %20, %23 : vector<8x32xf32>
    %c0_16 = arith.constant 0 : index
    %c0_17 = arith.constant 0 : index
    %25 = vector.load %arg31[%c0_16, %c0_17] : memref<32x32xf32, #tpu.memory_space<vmem>>, vector<8x32xf32>
    tpu.vector_store %arg31[%c0_16, %c0_17], %24 {strides = array<i32>} : memref<32x32xf32, #tpu.memory_space<vmem>>, vector<8x32xf32>,
    %cst_18 = arith.constant dense<0.000000e+00> : vector<8xf32>
    %26 = vector.multi_reduction <add>, %24, %cst_18 [1] : vector<8x32xf32> to vector<8xf32>
    %27 = vector.shape_cast %26 : vector<8xf32> to vector<8x1xf32>
    %28 = arith.addf %15, %27 : vector<8x1xf32>
    %29 = arith.mulf %24, %24 : vector<8x32xf32>
    %cst_19 = arith.constant dense<0.000000e+00> : vector<8xf32>
    %30 = vector.multi_reduction <add>, %29, %cst_19 [1] : vector<8x32xf32> to vector<8xf32>
    %31 = vector.shape_cast %30 : vector<8xf32> to vector<8x1xf32>
    %32 = arith.addf %16, %31 : vector<8x1xf32>
    %c1 = arith.constant 1 : index
    %c0_20 = arith.constant 0 : index
    %c0_21 = arith.constant 0 : index
    %33 = vector.load %arg4[%c1, %c0_20, %c0_21] : memref<4x32x32xbf16, #tpu.memory_space<vmem>>, vector<1x32x32xbf16>
    %34 = vector.shape_cast %33 : vector<1x32x32xbf16> to vector<32x32xbf16>
    %35 = arith.truncf %14 : vector<8x32xf32> to vector<8x32xbf16>
    %cst_22 = arith.constant dense<0.000000e+00> : vector<8x32xf32>
    %36 = tpu.matmul %35, %34, %cst_22 {dimension_numbers = #tpu.dot_dimension_numbers<[1], [0], [0], [1], [0, 0, 1, 1], [], []>} : vector<8x32xbf16>, vector<32x32xbf16>, vector<8x32xf32> -> vector<8x32xf32>
    %c1_23 = arith.constant 1 : index
    %c0_24 = arith.constant 0 : index
    %c0_25 = arith.constant 0 : index
    %37 = vector.load %arg5[%c1_23, %c0_24, %c0_25] : memref<4x1x32xf32, #tpu.memory_space<vmem>>, vector<1x1x32xf32>
    %38 = vector.shape_cast %37 : vector<1x1x32xf32> to vector<1x32xf32>
    %39 = vector.broadcast %38 : vector<1x32xf32> to vector<8x32xf32>
    %40 = arith.addf %36, %39 : vector<8x32xf32>
    %c8 = arith.constant 8 : index
    %c0_26 = arith.constant 0 : index
    %41 = vector.load %arg31[%c8, %c0_26] : memref<32x32xf32, #tpu.memory_space<vmem>>, vector<8x32xf32>
    tpu.vector_store %arg31[%c8, %c0_26], %40 {strides = array<i32>} : memref<32x32xf32, #tpu.memory_space<vmem>>, vector<8x32xf32>,
    %cst_27 = arith.constant dense<0.000000e+00> : vector<8xf32>
    %42 = vector.multi_reduction <add>, %40, %cst_27 [1] : vector<8x32xf32> to vector<8xf32>
    %43 = vector.shape_cast %42 : vector<8xf32> to vector<8x1xf32>
    %44 = arith.addf %28, %43 : vector<8x1xf32>
    %45 = arith.mulf %40, %40 : vector<8x32xf32>
    %cst_28 = arith.constant dense<0.000000e+00> : vector<8xf32>
    %46 = vector.multi_reduction <add>, %45, %cst_28 [1] : vector<8x32xf32> to vector<8xf32>
    %47 = vector.shape_cast %46 : vector<8xf32> to vector<8x1xf32>
    %48 = arith.addf %32, %47 : vector<8x1xf32>
    %c2 = arith.constant 2 : index
    %c0_29 = arith.constant 0 : index
    %c0_30 = arith.constant 0 : index
    %49 = vector.load %arg4[%c2, %c0_29, %c0_30] : memref<4x32x32xbf16, #tpu.memory_space<vmem>>, vector<1x32x32xbf16>
    %50 = vector.shape_cast %49 : vector<1x32x32xbf16> to vector<32x32xbf16>
    %51 = arith.truncf %14 : vector<8x32xf32> to vector<8x32xbf16>
    %cst_31 = arith.constant dense<0.000000e+00> : vector<8x32xf32>
    %52 = tpu.matmul %51, %50, %cst_31 {dimension_numbers = #tpu.dot_dimension_numbers<[1], [0], [0], [1], [0, 0, 1, 1], [], []>} : vector<8x32xbf16>, vector<32x32xbf16>, vector<8x32xf32> -> vector<8x32xf32>
    %c2_32 = arith.constant 2 : index
    %c0_33 = arith.constant 0 : index
    %c0_34 = arith.constant 0 : index
    %53 = vector.load %arg5[%c2_32, %c0_33, %c0_34] : memref<4x1x32xf32, #tpu.memory_space<vmem>>, vector<1x1x32xf32>
    %54 = vector.shape_cast %53 : vector<1x1x32xf32> to vector<1x32xf32>
    %55 = vector.broadcast %54 : vector<1x32xf32> to vector<8x32xf32>
    %56 = arith.addf %52, %55 : vector<8x32xf32>
    %c16 = arith.constant 16 : index
    %c0_35 = arith.constant 0 : index
    %57 = vector.load %arg31[%c16, %c0_35] : memref<32x32xf32, #tpu.memory_space<vmem>>, vector<8x32xf32>
    tpu.vector_store %arg31[%c16, %c0_35], %56 {strides = array<i32>} : memref<32x32xf32, #tpu.memory_space<vmem>>, vector<8x32xf32>,
    %cst_36 = arith.constant dense<0.000000e+00> : vector<8xf32>
    %58 = vector.multi_reduction <add>, %56, %cst_36 [1] : vector<8x32xf32> to vector<8xf32>
    %59 = vector.shape_cast %58 : vector<8xf32> to vector<8x1xf32>
    %60 = arith.addf %44, %59 : vector<8x1xf32>
    %61 = arith.mulf %56, %56 : vector<8x32xf32>
    %cst_37 = arith.constant dense<0.000000e+00> : vector<8xf32>
    %62 = vector.multi_reduction <add>, %61, %cst_37 [1] : vector<8x32xf32> to vector<8xf32>
    %63 = vector.shape_cast %62 : vector<8xf32> to vector<8x1xf32>
    %64 = arith.addf %48, %63 : vector<8x1xf32>
    %c3 = arith.constant 3 : index
    %c0_38 = arith.constant 0 : index
    %c0_39 = arith.constant 0 : index
    %65 = vector.load %arg4[%c3, %c0_38, %c0_39] : memref<4x32x32xbf16, #tpu.memory_space<vmem>>, vector<1x32x32xbf16>
    %66 = vector.shape_cast %65 : vector<1x32x32xbf16> to vector<32x32xbf16>
    %67 = arith.truncf %14 : vector<8x32xf32> to vector<8x32xbf16>
    %cst_40 = arith.constant dense<0.000000e+00> : vector<8x32xf32>
    %68 = tpu.matmul %67, %66, %cst_40 {dimension_numbers = #tpu.dot_dimension_numbers<[1], [0], [0], [1], [0, 0, 1, 1], [], []>} : vector<8x32xbf16>, vector<32x32xbf16>, vector<8x32xf32> -> vector<8x32xf32>
    %c3_41 = arith.constant 3 : index
    %c0_42 = arith.constant 0 : index
    %c0_43 = arith.constant 0 : index
    %69 = vector.load %arg5[%c3_41, %c0_42, %c0_43] : memref<4x1x32xf32, #tpu.memory_space<vmem>>, vector<1x1x32xf32>
    %70 = vector.shape_cast %69 : vector<1x1x32xf32> to vector<1x32xf32>
    %71 = vector.broadcast %70 : vector<1x32xf32> to vector<8x32xf32>
    %72 = arith.addf %68, %71 : vector<8x32xf32>
    %c24 = arith.constant 24 : index
    %c0_44 = arith.constant 0 : index
    %73 = vector.load %arg31[%c24, %c0_44] : memref<32x32xf32, #tpu.memory_space<vmem>>, vector<8x32xf32>
    tpu.vector_store %arg31[%c24, %c0_44], %72 {strides = array<i32>} : memref<32x32xf32, #tpu.memory_space<vmem>>, vector<8x32xf32>,
    %cst_45 = arith.constant dense<0.000000e+00> : vector<8xf32>
    %74 = vector.multi_reduction <add>, %72, %cst_45 [1] : vector<8x32xf32> to vector<8xf32>
    %75 = vector.shape_cast %74 : vector<8xf32> to vector<8x1xf32>
    %76 = arith.addf %60, %75 : vector<8x1xf32>
    %77 = arith.mulf %72, %72 : vector<8x32xf32>
    %cst_46 = arith.constant dense<0.000000e+00> : vector<8xf32>
    %78 = vector.multi_reduction <add>, %77, %cst_46 [1] : vector<8x32xf32> to vector<8xf32>
    %79 = vector.shape_cast %78 : vector<8xf32> to vector<8x1xf32>
    %80 = arith.addf %64, %79 : vector<8x1xf32>
    %cst_47 = arith.constant 7.812500e-03 : f32
    %81 = vector.broadcast %cst_47 : f32 to vector<8x1xf32>
    %82 = arith.mulf %76, %81 : vector<8x1xf32>
    %cst_48 = arith.constant 7.812500e-03 : f32
    %83 = vector.broadcast %cst_48 : f32 to vector<8x1xf32>
    %84 = arith.mulf %80, %83 : vector<8x1xf32>
    %85 = arith.mulf %82, %82 : vector<8x1xf32>
    %86 = arith.subf %84, %85 : vector<8x1xf32>
    %cst_49 = arith.constant 0.000000e+00 : f32
    %87 = vector.broadcast %cst_49 : f32 to vector<8x1xf32>
    %88 = arith.maximumf %86, %87 : vector<8x1xf32>
    %cst_50 = arith.constant 9.99999974E-6 : f32
    %89 = vector.broadcast %cst_50 : f32 to vector<8x1xf32>
    %90 = arith.addf %88, %89 : vector<8x1xf32>
    %91 = math.rsqrt %90 : vector<8x1xf32>
    %c0_51 = arith.constant 0 : index
    %c0_52 = arith.constant 0 : index
    %92 = vector.load %arg31[%c0_51, %c0_52] : memref<32x32xf32, #tpu.memory_space<vmem>>, vector<8x32xf32>
    %93 = vector.broadcast %82 : vector<8x1xf32> to vector<8x32xf32>
    %94 = arith.subf %92, %93 : vector<8x32xf32>
    %95 = vector.broadcast %91 : vector<8x1xf32> to vector<8x32xf32>
    %96 = arith.mulf %94, %95 : vector<8x32xf32>
    %c0_53 = arith.constant 0 : index
    %c0_54 = arith.constant 0 : index
    %c0_55 = arith.constant 0 : index
    %97 = vector.load %arg6[%c0_53, %c0_54, %c0_55] : memref<4x1x32xf32, #tpu.memory_space<vmem>>, vector<1x1x32xf32>
    %98 = vector.shape_cast %97 : vector<1x1x32xf32> to vector<1x32xf32>
    %99 = vector.broadcast %98 : vector<1x32xf32> to vector<8x32xf32>
    %100 = arith.mulf %96, %99 : vector<8x32xf32>
    %c0_56 = arith.constant 0 : index
    %c0_57 = arith.constant 0 : index
    %c0_58 = arith.constant 0 : index
    %101 = vector.load %arg7[%c0_56, %c0_57, %c0_58] : memref<4x1x32xf32, #tpu.memory_space<vmem>>, vector<1x1x32xf32>
    %102 = vector.shape_cast %101 : vector<1x1x32xf32> to vector<1x32xf32>
    %103 = vector.broadcast %102 : vector<1x32xf32> to vector<8x32xf32>
    %104 = arith.addf %100, %103 : vector<8x32xf32>
    %105 = arith.mulf %104, %104 : vector<8x32xf32>
    %cst_59 = arith.constant dense<0.000000e+00> : vector<8xf32>
    %106 = vector.multi_reduction <add>, %105, %cst_59 [1] : vector<8x32xf32> to vector<8xf32>
    %107 = vector.shape_cast %106 : vector<8xf32> to vector<8x1xf32>
    %cst_60 = arith.constant 1.000000e-24 : f32
    %108 = vector.broadcast %cst_60 : f32 to vector<8x1xf32>
    %109 = arith.maximumf %107, %108 : vector<8x1xf32>
    %110 = math.rsqrt %109 : vector<8x1xf32>
    %111 = vector.broadcast %110 : vector<8x1xf32> to vector<8x32xf32>
    %112 = arith.mulf %104, %111 : vector<8x32xf32>
    %c0_61 = arith.constant 0 : index
    %c0_62 = arith.constant 0 : index
    %c0_63 = arith.constant 0 : index
    %113 = vector.load %arg8[%c0_61, %c0_62, %c0_63] : memref<4x1x32xf32, #tpu.memory_space<vmem>>, vector<1x1x32xf32>
    %114 = vector.shape_cast %113 : vector<1x1x32xf32> to vector<1x32xf32>
    %115 = vector.broadcast %114 : vector<1x32xf32> to vector<8x32xf32>
    %116 = arith.addf %112, %115 : vector<8x32xf32>
    %c0_64 = arith.constant 0 : index
    %c0_65 = arith.constant 0 : index
    %117 = vector.load %arg31[%c0_64, %c0_65] : memref<32x32xf32, #tpu.memory_space<vmem>>, vector<8x32xf32>
    tpu.vector_store %arg31[%c0_64, %c0_65], %116 {strides = array<i32>} : memref<32x32xf32, #tpu.memory_space<vmem>>, vector<8x32xf32>,
    %c8_66 = arith.constant 8 : index
    %c0_67 = arith.constant 0 : index
    %118 = vector.load %arg31[%c8_66, %c0_67] : memref<32x32xf32, #tpu.memory_space<vmem>>, vector<8x32xf32>
    %119 = vector.broadcast %82 : vector<8x1xf32> to vector<8x32xf32>
    %120 = arith.subf %118, %119 : vector<8x32xf32>
    %121 = vector.broadcast %91 : vector<8x1xf32> to vector<8x32xf32>
    %122 = arith.mulf %120, %121 : vector<8x32xf32>
    %c1_68 = arith.constant 1 : index
    %c0_69 = arith.constant 0 : index
    %c0_70 = arith.constant 0 : index
    %123 = vector.load %arg6[%c1_68, %c0_69, %c0_70] : memref<4x1x32xf32, #tpu.memory_space<vmem>>, vector<1x1x32xf32>
    %124 = vector.shape_cast %123 : vector<1x1x32xf32> to vector<1x32xf32>
    %125 = vector.broadcast %124 : vector<1x32xf32> to vector<8x32xf32>
    %126 = arith.mulf %122, %125 : vector<8x32xf32>
    %c1_71 = arith.constant 1 : index
    %c0_72 = arith.constant 0 : index
    %c0_73 = arith.constant 0 : index
    %127 = vector.load %arg7[%c1_71, %c0_72, %c0_73] : memref<4x1x32xf32, #tpu.memory_space<vmem>>, vector<1x1x32xf32>
    %128 = vector.shape_cast %127 : vector<1x1x32xf32> to vector<1x32xf32>
    %129 = vector.broadcast %128 : vector<1x32xf32> to vector<8x32xf32>
    %130 = arith.addf %126, %129 : vector<8x32xf32>
    %131 = arith.mulf %130, %130 : vector<8x32xf32>
    %cst_74 = arith.constant dense<0.000000e+00> : vector<8xf32>
    %132 = vector.multi_reduction <add>, %131, %cst_74 [1] : vector<8x32xf32> to vector<8xf32>
    %133 = vector.shape_cast %132 : vector<8xf32> to vector<8x1xf32>
    %cst_75 = arith.constant 1.000000e-24 : f32
    %134 = vector.broadcast %cst_75 : f32 to vector<8x1xf32>
    %135 = arith.maximumf %133, %134 : vector<8x1xf32>
    %136 = math.rsqrt %135 : vector<8x1xf32>
    %137 = vector.broadcast %136 : vector<8x1xf32> to vector<8x32xf32>
    %138 = arith.mulf %130, %137 : vector<8x32xf32>
    %c1_76 = arith.constant 1 : index
    %c0_77 = arith.constant 0 : index
    %c0_78 = arith.constant 0 : index
    %139 = vector.load %arg8[%c1_76, %c0_77, %c0_78] : memref<4x1x32xf32, #tpu.memory_space<vmem>>, vector<1x1x32xf32>
    %140 = vector.shape_cast %139 : vector<1x1x32xf32> to vector<1x32xf32>
    %141 = vector.broadcast %140 : vector<1x32xf32> to vector<8x32xf32>
    %142 = arith.addf %138, %141 : vector<8x32xf32>
    %c8_79 = arith.constant 8 : index
    %c0_80 = arith.constant 0 : index
    %143 = vector.load %arg31[%c8_79, %c0_80] : memref<32x32xf32, #tpu.memory_space<vmem>>, vector<8x32xf32>
    tpu.vector_store %arg31[%c8_79, %c0_80], %142 {strides = array<i32>} : memref<32x32xf32, #tpu.memory_space<vmem>>, vector<8x32xf32>,
    %c16_81 = arith.constant 16 : index
    %c0_82 = arith.constant 0 : index
    %144 = vector.load %arg31[%c16_81, %c0_82] : memref<32x32xf32, #tpu.memory_space<vmem>>, vector<8x32xf32>
    %145 = vector.broadcast %82 : vector<8x1xf32> to vector<8x32xf32>
    %146 = arith.subf %144, %145 : vector<8x32xf32>
    %147 = vector.broadcast %91 : vector<8x1xf32> to vector<8x32xf32>
    %148 = arith.mulf %146, %147 : vector<8x32xf32>
    %c2_83 = arith.constant 2 : index
    %c0_84 = arith.constant 0 : index
    %c0_85 = arith.constant 0 : index
    %149 = vector.load %arg6[%c2_83, %c0_84, %c0_85] : memref<4x1x32xf32, #tpu.memory_space<vmem>>, vector<1x1x32xf32>
    %150 = vector.shape_cast %149 : vector<1x1x32xf32> to vector<1x32xf32>
    %151 = vector.broadcast %150 : vector<1x32xf32> to vector<8x32xf32>
    %152 = arith.mulf %148, %151 : vector<8x32xf32>
    %c2_86 = arith.constant 2 : index
    %c0_87 = arith.constant 0 : index
    %c0_88 = arith.constant 0 : index
    %153 = vector.load %arg7[%c2_86, %c0_87, %c0_88] : memref<4x1x32xf32, #tpu.memory_space<vmem>>, vector<1x1x32xf32>
    %154 = vector.shape_cast %153 : vector<1x1x32xf32> to vector<1x32xf32>
    %155 = vector.broadcast %154 : vector<1x32xf32> to vector<8x32xf32>
    %156 = arith.addf %152, %155 : vector<8x32xf32>
    %157 = arith.mulf %156, %156 : vector<8x32xf32>
    %cst_89 = arith.constant dense<0.000000e+00> : vector<8xf32>
    %158 = vector.multi_reduction <add>, %157, %cst_89 [1] : vector<8x32xf32> to vector<8xf32>
    %159 = vector.shape_cast %158 : vector<8xf32> to vector<8x1xf32>
    %cst_90 = arith.constant 1.000000e-24 : f32
    %160 = vector.broadcast %cst_90 : f32 to vector<8x1xf32>
    %161 = arith.maximumf %159, %160 : vector<8x1xf32>
    %162 = math.rsqrt %161 : vector<8x1xf32>
    %163 = vector.broadcast %162 : vector<8x1xf32> to vector<8x32xf32>
    %164 = arith.mulf %156, %163 : vector<8x32xf32>
    %c2_91 = arith.constant 2 : index
    %c0_92 = arith.constant 0 : index
    %c0_93 = arith.constant 0 : index
    %165 = vector.load %arg8[%c2_91, %c0_92, %c0_93] : memref<4x1x32xf32, #tpu.memory_space<vmem>>, vector<1x1x32xf32>
    %166 = vector.shape_cast %165 : vector<1x1x32xf32> to vector<1x32xf32>
    %167 = vector.broadcast %166 : vector<1x32xf32> to vector<8x32xf32>
    %168 = arith.addf %164, %167 : vector<8x32xf32>
    %c16_94 = arith.constant 16 : index
    %c0_95 = arith.constant 0 : index
    %169 = vector.load %arg31[%c16_94, %c0_95] : memref<32x32xf32, #tpu.memory_space<vmem>>, vector<8x32xf32>
    tpu.vector_store %arg31[%c16_94, %c0_95], %168 {strides = array<i32>} : memref<32x32xf32, #tpu.memory_space<vmem>>, vector<8x32xf32>,
    %c24_96 = arith.constant 24 : index
    %c0_97 = arith.constant 0 : index
    %170 = vector.load %arg31[%c24_96, %c0_97] : memref<32x32xf32, #tpu.memory_space<vmem>>, vector<8x32xf32>
    %171 = vector.broadcast %82 : vector<8x1xf32> to vector<8x32xf32>
    %172 = arith.subf %170, %171 : vector<8x32xf32>
    %173 = vector.broadcast %91 : vector<8x1xf32> to vector<8x32xf32>
    %174 = arith.mulf %172, %173 : vector<8x32xf32>
    %c3_98 = arith.constant 3 : index
    %c0_99 = arith.constant 0 : index
    %c0_100 = arith.constant 0 : index
    %175 = vector.load %arg6[%c3_98, %c0_99, %c0_100] : memref<4x1x32xf32, #tpu.memory_space<vmem>>, vector<1x1x32xf32>
    %176 = vector.shape_cast %175 : vector<1x1x32xf32> to vector<1x32xf32>
    %177 = vector.broadcast %176 : vector<1x32xf32> to vector<8x32xf32>
    %178 = arith.mulf %174, %177 : vector<8x32xf32>
    %c3_101 = arith.constant 3 : index
    %c0_102 = arith.constant 0 : index
    %c0_103 = arith.constant 0 : index
    %179 = vector.load %arg7[%c3_101, %c0_102, %c0_103] : memref<4x1x32xf32, #tpu.memory_space<vmem>>, vector<1x1x32xf32>
    %180 = vector.shape_cast %179 : vector<1x1x32xf32> to vector<1x32xf32>
    %181 = vector.broadcast %180 : vector<1x32xf32> to vector<8x32xf32>
    %182 = arith.addf %178, %181 : vector<8x32xf32>
    %183 = arith.mulf %182, %182 : vector<8x32xf32>
    %cst_104 = arith.constant dense<0.000000e+00> : vector<8xf32>
    %184 = vector.multi_reduction <add>, %183, %cst_104 [1] : vector<8x32xf32> to vector<8xf32>
    %185 = vector.shape_cast %184 : vector<8xf32> to vector<8x1xf32>
    %cst_105 = arith.constant 1.000000e-24 : f32
    %186 = vector.broadcast %cst_105 : f32 to vector<8x1xf32>
    %187 = arith.maximumf %185, %186 : vector<8x1xf32>
    %188 = math.rsqrt %187 : vector<8x1xf32>
    %189 = vector.broadcast %188 : vector<8x1xf32> to vector<8x32xf32>
    %190 = arith.mulf %182, %189 : vector<8x32xf32>
    %c3_106 = arith.constant 3 : index
    %c0_107 = arith.constant 0 : index
    %c0_108 = arith.constant 0 : index
    %191 = vector.load %arg8[%c3_106, %c0_107, %c0_108] : memref<4x1x32xf32, #tpu.memory_space<vmem>>, vector<1x1x32xf32>
    %192 = vector.shape_cast %191 : vector<1x1x32xf32> to vector<1x32xf32>
    %193 = vector.broadcast %192 : vector<1x32xf32> to vector<8x32xf32>
    %194 = arith.addf %190, %193 : vector<8x32xf32>
    %c24_109 = arith.constant 24 : index
    %c0_110 = arith.constant 0 : index
    %195 = vector.load %arg31[%c24_109, %c0_110] : memref<32x32xf32, #tpu.memory_space<vmem>>, vector<8x32xf32>
    tpu.vector_store %arg31[%c24_109, %c0_110], %194 {strides = array<i32>} : memref<32x32xf32, #tpu.memory_space<vmem>>, vector<8x32xf32>,
    %c0_111 = arith.constant 0 : index
    %c0_112 = arith.constant 0 : index
    %196 = vector.load %arg31[%c0_111, %c0_112] : memref<32x32xf32, #tpu.memory_space<vmem>>, vector<32x32xf32>
    %c0_113 = arith.constant 0 : index
    %c0_114 = arith.constant 0 : index
    %197 = vector.load %arg15[%c0_113, %c0_114] : memref<32x4xbf16, #tpu.memory_space<vmem>>, vector<32x4xbf16>
    %c0_115 = arith.constant 0 : index
    %c0_116 = arith.constant 0 : index
    %198 = vector.load %arg16[%c0_115, %c0_116] : memref<4x32xbf16, #tpu.memory_space<vmem>>, vector<4x32xbf16>
    %199 = arith.mulf %196, %196 : vector<32x32xf32>
    %cst_117 = arith.constant dense<0.000000e+00> : vector<32xf32>
    %200 = vector.multi_reduction <add>, %199, %cst_117 [1] : vector<32x32xf32> to vector<32xf32>
    %201 = vector.shape_cast %200 : vector<32xf32> to vector<32x1xf32>
    %cst_118 = arith.constant 1.000000e-24 : f32
    %202 = vector.broadcast %cst_118 : f32 to vector<32x1xf32>
    %203 = arith.maximumf %201, %202 : vector<32x1xf32>
    %204 = math.rsqrt %203 : vector<32x1xf32>
    %205 = vector.broadcast %204 : vector<32x1xf32> to vector<32x32xf32>
    %206 = arith.mulf %196, %205 : vector<32x32xf32>
    %c0_119 = arith.constant 0 : index
    %c0_120 = arith.constant 0 : index
    %c0_121 = arith.constant 0 : index
    %207 = vector.load %arg9[%c0_119, %c0_120, %c0_121] : memref<2x32x32xbf16, #tpu.memory_space<vmem>>, vector<1x32x32xbf16>
    %208 = vector.shape_cast %207 : vector<1x32x32xbf16> to vector<32x32xbf16>
    %209 = arith.truncf %206 : vector<32x32xf32> to vector<32x32xbf16>
    %cst_122 = arith.constant dense<0.000000e+00> : vector<32x32xf32>
    %210 = tpu.matmul %209, %208, %cst_122 {dimension_numbers = #tpu.dot_dimension_numbers<[1], [0], [0], [1], [0, 0, 1, 1], [], []>} : vector<32x32xbf16>, vector<32x32xbf16>, vector<32x32xf32> -> vector<32x32xf32>
    %c0_123 = arith.constant 0 : index
    %c0_124 = arith.constant 0 : index
    %c0_125 = arith.constant 0 : index
    %211 = vector.load %arg10[%c0_123, %c0_124, %c0_125] : memref<2x1x32xf32, #tpu.memory_space<vmem>>, vector<1x1x32xf32>
    %212 = vector.shape_cast %211 : vector<1x1x32xf32> to vector<1x32xf32>
    %213 = vector.broadcast %212 : vector<1x32xf32> to vector<32x32xf32>
    %214 = arith.addf %210, %213 : vector<32x32xf32>
    %cst_126 = arith.constant 0.353553385 : f32
    %215 = vector.broadcast %cst_126 : f32 to vector<32x32xf32>
    %216 = arith.mulf %214, %215 : vector<32x32xf32>
    %c0_127 = arith.constant 0 : index
    %c0_128 = arith.constant 0 : index
    %c0_129 = arith.constant 0 : index
    %217 = vector.load %arg11[%c0_127, %c0_128, %c0_129] : memref<2x32x32xbf16, #tpu.memory_space<vmem>>, vector<1x32x32xbf16>
    %218 = vector.shape_cast %217 : vector<1x32x32xbf16> to vector<32x32xbf16>
    %219 = arith.truncf %206 : vector<32x32xf32> to vector<32x32xbf16>
    %cst_130 = arith.constant dense<0.000000e+00> : vector<32x32xf32>
    %220 = tpu.matmul %219, %218, %cst_130 {dimension_numbers = #tpu.dot_dimension_numbers<[1], [0], [0], [1], [0, 0, 1, 1], [], []>} : vector<32x32xbf16>, vector<32x32xbf16>, vector<32x32xf32> -> vector<32x32xf32>
    %c0_131 = arith.constant 0 : index
    %c0_132 = arith.constant 0 : index
    %c0_133 = arith.constant 0 : index
    %221 = vector.load %arg12[%c0_131, %c0_132, %c0_133] : memref<2x1x32xf32, #tpu.memory_space<vmem>>, vector<1x1x32xf32>
    %222 = vector.shape_cast %221 : vector<1x1x32xf32> to vector<1x32xf32>
    %223 = vector.broadcast %222 : vector<1x32xf32> to vector<32x32xf32>
    %224 = arith.addf %220, %223 : vector<32x32xf32>
    %c0_134 = arith.constant 0 : index
    %c0_135 = arith.constant 0 : index
    %c0_136 = arith.constant 0 : index
    %225 = vector.load %arg13[%c0_134, %c0_135, %c0_136] : memref<2x32x32xbf16, #tpu.memory_space<vmem>>, vector<1x32x32xbf16>
    %226 = vector.shape_cast %225 : vector<1x32x32xbf16> to vector<32x32xbf16>
    %227 = arith.truncf %206 : vector<32x32xf32> to vector<32x32xbf16>
    %cst_137 = arith.constant dense<0.000000e+00> : vector<32x32xf32>
    %228 = tpu.matmul %227, %226, %cst_137 {dimension_numbers = #tpu.dot_dimension_numbers<[1], [0], [0], [1], [0, 0, 1, 1], [], []>} : vector<32x32xbf16>, vector<32x32xbf16>, vector<32x32xf32> -> vector<32x32xf32>
    %c0_138 = arith.constant 0 : index
    %c0_139 = arith.constant 0 : index
    %c0_140 = arith.constant 0 : index
    %229 = vector.load %arg14[%c0_138, %c0_139, %c0_140] : memref<2x1x32xf32, #tpu.memory_space<vmem>>, vector<1x1x32xf32>
    %230 = vector.shape_cast %229 : vector<1x1x32xf32> to vector<1x32xf32>
    %231 = vector.broadcast %230 : vector<1x32xf32> to vector<32x32xf32>
    %232 = arith.addf %228, %231 : vector<32x32xf32>
    %233 = vector.shape_cast %224 : vector<32x32xf32> to vector<4x8x32xf32>
    %234 = vector.shape_cast %232 : vector<32x32xf32> to vector<4x8x32xf32>
    %235 = vector.extract_strided_slice %216 {offsets = [0, 0], sizes = [8, 32], strides = [1, 1]} : vector<32x32xf32> to vector<8x32xf32>
    %236 = vector.shape_cast %235 : vector<8x32xf32> to vector<1x8x32xf32>
    %237 = vector.broadcast %236 : vector<1x8x32xf32> to vector<4x8x32xf32>
    %238 = arith.mulf %233, %237 : vector<4x8x32xf32>
    %239 = vector.shape_cast %238 : vector<4x8x32xf32> to vector<32x32xf32>
    %240 = arith.truncf %239 : vector<32x32xf32> to vector<32x32xbf16>
    %cst_141 = arith.constant dense<0.000000e+00> : vector<32x4xf32>
    %241 = tpu.matmul %240, %197, %cst_141 {dimension_numbers = #tpu.dot_dimension_numbers<[1], [0], [0], [1], [0, 0, 1, 1], [], []>} : vector<32x32xbf16>, vector<32x4xbf16>, vector<32x4xf32> -> vector<32x4xf32>
    %242 = vector.shape_cast %241 : vector<32x4xf32> to vector<4x8x4xf32>
    %cst_142 = arith.constant dense<0xFF800000> : vector<8x4xf32>
    %243 = vector.multi_reduction <maximumf>, %242, %cst_142 [0] : vector<4x8x4xf32> to vector<8x4xf32>
    %244 = vector.shape_cast %243 : vector<8x4xf32> to vector<1x8x4xf32>
    %245 = vector.broadcast %244 : vector<1x8x4xf32> to vector<4x8x4xf32>
    %246 = arith.subf %242, %245 : vector<4x8x4xf32>
    %247 = math.exp %246 : vector<4x8x4xf32>
    %cst_143 = arith.constant dense<0.000000e+00> : vector<8x4xf32>
    %248 = vector.multi_reduction <add>, %247, %cst_143 [0] : vector<4x8x4xf32> to vector<8x4xf32>
    %249 = tpu.reciprocal %248 {approx = true} : vector<8x4xf32> -> vector<8x4xf32>
    %250 = vector.shape_cast %249 : vector<8x4xf32> to vector<1x8x4xf32>
    %251 = vector.broadcast %250 : vector<1x8x4xf32> to vector<4x8x4xf32>
    %252 = arith.mulf %247, %251 : vector<4x8x4xf32>
    %253 = vector.shape_cast %252 : vector<4x8x4xf32> to vector<32x4xf32>
    %254 = arith.truncf %253 : vector<32x4xf32> to vector<32x4xbf16>
    %cst_144 = arith.constant dense<0.000000e+00> : vector<32x32xf32>
    %255 = tpu.matmul %254, %198, %cst_144 {dimension_numbers = #tpu.dot_dimension_numbers<[1], [0], [0], [1], [0, 0, 1, 1], [], []>} : vector<32x4xbf16>, vector<4x32xbf16>, vector<32x32xf32> -> vector<32x32xf32>
    %256 = vector.shape_cast %255 : vector<32x32xf32> to vector<4x8x32xf32>
    %257 = arith.mulf %256, %234 : vector<4x8x32xf32>
    %cst_145 = arith.constant dense<0.000000e+00> : vector<8x32xf32>
    %258 = vector.multi_reduction <add>, %257, %cst_145 [0] : vector<4x8x32xf32> to vector<8x32xf32>
    %c0_146 = arith.constant 0 : index
    %c0_147 = arith.constant 0 : index
    %259 = vector.load %arg31[%c0_146, %c0_147] : memref<32x32xf32, #tpu.memory_space<vmem>>, vector<8x32xf32>
    tpu.vector_store %arg31[%c0_146, %c0_147], %258 {strides = array<i32>} : memref<32x32xf32, #tpu.memory_space<vmem>>, vector<8x32xf32>,
    %260 = vector.extract_strided_slice %216 {offsets = [8, 0], sizes = [8, 32], strides = [1, 1]} : vector<32x32xf32> to vector<8x32xf32>
    %261 = vector.shape_cast %260 : vector<8x32xf32> to vector<1x8x32xf32>
    %262 = vector.broadcast %261 : vector<1x8x32xf32> to vector<4x8x32xf32>
    %263 = arith.mulf %233, %262 : vector<4x8x32xf32>
    %264 = vector.shape_cast %263 : vector<4x8x32xf32> to vector<32x32xf32>
    %265 = arith.truncf %264 : vector<32x32xf32> to vector<32x32xbf16>
    %cst_148 = arith.constant dense<0.000000e+00> : vector<32x4xf32>
    %266 = tpu.matmul %265, %197, %cst_148 {dimension_numbers = #tpu.dot_dimension_numbers<[1], [0], [0], [1], [0, 0, 1, 1], [], []>} : vector<32x32xbf16>, vector<32x4xbf16>, vector<32x4xf32> -> vector<32x4xf32>
    %267 = vector.shape_cast %266 : vector<32x4xf32> to vector<4x8x4xf32>
    %cst_149 = arith.constant dense<0xFF800000> : vector<8x4xf32>
    %268 = vector.multi_reduction <maximumf>, %267, %cst_149 [0] : vector<4x8x4xf32> to vector<8x4xf32>
    %269 = vector.shape_cast %268 : vector<8x4xf32> to vector<1x8x4xf32>
    %270 = vector.broadcast %269 : vector<1x8x4xf32> to vector<4x8x4xf32>
    %271 = arith.subf %267, %270 : vector<4x8x4xf32>
    %272 = math.exp %271 : vector<4x8x4xf32>
    %cst_150 = arith.constant dense<0.000000e+00> : vector<8x4xf32>
    %273 = vector.multi_reduction <add>, %272, %cst_150 [0] : vector<4x8x4xf32> to vector<8x4xf32>
    %274 = tpu.reciprocal %273 {approx = true} : vector<8x4xf32> -> vector<8x4xf32>
    %275 = vector.shape_cast %274 : vector<8x4xf32> to vector<1x8x4xf32>
    %276 = vector.broadcast %275 : vector<1x8x4xf32> to vector<4x8x4xf32>
    %277 = arith.mulf %272, %276 : vector<4x8x4xf32>
    %278 = vector.shape_cast %277 : vector<4x8x4xf32> to vector<32x4xf32>
    %279 = arith.truncf %278 : vector<32x4xf32> to vector<32x4xbf16>
    %cst_151 = arith.constant dense<0.000000e+00> : vector<32x32xf32>
    %280 = tpu.matmul %279, %198, %cst_151 {dimension_numbers = #tpu.dot_dimension_numbers<[1], [0], [0], [1], [0, 0, 1, 1], [], []>} : vector<32x4xbf16>, vector<4x32xbf16>, vector<32x32xf32> -> vector<32x32xf32>
    %281 = vector.shape_cast %280 : vector<32x32xf32> to vector<4x8x32xf32>
    %282 = arith.mulf %281, %234 : vector<4x8x32xf32>
    %cst_152 = arith.constant dense<0.000000e+00> : vector<8x32xf32>
    %283 = vector.multi_reduction <add>, %282, %cst_152 [0] : vector<4x8x32xf32> to vector<8x32xf32>
    %c8_153 = arith.constant 8 : index
    %c0_154 = arith.constant 0 : index
    %284 = vector.load %arg31[%c8_153, %c0_154] : memref<32x32xf32, #tpu.memory_space<vmem>>, vector<8x32xf32>
    tpu.vector_store %arg31[%c8_153, %c0_154], %283 {strides = array<i32>} : memref<32x32xf32, #tpu.memory_space<vmem>>, vector<8x32xf32>,
    %285 = vector.extract_strided_slice %216 {offsets = [16, 0], sizes = [8, 32], strides = [1, 1]} : vector<32x32xf32> to vector<8x32xf32>
    %286 = vector.shape_cast %285 : vector<8x32xf32> to vector<1x8x32xf32>
    %287 = vector.broadcast %286 : vector<1x8x32xf32> to vector<4x8x32xf32>
    %288 = arith.mulf %233, %287 : vector<4x8x32xf32>
    %289 = vector.shape_cast %288 : vector<4x8x32xf32> to vector<32x32xf32>
    %290 = arith.truncf %289 : vector<32x32xf32> to vector<32x32xbf16>
    %cst_155 = arith.constant dense<0.000000e+00> : vector<32x4xf32>
    %291 = tpu.matmul %290, %197, %cst_155 {dimension_numbers = #tpu.dot_dimension_numbers<[1], [0], [0], [1], [0, 0, 1, 1], [], []>} : vector<32x32xbf16>, vector<32x4xbf16>, vector<32x4xf32> -> vector<32x4xf32>
    %292 = vector.shape_cast %291 : vector<32x4xf32> to vector<4x8x4xf32>
    %cst_156 = arith.constant dense<0xFF800000> : vector<8x4xf32>
    %293 = vector.multi_reduction <maximumf>, %292, %cst_156 [0] : vector<4x8x4xf32> to vector<8x4xf32>
    %294 = vector.shape_cast %293 : vector<8x4xf32> to vector<1x8x4xf32>
    %295 = vector.broadcast %294 : vector<1x8x4xf32> to vector<4x8x4xf32>
    %296 = arith.subf %292, %295 : vector<4x8x4xf32>
    %297 = math.exp %296 : vector<4x8x4xf32>
    %cst_157 = arith.constant dense<0.000000e+00> : vector<8x4xf32>
    %298 = vector.multi_reduction <add>, %297, %cst_157 [0] : vector<4x8x4xf32> to vector<8x4xf32>
    %299 = tpu.reciprocal %298 {approx = true} : vector<8x4xf32> -> vector<8x4xf32>
    %300 = vector.shape_cast %299 : vector<8x4xf32> to vector<1x8x4xf32>
    %301 = vector.broadcast %300 : vector<1x8x4xf32> to vector<4x8x4xf32>
    %302 = arith.mulf %297, %301 : vector<4x8x4xf32>
    %303 = vector.shape_cast %302 : vector<4x8x4xf32> to vector<32x4xf32>
    %304 = arith.truncf %303 : vector<32x4xf32> to vector<32x4xbf16>
    %cst_158 = arith.constant dense<0.000000e+00> : vector<32x32xf32>
    %305 = tpu.matmul %304, %198, %cst_158 {dimension_numbers = #tpu.dot_dimension_numbers<[1], [0], [0], [1], [0, 0, 1, 1], [], []>} : vector<32x4xbf16>, vector<4x32xbf16>, vector<32x32xf32> -> vector<32x32xf32>
    %306 = vector.shape_cast %305 : vector<32x32xf32> to vector<4x8x32xf32>
    %307 = arith.mulf %306, %234 : vector<4x8x32xf32>
    %cst_159 = arith.constant dense<0.000000e+00> : vector<8x32xf32>
    %308 = vector.multi_reduction <add>, %307, %cst_159 [0] : vector<4x8x32xf32> to vector<8x32xf32>
    %c16_160 = arith.constant 16 : index
    %c0_161 = arith.constant 0 : index
    %309 = vector.load %arg31[%c16_160, %c0_161] : memref<32x32xf32, #tpu.memory_space<vmem>>, vector<8x32xf32>
    tpu.vector_store %arg31[%c16_160, %c0_161], %308 {strides = array<i32>} : memref<32x32xf32, #tpu.memory_space<vmem>>, vector<8x32xf32>,
    %310 = vector.extract_strided_slice %216 {offsets = [24, 0], sizes = [8, 32], strides = [1, 1]} : vector<32x32xf32> to vector<8x32xf32>
    %311 = vector.shape_cast %310 : vector<8x32xf32> to vector<1x8x32xf32>
    %312 = vector.broadcast %311 : vector<1x8x32xf32> to vector<4x8x32xf32>
    %313 = arith.mulf %233, %312 : vector<4x8x32xf32>
    %314 = vector.shape_cast %313 : vector<4x8x32xf32> to vector<32x32xf32>
    %315 = arith.truncf %314 : vector<32x32xf32> to vector<32x32xbf16>
    %cst_162 = arith.constant dense<0.000000e+00> : vector<32x4xf32>
    %316 = tpu.matmul %315, %197, %cst_162 {dimension_numbers = #tpu.dot_dimension_numbers<[1], [0], [0], [1], [0, 0, 1, 1], [], []>} : vector<32x32xbf16>, vector<32x4xbf16>, vector<32x4xf32> -> vector<32x4xf32>
    %317 = vector.shape_cast %316 : vector<32x4xf32> to vector<4x8x4xf32>
    %cst_163 = arith.constant dense<0xFF800000> : vector<8x4xf32>
    %318 = vector.multi_reduction <maximumf>, %317, %cst_163 [0] : vector<4x8x4xf32> to vector<8x4xf32>
    %319 = vector.shape_cast %318 : vector<8x4xf32> to vector<1x8x4xf32>
    %320 = vector.broadcast %319 : vector<1x8x4xf32> to vector<4x8x4xf32>
    %321 = arith.subf %317, %320 : vector<4x8x4xf32>
    %322 = math.exp %321 : vector<4x8x4xf32>
    %cst_164 = arith.constant dense<0.000000e+00> : vector<8x4xf32>
    %323 = vector.multi_reduction <add>, %322, %cst_164 [0] : vector<4x8x4xf32> to vector<8x4xf32>
    %324 = tpu.reciprocal %323 {approx = true} : vector<8x4xf32> -> vector<8x4xf32>
    %325 = vector.shape_cast %324 : vector<8x4xf32> to vector<1x8x4xf32>
    %326 = vector.broadcast %325 : vector<1x8x4xf32> to vector<4x8x4xf32>
    %327 = arith.mulf %322, %326 : vector<4x8x4xf32>
    %328 = vector.shape_cast %327 : vector<4x8x4xf32> to vector<32x4xf32>
    %329 = arith.truncf %328 : vector<32x4xf32> to vector<32x4xbf16>
    %cst_165 = arith.constant dense<0.000000e+00> : vector<32x32xf32>
    %330 = tpu.matmul %329, %198, %cst_165 {dimension_numbers = #tpu.dot_dimension_numbers<[1], [0], [0], [1], [0, 0, 1, 1], [], []>} : vector<32x4xbf16>, vector<4x32xbf16>, vector<32x32xf32> -> vector<32x32xf32>
    %331 = vector.shape_cast %330 : vector<32x32xf32> to vector<4x8x32xf32>
    %332 = arith.mulf %331, %234 : vector<4x8x32xf32>
    %cst_166 = arith.constant dense<0.000000e+00> : vector<8x32xf32>
    %333 = vector.multi_reduction <add>, %332, %cst_166 [0] : vector<4x8x32xf32> to vector<8x32xf32>
    %c24_167 = arith.constant 24 : index
    %c0_168 = arith.constant 0 : index
    %334 = vector.load %arg31[%c24_167, %c0_168] : memref<32x32xf32, #tpu.memory_space<vmem>>, vector<8x32xf32>
    tpu.vector_store %arg31[%c24_167, %c0_168], %333 {strides = array<i32>} : memref<32x32xf32, #tpu.memory_space<vmem>>, vector<8x32xf32>,
    %c0_169 = arith.constant 0 : index
    %c0_170 = arith.constant 0 : index
    %335 = vector.load %arg31[%c0_169, %c0_170] : memref<32x32xf32, #tpu.memory_space<vmem>>, vector<32x32xf32>
    %c0_171 = arith.constant 0 : index
    %c0_172 = arith.constant 0 : index
    %c0_173 = arith.constant 0 : index
    %336 = vector.load %arg17[%c0_171, %c0_172, %c0_173] : memref<2x32x32xbf16, #tpu.memory_space<vmem>>, vector<1x32x32xbf16>
    %337 = vector.shape_cast %336 : vector<1x32x32xbf16> to vector<32x32xbf16>
    %338 = arith.truncf %335 : vector<32x32xf32> to vector<32x32xbf16>
    %cst_174 = arith.constant dense<0.000000e+00> : vector<32x32xf32>
    %339 = tpu.matmul %338, %337, %cst_174 {dimension_numbers = #tpu.dot_dimension_numbers<[1], [0], [0], [1], [0, 0, 1, 1], [], []>} : vector<32x32xbf16>, vector<32x32xbf16>, vector<32x32xf32> -> vector<32x32xf32>
    %c0_175 = arith.constant 0 : index
    %c0_176 = arith.constant 0 : index
    %c0_177 = arith.constant 0 : index
    %340 = vector.load %arg18[%c0_175, %c0_176, %c0_177] : memref<2x1x32xf32, #tpu.memory_space<vmem>>, vector<1x1x32xf32>
    %341 = vector.shape_cast %340 : vector<1x1x32xf32> to vector<1x32xf32>
    %342 = vector.broadcast %341 : vector<1x32xf32> to vector<32x32xf32>
    %343 = arith.addf %339, %342 : vector<32x32xf32>
    %344 = arith.mulf %343, %343 : vector<32x32xf32>
    %cst_178 = arith.constant dense<0.000000e+00> : vector<32xf32>
    %345 = vector.multi_reduction <add>, %344, %cst_178 [1] : vector<32x32xf32> to vector<32xf32>
    %346 = vector.shape_cast %345 : vector<32xf32> to vector<32x1xf32>
    %cst_179 = arith.constant 1.000000e-24 : f32
    %347 = vector.broadcast %cst_179 : f32 to vector<32x1xf32>
    %348 = arith.maximumf %346, %347 : vector<32x1xf32>
    %349 = math.rsqrt %348 : vector<32x1xf32>
    %350 = vector.broadcast %349 : vector<32x1xf32> to vector<32x32xf32>
    %351 = arith.mulf %343, %350 : vector<32x32xf32>
    %c0_180 = arith.constant 0 : index
    %352 = memref.load %arg23[%c0_180] : memref<2xf32, #tpu.memory_space<smem>>
    %353 = arith.subf %351, %206 : vector<32x32xf32>
    %354 = vector.broadcast %352 : f32 to vector<32x32xf32>
    %355 = arith.mulf %354, %353 : vector<32x32xf32>
    %356 = arith.addf %206, %355 : vector<32x32xf32>
    %357 = arith.mulf %356, %356 : vector<32x32xf32>
    %cst_181 = arith.constant dense<0.000000e+00> : vector<32xf32>
    %358 = vector.multi_reduction <add>, %357, %cst_181 [1] : vector<32x32xf32> to vector<32xf32>
    %359 = vector.shape_cast %358 : vector<32xf32> to vector<32x1xf32>
    %cst_182 = arith.constant 1.000000e-24 : f32
    %360 = vector.broadcast %cst_182 : f32 to vector<32x1xf32>
    %361 = arith.maximumf %359, %360 : vector<32x1xf32>
    %362 = math.rsqrt %361 : vector<32x1xf32>
    %363 = vector.broadcast %362 : vector<32x1xf32> to vector<32x32xf32>
    %364 = arith.mulf %356, %363 : vector<32x32xf32>
    %c0_183 = arith.constant 0 : index
    %c0_184 = arith.constant 0 : index
    %c0_185 = arith.constant 0 : index
    %365 = vector.load %arg19[%c0_183, %c0_184, %c0_185] : memref<2x32x64xbf16, #tpu.memory_space<vmem>>, vector<1x32x64xbf16>
    %366 = vector.shape_cast %365 : vector<1x32x64xbf16> to vector<32x64xbf16>
    %367 = arith.truncf %364 : vector<32x32xf32> to vector<32x32xbf16>
    %cst_186 = arith.constant dense<0.000000e+00> : vector<32x64xf32>
    %368 = tpu.matmul %367, %366, %cst_186 {dimension_numbers = #tpu.dot_dimension_numbers<[1], [0], [0], [1], [0, 0, 1, 1], [], []>} : vector<32x32xbf16>, vector<32x64xbf16>, vector<32x64xf32> -> vector<32x64xf32>
    %c0_187 = arith.constant 0 : index
    %c0_188 = arith.constant 0 : index
    %c0_189 = arith.constant 0 : index
    %369 = vector.load %arg20[%c0_187, %c0_188, %c0_189] : memref<2x1x64xf32, #tpu.memory_space<vmem>>, vector<1x1x64xf32>
    %370 = vector.shape_cast %369 : vector<1x1x64xf32> to vector<1x64xf32>
    %371 = vector.broadcast %370 : vector<1x64xf32> to vector<32x64xf32>
    %372 = arith.addf %368, %371 : vector<32x64xf32>
    %cst_190 = arith.constant 0.000000e+00 : f32
    %373 = vector.broadcast %cst_190 : f32 to vector<32x64xf32>
    %374 = arith.maximumf %372, %373 : vector<32x64xf32>
    %c0_191 = arith.constant 0 : index
    %c0_192 = arith.constant 0 : index
    %c0_193 = arith.constant 0 : index
    %375 = vector.load %arg21[%c0_191, %c0_192, %c0_193] : memref<2x64x32xbf16, #tpu.memory_space<vmem>>, vector<1x64x32xbf16>
    %376 = vector.shape_cast %375 : vector<1x64x32xbf16> to vector<64x32xbf16>
    %377 = arith.truncf %374 : vector<32x64xf32> to vector<32x64xbf16>
    %cst_194 = arith.constant dense<0.000000e+00> : vector<32x32xf32>
    %378 = tpu.matmul %377, %376, %cst_194 {dimension_numbers = #tpu.dot_dimension_numbers<[1], [0], [0], [1], [0, 0, 1, 1], [], []>} : vector<32x64xbf16>, vector<64x32xbf16>, vector<32x32xf32> -> vector<32x32xf32>
    %c0_195 = arith.constant 0 : index
    %c0_196 = arith.constant 0 : index
    %c0_197 = arith.constant 0 : index
    %379 = vector.load %arg22[%c0_195, %c0_196, %c0_197] : memref<2x1x32xf32, #tpu.memory_space<vmem>>, vector<1x1x32xf32>
    %380 = vector.shape_cast %379 : vector<1x1x32xf32> to vector<1x32xf32>
    %381 = vector.broadcast %380 : vector<1x32xf32> to vector<32x32xf32>
    %382 = arith.addf %378, %381 : vector<32x32xf32>
    %383 = arith.mulf %382, %382 : vector<32x32xf32>
    %cst_198 = arith.constant dense<0.000000e+00> : vector<32xf32>
    %384 = vector.multi_reduction <add>, %383, %cst_198 [1] : vector<32x32xf32> to vector<32xf32>
    %385 = vector.shape_cast %384 : vector<32xf32> to vector<32x1xf32>
    %cst_199 = arith.constant 1.000000e-24 : f32
    %386 = vector.broadcast %cst_199 : f32 to vector<32x1xf32>
    %387 = arith.maximumf %385, %386 : vector<32x1xf32>
    %388 = math.rsqrt %387 : vector<32x1xf32>
    %389 = vector.broadcast %388 : vector<32x1xf32> to vector<32x32xf32>
    %390 = arith.mulf %382, %389 : vector<32x32xf32>
    %c0_200 = arith.constant 0 : index
    %391 = memref.load %arg24[%c0_200] : memref<2xf32, #tpu.memory_space<smem>>
    %392 = arith.subf %390, %364 : vector<32x32xf32>
    %393 = vector.broadcast %391 : f32 to vector<32x32xf32>
    %394 = arith.mulf %393, %392 : vector<32x32xf32>
    %395 = arith.addf %364, %394 : vector<32x32xf32>
    %396 = arith.mulf %395, %395 : vector<32x32xf32>
    %cst_201 = arith.constant dense<0.000000e+00> : vector<32xf32>
    %397 = vector.multi_reduction <add>, %396, %cst_201 [1] : vector<32x32xf32> to vector<32xf32>
    %398 = vector.shape_cast %397 : vector<32xf32> to vector<32x1xf32>
    %cst_202 = arith.constant 1.000000e-24 : f32
    %399 = vector.broadcast %cst_202 : f32 to vector<32x1xf32>
    %400 = arith.maximumf %398, %399 : vector<32x1xf32>
    %401 = math.rsqrt %400 : vector<32x1xf32>
    %402 = vector.broadcast %401 : vector<32x1xf32> to vector<32x32xf32>
    %403 = arith.mulf %395, %402 : vector<32x32xf32>
    %404 = arith.mulf %403, %403 : vector<32x32xf32>
    %cst_203 = arith.constant dense<0.000000e+00> : vector<32xf32>
    %405 = vector.multi_reduction <add>, %404, %cst_203 [1] : vector<32x32xf32> to vector<32xf32>
    %406 = vector.shape_cast %405 : vector<32xf32> to vector<32x1xf32>
    %cst_204 = arith.constant 1.000000e-24 : f32
    %407 = vector.broadcast %cst_204 : f32 to vector<32x1xf32>
    %408 = arith.maximumf %406, %407 : vector<32x1xf32>
    %409 = math.rsqrt %408 : vector<32x1xf32>
    %410 = vector.broadcast %409 : vector<32x1xf32> to vector<32x32xf32>
    %411 = arith.mulf %403, %410 : vector<32x32xf32>
    %c1_205 = arith.constant 1 : index
    %c0_206 = arith.constant 0 : index
    %c0_207 = arith.constant 0 : index
    %412 = vector.load %arg9[%c1_205, %c0_206, %c0_207] : memref<2x32x32xbf16, #tpu.memory_space<vmem>>, vector<1x32x32xbf16>
    %413 = vector.shape_cast %412 : vector<1x32x32xbf16> to vector<32x32xbf16>
    %414 = arith.truncf %411 : vector<32x32xf32> to vector<32x32xbf16>
    %cst_208 = arith.constant dense<0.000000e+00> : vector<32x32xf32>
    %415 = tpu.matmul %414, %413, %cst_208 {dimension_numbers = #tpu.dot_dimension_numbers<[1], [0], [0], [1], [0, 0, 1, 1], [], []>} : vector<32x32xbf16>, vector<32x32xbf16>, vector<32x32xf32> -> vector<32x32xf32>
    %c1_209 = arith.constant 1 : index
    %c0_210 = arith.constant 0 : index
    %c0_211 = arith.constant 0 : index
    %416 = vector.load %arg10[%c1_209, %c0_210, %c0_211] : memref<2x1x32xf32, #tpu.memory_space<vmem>>, vector<1x1x32xf32>
    %417 = vector.shape_cast %416 : vector<1x1x32xf32> to vector<1x32xf32>
    %418 = vector.broadcast %417 : vector<1x32xf32> to vector<32x32xf32>
    %419 = arith.addf %415, %418 : vector<32x32xf32>
    %cst_212 = arith.constant 0.353553385 : f32
    %420 = vector.broadcast %cst_212 : f32 to vector<32x32xf32>
    %421 = arith.mulf %419, %420 : vector<32x32xf32>
    %c1_213 = arith.constant 1 : index
    %c0_214 = arith.constant 0 : index
    %c0_215 = arith.constant 0 : index
    %422 = vector.load %arg11[%c1_213, %c0_214, %c0_215] : memref<2x32x32xbf16, #tpu.memory_space<vmem>>, vector<1x32x32xbf16>
    %423 = vector.shape_cast %422 : vector<1x32x32xbf16> to vector<32x32xbf16>
    %424 = arith.truncf %411 : vector<32x32xf32> to vector<32x32xbf16>
    %cst_216 = arith.constant dense<0.000000e+00> : vector<32x32xf32>
    %425 = tpu.matmul %424, %423, %cst_216 {dimension_numbers = #tpu.dot_dimension_numbers<[1], [0], [0], [1], [0, 0, 1, 1], [], []>} : vector<32x32xbf16>, vector<32x32xbf16>, vector<32x32xf32> -> vector<32x32xf32>
    %c1_217 = arith.constant 1 : index
    %c0_218 = arith.constant 0 : index
    %c0_219 = arith.constant 0 : index
    %426 = vector.load %arg12[%c1_217, %c0_218, %c0_219] : memref<2x1x32xf32, #tpu.memory_space<vmem>>, vector<1x1x32xf32>
    %427 = vector.shape_cast %426 : vector<1x1x32xf32> to vector<1x32xf32>
    %428 = vector.broadcast %427 : vector<1x32xf32> to vector<32x32xf32>
    %429 = arith.addf %425, %428 : vector<32x32xf32>
    %c1_220 = arith.constant 1 : index
    %c0_221 = arith.constant 0 : index
    %c0_222 = arith.constant 0 : index
    %430 = vector.load %arg13[%c1_220, %c0_221, %c0_222] : memref<2x32x32xbf16, #tpu.memory_space<vmem>>, vector<1x32x32xbf16>
    %431 = vector.shape_cast %430 : vector<1x32x32xbf16> to vector<32x32xbf16>
    %432 = arith.truncf %411 : vector<32x32xf32> to vector<32x32xbf16>
    %cst_223 = arith.constant dense<0.000000e+00> : vector<32x32xf32>
    %433 = tpu.matmul %432, %431, %cst_223 {dimension_numbers = #tpu.dot_dimension_numbers<[1], [0], [0], [1], [0, 0, 1, 1], [], []>} : vector<32x32xbf16>, vector<32x32xbf16>, vector<32x32xf32> -> vector<32x32xf32>
    %c1_224 = arith.constant 1 : index
    %c0_225 = arith.constant 0 : index
    %c0_226 = arith.constant 0 : index
    %434 = vector.load %arg14[%c1_224, %c0_225, %c0_226] : memref<2x1x32xf32, #tpu.memory_space<vmem>>, vector<1x1x32xf32>
    %435 = vector.shape_cast %434 : vector<1x1x32xf32> to vector<1x32xf32>
    %436 = vector.broadcast %435 : vector<1x32xf32> to vector<32x32xf32>
    %437 = arith.addf %433, %436 : vector<32x32xf32>
    %438 = vector.shape_cast %429 : vector<32x32xf32> to vector<4x8x32xf32>
    %439 = vector.shape_cast %437 : vector<32x32xf32> to vector<4x8x32xf32>
    %440 = vector.extract_strided_slice %421 {offsets = [0, 0], sizes = [8, 32], strides = [1, 1]} : vector<32x32xf32> to vector<8x32xf32>
    %441 = vector.shape_cast %440 : vector<8x32xf32> to vector<1x8x32xf32>
    %442 = vector.broadcast %441 : vector<1x8x32xf32> to vector<4x8x32xf32>
    %443 = arith.mulf %438, %442 : vector<4x8x32xf32>
    %444 = vector.shape_cast %443 : vector<4x8x32xf32> to vector<32x32xf32>
    %445 = arith.truncf %444 : vector<32x32xf32> to vector<32x32xbf16>
    %cst_227 = arith.constant dense<0.000000e+00> : vector<32x4xf32>
    %446 = tpu.matmul %445, %197, %cst_227 {dimension_numbers = #tpu.dot_dimension_numbers<[1], [0], [0], [1], [0, 0, 1, 1], [], []>} : vector<32x32xbf16>, vector<32x4xbf16>, vector<32x4xf32> -> vector<32x4xf32>
    %447 = vector.shape_cast %446 : vector<32x4xf32> to vector<4x8x4xf32>
    %cst_228 = arith.constant dense<0xFF800000> : vector<8x4xf32>
    %448 = vector.multi_reduction <maximumf>, %447, %cst_228 [0] : vector<4x8x4xf32> to vector<8x4xf32>
    %449 = vector.shape_cast %448 : vector<8x4xf32> to vector<1x8x4xf32>
    %450 = vector.broadcast %449 : vector<1x8x4xf32> to vector<4x8x4xf32>
    %451 = arith.subf %447, %450 : vector<4x8x4xf32>
    %452 = math.exp %451 : vector<4x8x4xf32>
    %cst_229 = arith.constant dense<0.000000e+00> : vector<8x4xf32>
    %453 = vector.multi_reduction <add>, %452, %cst_229 [0] : vector<4x8x4xf32> to vector<8x4xf32>
    %454 = tpu.reciprocal %453 {approx = true} : vector<8x4xf32> -> vector<8x4xf32>
    %455 = vector.shape_cast %454 : vector<8x4xf32> to vector<1x8x4xf32>
    %456 = vector.broadcast %455 : vector<1x8x4xf32> to vector<4x8x4xf32>
    %457 = arith.mulf %452, %456 : vector<4x8x4xf32>
    %458 = vector.shape_cast %457 : vector<4x8x4xf32> to vector<32x4xf32>
    %459 = arith.truncf %458 : vector<32x4xf32> to vector<32x4xbf16>
    %cst_230 = arith.constant dense<0.000000e+00> : vector<32x32xf32>
    %460 = tpu.matmul %459, %198, %cst_230 {dimension_numbers = #tpu.dot_dimension_numbers<[1], [0], [0], [1], [0, 0, 1, 1], [], []>} : vector<32x4xbf16>, vector<4x32xbf16>, vector<32x32xf32> -> vector<32x32xf32>
    %461 = vector.shape_cast %460 : vector<32x32xf32> to vector<4x8x32xf32>
    %462 = arith.mulf %461, %439 : vector<4x8x32xf32>
    %cst_231 = arith.constant dense<0.000000e+00> : vector<8x32xf32>
    %463 = vector.multi_reduction <add>, %462, %cst_231 [0] : vector<4x8x32xf32> to vector<8x32xf32>
    %c0_232 = arith.constant 0 : index
    %c0_233 = arith.constant 0 : index
    %464 = vector.load %arg31[%c0_232, %c0_233] : memref<32x32xf32, #tpu.memory_space<vmem>>, vector<8x32xf32>
    tpu.vector_store %arg31[%c0_232, %c0_233], %463 {strides = array<i32>} : memref<32x32xf32, #tpu.memory_space<vmem>>, vector<8x32xf32>,
    %465 = vector.extract_strided_slice %421 {offsets = [8, 0], sizes = [8, 32], strides = [1, 1]} : vector<32x32xf32> to vector<8x32xf32>
    %466 = vector.shape_cast %465 : vector<8x32xf32> to vector<1x8x32xf32>
    %467 = vector.broadcast %466 : vector<1x8x32xf32> to vector<4x8x32xf32>
    %468 = arith.mulf %438, %467 : vector<4x8x32xf32>
    %469 = vector.shape_cast %468 : vector<4x8x32xf32> to vector<32x32xf32>
    %470 = arith.truncf %469 : vector<32x32xf32> to vector<32x32xbf16>
    %cst_234 = arith.constant dense<0.000000e+00> : vector<32x4xf32>
    %471 = tpu.matmul %470, %197, %cst_234 {dimension_numbers = #tpu.dot_dimension_numbers<[1], [0], [0], [1], [0, 0, 1, 1], [], []>} : vector<32x32xbf16>, vector<32x4xbf16>, vector<32x4xf32> -> vector<32x4xf32>
    %472 = vector.shape_cast %471 : vector<32x4xf32> to vector<4x8x4xf32>
    %cst_235 = arith.constant dense<0xFF800000> : vector<8x4xf32>
    %473 = vector.multi_reduction <maximumf>, %472, %cst_235 [0] : vector<4x8x4xf32> to vector<8x4xf32>
    %474 = vector.shape_cast %473 : vector<8x4xf32> to vector<1x8x4xf32>
    %475 = vector.broadcast %474 : vector<1x8x4xf32> to vector<4x8x4xf32>
    %476 = arith.subf %472, %475 : vector<4x8x4xf32>
    %477 = math.exp %476 : vector<4x8x4xf32>
    %cst_236 = arith.constant dense<0.000000e+00> : vector<8x4xf32>
    %478 = vector.multi_reduction <add>, %477, %cst_236 [0] : vector<4x8x4xf32> to vector<8x4xf32>
    %479 = tpu.reciprocal %478 {approx = true} : vector<8x4xf32> -> vector<8x4xf32>
    %480 = vector.shape_cast %479 : vector<8x4xf32> to vector<1x8x4xf32>
    %481 = vector.broadcast %480 : vector<1x8x4xf32> to vector<4x8x4xf32>
    %482 = arith.mulf %477, %481 : vector<4x8x4xf32>
    %483 = vector.shape_cast %482 : vector<4x8x4xf32> to vector<32x4xf32>
    %484 = arith.truncf %483 : vector<32x4xf32> to vector<32x4xbf16>
    %cst_237 = arith.constant dense<0.000000e+00> : vector<32x32xf32>
    %485 = tpu.matmul %484, %198, %cst_237 {dimension_numbers = #tpu.dot_dimension_numbers<[1], [0], [0], [1], [0, 0, 1, 1], [], []>} : vector<32x4xbf16>, vector<4x32xbf16>, vector<32x32xf32> -> vector<32x32xf32>
    %486 = vector.shape_cast %485 : vector<32x32xf32> to vector<4x8x32xf32>
    %487 = arith.mulf %486, %439 : vector<4x8x32xf32>
    %cst_238 = arith.constant dense<0.000000e+00> : vector<8x32xf32>
    %488 = vector.multi_reduction <add>, %487, %cst_238 [0] : vector<4x8x32xf32> to vector<8x32xf32>
    %c8_239 = arith.constant 8 : index
    %c0_240 = arith.constant 0 : index
    %489 = vector.load %arg31[%c8_239, %c0_240] : memref<32x32xf32, #tpu.memory_space<vmem>>, vector<8x32xf32>
    tpu.vector_store %arg31[%c8_239, %c0_240], %488 {strides = array<i32>} : memref<32x32xf32, #tpu.memory_space<vmem>>, vector<8x32xf32>,
    %490 = vector.extract_strided_slice %421 {offsets = [16, 0], sizes = [8, 32], strides = [1, 1]} : vector<32x32xf32> to vector<8x32xf32>
    %491 = vector.shape_cast %490 : vector<8x32xf32> to vector<1x8x32xf32>
    %492 = vector.broadcast %491 : vector<1x8x32xf32> to vector<4x8x32xf32>
    %493 = arith.mulf %438, %492 : vector<4x8x32xf32>
    %494 = vector.shape_cast %493 : vector<4x8x32xf32> to vector<32x32xf32>
    %495 = arith.truncf %494 : vector<32x32xf32> to vector<32x32xbf16>
    %cst_241 = arith.constant dense<0.000000e+00> : vector<32x4xf32>
    %496 = tpu.matmul %495, %197, %cst_241 {dimension_numbers = #tpu.dot_dimension_numbers<[1], [0], [0], [1], [0, 0, 1, 1], [], []>} : vector<32x32xbf16>, vector<32x4xbf16>, vector<32x4xf32> -> vector<32x4xf32>
    %497 = vector.shape_cast %496 : vector<32x4xf32> to vector<4x8x4xf32>
    %cst_242 = arith.constant dense<0xFF800000> : vector<8x4xf32>
    %498 = vector.multi_reduction <maximumf>, %497, %cst_242 [0] : vector<4x8x4xf32> to vector<8x4xf32>
    %499 = vector.shape_cast %498 : vector<8x4xf32> to vector<1x8x4xf32>
    %500 = vector.broadcast %499 : vector<1x8x4xf32> to vector<4x8x4xf32>
    %501 = arith.subf %497, %500 : vector<4x8x4xf32>
    %502 = math.exp %501 : vector<4x8x4xf32>
    %cst_243 = arith.constant dense<0.000000e+00> : vector<8x4xf32>
    %503 = vector.multi_reduction <add>, %502, %cst_243 [0] : vector<4x8x4xf32> to vector<8x4xf32>
    %504 = tpu.reciprocal %503 {approx = true} : vector<8x4xf32> -> vector<8x4xf32>
    %505 = vector.shape_cast %504 : vector<8x4xf32> to vector<1x8x4xf32>
    %506 = vector.broadcast %505 : vector<1x8x4xf32> to vector<4x8x4xf32>
    %507 = arith.mulf %502, %506 : vector<4x8x4xf32>
    %508 = vector.shape_cast %507 : vector<4x8x4xf32> to vector<32x4xf32>
    %509 = arith.truncf %508 : vector<32x4xf32> to vector<32x4xbf16>
    %cst_244 = arith.constant dense<0.000000e+00> : vector<32x32xf32>
    %510 = tpu.matmul %509, %198, %cst_244 {dimension_numbers = #tpu.dot_dimension_numbers<[1], [0], [0], [1], [0, 0, 1, 1], [], []>} : vector<32x4xbf16>, vector<4x32xbf16>, vector<32x32xf32> -> vector<32x32xf32>
    %511 = vector.shape_cast %510 : vector<32x32xf32> to vector<4x8x32xf32>
    %512 = arith.mulf %511, %439 : vector<4x8x32xf32>
    %cst_245 = arith.constant dense<0.000000e+00> : vector<8x32xf32>
    %513 = vector.multi_reduction <add>, %512, %cst_245 [0] : vector<4x8x32xf32> to vector<8x32xf32>
    %c16_246 = arith.constant 16 : index
    %c0_247 = arith.constant 0 : index
    %514 = vector.load %arg31[%c16_246, %c0_247] : memref<32x32xf32, #tpu.memory_space<vmem>>, vector<8x32xf32>
    tpu.vector_store %arg31[%c16_246, %c0_247], %513 {strides = array<i32>} : memref<32x32xf32, #tpu.memory_space<vmem>>, vector<8x32xf32>,
    %515 = vector.extract_strided_slice %421 {offsets = [24, 0], sizes = [8, 32], strides = [1, 1]} : vector<32x32xf32> to vector<8x32xf32>
    %516 = vector.shape_cast %515 : vector<8x32xf32> to vector<1x8x32xf32>
    %517 = vector.broadcast %516 : vector<1x8x32xf32> to vector<4x8x32xf32>
    %518 = arith.mulf %438, %517 : vector<4x8x32xf32>
    %519 = vector.shape_cast %518 : vector<4x8x32xf32> to vector<32x32xf32>
    %520 = arith.truncf %519 : vector<32x32xf32> to vector<32x32xbf16>
    %cst_248 = arith.constant dense<0.000000e+00> : vector<32x4xf32>
    %521 = tpu.matmul %520, %197, %cst_248 {dimension_numbers = #tpu.dot_dimension_numbers<[1], [0], [0], [1], [0, 0, 1, 1], [], []>} : vector<32x32xbf16>, vector<32x4xbf16>, vector<32x4xf32> -> vector<32x4xf32>
    %522 = vector.shape_cast %521 : vector<32x4xf32> to vector<4x8x4xf32>
    %cst_249 = arith.constant dense<0xFF800000> : vector<8x4xf32>
    %523 = vector.multi_reduction <maximumf>, %522, %cst_249 [0] : vector<4x8x4xf32> to vector<8x4xf32>
    %524 = vector.shape_cast %523 : vector<8x4xf32> to vector<1x8x4xf32>
    %525 = vector.broadcast %524 : vector<1x8x4xf32> to vector<4x8x4xf32>
    %526 = arith.subf %522, %525 : vector<4x8x4xf32>
    %527 = math.exp %526 : vector<4x8x4xf32>
    %cst_250 = arith.constant dense<0.000000e+00> : vector<8x4xf32>
    %528 = vector.multi_reduction <add>, %527, %cst_250 [0] : vector<4x8x4xf32> to vector<8x4xf32>
    %529 = tpu.reciprocal %528 {approx = true} : vector<8x4xf32> -> vector<8x4xf32>
    %530 = vector.shape_cast %529 : vector<8x4xf32> to vector<1x8x4xf32>
    %531 = vector.broadcast %530 : vector<1x8x4xf32> to vector<4x8x4xf32>
    %532 = arith.mulf %527, %531 : vector<4x8x4xf32>
    %533 = vector.shape_cast %532 : vector<4x8x4xf32> to vector<32x4xf32>
    %534 = arith.truncf %533 : vector<32x4xf32> to vector<32x4xbf16>
    %cst_251 = arith.constant dense<0.000000e+00> : vector<32x32xf32>
    %535 = tpu.matmul %534, %198, %cst_251 {dimension_numbers = #tpu.dot_dimension_numbers<[1], [0], [0], [1], [0, 0, 1, 1], [], []>} : vector<32x4xbf16>, vector<4x32xbf16>, vector<32x32xf32> -> vector<32x32xf32>
    %536 = vector.shape_cast %535 : vector<32x32xf32> to vector<4x8x32xf32>
    %537 = arith.mulf %536, %439 : vector<4x8x32xf32>
    %cst_252 = arith.constant dense<0.000000e+00> : vector<8x32xf32>
    %538 = vector.multi_reduction <add>, %537, %cst_252 [0] : vector<4x8x32xf32> to vector<8x32xf32>
    %c24_253 = arith.constant 24 : index
    %c0_254 = arith.constant 0 : index
    %539 = vector.load %arg31[%c24_253, %c0_254] : memref<32x32xf32, #tpu.memory_space<vmem>>, vector<8x32xf32>
    tpu.vector_store %arg31[%c24_253, %c0_254], %538 {strides = array<i32>} : memref<32x32xf32, #tpu.memory_space<vmem>>, vector<8x32xf32>,
    %c0_255 = arith.constant 0 : index
    %c0_256 = arith.constant 0 : index
    %540 = vector.load %arg31[%c0_255, %c0_256] : memref<32x32xf32, #tpu.memory_space<vmem>>, vector<32x32xf32>
    %c1_257 = arith.constant 1 : index
    %c0_258 = arith.constant 0 : index
    %c0_259 = arith.constant 0 : index
    %541 = vector.load %arg17[%c1_257, %c0_258, %c0_259] : memref<2x32x32xbf16, #tpu.memory_space<vmem>>, vector<1x32x32xbf16>
    %542 = vector.shape_cast %541 : vector<1x32x32xbf16> to vector<32x32xbf16>
    %543 = arith.truncf %540 : vector<32x32xf32> to vector<32x32xbf16>
    %cst_260 = arith.constant dense<0.000000e+00> : vector<32x32xf32>
    %544 = tpu.matmul %543, %542, %cst_260 {dimension_numbers = #tpu.dot_dimension_numbers<[1], [0], [0], [1], [0, 0, 1, 1], [], []>} : vector<32x32xbf16>, vector<32x32xbf16>, vector<32x32xf32> -> vector<32x32xf32>
    %c1_261 = arith.constant 1 : index
    %c0_262 = arith.constant 0 : index
    %c0_263 = arith.constant 0 : index
    %545 = vector.load %arg18[%c1_261, %c0_262, %c0_263] : memref<2x1x32xf32, #tpu.memory_space<vmem>>, vector<1x1x32xf32>
    %546 = vector.shape_cast %545 : vector<1x1x32xf32> to vector<1x32xf32>
    %547 = vector.broadcast %546 : vector<1x32xf32> to vector<32x32xf32>
    %548 = arith.addf %544, %547 : vector<32x32xf32>
    %549 = arith.mulf %548, %548 : vector<32x32xf32>
    %cst_264 = arith.constant dense<0.000000e+00> : vector<32xf32>
    %550 = vector.multi_reduction <add>, %549, %cst_264 [1] : vector<32x32xf32> to vector<32xf32>
    %551 = vector.shape_cast %550 : vector<32xf32> to vector<32x1xf32>
    %cst_265 = arith.constant 1.000000e-24 : f32
    %552 = vector.broadcast %cst_265 : f32 to vector<32x1xf32>
    %553 = arith.maximumf %551, %552 : vector<32x1xf32>
    %554 = math.rsqrt %553 : vector<32x1xf32>
    %555 = vector.broadcast %554 : vector<32x1xf32> to vector<32x32xf32>
    %556 = arith.mulf %548, %555 : vector<32x32xf32>
    %c1_266 = arith.constant 1 : index
    %557 = memref.load %arg23[%c1_266] : memref<2xf32, #tpu.memory_space<smem>>
    %558 = arith.subf %556, %411 : vector<32x32xf32>
    %559 = vector.broadcast %557 : f32 to vector<32x32xf32>
    %560 = arith.mulf %559, %558 : vector<32x32xf32>
    %561 = arith.addf %411, %560 : vector<32x32xf32>
    %562 = arith.mulf %561, %561 : vector<32x32xf32>
    %cst_267 = arith.constant dense<0.000000e+00> : vector<32xf32>
    %563 = vector.multi_reduction <add>, %562, %cst_267 [1] : vector<32x32xf32> to vector<32xf32>
    %564 = vector.shape_cast %563 : vector<32xf32> to vector<32x1xf32>
    %cst_268 = arith.constant 1.000000e-24 : f32
    %565 = vector.broadcast %cst_268 : f32 to vector<32x1xf32>
    %566 = arith.maximumf %564, %565 : vector<32x1xf32>
    %567 = math.rsqrt %566 : vector<32x1xf32>
    %568 = vector.broadcast %567 : vector<32x1xf32> to vector<32x32xf32>
    %569 = arith.mulf %561, %568 : vector<32x32xf32>
    %c1_269 = arith.constant 1 : index
    %c0_270 = arith.constant 0 : index
    %c0_271 = arith.constant 0 : index
    %570 = vector.load %arg19[%c1_269, %c0_270, %c0_271] : memref<2x32x64xbf16, #tpu.memory_space<vmem>>, vector<1x32x64xbf16>
    %571 = vector.shape_cast %570 : vector<1x32x64xbf16> to vector<32x64xbf16>
    %572 = arith.truncf %569 : vector<32x32xf32> to vector<32x32xbf16>
    %cst_272 = arith.constant dense<0.000000e+00> : vector<32x64xf32>
    %573 = tpu.matmul %572, %571, %cst_272 {dimension_numbers = #tpu.dot_dimension_numbers<[1], [0], [0], [1], [0, 0, 1, 1], [], []>} : vector<32x32xbf16>, vector<32x64xbf16>, vector<32x64xf32> -> vector<32x64xf32>
    %c1_273 = arith.constant 1 : index
    %c0_274 = arith.constant 0 : index
    %c0_275 = arith.constant 0 : index
    %574 = vector.load %arg20[%c1_273, %c0_274, %c0_275] : memref<2x1x64xf32, #tpu.memory_space<vmem>>, vector<1x1x64xf32>
    %575 = vector.shape_cast %574 : vector<1x1x64xf32> to vector<1x64xf32>
    %576 = vector.broadcast %575 : vector<1x64xf32> to vector<32x64xf32>
    %577 = arith.addf %573, %576 : vector<32x64xf32>
    %cst_276 = arith.constant 0.000000e+00 : f32
    %578 = vector.broadcast %cst_276 : f32 to vector<32x64xf32>
    %579 = arith.maximumf %577, %578 : vector<32x64xf32>
    %c1_277 = arith.constant 1 : index
    %c0_278 = arith.constant 0 : index
    %c0_279 = arith.constant 0 : index
    %580 = vector.load %arg21[%c1_277, %c0_278, %c0_279] : memref<2x64x32xbf16, #tpu.memory_space<vmem>>, vector<1x64x32xbf16>
    %581 = vector.shape_cast %580 : vector<1x64x32xbf16> to vector<64x32xbf16>
    %582 = arith.truncf %579 : vector<32x64xf32> to vector<32x64xbf16>
    %cst_280 = arith.constant dense<0.000000e+00> : vector<32x32xf32>
    %583 = tpu.matmul %582, %581, %cst_280 {dimension_numbers = #tpu.dot_dimension_numbers<[1], [0], [0], [1], [0, 0, 1, 1], [], []>} : vector<32x64xbf16>, vector<64x32xbf16>, vector<32x32xf32> -> vector<32x32xf32>
    %c1_281 = arith.constant 1 : index
    %c0_282 = arith.constant 0 : index
    %c0_283 = arith.constant 0 : index
    %584 = vector.load %arg22[%c1_281, %c0_282, %c0_283] : memref<2x1x32xf32, #tpu.memory_space<vmem>>, vector<1x1x32xf32>
    %585 = vector.shape_cast %584 : vector<1x1x32xf32> to vector<1x32xf32>
    %586 = vector.broadcast %585 : vector<1x32xf32> to vector<32x32xf32>
    %587 = arith.addf %583, %586 : vector<32x32xf32>
    %588 = arith.mulf %587, %587 : vector<32x32xf32>
    %cst_284 = arith.constant dense<0.000000e+00> : vector<32xf32>
    %589 = vector.multi_reduction <add>, %588, %cst_284 [1] : vector<32x32xf32> to vector<32xf32>
    %590 = vector.shape_cast %589 : vector<32xf32> to vector<32x1xf32>
    %cst_285 = arith.constant 1.000000e-24 : f32
    %591 = vector.broadcast %cst_285 : f32 to vector<32x1xf32>
    %592 = arith.maximumf %590, %591 : vector<32x1xf32>
    %593 = math.rsqrt %592 : vector<32x1xf32>
    %594 = vector.broadcast %593 : vector<32x1xf32> to vector<32x32xf32>
    %595 = arith.mulf %587, %594 : vector<32x32xf32>
    %c1_286 = arith.constant 1 : index
    %596 = memref.load %arg24[%c1_286] : memref<2xf32, #tpu.memory_space<smem>>
    %597 = arith.subf %595, %569 : vector<32x32xf32>
    %598 = vector.broadcast %596 : f32 to vector<32x32xf32>
    %599 = arith.mulf %598, %597 : vector<32x32xf32>
    %600 = arith.addf %569, %599 : vector<32x32xf32>
    %601 = arith.mulf %600, %600 : vector<32x32xf32>
    %cst_287 = arith.constant dense<0.000000e+00> : vector<32xf32>
    %602 = vector.multi_reduction <add>, %601, %cst_287 [1] : vector<32x32xf32> to vector<32xf32>
    %603 = vector.shape_cast %602 : vector<32xf32> to vector<32x1xf32>
    %cst_288 = arith.constant 1.000000e-24 : f32
    %604 = vector.broadcast %cst_288 : f32 to vector<32x1xf32>
    %605 = arith.maximumf %603, %604 : vector<32x1xf32>
    %606 = math.rsqrt %605 : vector<32x1xf32>
    %607 = vector.broadcast %606 : vector<32x1xf32> to vector<32x32xf32>
    %608 = arith.mulf %600, %607 : vector<32x32xf32>
    %609 = vector.shape_cast %608 : vector<32x32xf32> to vector<4x8x32xf32>
    %cst_289 = arith.constant dense<0.000000e+00> : vector<8x32xf32>
    %610 = vector.multi_reduction <add>, %609, %cst_289 [0] : vector<4x8x32xf32> to vector<8x32xf32>
    %cst_290 = arith.constant 2.500000e-01 : f32
    %611 = vector.broadcast %cst_290 : f32 to vector<8x32xf32>
    %612 = arith.mulf %610, %611 : vector<8x32xf32>
    %c0_291 = arith.constant 0 : index
    %c0_292 = arith.constant 0 : index
    %613 = vector.load %arg27[%c0_291, %c0_292] : memref<32x32xbf16, #tpu.memory_space<vmem>>, vector<32x32xbf16>
    %614 = arith.truncf %612 : vector<8x32xf32> to vector<8x32xbf16>
    %cst_293 = arith.constant dense<0.000000e+00> : vector<8x32xf32>
    %615 = tpu.matmul %614, %613, %cst_293 {dimension_numbers = #tpu.dot_dimension_numbers<[1], [0], [0], [1], [0, 0, 1, 1], [], []>} : vector<8x32xbf16>, vector<32x32xbf16>, vector<8x32xf32> -> vector<8x32xf32>
    %c0_294 = arith.constant 0 : index
    %c0_295 = arith.constant 0 : index
    %616 = vector.load %arg28[%c0_294, %c0_295] : memref<1x32xf32, #tpu.memory_space<vmem>>, vector<1x32xf32>
    %617 = vector.broadcast %616 : vector<1x32xf32> to vector<8x32xf32>
    %618 = arith.addf %615, %617 : vector<8x32xf32>
    %cst_296 = arith.constant 0.000000e+00 : f32
    %619 = vector.broadcast %cst_296 : f32 to vector<8x32xf32>
    %620 = arith.maximumf %618, %619 : vector<8x32xf32>
    %c0_297 = arith.constant 0 : index
    %c0_298 = arith.constant 0 : index
    %621 = vector.load %arg25[%c0_297, %c0_298] : memref<32x128xbf16, #tpu.memory_space<vmem>>, vector<32x128xbf16>
    %622 = arith.truncf %612 : vector<8x32xf32> to vector<8x32xbf16>
    %cst_299 = arith.constant dense<0.000000e+00> : vector<8x128xf32>
    %623 = tpu.matmul %622, %621, %cst_299 {dimension_numbers = #tpu.dot_dimension_numbers<[1], [0], [0], [1], [0, 0, 1, 1], [], []>} : vector<8x32xbf16>, vector<32x128xbf16>, vector<8x128xf32> -> vector<8x128xf32>
    %c0_300 = arith.constant 0 : index
    %c0_301 = arith.constant 0 : index
    %624 = vector.load %arg29[%c0_300, %c0_301] : memref<32x128xbf16, #tpu.memory_space<vmem>>, vector<32x128xbf16>
    %625 = arith.truncf %620 : vector<8x32xf32> to vector<8x32xbf16>
    %cst_302 = arith.constant dense<0.000000e+00> : vector<8x128xf32>
    %626 = tpu.matmul %625, %624, %cst_302 {dimension_numbers = #tpu.dot_dimension_numbers<[1], [0], [0], [1], [0, 0, 1, 1], [], []>} : vector<8x32xbf16>, vector<32x128xbf16>, vector<8x128xf32> -> vector<8x128xf32>
    %627 = arith.addf %623, %626 : vector<8x128xf32>
    %c0_303 = arith.constant 0 : index
    %c0_304 = arith.constant 0 : index
    %628 = vector.load %arg26[%c0_303, %c0_304] : memref<1x128xf32, #tpu.memory_space<vmem>>, vector<1x128xf32>
    %629 = vector.broadcast %628 : vector<1x128xf32> to vector<8x128xf32>
    %630 = arith.addf %627, %629 : vector<8x128xf32>
    %c0_305 = arith.constant 0 : index
    %c0_306 = arith.constant 0 : index
    %631 = vector.load %arg30[%c0_305, %c0_306] : memref<8x128xf32, #tpu.memory_space<vmem>>, vector<8x128xf32>
    tpu.vector_store %arg30[%c0_305, %c0_306], %630 {strides = array<i32>} : memref<8x128xf32, #tpu.memory_space<vmem>>, vector<8x128xf32>,
    return
  }
  func.func @transform_0(%arg0: i32) -> (i32, i32) {
    %c0_i32 = arith.constant 0 : i32
    %c0_i32_0 = arith.constant 0 : i32
    return %arg0, %c0_i32 : i32, i32
  }
  func.func @transform_1(%arg0: i32) -> (i32, i32) {
    %c0_i32 = arith.constant 0 : i32
    %c0_i32_0 = arith.constant 0 : i32
    %c0_i32_1 = arith.constant 0 : i32
    return %c0_i32, %c0_i32_0 : i32, i32
  }
  func.func @transform_2(%arg0: i32) -> (i32, i32) {
    %c0_i32 = arith.constant 0 : i32
    %c0_i32_0 = arith.constant 0 : i32
    %c0_i32_1 = arith.constant 0 : i32
    return %c0_i32, %c0_i32_0 : i32, i32
  }
  func.func @transform_3(%arg0: i32) -> (i32, i32, i32) {
    %c0_i32 = arith.constant 0 : i32
    %c0_i32_0 = arith.constant 0 : i32
    %c0_i32_1 = arith.constant 0 : i32
    %c0_i32_2 = arith.constant 0 : i32
    return %c0_i32, %c0_i32_0, %c0_i32_1 : i32, i32, i32
  }
  func.func @transform_4(%arg0: i32) -> (i32, i32, i32) {
    %c0_i32 = arith.constant 0 : i32
    %c0_i32_0 = arith.constant 0 : i32
    %c0_i32_1 = arith.constant 0 : i32
    %c0_i32_2 = arith.constant 0 : i32
    return %c0_i32, %c0_i32_0, %c0_i32_1 : i32, i32, i32
  }
  func.func @transform_5(%arg0: i32) -> (i32, i32, i32) {
    %c0_i32 = arith.constant 0 : i32
    %c0_i32_0 = arith.constant 0 : i32
    %c0_i32_1 = arith.constant 0 : i32
    %c0_i32_2 = arith.constant 0 : i32
    return %c0_i32, %c0_i32_0, %c0_i32_1 : i32, i32, i32
  }
  func.func @transform_6(%arg0: i32) -> (i32, i32, i32) {
    %c0_i32 = arith.constant 0 : i32
    %c0_i32_0 = arith.constant 0 : i32
    %c0_i32_1 = arith.constant 0 : i32
    %c0_i32_2 = arith.constant 0 : i32
    return %c0_i32, %c0_i32_0, %c0_i32_1 : i32, i32, i32
  }
  func.func @transform_7(%arg0: i32) -> (i32, i32, i32) {
    %c0_i32 = arith.constant 0 : i32
    %c0_i32_0 = arith.constant 0 : i32
    %c0_i32_1 = arith.constant 0 : i32
    %c0_i32_2 = arith.constant 0 : i32
    return %c0_i32, %c0_i32_0, %c0_i32_1 : i32, i32, i32
  }
  func.func @transform_8(%arg0: i32) -> (i32, i32, i32) {
    %c0_i32 = arith.constant 0 : i32
    %c0_i32_0 = arith.constant 0 : i32
    %c0_i32_1 = arith.constant 0 : i32
    %c0_i32_2 = arith.constant 0 : i32
    return %c0_i32, %c0_i32_0, %c0_i32_1 : i32, i32, i32
  }
  func.func @transform_9(%arg0: i32) -> (i32, i32, i32) {
    %c0_i32 = arith.constant 0 : i32
    %c0_i32_0 = arith.constant 0 : i32
    %c0_i32_1 = arith.constant 0 : i32
    %c0_i32_2 = arith.constant 0 : i32
    return %c0_i32, %c0_i32_0, %c0_i32_1 : i32, i32, i32
  }
  func.func @transform_10(%arg0: i32) -> (i32, i32, i32) {
    %c0_i32 = arith.constant 0 : i32
    %c0_i32_0 = arith.constant 0 : i32
    %c0_i32_1 = arith.constant 0 : i32
    %c0_i32_2 = arith.constant 0 : i32
    return %c0_i32, %c0_i32_0, %c0_i32_1 : i32, i32, i32
  }
  func.func @transform_11(%arg0: i32) -> (i32, i32, i32) {
    %c0_i32 = arith.constant 0 : i32
    %c0_i32_0 = arith.constant 0 : i32
    %c0_i32_1 = arith.constant 0 : i32
    %c0_i32_2 = arith.constant 0 : i32
    return %c0_i32, %c0_i32_0, %c0_i32_1 : i32, i32, i32
  }
  func.func @transform_12(%arg0: i32) -> (i32, i32, i32) {
    %c0_i32 = arith.constant 0 : i32
    %c0_i32_0 = arith.constant 0 : i32
    %c0_i32_1 = arith.constant 0 : i32
    %c0_i32_2 = arith.constant 0 : i32
    return %c0_i32, %c0_i32_0, %c0_i32_1 : i32, i32, i32
  }
  func.func @transform_13(%arg0: i32) -> (i32, i32, i32) {
    %c0_i32 = arith.constant 0 : i32
    %c0_i32_0 = arith.constant 0 : i32
    %c0_i32_1 = arith.constant 0 : i32
    %c0_i32_2 = arith.constant 0 : i32
    return %c0_i32, %c0_i32_0, %c0_i32_1 : i32, i32, i32
  }
  func.func @transform_14(%arg0: i32) -> (i32, i32) {
    %c0_i32 = arith.constant 0 : i32
    %c0_i32_0 = arith.constant 0 : i32
    %c0_i32_1 = arith.constant 0 : i32
    return %c0_i32, %c0_i32_0 : i32, i32
  }
  func.func @transform_15(%arg0: i32) -> (i32, i32) {
    %c0_i32 = arith.constant 0 : i32
    %c0_i32_0 = arith.constant 0 : i32
    %c0_i32_1 = arith.constant 0 : i32
    return %c0_i32, %c0_i32_0 : i32, i32
  }
  func.func @transform_16(%arg0: i32) -> (i32, i32, i32) {
    %c0_i32 = arith.constant 0 : i32
    %c0_i32_0 = arith.constant 0 : i32
    %c0_i32_1 = arith.constant 0 : i32
    %c0_i32_2 = arith.constant 0 : i32
    return %c0_i32, %c0_i32_0, %c0_i32_1 : i32, i32, i32
  }
  func.func @transform_17(%arg0: i32) -> (i32, i32, i32) {
    %c0_i32 = arith.constant 0 : i32
    %c0_i32_0 = arith.constant 0 : i32
    %c0_i32_1 = arith.constant 0 : i32
    %c0_i32_2 = arith.constant 0 : i32
    return %c0_i32, %c0_i32_0, %c0_i32_1 : i32, i32, i32
  }
  func.func @transform_18(%arg0: i32) -> (i32, i32, i32) {
    %c0_i32 = arith.constant 0 : i32
    %c0_i32_0 = arith.constant 0 : i32
    %c0_i32_1 = arith.constant 0 : i32
    %c0_i32_2 = arith.constant 0 : i32
    return %c0_i32, %c0_i32_0, %c0_i32_1 : i32, i32, i32
  }
  func.func @transform_19(%arg0: i32) -> (i32, i32, i32) {
    %c0_i32 = arith.constant 0 : i32
    %c0_i32_0 = arith.constant 0 : i32
    %c0_i32_1 = arith.constant 0 : i32
    %c0_i32_2 = arith.constant 0 : i32
    return %c0_i32, %c0_i32_0, %c0_i32_1 : i32, i32, i32
  }
  func.func @transform_20(%arg0: i32) -> (i32, i32, i32) {
    %c0_i32 = arith.constant 0 : i32
    %c0_i32_0 = arith.constant 0 : i32
    %c0_i32_1 = arith.constant 0 : i32
    %c0_i32_2 = arith.constant 0 : i32
    return %c0_i32, %c0_i32_0, %c0_i32_1 : i32, i32, i32
  }
  func.func @transform_21(%arg0: i32) -> (i32, i32, i32) {
    %c0_i32 = arith.constant 0 : i32
    %c0_i32_0 = arith.constant 0 : i32
    %c0_i32_1 = arith.constant 0 : i32
    %c0_i32_2 = arith.constant 0 : i32
    return %c0_i32, %c0_i32_0, %c0_i32_1 : i32, i32, i32
  }
  func.func @transform_22(%arg0: i32) -> i32 {
    %c0_i32 = arith.constant 0 : i32
    %c0_i32_0 = arith.constant 0 : i32
    return %c0_i32 : i32
  }
  func.func @transform_23(%arg0: i32) -> i32 {
    %c0_i32 = arith.constant 0 : i32
    %c0_i32_0 = arith.constant 0 : i32
    return %c0_i32 : i32
  }
  func.func @transform_24(%arg0: i32) -> (i32, i32) {
    %c0_i32 = arith.constant 0 : i32
    %c0_i32_0 = arith.constant 0 : i32
    %c0_i32_1 = arith.constant 0 : i32
    return %c0_i32, %c0_i32_0 : i32, i32
  }
  func.func @transform_25(%arg0: i32) -> (i32, i32) {
    %c0_i32 = arith.constant 0 : i32
    %c0_i32_0 = arith.constant 0 : i32
    %c0_i32_1 = arith.constant 0 : i32
    return %c0_i32, %c0_i32_0 : i32, i32
  }
  func.func @transform_26(%arg0: i32) -> (i32, i32) {
    %c0_i32 = arith.constant 0 : i32
    %c0_i32_0 = arith.constant 0 : i32
    %c0_i32_1 = arith.constant 0 : i32
    return %c0_i32, %c0_i32_0 : i32, i32
  }
  func.func @transform_27(%arg0: i32) -> (i32, i32) {
    %c0_i32 = arith.constant 0 : i32
    %c0_i32_0 = arith.constant 0 : i32
    %c0_i32_1 = arith.constant 0 : i32
    return %c0_i32, %c0_i32_0 : i32, i32
  }
  func.func @transform_28(%arg0: i32) -> (i32, i32) {
    %c0_i32 = arith.constant 0 : i32
    %c0_i32_0 = arith.constant 0 : i32
    %c0_i32_1 = arith.constant 0 : i32
    return %c0_i32, %c0_i32_0 : i32, i32
  }
  func.func @transform_29(%arg0: i32) -> (i32, i32) {
    %c0_i32 = arith.constant 0 : i32
    %c0_i32_0 = arith.constant 0 : i32
    return %arg0, %c0_i32 : i32, i32
  }
}

module attributes {stable_mosaic.version = 11 : i64} {
  func.func @mtl_kernel(%arg0: i32, %arg1: memref<8x16xf32, #tpu.memory_space<vmem>>, %arg2: memref<16x32xbf16, #tpu.memory_space<vmem>>, %arg3: memref<1x32xf32, #tpu.memory_space<vmem>>, %arg4: memref<4x32x32xbf16, #tpu.memory_space<vmem>>, %arg5: memref<4x1x32xf32, #tpu.memory_space<vmem>>, %arg6: memref<4x1x32xf32, #tpu.memory_space<vmem>>, %arg7: memref<4x1x32xf32, #tpu.memory_space<vmem>>, %arg8: memref<4x1x32xf32, #tpu.memory_space<vmem>>, %arg9: memref<2x32x32xbf16, #tpu.memory_space<vmem>>, %arg10: memref<2x1x32xf32, #tpu.memory_space<vmem>>, %arg11: memref<2x32x32xbf16, #tpu.memory_space<vmem>>, %arg12: memref<2x1x32xf32, #tpu.memory_space<vmem>>, %arg13: memref<2x32x32xbf16, #tpu.memory_space<vmem>>, %arg14: memref<2x1x32xf32, #tpu.memory_space<vmem>>, %arg15: memref<32x4xbf16, #tpu.memory_space<vmem>>, %arg16: memref<4x32xbf16, #tpu.memory_space<vmem>>, %arg17: memref<2x32x32xbf16, #tpu.memory_space<vmem>>, %arg18: memref<2x1x32xf32, #tpu.memory_space<vmem>>, %arg19: memref<2x32x64xbf16, #tpu.memory_space<vmem>>, %arg20: memref<2x1x64xf32, #tpu.memory_space<vmem>>, %arg21: memref<2x64x32xbf16, #tpu.memory_space<vmem>>, %arg22: memref<2x1x32xf32, #tpu.memory_space<vmem>>, %arg23: memref<2xf32, #tpu.memory_space<smem>>, %arg24: memref<2xf32, #tpu.memory_space<smem>>, %arg25: memref<32x128xbf16, #tpu.memory_space<vmem>>, %arg26: memref<1x128xf32, #tpu.memory_space<vmem>>, %arg27: memref<32x32xbf16, #tpu.memory_space<vmem>>, %arg28: memref<1x32xf32, #tpu.memory_space<vmem>>, %arg29: memref<32x128xbf16, #tpu.memory_space<vmem>>, %arg30: memref<8x128xf32, #tpu.memory_space<vmem>>, %arg31: memref<32x32xf32, #tpu.memory_space<vmem>>) attributes {dimension_semantics = [#tpu.dimension_semantics<parallel>], iteration_bounds = array<i64: 1>, scalar_prefetch = 0 : i64, scratch_operands = 1 : i64, tpu.core_type = #tpu.core_type<tc>, window_params = [{transform_indices = @transform_0, window_bounds = array<i64: 8, 16>}, {pipeline_mode = #tpu.pipeline_mode<synchronous>, transform_indices = @transform_1, window_bounds = array<i64: 16, 32>}, {pipeline_mode = #tpu.pipeline_mode<synchronous>, transform_indices = @transform_2, window_bounds = array<i64: 1, 32>}, {pipeline_mode = #tpu.pipeline_mode<synchronous>, transform_indices = @transform_3, window_bounds = array<i64: 4, 32, 32>}, {pipeline_mode = #tpu.pipeline_mode<synchronous>, transform_indices = @transform_4, window_bounds = array<i64: 4, 1, 32>}, {pipeline_mode = #tpu.pipeline_mode<synchronous>, transform_indices = @transform_5, window_bounds = array<i64: 4, 1, 32>}, {pipeline_mode = #tpu.pipeline_mode<synchronous>, transform_indices = @transform_6, window_bounds = array<i64: 4, 1, 32>}, {pipeline_mode = #tpu.pipeline_mode<synchronous>, transform_indices = @transform_7, window_bounds = array<i64: 4, 1, 32>}, {pipeline_mode = #tpu.pipeline_mode<synchronous>, transform_indices = @transform_8, window_bounds = array<i64: 2, 32, 32>}, {pipeline_mode = #tpu.pipeline_mode<synchronous>, transform_indices = @transform_9, window_bounds = array<i64: 2, 1, 32>}, {pipeline_mode = #tpu.pipeline_mode<synchronous>, transform_indices = @transform_10, window_bounds = array<i64: 2, 32, 32>}, {pipeline_mode = #tpu.pipeline_mode<synchronous>, transform_indices = @transform_11, window_bounds = array<i64: 2, 1, 32>}, {pipeline_mode = #tpu.pipeline_mode<synchronous>, transform_indices = @transform_12, window_bounds = array<i64: 2, 32, 32>}, {pipeline_mode = #tpu.pipeline_mode<synchronous>, transform_indices = @transform_13, window_bounds = array<i64: 2, 1, 32>}, {pipeline_mode = #tpu.pipeline_mode<synchronous>, transform_indices = @transform_14, window_bounds = array<i64: 32, 4>}, {pipeline_mode = #tpu.pipeline_mode<synchronous>, transform_indices = @transform_15, window_bounds = array<i64: 4, 32>}, {pipeline_mode = #tpu.pipeline_mode<synchronous>, transform_indices = @transform_16, window_bounds = array<i64: 2, 32, 32>}, {pipeline_mode = #tpu.pipeline_mode<synchronous>, transform_indices = @transform_17, window_bounds = array<i64: 2, 1, 32>}, {pipeline_mode = #tpu.pipeline_mode<synchronous>, transform_indices = @transform_18, window_bounds = array<i64: 2, 32, 64>}, {pipeline_mode = #tpu.pipeline_mode<synchronous>, transform_indices = @transform_19, window_bounds = array<i64: 2, 1, 64>}, {pipeline_mode = #tpu.pipeline_mode<synchronous>, transform_indices = @transform_20, window_bounds = array<i64: 2, 64, 32>}, {pipeline_mode = #tpu.pipeline_mode<synchronous>, transform_indices = @transform_21, window_bounds = array<i64: 2, 1, 32>}, {transform_indices = @transform_22, window_bounds = array<i64: 2>}, {transform_indices = @transform_23, window_bounds = array<i64: 2>}, {pipeline_mode = #tpu.pipeline_mode<synchronous>, transform_indices = @transform_24, window_bounds = array<i64: 32, 128>}, {pipeline_mode = #tpu.pipeline_mode<synchronous>, transform_indices = @transform_25, window_bounds = array<i64: 1, 128>}, {pipeline_mode = #tpu.pipeline_mode<synchronous>, transform_indices = @transform_26, window_bounds = array<i64: 32, 32>}, {pipeline_mode = #tpu.pipeline_mode<synchronous>, transform_indices = @transform_27, window_bounds = array<i64: 1, 32>}, {pipeline_mode = #tpu.pipeline_mode<synchronous>, transform_indices = @transform_28, window_bounds = array<i64: 32, 128>}, {transform_indices = @transform_29, window_bounds = array<i64: 8, 128>}]} {
    %c0 = arith.constant 0 : index
    %c0_0 = arith.constant 0 : index
    %0 = vector.load %arg1[%c0, %c0_0] : memref<8x16xf32, #tpu.memory_space<vmem>>, vector<8x16xf32>
    %c0_1 = arith.constant 0 : index
    %c0_2 = arith.constant 0 : index
    %1 = vector.load %arg2[%c0_1, %c0_2] : memref<16x32xbf16, #tpu.memory_space<vmem>>, vector<16x32xbf16>
    %2 = arith.truncf %0 : vector<8x16xf32> to vector<8x16xbf16>
    %cst = arith.constant dense<0.000000e+00> : vector<8x32xf32>
    %3 = tpu.matmul %2, %1, %cst {dimension_numbers = #tpu.dot_dimension_numbers<[1], [0], [0], [1], [0, 0, 1, 1], [], []>} : vector<8x16xbf16>, vector<16x32xbf16>, vector<8x32xf32> -> vector<8x32xf32>
    %c0_3 = arith.constant 0 : index
    %c0_4 = arith.constant 0 : index
    %4 = vector.load %arg3[%c0_3, %c0_4] : memref<1x32xf32, #tpu.memory_space<vmem>>, vector<1x32xf32>
    %5 = vector.broadcast %4 : vector<1x32xf32> to vector<8x32xf32>
    %6 = arith.addf %3, %5 : vector<8x32xf32>
    %7 = arith.mulf %6, %6 : vector<8x32xf32>
    %cst_5 = arith.constant dense<0.000000e+00> : vector<8xf32>
    %8 = vector.multi_reduction <add>, %7, %cst_5 [1] : vector<8x32xf32> to vector<8xf32>
    %9 = vector.shape_cast %8 : vector<8xf32> to vector<8x1xf32>
    %cst_6 = arith.constant 1.000000e-24 : f32
    %10 = vector.broadcast %cst_6 : f32 to vector<8x1xf32>
    %11 = arith.maximumf %9, %10 : vector<8x1xf32>
    %12 = math.rsqrt %11 : vector<8x1xf32>
    %13 = vector.broadcast %12 : vector<8x1xf32> to vector<8x32xf32>
    %14 = arith.mulf %6, %13 : vector<8x32xf32>
    %cst_7 = arith.constant 0.000000e+00 : f32
    %15 = vector.broadcast %cst_7 : f32 to vector<8x1xf32>
    %cst_8 = arith.constant 0.000000e+00 : f32
    %16 = vector.broadcast %cst_8 : f32 to vector<8x1xf32>
    %c0_9 = arith.constant 0 : index
    %c0_10 = arith.constant 0 : index
    %c0_11 = arith.constant 0 : index
    %17 = vector.load %arg4[%c0_9, %c0_10, %c0_11] : memref<4x32x32xbf16, #tpu.memory_space<vmem>>, vector<1x32x32xbf16>
    %18 = vector.shape_cast %17 : vector<1x32x32xbf16> to vector<32x32xbf16>
    %19 = arith.truncf %14 : vector<8x32xf32> to vector<8x32xbf16>
    %cst_12 = arith.constant dense<0.000000e+00> : vector<8x32xf32>
    %20 = tpu.matmul %19, %18, %cst_12 {dimension_numbers = #tpu.dot_dimension_numbers<[1], [0], [0], [1], [0, 0, 1, 1], [], []>} : vector<8x32xbf16>, vector<32x32xbf16>, vector<8x32xf32> -> vector<8x32xf32>
    %c0_13 = arith.constant 0 : index
    %c0_14 = arith.constant 0 : index
    %c0_15 = arith.constant 0 : index
    %21 = vector.load %arg5[%c0_13, %c0_14, %c0_15] : memref<4x1x32xf32, #tpu.memory_space<vmem>>, vector<1x1x32xf32>
    %22 = vector.shape_cast %21 : vector<1x1x32xf32> to vector<1x32xf32>
    %23 = vector.broadcast %22 : vector<1x32xf32> to vector<8x32xf32>
    %24 = arith.addf %20, %23 : vector<8x32xf32>
    %c0_16 = arith.constant 0 : index
    %c0_17 = arith.constant 0 : index
    %25 = vector.load %arg31[%c0_16, %c0_17] : memref<32x32xf32, #tpu.memory_space<vmem>>, vector<8x32xf32>
    tpu.vector_store %arg31[%c0_16, %c0_17], %24 {strides = array<i32>} : memref<32x32xf32, #tpu.memory_space<vmem>>, vector<8x32xf32>,
    %cst_18 = arith.constant dense<0.000000e+00> : vector<8xf32>
    %26 = vector.multi_reduction <add>, %24, %cst_18 [1] : vector<8x32xf32> to vector<8xf32>
    %27 = vector.shape_cast %26 : vector<8xf32> to vector<8x1xf32>
    %28 = arith.addf %15, %27 : vector<8x1xf32>
    %29 = arith.mulf %24, %24 : vector<8x32xf32>
    %cst_19 = arith.constant dense<0.000000e+00> : vector<8xf32>
    %30 = vector.multi_reduction <add>, %29, %cst_19 [1] : vector<8x32xf32> to vector<8xf32>
    %31 = vector.shape_cast %30 : vector<8xf32> to vector<8x1xf32>
    %32 = arith.addf %16, %31 : vector<8x1xf32>
    %c1 = arith.constant 1 : index
    %c0_20 = arith.constant 0 : index
    %c0_21 = arith.constant 0 : index
    %33 = vector.load %arg4[%c1, %c0_20, %c0_21] : memref<4x32x32xbf16, #tpu.memory_space<vmem>>, vector<1x32x32xbf16>
    %34 = vector.shape_cast %33 : vector<1x32x32xbf16> to vector<32x32xbf16>
    %35 = arith.truncf %14 : vector<8x32xf32> to vector<8x32xbf16>
    %cst_22 = arith.constant dense<0.000000e+00> : vector<8x32xf32>
    %36 = tpu.matmul %35, %34, %cst_22 {dimension_numbers = #tpu.dot_dimension_numbers<[1], [0], [0], [1], [0, 0, 1, 1], [], []>} : vector<8x32xbf16>, vector<32x32xbf16>, vector<8x32xf32> -> vector<8x32xf32>
    %c1_23 = arith.constant 1 : index
    %c0_24 = arith.constant 0 : index
    %c0_25 = arith.constant 0 : index
    %37 = vector.load %arg5[%c1_23, %c0_24, %c0_25] : memref<4x1x32xf32, #tpu.memory_space<vmem>>, vector<1x1x32xf32>
    %38 = vector.shape_cast %37 : vector<1x1x32xf32> to vector<1x32xf32>
    %39 = vector.broadcast %38 : vector<1x32xf32> to vector<8x32xf32>
    %40 = arith.addf %36, %39 : vector<8x32xf32>
    %c8 = arith.constant 8 : index
    %c0_26 = arith.constant 0 : index
    %41 = vector.load %arg31[%c8, %c0_26] : memref<32x32xf32, #tpu.memory_space<vmem>>, vector<8x32xf32>
    tpu.vector_store %arg31[%c8, %c0_26], %40 {strides = array<i32>} : memref<32x32xf32, #tpu.memory_space<vmem>>, vector<8x32xf32>,
    %cst_27 = arith.constant dense<0.000000e+00> : vector<8xf32>
    %42 = vector.multi_reduction <add>, %40, %cst_27 [1] : vector<8x32xf32> to vector<8xf32>
    %43 = vector.shape_cast %42 : vector<8xf32> to vector<8x1xf32>
    %44 = arith.addf %28, %43 : vector<8x1xf32>
    %45 = arith.mulf %40, %40 : vector<8x32xf32>
    %cst_28 = arith.constant dense<0.000000e+00> : vector<8xf32>
    %46 = vector.multi_reduction <add>, %45, %cst_28 [1] : vector<8x32xf32> to vector<8xf32>
    %47 = vector.shape_cast %46 : vector<8xf32> to vector<8x1xf32>
    %48 = arith.addf %32, %47 : vector<8x1xf32>
    %c2 = arith.constant 2 : index
    %c0_29 = arith.constant 0 : index
    %c0_30 = arith.constant 0 : index
    %49 = vector.load %arg4[%c2, %c0_29, %c0_30] : memref<4x32x32xbf16, #tpu.memory_space<vmem>>, vector<1x32x32xbf16>
    %50 = vector.shape_cast %49 : vector<1x32x32xbf16> to vector<32x32xbf16>
    %51 = arith.truncf %14 : vector<8x32xf32> to vector<8x32xbf16>
    %cst_31 = arith.constant dense<0.000000e+00> : vector<8x32xf32>
    %52 = tpu.matmul %51, %50, %cst_31 {dimension_numbers = #tpu.dot_dimension_numbers<[1], [0], [0], [1], [0, 0, 1, 1], [], []>} : vector<8x32xbf16>, vector<32x32xbf16>, vector<8x32xf32> -> vector<8x32xf32>
    %c2_32 = arith.constant 2 : index
    %c0_33 = arith.constant 0 : index
    %c0_34 = arith.constant 0 : index
    %53 = vector.load %arg5[%c2_32, %c0_33, %c0_34] : memref<4x1x32xf32, #tpu.memory_space<vmem>>, vector<1x1x32xf32>
    %54 = vector.shape_cast %53 : vector<1x1x32xf32> to vector<1x32xf32>
    %55 = vector.broadcast %54 : vector<1x32xf32> to vector<8x32xf32>
    %56 = arith.addf %52, %55 : vector<8x32xf32>
    %c16 = arith.constant 16 : index
    %c0_35 = arith.constant 0 : index
    %57 = vector.load %arg31[%c16, %c0_35] : memref<32x32xf32, #tpu.memory_space<vmem>>, vector<8x32xf32>
    tpu.vector_store %arg31[%c16, %c0_35], %56 {strides = array<i32>} : memref<32x32xf32, #tpu.memory_space<vmem>>, vector<8x32xf32>,
    %cst_36 = arith.constant dense<0.000000e+00> : vector<8xf32>
    %58 = vector.multi_reduction <add>, %56, %cst_36 [1] : vector<8x32xf32> to vector<8xf32>
    %59 = vector.shape_cast %58 : vector<8xf32> to vector<8x1xf32>
    %60 = arith.addf %44, %59 : vector<8x1xf32>
    %61 = arith.mulf %56, %56 : vector<8x32xf32>
    %cst_37 = arith.constant dense<0.000000e+00> : vector<8xf32>
    %62 = vector.multi_reduction <add>, %61, %cst_37 [1] : vector<8x32xf32> to vector<8xf32>
    %63 = vector.shape_cast %62 : vector<8xf32> to vector<8x1xf32>
    %64 = arith.addf %48, %63 : vector<8x1xf32>
    %c3 = arith.constant 3 : index
    %c0_38 = arith.constant 0 : index
    %c0_39 = arith.constant 0 : index
    %65 = vector.load %arg4[%c3, %c0_38, %c0_39] : memref<4x32x32xbf16, #tpu.memory_space<vmem>>, vector<1x32x32xbf16>
    %66 = vector.shape_cast %65 : vector<1x32x32xbf16> to vector<32x32xbf16>
    %67 = arith.truncf %14 : vector<8x32xf32> to vector<8x32xbf16>
    %cst_40 = arith.constant dense<0.000000e+00> : vector<8x32xf32>
    %68 = tpu.matmul %67, %66, %cst_40 {dimension_numbers = #tpu.dot_dimension_numbers<[1], [0], [0], [1], [0, 0, 1, 1], [], []>} : vector<8x32xbf16>, vector<32x32xbf16>, vector<8x32xf32> -> vector<8x32xf32>
    %c3_41 = arith.constant 3 : index
    %c0_42 = arith.constant 0 : index
    %c0_43 = arith.constant 0 : index
    %69 = vector.load %arg5[%c3_41, %c0_42, %c0_43] : memref<4x1x32xf32, #tpu.memory_space<vmem>>, vector<1x1x32xf32>
    %70 = vector.shape_cast %69 : vector<1x1x32xf32> to vector<1x32xf32>
    %71 = vector.broadcast %70 : vector<1x32xf32> to vector<8x32xf32>
    %72 = arith.addf %68, %71 : vector<8x32xf32>
    %c24 = arith.constant 24 : index
    %c0_44 = arith.constant 0 : index
    %73 = vector.load %arg31[%c24, %c0_44] : memref<32x32xf32, #tpu.memory_space<vmem>>, vector<8x32xf32>
    tpu.vector_store %arg31[%c24, %c0_44], %72 {strides = array<i32>} : memref<32x32xf32, #tpu.memory_space<vmem>>, vector<8x32xf32>,
    %cst_45 = arith.constant dense<0.000000e+00> : vector<8xf32>
    %74 = vector.multi_reduction <add>, %72, %cst_45 [1] : vector<8x32xf32> to vector<8xf32>
    %75 = vector.shape_cast %74 : vector<8xf32> to vector<8x1xf32>
    %76 = arith.addf %60, %75 : vector<8x1xf32>
    %77 = arith.mulf %72, %72 : vector<8x32xf32>
    %cst_46 = arith.constant dense<0.000000e+00> : vector<8xf32>
    %78 = vector.multi_reduction <add>, %77, %cst_46 [1] : vector<8x32xf32> to vector<8xf32>
    %79 = vector.shape_cast %78 : vector<8xf32> to vector<8x1xf32>
    %80 = arith.addf %64, %79 : vector<8x1xf32>
    %cst_47 = arith.constant 7.812500e-03 : f32
    %81 = vector.broadcast %cst_47 : f32 to vector<8x1xf32>
    %82 = arith.mulf %76, %81 : vector<8x1xf32>
    %cst_48 = arith.constant 7.812500e-03 : f32
    %83 = vector.broadcast %cst_48 : f32 to vector<8x1xf32>
    %84 = arith.mulf %80, %83 : vector<8x1xf32>
    %85 = arith.mulf %82, %82 : vector<8x1xf32>
    %86 = arith.subf %84, %85 : vector<8x1xf32>
    %cst_49 = arith.constant 0.000000e+00 : f32
    %87 = vector.broadcast %cst_49 : f32 to vector<8x1xf32>
    %88 = arith.maximumf %86, %87 : vector<8x1xf32>
    %cst_50 = arith.constant 9.99999974E-6 : f32
    %89 = vector.broadcast %cst_50 : f32 to vector<8x1xf32>
    %90 = arith.addf %88, %89 : vector<8x1xf32>
    %91 = math.rsqrt %90 : vector<8x1xf32>
    %c0_51 = arith.constant 0 : index
    %c0_52 = arith.constant 0 : index
    %92 = vector.load %arg31[%c0_51, %c0_52] : memref<32x32xf32, #tpu.memory_space<vmem>>, vector<8x32xf32>
    %93 = vector.broadcast %82 : vector<8x1xf32> to vector<8x32xf32>
    %94 = arith.subf %92, %93 : vector<8x32xf32>
    %95 = vector.broadcast %91 : vector<8x1xf32> to vector<8x32xf32>
    %96 = arith.mulf %94, %95 : vector<8x32xf32>
    %c0_53 = arith.constant 0 : index
    %c0_54 = arith.constant 0 : index
    %c0_55 = arith.constant 0 : index
    %97 = vector.load %arg6[%c0_53, %c0_54, %c0_55] : memref<4x1x32xf32, #tpu.memory_space<vmem>>, vector<1x1x32xf32>
    %98 = vector.shape_cast %97 : vector<1x1x32xf32> to vector<1x32xf32>
    %99 = vector.broadcast %98 : vector<1x32xf32> to vector<8x32xf32>
    %100 = arith.mulf %96, %99 : vector<8x32xf32>
    %c0_56 = arith.constant 0 : index
    %c0_57 = arith.constant 0 : index
    %c0_58 = arith.constant 0 : index
    %101 = vector.load %arg7[%c0_56, %c0_57, %c0_58] : memref<4x1x32xf32, #tpu.memory_space<vmem>>, vector<1x1x32xf32>
    %102 = vector.shape_cast %101 : vector<1x1x32xf32> to vector<1x32xf32>
    %103 = vector.broadcast %102 : vector<1x32xf32> to vector<8x32xf32>
    %104 = arith.addf %100, %103 : vector<8x32xf32>
    %105 = arith.mulf %104, %104 : vector<8x32xf32>
    %cst_59 = arith.constant dense<0.000000e+00> : vector<8xf32>
    %106 = vector.multi_reduction <add>, %105, %cst_59 [1] : vector<8x32xf32> to vector<8xf32>
    %107 = vector.shape_cast %106 : vector<8xf32> to vector<8x1xf32>
    %cst_60 = arith.constant 1.000000e-24 : f32
    %108 = vector.broadcast %cst_60 : f32 to vector<8x1xf32>
    %109 = arith.maximumf %107, %108 : vector<8x1xf32>
    %110 = math.rsqrt %109 : vector<8x1xf32>
    %111 = vector.broadcast %110 : vector<8x1xf32> to vector<8x32xf32>
    %112 = arith.mulf %104, %111 : vector<8x32xf32>
    %c0_61 = arith.constant 0 : index
    %c0_62 = arith.constant 0 : index
    %c0_63 = arith.constant 0 : index
    %113 = vector.load %arg8[%c0_61, %c0_62, %c0_63] : memref<4x1x32xf32, #tpu.memory_space<vmem>>, vector<1x1x32xf32>
    %114 = vector.shape_cast %113 : vector<1x1x32xf32> to vector<1x32xf32>
    %115 = vector.broadcast %114 : vector<1x32xf32> to vector<8x32xf32>
    %116 = arith.addf %112, %115 : vector<8x32xf32>
    %c0_64 = arith.constant 0 : index
    %c0_65 = arith.constant 0 : index
    %117 = vector.load %arg31[%c0_64, %c0_65] : memref<32x32xf32, #tpu.memory_space<vmem>>, vector<8x32xf32>
    tpu.vector_store %arg31[%c0_64, %c0_65], %116 {strides = array<i32>} : memref<32x32xf32, #tpu.memory_space<vmem>>, vector<8x32xf32>,
    %c8_66 = arith.constant 8 : index
    %c0_67 = arith.constant 0 : index
    %118 = vector.load %arg31[%c8_66, %c0_67] : memref<32x32xf32, #tpu.memory_space<vmem>>, vector<8x32xf32>
    %119 = vector.broadcast %82 : vector<8x1xf32> to vector<8x32xf32>
    %120 = arith.subf %118, %119 : vector<8x32xf32>
    %121 = vector.broadcast %91 : vector<8x1xf32> to vector<8x32xf32>
    %122 = arith.mulf %120, %121 : vector<8x32xf32>
    %c1_68 = arith.constant 1 : index
    %c0_69 = arith.constant 0 : index
    %c0_70 = arith.constant 0 : index
    %123 = vector.load %arg6[%c1_68, %c0_69, %c0_70] : memref<4x1x32xf32, #tpu.memory_space<vmem>>, vector<1x1x32xf32>
    %124 = vector.shape_cast %123 : vector<1x1x32xf32> to vector<1x32xf32>
    %125 = vector.broadcast %124 : vector<1x32xf32> to vector<8x32xf32>
    %126 = arith.mulf %122, %125 : vector<8x32xf32>
    %c1_71 = arith.constant 1 : index
    %c0_72 = arith.constant 0 : index
    %c0_73 = arith.constant 0 : index
    %127 = vector.load %arg7[%c1_71, %c0_72, %c0_73] : memref<4x1x32xf32, #tpu.memory_space<vmem>>, vector<1x1x32xf32>
    %128 = vector.shape_cast %127 : vector<1x1x32xf32> to vector<1x32xf32>
    %129 = vector.broadcast %128 : vector<1x32xf32> to vector<8x32xf32>
    %130 = arith.addf %126, %129 : vector<8x32xf32>
    %131 = arith.mulf %130, %130 : vector<8x32xf32>
    %cst_74 = arith.constant dense<0.000000e+00> : vector<8xf32>
    %132 = vector.multi_reduction <add>, %131, %cst_74 [1] : vector<8x32xf32> to vector<8xf32>
    %133 = vector.shape_cast %132 : vector<8xf32> to vector<8x1xf32>
    %cst_75 = arith.constant 1.000000e-24 : f32
    %134 = vector.broadcast %cst_75 : f32 to vector<8x1xf32>
    %135 = arith.maximumf %133, %134 : vector<8x1xf32>
    %136 = math.rsqrt %135 : vector<8x1xf32>
    %137 = vector.broadcast %136 : vector<8x1xf32> to vector<8x32xf32>
    %138 = arith.mulf %130, %137 : vector<8x32xf32>
    %c1_76 = arith.constant 1 : index
    %c0_77 = arith.constant 0 : index
    %c0_78 = arith.constant 0 : index
    %139 = vector.load %arg8[%c1_76, %c0_77, %c0_78] : memref<4x1x32xf32, #tpu.memory_space<vmem>>, vector<1x1x32xf32>
    %140 = vector.shape_cast %139 : vector<1x1x32xf32> to vector<1x32xf32>
    %141 = vector.broadcast %140 : vector<1x32xf32> to vector<8x32xf32>
    %142 = arith.addf %138, %141 : vector<8x32xf32>
    %c8_79 = arith.constant 8 : index
    %c0_80 = arith.constant 0 : index
    %143 = vector.load %arg31[%c8_79, %c0_80] : memref<32x32xf32, #tpu.memory_space<vmem>>, vector<8x32xf32>
    tpu.vector_store %arg31[%c8_79, %c0_80], %142 {strides = array<i32>} : memref<32x32xf32, #tpu.memory_space<vmem>>, vector<8x32xf32>,
    %c16_81 = arith.constant 16 : index
    %c0_82 = arith.constant 0 : index
    %144 = vector.load %arg31[%c16_81, %c0_82] : memref<32x32xf32, #tpu.memory_space<vmem>>, vector<8x32xf32>
    %145 = vector.broadcast %82 : vector<8x1xf32> to vector<8x32xf32>
    %146 = arith.subf %144, %145 : vector<8x32xf32>
    %147 = vector.broadcast %91 : vector<8x1xf32> to vector<8x32xf32>
    %148 = arith.mulf %146, %147 : vector<8x32xf32>
    %c2_83 = arith.constant 2 : index
    %c0_84 = arith.constant 0 : index
    %c0_85 = arith.constant 0 : index
    %149 = vector.load %arg6[%c2_83, %c0_84, %c0_85] : memref<4x1x32xf32, #tpu.memory_space<vmem>>, vector<1x1x32xf32>
    %150 = vector.shape_cast %149 : vector<1x1x32xf32> to vector<1x32xf32>
    %151 = vector.broadcast %150 : vector<1x32xf32> to vector<8x32xf32>
    %152 = arith.mulf %148, %151 : vector<8x32xf32>
    %c2_86 = arith.constant 2 : index
    %c0_87 = arith.constant 0 : index
    %c0_88 = arith.constant 0 : index
    %153 = vector.load %arg7[%c2_86, %c0_87, %c0_88] : memref<4x1x32xf32, #tpu.memory_space<vmem>>, vector<1x1x32xf32>
    %154 = vector.shape_cast %153 : vector<1x1x32xf32> to vector<1x32xf32>
    %155 = vector.broadcast %154 : vector<1x32xf32> to vector<8x32xf32>
    %156 = arith.addf %152, %155 : vector<8x32xf32>
    %157 = arith.mulf %156, %156 : vector<8x32xf32>
    %cst_89 = arith.constant dense<0.000000e+00> : vector<8xf32>
    %158 = vector.multi_reduction <add>, %157, %cst_89 [1] : vector<8x32xf32> to vector<8xf32>
    %159 = vector.shape_cast %158 : vector<8xf32> to vector<8x1xf32>
    %cst_90 = arith.constant 1.000000e-24 : f32
    %160 = vector.broadcast %cst_90 : f32 to vector<8x1xf32>
    %161 = arith.maximumf %159, %160 : vector<8x1xf32>
    %162 = math.rsqrt %161 : vector<8x1xf32>
    %163 = vector.broadcast %162 : vector<8x1xf32> to vector<8x32xf32>
    %164 = arith.mulf %156, %163 : vector<8x32xf32>
    %c2_91 = arith.constant 2 : index
    %c0_92 = arith.constant 0 : index
    %c0_93 = arith.constant 0 : index
    %165 = vector.load %arg8[%c2_91, %c0_92, %c0_93] : memref<4x1x32xf32, #tpu.memory_space<vmem>>, vector<1x1x32xf32>
    %166 = vector.shape_cast %165 : vector<1x1x32xf32> to vector<1x32xf32>
    %167 = vector.broadcast %166 : vector<1x32xf32> to vector<8x32xf32>
    %168 = arith.addf %164, %167 : vector<8x32xf32>
    %c16_94 = arith.constant 16 : index
    %c0_95 = arith.constant 0 : index
    %169 = vector.load %arg31[%c16_94, %c0_95] : memref<32x32xf32, #tpu.memory_space<vmem>>, vector<8x32xf32>
    tpu.vector_store %arg31[%c16_94, %c0_95], %168 {strides = array<i32>} : memref<32x32xf32, #tpu.memory_space<vmem>>, vector<8x32xf32>,
    %c24_96 = arith.constant 24 : index
    %c0_97 = arith.constant 0 : index
    %170 = vector.load %arg31[%c24_96, %c0_97] : memref<32x32xf32, #tpu.memory_space<vmem>>, vector<8x32xf32>
    %171 = vector.broadcast %82 : vector<8x1xf32> to vector<8x32xf32>
    %172 = arith.subf %170, %171 : vector<8x32xf32>
    %173 = vector.broadcast %91 : vector<8x1xf32> to vector<8x32xf32>
    %174 = arith.mulf %172, %173 : vector<8x32xf32>
    %c3_98 = arith.constant 3 : index
    %c0_99 = arith.constant 0 : index
    %c0_100 = arith.constant 0 : index
    %175 = vector.load %arg6[%c3_98, %c0_99, %c0_100] : memref<4x1x32xf32, #tpu.memory_space<vmem>>, vector<1x1x32xf32>
    %176 = vector.shape_cast %175 : vector<1x1x32xf32> to vector<1x32xf32>
    %177 = vector.broadcast %176 : vector<1x32xf32> to vector<8x32xf32>
    %178 = arith.mulf %174, %177 : vector<8x32xf32>
    %c3_101 = arith.constant 3 : index
    %c0_102 = arith.constant 0 : index
    %c0_103 = arith.constant 0 : index
    %179 = vector.load %arg7[%c3_101, %c0_102, %c0_103] : memref<4x1x32xf32, #tpu.memory_space<vmem>>, vector<1x1x32xf32>
    %180 = vector.shape_cast %179 : vector<1x1x32xf32> to vector<1x32xf32>
    %181 = vector.broadcast %180 : vector<1x32xf32> to vector<8x32xf32>
    %182 = arith.addf %178, %181 : vector<8x32xf32>
    %183 = arith.mulf %182, %182 : vector<8x32xf32>
    %cst_104 = arith.constant dense<0.000000e+00> : vector<8xf32>
    %184 = vector.multi_reduction <add>, %183, %cst_104 [1] : vector<8x32xf32> to vector<8xf32>
    %185 = vector.shape_cast %184 : vector<8xf32> to vector<8x1xf32>
    %cst_105 = arith.constant 1.000000e-24 : f32
    %186 = vector.broadcast %cst_105 : f32 to vector<8x1xf32>
    %187 = arith.maximumf %185, %186 : vector<8x1xf32>
    %188 = math.rsqrt %187 : vector<8x1xf32>
    %189 = vector.broadcast %188 : vector<8x1xf32> to vector<8x32xf32>
    %190 = arith.mulf %182, %189 : vector<8x32xf32>
    %c3_106 = arith.constant 3 : index
    %c0_107 = arith.constant 0 : index
    %c0_108 = arith.constant 0 : index
    %191 = vector.load %arg8[%c3_106, %c0_107, %c0_108] : memref<4x1x32xf32, #tpu.memory_space<vmem>>, vector<1x1x32xf32>
    %192 = vector.shape_cast %191 : vector<1x1x32xf32> to vector<1x32xf32>
    %193 = vector.broadcast %192 : vector<1x32xf32> to vector<8x32xf32>
    %194 = arith.addf %190, %193 : vector<8x32xf32>
    %c24_109 = arith.constant 24 : index
    %c0_110 = arith.constant 0 : index
    %195 = vector.load %arg31[%c24_109, %c0_110] : memref<32x32xf32, #tpu.memory_space<vmem>>, vector<8x32xf32>
    tpu.vector_store %arg31[%c24_109, %c0_110], %194 {strides = array<i32>} : memref<32x32xf32, #tpu.memory_space<vmem>>, vector<8x32xf32>,
    %c0_111 = arith.constant 0 : index
    %c0_112 = arith.constant 0 : index
    %196 = vector.load %arg31[%c0_111, %c0_112] : memref<32x32xf32, #tpu.memory_space<vmem>>, vector<32x32xf32>
    %c0_113 = arith.constant 0 : index
    %c0_114 = arith.constant 0 : index
    %197 = vector.load %arg15[%c0_113, %c0_114] : memref<32x4xbf16, #tpu.memory_space<vmem>>, vector<32x4xbf16>
    %c0_115 = arith.constant 0 : index
    %c0_116 = arith.constant 0 : index
    %198 = vector.load %arg16[%c0_115, %c0_116] : memref<4x32xbf16, #tpu.memory_space<vmem>>, vector<4x32xbf16>
    %199 = arith.mulf %196, %196 : vector<32x32xf32>
    %cst_117 = arith.constant dense<0.000000e+00> : vector<32xf32>
    %200 = vector.multi_reduction <add>, %199, %cst_117 [1] : vector<32x32xf32> to vector<32xf32>
    %201 = vector.shape_cast %200 : vector<32xf32> to vector<32x1xf32>
    %cst_118 = arith.constant 1.000000e-24 : f32
    %202 = vector.broadcast %cst_118 : f32 to vector<32x1xf32>
    %203 = arith.maximumf %201, %202 : vector<32x1xf32>
    %204 = math.rsqrt %203 : vector<32x1xf32>
    %205 = vector.broadcast %204 : vector<32x1xf32> to vector<32x32xf32>
    %206 = arith.mulf %196, %205 : vector<32x32xf32>
    %c0_119 = arith.constant 0 : index
    %c0_120 = arith.constant 0 : index
    %c0_121 = arith.constant 0 : index
    %207 = vector.load %arg9[%c0_119, %c0_120, %c0_121] : memref<2x32x32xbf16, #tpu.memory_space<vmem>>, vector<1x32x32xbf16>
    %208 = vector.shape_cast %207 : vector<1x32x32xbf16> to vector<32x32xbf16>
    %209 = arith.truncf %206 : vector<32x32xf32> to vector<32x32xbf16>
    %cst_122 = arith.constant dense<0.000000e+00> : vector<32x32xf32>
    %210 = tpu.matmul %209, %208, %cst_122 {dimension_numbers = #tpu.dot_dimension_numbers<[1], [0], [0], [1], [0, 0, 1, 1], [], []>} : vector<32x32xbf16>, vector<32x32xbf16>, vector<32x32xf32> -> vector<32x32xf32>
    %c0_123 = arith.constant 0 : index
    %c0_124 = arith.constant 0 : index
    %c0_125 = arith.constant 0 : index
    %211 = vector.load %arg10[%c0_123, %c0_124, %c0_125] : memref<2x1x32xf32, #tpu.memory_space<vmem>>, vector<1x1x32xf32>
    %212 = vector.shape_cast %211 : vector<1x1x32xf32> to vector<1x32xf32>
    %213 = vector.broadcast %212 : vector<1x32xf32> to vector<32x32xf32>
    %214 = arith.addf %210, %213 : vector<32x32xf32>
    %cst_126 = arith.constant 0.353553385 : f32
    %215 = vector.broadcast %cst_126 : f32 to vector<32x32xf32>
    %216 = arith.mulf %214, %215 : vector<32x32xf32>
    %c0_127 = arith.constant 0 : index
    %c0_128 = arith.constant 0 : index
    %c0_129 = arith.constant 0 : index
    %217 = vector.load %arg11[%c0_127, %c0_128, %c0_129] : memref<2x32x32xbf16, #tpu.memory_space<vmem>>, vector<1x32x32xbf16>
    %218 = vector.shape_cast %217 : vector<1x32x32xbf16> to vector<32x32xbf16>
    %219 = arith.truncf %206 : vector<32x32xf32> to vector<32x32xbf16>
    %cst_130 = arith.constant dense<0.000000e+00> : vector<32x32xf32>
    %220 = tpu.matmul %219, %218, %cst_130 {dimension_numbers = #tpu.dot_dimension_numbers<[1], [0], [0], [1], [0, 0, 1, 1], [], []>} : vector<32x32xbf16>, vector<32x32xbf16>, vector<32x32xf32> -> vector<32x32xf32>
    %c0_131 = arith.constant 0 : index
    %c0_132 = arith.constant 0 : index
    %c0_133 = arith.constant 0 : index
    %221 = vector.load %arg12[%c0_131, %c0_132, %c0_133] : memref<2x1x32xf32, #tpu.memory_space<vmem>>, vector<1x1x32xf32>
    %222 = vector.shape_cast %221 : vector<1x1x32xf32> to vector<1x32xf32>
    %223 = vector.broadcast %222 : vector<1x32xf32> to vector<32x32xf32>
    %224 = arith.addf %220, %223 : vector<32x32xf32>
    %c0_134 = arith.constant 0 : index
    %c0_135 = arith.constant 0 : index
    %c0_136 = arith.constant 0 : index
    %225 = vector.load %arg13[%c0_134, %c0_135, %c0_136] : memref<2x32x32xbf16, #tpu.memory_space<vmem>>, vector<1x32x32xbf16>
    %226 = vector.shape_cast %225 : vector<1x32x32xbf16> to vector<32x32xbf16>
    %227 = arith.truncf %206 : vector<32x32xf32> to vector<32x32xbf16>
    %cst_137 = arith.constant dense<0.000000e+00> : vector<32x32xf32>
    %228 = tpu.matmul %227, %226, %cst_137 {dimension_numbers = #tpu.dot_dimension_numbers<[1], [0], [0], [1], [0, 0, 1, 1], [], []>} : vector<32x32xbf16>, vector<32x32xbf16>, vector<32x32xf32> -> vector<32x32xf32>
    %c0_138 = arith.constant 0 : index
    %c0_139 = arith.constant 0 : index
    %c0_140 = arith.constant 0 : index
    %229 = vector.load %arg14[%c0_138, %c0_139, %c0_140] : memref<2x1x32xf32, #tpu.memory_space<vmem>>, vector<1x1x32xf32>
    %230 = vector.shape_cast %229 : vector<1x1x32xf32> to vector<1x32xf32>
    %231 = vector.broadcast %230 : vector<1x32xf32> to vector<32x32xf32>
    %232 = arith.addf %228, %231 : vector<32x32xf32>
    %233 = vector.shape_cast %224 : vector<32x32xf32> to vector<4x8x32xf32>
    %234 = vector.shape_cast %232 : vector<32x32xf32> to vector<4x8x32xf32>
    %235 = vector.extract_strided_slice %216 {offsets = [0, 0], sizes = [8, 32], strides = [1, 1]} : vector<32x32xf32> to vector<8x32xf32>
    %236 = vector.shape_cast %235 : vector<8x32xf32> to vector<1x8x32xf32>
    %237 = vector.broadcast %236 : vector<1x8x32xf32> to vector<4x8x32xf32>
    %238 = arith.mulf %233, %237 : vector<4x8x32xf32>
    %239 = vector.shape_cast %238 : vector<4x8x32xf32> to vector<32x32xf32>
    %240 = arith.truncf %239 : vector<32x32xf32> to vector<32x32xbf16>
    %cst_141 = arith.constant dense<0.000000e+00> : vector<32x4xf32>
    %241 = tpu.matmul %240, %197, %cst_141 {dimension_numbers = #tpu.dot_dimension_numbers<[1], [0], [0], [1], [0, 0, 1, 1], [], []>} : vector<32x32xbf16>, vector<32x4xbf16>, vector<32x4xf32> -> vector<32x4xf32>
    %242 = vector.shape_cast %241 : vector<32x4xf32> to vector<4x8x4xf32>
    %cst_142 = arith.constant dense<0xFF800000> : vector<8x4xf32>
    %243 = vector.multi_reduction <maximumf>, %242, %cst_142 [0] : vector<4x8x4xf32> to vector<8x4xf32>
    %244 = vector.shape_cast %243 : vector<8x4xf32> to vector<1x8x4xf32>
    %245 = vector.broadcast %244 : vector<1x8x4xf32> to vector<4x8x4xf32>
    %246 = arith.subf %242, %245 : vector<4x8x4xf32>
    %247 = math.exp %246 : vector<4x8x4xf32>
    %cst_143 = arith.constant dense<0.000000e+00> : vector<8x4xf32>
    %248 = vector.multi_reduction <add>, %247, %cst_143 [0] : vector<4x8x4xf32> to vector<8x4xf32>
    %249 = tpu.reciprocal %248 {approx = true} : vector<8x4xf32> -> vector<8x4xf32>
    %250 = vector.shape_cast %249 : vector<8x4xf32> to vector<1x8x4xf32>
    %251 = vector.broadcast %250 : vector<1x8x4xf32> to vector<4x8x4xf32>
    %252 = arith.mulf %247, %251 : vector<4x8x4xf32>
    %253 = vector.shape_cast %252 : vector<4x8x4xf32> to vector<32x4xf32>
    %254 = arith.truncf %253 : vector<32x4xf32> to vector<32x4xbf16>
    %cst_144 = arith.constant dense<0.000000e+00> : vector<32x32xf32>
    %255 = tpu.matmul %254, %198, %cst_144 {dimension_numbers = #tpu.dot_dimension_numbers<[1], [0], [0], [1], [0, 0, 1, 1], [], []>} : vector<32x4xbf16>, vector<4x32xbf16>, vector<32x32xf32> -> vector<32x32xf32>
    %256 = vector.shape_cast %255 : vector<32x32xf32> to vector<4x8x32xf32>
    %257 = arith.mulf %256, %234 : vector<4x8x32xf32>
    %cst_145 = arith.constant dense<0.000000e+00> : vector<8x32xf32>
    %258 = vector.multi_reduction <add>, %257, %cst_145 [0] : vector<4x8x32xf32> to vector<8x32xf32>
    %c0_146 = arith.constant 0 : index
    %c0_147 = arith.constant 0 : index
    %259 = vector.load %arg31[%c0_146, %c0_147] : memref<32x32xf32, #tpu.memory_space<vmem>>, vector<8x32xf32>
    tpu.vector_store %arg31[%c0_146, %c0_147], %258 {strides = array<i32>} : memref<32x32xf32, #tpu.memory_space<vmem>>, vector<8x32xf32>,
    %260 = vector.extract_strided_slice %216 {offsets = [8, 0], sizes = [8, 32], strides = [1, 1]} : vector<32x32xf32> to vector<8x32xf32>
    %261 = vector.shape_cast %260 : vector<8x32xf32> to vector<1x8x32xf32>
    %262 = vector.broadcast %261 : vector<1x8x32xf32> to vector<4x8x32xf32>
    %263 = arith.mulf %233, %262 : vector<4x8x32xf32>
    %264 = vector.shape_cast %263 : vector<4x8x32xf32> to vector<32x32xf32>
    %265 = arith.truncf %264 : vector<32x32xf32> to vector<32x32xbf16>
    %cst_148 = arith.constant dense<0.000000e+00> : vector<32x4xf32>
    %266 = tpu.matmul %265, %197, %cst_148 {dimension_numbers = #tpu.dot_dimension_numbers<[1], [0], [0], [1], [0, 0, 1, 1], [], []>} : vector<32x32xbf16>, vector<32x4xbf16>, vector<32x4xf32> -> vector<32x4xf32>
    %267 = vector.shape_cast %266 : vector<32x4xf32> to vector<4x8x4xf32>
    %cst_149 = arith.constant dense<0xFF800000> : vector<8x4xf32>
    %268 = vector.multi_reduction <maximumf>, %267, %cst_149 [0] : vector<4x8x4xf32> to vector<8x4xf32>
    %269 = vector.shape_cast %268 : vector<8x4xf32> to vector<1x8x4xf32>
    %270 = vector.broadcast %269 : vector<1x8x4xf32> to vector<4x8x4xf32>
    %271 = arith.subf %267, %270 : vector<4x8x4xf32>
    %272 = math.exp %271 : vector<4x8x4xf32>
    %cst_150 = arith.constant dense<0.000000e+00> : vector<8x4xf32>
    %273 = vector.multi_reduction <add>, %272, %cst_150 [0] : vector<4x8x4xf32> to vector<8x4xf32>
    %274 = tpu.reciprocal %273 {approx = true} : vector<8x4xf32> -> vector<8x4xf32>
    %275 = vector.shape_cast %274 : vector<8x4xf32> to vector<1x8x4xf32>
    %276 = vector.broadcast %275 : vector<1x8x4xf32> to vector<4x8x4xf32>
    %277 = arith.mulf %272, %276 : vector<4x8x4xf32>
    %278 = vector.shape_cast %277 : vector<4x8x4xf32> to vector<32x4xf32>
    %279 = arith.truncf %278 : vector<32x4xf32> to vector<32x4xbf16>
    %cst_151 = arith.constant dense<0.000000e+00> : vector<32x32xf32>
    %280 = tpu.matmul %279, %198, %cst_151 {dimension_numbers = #tpu.dot_dimension_numbers<[1], [0], [0], [1], [0, 0, 1, 1], [], []>} : vector<32x4xbf16>, vector<4x32xbf16>, vector<32x32xf32> -> vector<32x32xf32>
    %281 = vector.shape_cast %280 : vector<32x32xf32> to vector<4x8x32xf32>
    %282 = arith.mulf %281, %234 : vector<4x8x32xf32>
    %cst_152 = arith.constant dense<0.000000e+00> : vector<8x32xf32>
    %283 = vector.multi_reduction <add>, %282, %cst_152 [0] : vector<4x8x32xf32> to vector<8x32xf32>
    %c8_153 = arith.constant 8 : index
    %c0_154 = arith.constant 0 : index
    %284 = vector.load %arg31[%c8_153, %c0_154] : memref<32x32xf32, #tpu.memory_space<vmem>>, vector<8x32xf32>
    tpu.vector_store %arg31[%c8_153, %c0_154], %283 {strides = array<i32>} : memref<32x32xf32, #tpu.memory_space<vmem>>, vector<8x32xf32>,
    %285 = vector.extract_strided_slice %216 {offsets = [16, 0], sizes = [8, 32], strides = [1, 1]} : vector<32x32xf32> to vector<8x32xf32>
    %286 = vector.shape_cast %285 : vector<8x32xf32> to vector<1x8x32xf32>
    %287 = vector.broadcast %286 : vector<1x8x32xf32> to vector<4x8x32xf32>
    %288 = arith.mulf %233, %287 : vector<4x8x32xf32>
    %289 = vector.shape_cast %288 : vector<4x8x32xf32> to vector<32x32xf32>
    %290 = arith.truncf %289 : vector<32x32xf32> to vector<32x32xbf16>
    %cst_155 = arith.constant dense<0.000000e+00> : vector<32x4xf32>
    %291 = tpu.matmul %290, %197, %cst_155 {dimension_numbers = #tpu.dot_dimension_numbers<[1], [0], [0], [1], [0, 0, 1, 1], [], []>} : vector<32x32xbf16>, vector<32x4xbf16>, vector<32x4xf32> -> vector<32x4xf32>
    %292 = vector.shape_cast %291 : vector<32x4xf32> to vector<4x8x4xf32>
    %cst_156 = arith.constant dense<0xFF800000> : vector<8x4xf32>
    %293 = vector.multi_reduction <maximumf>, %292, %cst_156 [0] : vector<4x8x4xf32> to vector<8x4xf32>
    %294 = vector.shape_cast %293 : vector<8x4xf32> to vector<1x8x4xf32>
    %295 = vector.broadcast %294 : vector<1x8x4xf32> to vector<4x8x4xf32>
    %296 = arith.subf %292, %295 : vector<4x8x4xf32>
    %297 = math.exp %296 : vector<4x8x4xf32>
    %cst_157 = arith.constant dense<0.000000e+00> : vector<8x4xf32>
    %298 = vector.multi_reduction <add>, %297, %cst_157 [0] : vector<4x8x4xf32> to vector<8x4xf32>
    %299 = tpu.reciprocal %298 {approx = true} : vector<8x4xf32> -> vector<8x4xf32>
    %300 = vector.shape_cast %299 : vector<8x4xf32> to vector<1x8x4xf32>
    %301 = vector.broadcast %300 : vector<1x8x4xf32> to vector<4x8x4xf32>
    %302 = arith.mulf %297, %301 : vector<4x8x4xf32>
    %303 = vector.shape_cast %302 : vector<4x8x4xf32> to vector<32x4xf32>
    %304 = arith.truncf %303 : vector<32x4xf32> to vector<32x4xbf16>
    %cst_158 = arith.constant dense<0.000000e+00> : vector<32x32xf32>
    %305 = tpu.matmul %304, %198, %cst_158 {dimension_numbers = #tpu.dot_dimension_numbers<[1], [0], [0], [1], [0, 0, 1, 1], [], []>} : vector<32x4xbf16>, vector<4x32xbf16>, vector<32x32xf32> -> vector<32x32xf32>
    %306 = vector.shape_cast %305 : vector<32x32xf32> to vector<4x8x32xf32>
    %307 = arith.mulf %306, %234 : vector<4x8x32xf32>
    %cst_159 = arith.constant dense<0.000000e+00> : vector<8x32xf32>
    %308 = vector.multi_reduction <add>, %307, %cst_159 [0] : vector<4x8x32xf32> to vector<8x32xf32>
    %c16_160 = arith.constant 16 : index
    %c0_161 = arith.constant 0 : index
    %309 = vector.load %arg31[%c16_160, %c0_161] : memref<32x32xf32, #tpu.memory_space<vmem>>, vector<8x32xf32>
    tpu.vector_store %arg31[%c16_160, %c0_161], %308 {strides = array<i32>} : memref<32x32xf32, #tpu.memory_space<vmem>>, vector<8x32xf32>,
    %310 = vector.extract_strided_slice %216 {offsets = [24, 0], sizes = [8, 32], strides = [1, 1]} : vector<32x32xf32> to vector<8x32xf32>
    %311 = vector.shape_cast %310 : vector<8x32xf32> to vector<1x8x32xf32>
    %312 = vector.broadcast %311 : vector<1x8x32xf32> to vector<4x8x32xf32>
    %313 = arith.mulf %233, %312 : vector<4x8x32xf32>
    %314 = vector.shape_cast %313 : vector<4x8x32xf32> to vector<32x32xf32>
    %315 = arith.truncf %314 : vector<32x32xf32> to vector<32x32xbf16>
    %cst_162 = arith.constant dense<0.000000e+00> : vector<32x4xf32>
    %316 = tpu.matmul %315, %197, %cst_162 {dimension_numbers = #tpu.dot_dimension_numbers<[1], [0], [0], [1], [0, 0, 1, 1], [], []>} : vector<32x32xbf16>, vector<32x4xbf16>, vector<32x4xf32> -> vector<32x4xf32>
    %317 = vector.shape_cast %316 : vector<32x4xf32> to vector<4x8x4xf32>
    %cst_163 = arith.constant dense<0xFF800000> : vector<8x4xf32>
    %318 = vector.multi_reduction <maximumf>, %317, %cst_163 [0] : vector<4x8x4xf32> to vector<8x4xf32>
    %319 = vector.shape_cast %318 : vector<8x4xf32> to vector<1x8x4xf32>
    %320 = vector.broadcast %319 : vector<1x8x4xf32> to vector<4x8x4xf32>
    %321 = arith.subf %317, %320 : vector<4x8x4xf32>
    %322 = math.exp %321 : vector<4x8x4xf32>
    %cst_164 = arith.constant dense<0.000000e+00> : vector<8x4xf32>
    %323 = vector.multi_reduction <add>, %322, %cst_164 [0] : vector<4x8x4xf32> to vector<8x4xf32>
    %324 = tpu.reciprocal %323 {approx = true} : vector<8x4xf32> -> vector<8x4xf32>
    %325 = vector.shape_cast %324 : vector<8x4xf32> to vector<1x8x4xf32>
    %326 = vector.broadcast %325 : vector<1x8x4xf32> to vector<4x8x4xf32>
    %327 = arith.mulf %322, %326 : vector<4x8x4xf32>
    %328 = vector.shape_cast %327 : vector<4x8x4xf32> to vector<32x4xf32>
    %329 = arith.truncf %328 : vector<32x4xf32> to vector<32x4xbf16>
    %cst_165 = arith.constant dense<0.000000e+00> : vector<32x32xf32>
    %330 = tpu.matmul %329, %198, %cst_165 {dimension_numbers = #tpu.dot_dimension_numbers<[1], [0], [0], [1], [0, 0, 1, 1], [], []>} : vector<32x4xbf16>, vector<4x32xbf16>, vector<32x32xf32> -> vector<32x32xf32>
    %331 = vector.shape_cast %330 : vector<32x32xf32> to vector<4x8x32xf32>
    %332 = arith.mulf %331, %234 : vector<4x8x32xf32>
    %cst_166 = arith.constant dense<0.000000e+00> : vector<8x32xf32>
    %333 = vector.multi_reduction <add>, %332, %cst_166 [0] : vector<4x8x32xf32> to vector<8x32xf32>
    %c24_167 = arith.constant 24 : index
    %c0_168 = arith.constant 0 : index
    %334 = vector.load %arg31[%c24_167, %c0_168] : memref<32x32xf32, #tpu.memory_space<vmem>>, vector<8x32xf32>
    tpu.vector_store %arg31[%c24_167, %c0_168], %333 {strides = array<i32>} : memref<32x32xf32, #tpu.memory_space<vmem>>, vector<8x32xf32>,
    %c0_169 = arith.constant 0 : index
    %c0_170 = arith.constant 0 : index
    %335 = vector.load %arg31[%c0_169, %c0_170] : memref<32x32xf32, #tpu.memory_space<vmem>>, vector<32x32xf32>
    %c0_171 = arith.constant 0 : index
    %c0_172 = arith.constant 0 : index
    %c0_173 = arith.constant 0 : index
    %336 = vector.load %arg17[%c0_171, %c0_172, %c0_173] : memref<2x32x32xbf16, #tpu.memory_space<vmem>>, vector<1x32x32xbf16>
    %337 = vector.shape_cast %336 : vector<1x32x32xbf16> to vector<32x32xbf16>
    %338 = arith.truncf %335 : vector<32x32xf32> to vector<32x32xbf16>
    %cst_174 = arith.constant dense<0.000000e+00> : vector<32x32xf32>
    %339 = tpu.matmul %338, %337, %cst_174 {dimension_numbers = #tpu.dot_dimension_numbers<[1], [0], [0], [1], [0, 0, 1, 1], [], []>} : vector<32x32xbf16>, vector<32x32xbf16>, vector<32x32xf32> -> vector<32x32xf32>
    %c0_175 = arith.constant 0 : index
    %c0_176 = arith.constant 0 : index
    %c0_177 = arith.constant 0 : index
    %340 = vector.load %arg18[%c0_175, %c0_176, %c0_177] : memref<2x1x32xf32, #tpu.memory_space<vmem>>, vector<1x1x32xf32>
    %341 = vector.shape_cast %340 : vector<1x1x32xf32> to vector<1x32xf32>
    %342 = vector.broadcast %341 : vector<1x32xf32> to vector<32x32xf32>
    %343 = arith.addf %339, %342 : vector<32x32xf32>
    %344 = arith.mulf %343, %343 : vector<32x32xf32>
    %cst_178 = arith.constant dense<0.000000e+00> : vector<32xf32>
    %345 = vector.multi_reduction <add>, %344, %cst_178 [1] : vector<32x32xf32> to vector<32xf32>
    %346 = vector.shape_cast %345 : vector<32xf32> to vector<32x1xf32>
    %cst_179 = arith.constant 1.000000e-24 : f32
    %347 = vector.broadcast %cst_179 : f32 to vector<32x1xf32>
    %348 = arith.maximumf %346, %347 : vector<32x1xf32>
    %349 = math.rsqrt %348 : vector<32x1xf32>
    %350 = vector.broadcast %349 : vector<32x1xf32> to vector<32x32xf32>
    %351 = arith.mulf %343, %350 : vector<32x32xf32>
    %c0_180 = arith.constant 0 : index
    %352 = memref.load %arg23[%c0_180] : memref<2xf32, #tpu.memory_space<smem>>
    %353 = arith.subf %351, %206 : vector<32x32xf32>
    %354 = vector.broadcast %352 : f32 to vector<32x32xf32>
    %355 = arith.mulf %354, %353 : vector<32x32xf32>
    %356 = arith.addf %206, %355 : vector<32x32xf32>
    %357 = arith.mulf %356, %356 : vector<32x32xf32>
    %cst_181 = arith.constant dense<0.000000e+00> : vector<32xf32>
    %358 = vector.multi_reduction <add>, %357, %cst_181 [1] : vector<32x32xf32> to vector<32xf32>
    %359 = vector.shape_cast %358 : vector<32xf32> to vector<32x1xf32>
    %cst_182 = arith.constant 1.000000e-24 : f32
    %360 = vector.broadcast %cst_182 : f32 to vector<32x1xf32>
    %361 = arith.maximumf %359, %360 : vector<32x1xf32>
    %362 = math.rsqrt %361 : vector<32x1xf32>
    %363 = vector.broadcast %362 : vector<32x1xf32> to vector<32x32xf32>
    %364 = arith.mulf %356, %363 : vector<32x32xf32>
    %c0_183 = arith.constant 0 : index
    %c0_184 = arith.constant 0 : index
    %c0_185 = arith.constant 0 : index
    %365 = vector.load %arg19[%c0_183, %c0_184, %c0_185] : memref<2x32x64xbf16, #tpu.memory_space<vmem>>, vector<1x32x64xbf16>
    %366 = vector.shape_cast %365 : vector<1x32x64xbf16> to vector<32x64xbf16>
    %367 = arith.truncf %364 : vector<32x32xf32> to vector<32x32xbf16>
    %cst_186 = arith.constant dense<0.000000e+00> : vector<32x64xf32>
    %368 = tpu.matmul %367, %366, %cst_186 {dimension_numbers = #tpu.dot_dimension_numbers<[1], [0], [0], [1], [0, 0, 1, 1], [], []>} : vector<32x32xbf16>, vector<32x64xbf16>, vector<32x64xf32> -> vector<32x64xf32>
    %c0_187 = arith.constant 0 : index
    %c0_188 = arith.constant 0 : index
    %c0_189 = arith.constant 0 : index
    %369 = vector.load %arg20[%c0_187, %c0_188, %c0_189] : memref<2x1x64xf32, #tpu.memory_space<vmem>>, vector<1x1x64xf32>
    %370 = vector.shape_cast %369 : vector<1x1x64xf32> to vector<1x64xf32>
    %371 = vector.broadcast %370 : vector<1x64xf32> to vector<32x64xf32>
    %372 = arith.addf %368, %371 : vector<32x64xf32>
    %cst_190 = arith.constant 0.000000e+00 : f32
    %373 = vector.broadcast %cst_190 : f32 to vector<32x64xf32>
    %374 = arith.maximumf %372, %373 : vector<32x64xf32>
    %c0_191 = arith.constant 0 : index
    %c0_192 = arith.constant 0 : index
    %c0_193 = arith.constant 0 : index
    %375 = vector.load %arg21[%c0_191, %c0_192, %c0_193] : memref<2x64x32xbf16, #tpu.memory_space<vmem>>, vector<1x64x32xbf16>
    %376 = vector.shape_cast %375 : vector<1x64x32xbf16> to vector<64x32xbf16>
    %377 = arith.truncf %374 : vector<32x64xf32> to vector<32x64xbf16>
    %cst_194 = arith.constant dense<0.000000e+00> : vector<32x32xf32>
    %378 = tpu.matmul %377, %376, %cst_194 {dimension_numbers = #tpu.dot_dimension_numbers<[1], [0], [0], [1], [0, 0, 1, 1], [], []>} : vector<32x64xbf16>, vector<64x32xbf16>, vector<32x32xf32> -> vector<32x32xf32>
    %c0_195 = arith.constant 0 : index
    %c0_196 = arith.constant 0 : index
    %c0_197 = arith.constant 0 : index
    %379 = vector.load %arg22[%c0_195, %c0_196, %c0_197] : memref<2x1x32xf32, #tpu.memory_space<vmem>>, vector<1x1x32xf32>
    %380 = vector.shape_cast %379 : vector<1x1x32xf32> to vector<1x32xf32>
    %381 = vector.broadcast %380 : vector<1x32xf32> to vector<32x32xf32>
    %382 = arith.addf %378, %381 : vector<32x32xf32>
    %383 = arith.mulf %382, %382 : vector<32x32xf32>
    %cst_198 = arith.constant dense<0.000000e+00> : vector<32xf32>
    %384 = vector.multi_reduction <add>, %383, %cst_198 [1] : vector<32x32xf32> to vector<32xf32>
    %385 = vector.shape_cast %384 : vector<32xf32> to vector<32x1xf32>
    %cst_199 = arith.constant 1.000000e-24 : f32
    %386 = vector.broadcast %cst_199 : f32 to vector<32x1xf32>
    %387 = arith.maximumf %385, %386 : vector<32x1xf32>
    %388 = math.rsqrt %387 : vector<32x1xf32>
    %389 = vector.broadcast %388 : vector<32x1xf32> to vector<32x32xf32>
    %390 = arith.mulf %382, %389 : vector<32x32xf32>
    %c0_200 = arith.constant 0 : index
    %391 = memref.load %arg24[%c0_200] : memref<2xf32, #tpu.memory_space<smem>>
    %392 = arith.subf %390, %364 : vector<32x32xf32>
    %393 = vector.broadcast %391 : f32 to vector<32x32xf32>
    %394 = arith.mulf %393, %392 : vector<32x32xf32>
    %395 = arith.addf %364, %394 : vector<32x32xf32>
    %396 = arith.mulf %395, %395 : vector<32x32xf32>
    %cst_201 = arith.constant dense<0.000000e+00> : vector<32xf32>
    %397 = vector.multi_reduction <add>, %396, %cst_201 [1] : vector<32x32xf32> to vector<32xf32>
    %398 = vector.shape_cast %397 : vector<32xf32> to vector<32x1xf32>
    %cst_202 = arith.constant 1.000000e-24 : f32
    %399 = vector.broadcast %cst_202 : f32 to vector<32x1xf32>
    %400 = arith.maximumf %398, %399 : vector<32x1xf32>
    %401 = math.rsqrt %400 : vector<32x1xf32>
    %402 = vector.broadcast %401 : vector<32x1xf32> to vector<32x32xf32>
    %403 = arith.mulf %395, %402 : vector<32x32xf32>
    %404 = arith.mulf %403, %403 : vector<32x32xf32>
    %cst_203 = arith.constant dense<0.000000e+00> : vector<32xf32>
    %405 = vector.multi_reduction <add>, %404, %cst_203 [1] : vector<32x32xf32> to vector<32xf32>
    %406 = vector.shape_cast %405 : vector<32xf32> to vector<32x1xf32>
    %cst_204 = arith.constant 1.000000e-24 : f32
    %407 = vector.broadcast %cst_204 : f32 to vector<32x1xf32>
    %408 = arith.maximumf %406, %407 : vector<32x1xf32>
    %409 = math.rsqrt %408 : vector<32x1xf32>
    %410 = vector.broadcast %409 : vector<32x1xf32> to vector<32x32xf32>
    %411 = arith.mulf %403, %410 : vector<32x32xf32>
    %c1_205 = arith.constant 1 : index
    %c0_206 = arith.constant 0 : index
    %c0_207 = arith.constant 0 : index
    %412 = vector.load %arg9[%c1_205, %c0_206, %c0_207] : memref<2x32x32xbf16, #tpu.memory_space<vmem>>, vector<1x32x32xbf16>
    %413 = vector.shape_cast %412 : vector<1x32x32xbf16> to vector<32x32xbf16>
    %414 = arith.truncf %411 : vector<32x32xf32> to vector<32x32xbf16>
    %cst_208 = arith.constant dense<0.000000e+00> : vector<32x32xf32>
    %415 = tpu.matmul %414, %413, %cst_208 {dimension_numbers = #tpu.dot_dimension_numbers<[1], [0], [0], [1], [0, 0, 1, 1], [], []>} : vector<32x32xbf16>, vector<32x32xbf16>, vector<32x32xf32> -> vector<32x32xf32>
    %c1_209 = arith.constant 1 : index
    %c0_210 = arith.constant 0 : index
    %c0_211 = arith.constant 0 : index
    %416 = vector.load %arg10[%c1_209, %c0_210, %c0_211] : memref<2x1x32xf32, #tpu.memory_space<vmem>>, vector<1x1x32xf32>
    %417 = vector.shape_cast %416 : vector<1x1x32xf32> to vector<1x32xf32>
    %418 = vector.broadcast %417 : vector<1x32xf32> to vector<32x32xf32>
    %419 = arith.addf %415, %418 : vector<32x32xf32>
    %cst_212 = arith.constant 0.353553385 : f32
    %420 = vector.broadcast %cst_212 : f32 to vector<32x32xf32>
    %421 = arith.mulf %419, %420 : vector<32x32xf32>
    %c1_213 = arith.constant 1 : index
    %c0_214 = arith.constant 0 : index
    %c0_215 = arith.constant 0 : index
    %422 = vector.load %arg11[%c1_213, %c0_214, %c0_215] : memref<2x32x32xbf16, #tpu.memory_space<vmem>>, vector<1x32x32xbf16>
    %423 = vector.shape_cast %422 : vector<1x32x32xbf16> to vector<32x32xbf16>
    %424 = arith.truncf %411 : vector<32x32xf32> to vector<32x32xbf16>
    %cst_216 = arith.constant dense<0.000000e+00> : vector<32x32xf32>
    %425 = tpu.matmul %424, %423, %cst_216 {dimension_numbers = #tpu.dot_dimension_numbers<[1], [0], [0], [1], [0, 0, 1, 1], [], []>} : vector<32x32xbf16>, vector<32x32xbf16>, vector<32x32xf32> -> vector<32x32xf32>
    %c1_217 = arith.constant 1 : index
    %c0_218 = arith.constant 0 : index
    %c0_219 = arith.constant 0 : index
    %426 = vector.load %arg12[%c1_217, %c0_218, %c0_219] : memref<2x1x32xf32, #tpu.memory_space<vmem>>, vector<1x1x32xf32>
    %427 = vector.shape_cast %426 : vector<1x1x32xf32> to vector<1x32xf32>
    %428 = vector.broadcast %427 : vector<1x32xf32> to vector<32x32xf32>
    %429 = arith.addf %425, %428 : vector<32x32xf32>
    %c1_220 = arith.constant 1 : index
    %c0_221 = arith.constant 0 : index
    %c0_222 = arith.constant 0 : index
    %430 = vector.load %arg13[%c1_220, %c0_221, %c0_222] : memref<2x32x32xbf16, #tpu.memory_space<vmem>>, vector<1x32x32xbf16>
    %431 = vector.shape_cast %430 : vector<1x32x32xbf16> to vector<32x32xbf16>
    %432 = arith.truncf %411 : vector<32x32xf32> to vector<32x32xbf16>
    %cst_223 = arith.constant dense<0.000000e+00> : vector<32x32xf32>
    %433 = tpu.matmul %432, %431, %cst_223 {dimension_numbers = #tpu.dot_dimension_numbers<[1], [0], [0], [1], [0, 0, 1, 1], [], []>} : vector<32x32xbf16>, vector<32x32xbf16>, vector<32x32xf32> -> vector<32x32xf32>
    %c1_224 = arith.constant 1 : index
    %c0_225 = arith.constant 0 : index
    %c0_226 = arith.constant 0 : index
    %434 = vector.load %arg14[%c1_224, %c0_225, %c0_226] : memref<2x1x32xf32, #tpu.memory_space<vmem>>, vector<1x1x32xf32>
    %435 = vector.shape_cast %434 : vector<1x1x32xf32> to vector<1x32xf32>
    %436 = vector.broadcast %435 : vector<1x32xf32> to vector<32x32xf32>
    %437 = arith.addf %433, %436 : vector<32x32xf32>
    %438 = vector.shape_cast %429 : vector<32x32xf32> to vector<4x8x32xf32>
    %439 = vector.shape_cast %437 : vector<32x32xf32> to vector<4x8x32xf32>
    %440 = vector.extract_strided_slice %421 {offsets = [0, 0], sizes = [8, 32], strides = [1, 1]} : vector<32x32xf32> to vector<8x32xf32>
    %441 = vector.shape_cast %440 : vector<8x32xf32> to vector<1x8x32xf32>
    %442 = vector.broadcast %441 : vector<1x8x32xf32> to vector<4x8x32xf32>
    %443 = arith.mulf %438, %442 : vector<4x8x32xf32>
    %444 = vector.shape_cast %443 : vector<4x8x32xf32> to vector<32x32xf32>
    %445 = arith.truncf %444 : vector<32x32xf32> to vector<32x32xbf16>
    %cst_227 = arith.constant dense<0.000000e+00> : vector<32x4xf32>
    %446 = tpu.matmul %445, %197, %cst_227 {dimension_numbers = #tpu.dot_dimension_numbers<[1], [0], [0], [1], [0, 0, 1, 1], [], []>} : vector<32x32xbf16>, vector<32x4xbf16>, vector<32x4xf32> -> vector<32x4xf32>
    %447 = vector.shape_cast %446 : vector<32x4xf32> to vector<4x8x4xf32>
    %cst_228 = arith.constant dense<0xFF800000> : vector<8x4xf32>
    %448 = vector.multi_reduction <maximumf>, %447, %cst_228 [0] : vector<4x8x4xf32> to vector<8x4xf32>
    %449 = vector.shape_cast %448 : vector<8x4xf32> to vector<1x8x4xf32>
    %450 = vector.broadcast %449 : vector<1x8x4xf32> to vector<4x8x4xf32>
    %451 = arith.subf %447, %450 : vector<4x8x4xf32>
    %452 = math.exp %451 : vector<4x8x4xf32>
    %cst_229 = arith.constant dense<0.000000e+00> : vector<8x4xf32>
    %453 = vector.multi_reduction <add>, %452, %cst_229 [0] : vector<4x8x4xf32> to vector<8x4xf32>
    %454 = tpu.reciprocal %453 {approx = true} : vector<8x4xf32> -> vector<8x4xf32>
    %455 = vector.shape_cast %454 : vector<8x4xf32> to vector<1x8x4xf32>
    %456 = vector.broadcast %455 : vector<1x8x4xf32> to vector<4x8x4xf32>
    %457 = arith.mulf %452, %456 : vector<4x8x4xf32>
    %458 = vector.shape_cast %457 : vector<4x8x4xf32> to vector<32x4xf32>
    %459 = arith.truncf %458 : vector<32x4xf32> to vector<32x4xbf16>
    %cst_230 = arith.constant dense<0.000000e+00> : vector<32x32xf32>
    %460 = tpu.matmul %459, %198, %cst_230 {dimension_numbers = #tpu.dot_dimension_numbers<[1], [0], [0], [1], [0, 0, 1, 1], [], []>} : vector<32x4xbf16>, vector<4x32xbf16>, vector<32x32xf32> -> vector<32x32xf32>
    %461 = vector.shape_cast %460 : vector<32x32xf32> to vector<4x8x32xf32>
    %462 = arith.mulf %461, %439 : vector<4x8x32xf32>
    %cst_231 = arith.constant dense<0.000000e+00> : vector<8x32xf32>
    %463 = vector.multi_reduction <add>, %462, %cst_231 [0] : vector<4x8x32xf32> to vector<8x32xf32>
    %c0_232 = arith.constant 0 : index
    %c0_233 = arith.constant 0 : index
    %464 = vector.load %arg31[%c0_232, %c0_233] : memref<32x32xf32, #tpu.memory_space<vmem>>, vector<8x32xf32>
    tpu.vector_store %arg31[%c0_232, %c0_233], %463 {strides = array<i32>} : memref<32x32xf32, #tpu.memory_space<vmem>>, vector<8x32xf32>,
    %465 = vector.extract_strided_slice %421 {offsets = [8, 0], sizes = [8, 32], strides = [1, 1]} : vector<32x32xf32> to vector<8x32xf32>
    %466 = vector.shape_cast %465 : vector<8x32xf32> to vector<1x8x32xf32>
    %467 = vector.broadcast %466 : vector<1x8x32xf32> to vector<4x8x32xf32>
    %468 = arith.mulf %438, %467 : vector<4x8x32xf32>
    %469 = vector.shape_cast %468 : vector<4x8x32xf32> to vector<32x32xf32>
    %470 = arith.truncf %469 : vector<32x32xf32> to vector<32x32xbf16>
    %cst_234 = arith.constant dense<0.000000e+00> : vector<32x4xf32>
    %471 = tpu.matmul %470, %197, %cst_234 {dimension_numbers = #tpu.dot_dimension_numbers<[1], [0], [0], [1], [0, 0, 1, 1], [], []>} : vector<32x32xbf16>, vector<32x4xbf16>, vector<32x4xf32> -> vector<32x4xf32>
    %472 = vector.shape_cast %471 : vector<32x4xf32> to vector<4x8x4xf32>
    %cst_235 = arith.constant dense<0xFF800000> : vector<8x4xf32>
    %473 = vector.multi_reduction <maximumf>, %472, %cst_235 [0] : vector<4x8x4xf32> to vector<8x4xf32>
    %474 = vector.shape_cast %473 : vector<8x4xf32> to vector<1x8x4xf32>
    %475 = vector.broadcast %474 : vector<1x8x4xf32> to vector<4x8x4xf32>
    %476 = arith.subf %472, %475 : vector<4x8x4xf32>
    %477 = math.exp %476 : vector<4x8x4xf32>
    %cst_236 = arith.constant dense<0.000000e+00> : vector<8x4xf32>
    %478 = vector.multi_reduction <add>, %477, %cst_236 [0] : vector<4x8x4xf32> to vector<8x4xf32>
    %479 = tpu.reciprocal %478 {approx = true} : vector<8x4xf32> -> vector<8x4xf32>
    %480 = vector.shape_cast %479 : vector<8x4xf32> to vector<1x8x4xf32>
    %481 = vector.broadcast %480 : vector<1x8x4xf32> to vector<4x8x4xf32>
    %482 = arith.mulf %477, %481 : vector<4x8x4xf32>
    %483 = vector.shape_cast %482 : vector<4x8x4xf32> to vector<32x4xf32>
    %484 = arith.truncf %483 : vector<32x4xf32> to vector<32x4xbf16>
    %cst_237 = arith.constant dense<0.000000e+00> : vector<32x32xf32>
    %485 = tpu.matmul %484, %198, %cst_237 {dimension_numbers = #tpu.dot_dimension_numbers<[1], [0], [0], [1], [0, 0, 1, 1], [], []>} : vector<32x4xbf16>, vector<4x32xbf16>, vector<32x32xf32> -> vector<32x32xf32>
    %486 = vector.shape_cast %485 : vector<32x32xf32> to vector<4x8x32xf32>
    %487 = arith.mulf %486, %439 : vector<4x8x32xf32>
    %cst_238 = arith.constant dense<0.000000e+00> : vector<8x32xf32>
    %488 = vector.multi_reduction <add>, %487, %cst_238 [0] : vector<4x8x32xf32> to vector<8x32xf32>
    %c8_239 = arith.constant 8 : index
    %c0_240 = arith.constant 0 : index
    %489 = vector.load %arg31[%c8_239, %c0_240] : memref<32x32xf32, #tpu.memory_space<vmem>>, vector<8x32xf32>
    tpu.vector_store %arg31[%c8_239, %c0_240], %488 {strides = array<i32>} : memref<32x32xf32, #tpu.memory_space<vmem>>, vector<8x32xf32>,
    %490 = vector.extract_strided_slice %421 {offsets = [16, 0], sizes = [8, 32], strides = [1, 1]} : vector<32x32xf32> to vector<8x32xf32>
    %491 = vector.shape_cast %490 : vector<8x32xf32> to vector<1x8x32xf32>
    %492 = vector.broadcast %491 : vector<1x8x32xf32> to vector<4x8x32xf32>
    %493 = arith.mulf %438, %492 : vector<4x8x32xf32>
    %494 = vector.shape_cast %493 : vector<4x8x32xf32> to vector<32x32xf32>
    %495 = arith.truncf %494 : vector<32x32xf32> to vector<32x32xbf16>
    %cst_241 = arith.constant dense<0.000000e+00> : vector<32x4xf32>
    %496 = tpu.matmul %495, %197, %cst_241 {dimension_numbers = #tpu.dot_dimension_numbers<[1], [0], [0], [1], [0, 0, 1, 1], [], []>} : vector<32x32xbf16>, vector<32x4xbf16>, vector<32x4xf32> -> vector<32x4xf32>
    %497 = vector.shape_cast %496 : vector<32x4xf32> to vector<4x8x4xf32>
    %cst_242 = arith.constant dense<0xFF800000> : vector<8x4xf32>
    %498 = vector.multi_reduction <maximumf>, %497, %cst_242 [0] : vector<4x8x4xf32> to vector<8x4xf32>
    %499 = vector.shape_cast %498 : vector<8x4xf32> to vector<1x8x4xf32>
    %500 = vector.broadcast %499 : vector<1x8x4xf32> to vector<4x8x4xf32>
    %501 = arith.subf %497, %500 : vector<4x8x4xf32>
    %502 = math.exp %501 : vector<4x8x4xf32>
    %cst_243 = arith.constant dense<0.000000e+00> : vector<8x4xf32>
    %503 = vector.multi_reduction <add>, %502, %cst_243 [0] : vector<4x8x4xf32> to vector<8x4xf32>
    %504 = tpu.reciprocal %503 {approx = true} : vector<8x4xf32> -> vector<8x4xf32>
    %505 = vector.shape_cast %504 : vector<8x4xf32> to vector<1x8x4xf32>
    %506 = vector.broadcast %505 : vector<1x8x4xf32> to vector<4x8x4xf32>
    %507 = arith.mulf %502, %506 : vector<4x8x4xf32>
    %508 = vector.shape_cast %507 : vector<4x8x4xf32> to vector<32x4xf32>
    %509 = arith.truncf %508 : vector<32x4xf32> to vector<32x4xbf16>
    %cst_244 = arith.constant dense<0.000000e+00> : vector<32x32xf32>
    %510 = tpu.matmul %509, %198, %cst_244 {dimension_numbers = #tpu.dot_dimension_numbers<[1], [0], [0], [1], [0, 0, 1, 1], [], []>} : vector<32x4xbf16>, vector<4x32xbf16>, vector<32x32xf32> -> vector<32x32xf32>
    %511 = vector.shape_cast %510 : vector<32x32xf32> to vector<4x8x32xf32>
    %512 = arith.mulf %511, %439 : vector<4x8x32xf32>
    %cst_245 = arith.constant dense<0.000000e+00> : vector<8x32xf32>
    %513 = vector.multi_reduction <add>, %512, %cst_245 [0] : vector<4x8x32xf32> to vector<8x32xf32>
    %c16_246 = arith.constant 16 : index
    %c0_247 = arith.constant 0 : index
    %514 = vector.load %arg31[%c16_246, %c0_247] : memref<32x32xf32, #tpu.memory_space<vmem>>, vector<8x32xf32>
    tpu.vector_store %arg31[%c16_246, %c0_247], %513 {strides = array<i32>} : memref<32x32xf32, #tpu.memory_space<vmem>>, vector<8x32xf32>,
    %515 = vector.extract_strided_slice %421 {offsets = [24, 0], sizes = [8, 32], strides = [1, 1]} : vector<32x32xf32> to vector<8x32xf32>
    %516 = vector.shape_cast %515 : vector<8x32xf32> to vector<1x8x32xf32>
    %517 = vector.broadcast %516 : vector<1x8x32xf32> to vector<4x8x32xf32>
    %518 = arith.mulf %438, %517 : vector<4x8x32xf32>
    %519 = vector.shape_cast %518 : vector<4x8x32xf32> to vector<32x32xf32>
    %520 = arith.truncf %519 : vector<32x32xf32> to vector<32x32xbf16>
    %cst_248 = arith.constant dense<0.000000e+00> : vector<32x4xf32>
    %521 = tpu.matmul %520, %197, %cst_248 {dimension_numbers = #tpu.dot_dimension_numbers<[1], [0], [0], [1], [0, 0, 1, 1], [], []>} : vector<32x32xbf16>, vector<32x4xbf16>, vector<32x4xf32> -> vector<32x4xf32>
    %522 = vector.shape_cast %521 : vector<32x4xf32> to vector<4x8x4xf32>
    %cst_249 = arith.constant dense<0xFF800000> : vector<8x4xf32>
    %523 = vector.multi_reduction <maximumf>, %522, %cst_249 [0] : vector<4x8x4xf32> to vector<8x4xf32>
    %524 = vector.shape_cast %523 : vector<8x4xf32> to vector<1x8x4xf32>
    %525 = vector.broadcast %524 : vector<1x8x4xf32> to vector<4x8x4xf32>
    %526 = arith.subf %522, %525 : vector<4x8x4xf32>
    %527 = math.exp %526 : vector<4x8x4xf32>
    %cst_250 = arith.constant dense<0.000000e+00> : vector<8x4xf32>
    %528 = vector.multi_reduction <add>, %527, %cst_250 [0] : vector<4x8x4xf32> to vector<8x4xf32>
    %529 = tpu.reciprocal %528 {approx = true} : vector<8x4xf32> -> vector<8x4xf32>
    %530 = vector.shape_cast %529 : vector<8x4xf32> to vector<1x8x4xf32>
    %531 = vector.broadcast %530 : vector<1x8x4xf32> to vector<4x8x4xf32>
    %532 = arith.mulf %527, %531 : vector<4x8x4xf32>
    %533 = vector.shape_cast %532 : vector<4x8x4xf32> to vector<32x4xf32>
    %534 = arith.truncf %533 : vector<32x4xf32> to vector<32x4xbf16>
    %cst_251 = arith.constant dense<0.000000e+00> : vector<32x32xf32>
    %535 = tpu.matmul %534, %198, %cst_251 {dimension_numbers = #tpu.dot_dimension_numbers<[1], [0], [0], [1], [0, 0, 1, 1], [], []>} : vector<32x4xbf16>, vector<4x32xbf16>, vector<32x32xf32> -> vector<32x32xf32>
    %536 = vector.shape_cast %535 : vector<32x32xf32> to vector<4x8x32xf32>
    %537 = arith.mulf %536, %439 : vector<4x8x32xf32>
    %cst_252 = arith.constant dense<0.000000e+00> : vector<8x32xf32>
    %538 = vector.multi_reduction <add>, %537, %cst_252 [0] : vector<4x8x32xf32> to vector<8x32xf32>
    %c24_253 = arith.constant 24 : index
    %c0_254 = arith.constant 0 : index
    %539 = vector.load %arg31[%c24_253, %c0_254] : memref<32x32xf32, #tpu.memory_space<vmem>>, vector<8x32xf32>
    tpu.vector_store %arg31[%c24_253, %c0_254], %538 {strides = array<i32>} : memref<32x32xf32, #tpu.memory_space<vmem>>, vector<8x32xf32>,
    %c0_255 = arith.constant 0 : index
    %c0_256 = arith.constant 0 : index
    %540 = vector.load %arg31[%c0_255, %c0_256] : memref<32x32xf32, #tpu.memory_space<vmem>>, vector<32x32xf32>
    %c1_257 = arith.constant 1 : index
    %c0_258 = arith.constant 0 : index
    %c0_259 = arith.constant 0 : index
    %541 = vector.load %arg17[%c1_257, %c0_258, %c0_259] : memref<2x32x32xbf16, #tpu.memory_space<vmem>>, vector<1x32x32xbf16>
    %542 = vector.shape_cast %541 : vector<1x32x32xbf16> to vector<32x32xbf16>
    %543 = arith.truncf %540 : vector<32x32xf32> to vector<32x32xbf16>
    %cst_260 = arith.constant dense<0.000000e+00> : vector<32x32xf32>
    %544 = tpu.matmul %543, %542, %cst_260 {dimension_numbers = #tpu.dot_dimension_numbers<[1], [0], [0], [1], [0, 0, 1, 1], [], []>} : vector<32x32xbf16>, vector<32x32xbf16>, vector<32x32xf32> -> vector<32x32xf32>
    %c1_261 = arith.constant 1 : index
    %c0_262 = arith.constant 0 : index
    %c0_263 = arith.constant 0 : index
    %545 = vector.load %arg18[%c1_261, %c0_262, %c0_263] : memref<2x1x32xf32, #tpu.memory_space<vmem>>, vector<1x1x32xf32>
    %546 = vector.shape_cast %545 : vector<1x1x32xf32> to vector<1x32xf32>
    %547 = vector.broadcast %546 : vector<1x32xf32> to vector<32x32xf32>
    %548 = arith.addf %544, %547 : vector<32x32xf32>
    %549 = arith.mulf %548, %548 : vector<32x32xf32>
    %cst_264 = arith.constant dense<0.000000e+00> : vector<32xf32>
    %550 = vector.multi_reduction <add>, %549, %cst_264 [1] : vector<32x32xf32> to vector<32xf32>
    %551 = vector.shape_cast %550 : vector<32xf32> to vector<32x1xf32>
    %cst_265 = arith.constant 1.000000e-24 : f32
    %552 = vector.broadcast %cst_265 : f32 to vector<32x1xf32>
    %553 = arith.maximumf %551, %552 : vector<32x1xf32>
    %554 = math.rsqrt %553 : vector<32x1xf32>
    %555 = vector.broadcast %554 : vector<32x1xf32> to vector<32x32xf32>
    %556 = arith.mulf %548, %555 : vector<32x32xf32>
    %c1_266 = arith.constant 1 : index
    %557 = memref.load %arg23[%c1_266] : memref<2xf32, #tpu.memory_space<smem>>
    %558 = arith.subf %556, %411 : vector<32x32xf32>
    %559 = vector.broadcast %557 : f32 to vector<32x32xf32>
    %560 = arith.mulf %559, %558 : vector<32x32xf32>
    %561 = arith.addf %411, %560 : vector<32x32xf32>
    %562 = arith.mulf %561, %561 : vector<32x32xf32>
    %cst_267 = arith.constant dense<0.000000e+00> : vector<32xf32>
    %563 = vector.multi_reduction <add>, %562, %cst_267 [1] : vector<32x32xf32> to vector<32xf32>
    %564 = vector.shape_cast %563 : vector<32xf32> to vector<32x1xf32>
    %cst_268 = arith.constant 1.000000e-24 : f32
    %565 = vector.broadcast %cst_268 : f32 to vector<32x1xf32>
    %566 = arith.maximumf %564, %565 : vector<32x1xf32>
    %567 = math.rsqrt %566 : vector<32x1xf32>
    %568 = vector.broadcast %567 : vector<32x1xf32> to vector<32x32xf32>
    %569 = arith.mulf %561, %568 : vector<32x32xf32>
    %c1_269 = arith.constant 1 : index
    %c0_270 = arith.constant 0 : index
    %c0_271 = arith.constant 0 : index
    %570 = vector.load %arg19[%c1_269, %c0_270, %c0_271] : memref<2x32x64xbf16, #tpu.memory_space<vmem>>, vector<1x32x64xbf16>
    %571 = vector.shape_cast %570 : vector<1x32x64xbf16> to vector<32x64xbf16>
    %572 = arith.truncf %569 : vector<32x32xf32> to vector<32x32xbf16>
    %cst_272 = arith.constant dense<0.000000e+00> : vector<32x64xf32>
    %573 = tpu.matmul %572, %571, %cst_272 {dimension_numbers = #tpu.dot_dimension_numbers<[1], [0], [0], [1], [0, 0, 1, 1], [], []>} : vector<32x32xbf16>, vector<32x64xbf16>, vector<32x64xf32> -> vector<32x64xf32>
    %c1_273 = arith.constant 1 : index
    %c0_274 = arith.constant 0 : index
    %c0_275 = arith.constant 0 : index
    %574 = vector.load %arg20[%c1_273, %c0_274, %c0_275] : memref<2x1x64xf32, #tpu.memory_space<vmem>>, vector<1x1x64xf32>
    %575 = vector.shape_cast %574 : vector<1x1x64xf32> to vector<1x64xf32>
    %576 = vector.broadcast %575 : vector<1x64xf32> to vector<32x64xf32>
    %577 = arith.addf %573, %576 : vector<32x64xf32>
    %cst_276 = arith.constant 0.000000e+00 : f32
    %578 = vector.broadcast %cst_276 : f32 to vector<32x64xf32>
    %579 = arith.maximumf %577, %578 : vector<32x64xf32>
    %c1_277 = arith.constant 1 : index
    %c0_278 = arith.constant 0 : index
    %c0_279 = arith.constant 0 : index
    %580 = vector.load %arg21[%c1_277, %c0_278, %c0_279] : memref<2x64x32xbf16, #tpu.memory_space<vmem>>, vector<1x64x32xbf16>
    %581 = vector.shape_cast %580 : vector<1x64x32xbf16> to vector<64x32xbf16>
    %582 = arith.truncf %579 : vector<32x64xf32> to vector<32x64xbf16>
    %cst_280 = arith.constant dense<0.000000e+00> : vector<32x32xf32>
    %583 = tpu.matmul %582, %581, %cst_280 {dimension_numbers = #tpu.dot_dimension_numbers<[1], [0], [0], [1], [0, 0, 1, 1], [], []>} : vector<32x64xbf16>, vector<64x32xbf16>, vector<32x32xf32> -> vector<32x32xf32>
    %c1_281 = arith.constant 1 : index
    %c0_282 = arith.constant 0 : index
    %c0_283 = arith.constant 0 : index
    %584 = vector.load %arg22[%c1_281, %c0_282, %c0_283] : memref<2x1x32xf32, #tpu.memory_space<vmem>>, vector<1x1x32xf32>
    %585 = vector.shape_cast %584 : vector<1x1x32xf32> to vector<1x32xf32>
    %586 = vector.broadcast %585 : vector<1x32xf32> to vector<32x32xf32>
    %587 = arith.addf %583, %586 : vector<32x32xf32>
    %588 = arith.mulf %587, %587 : vector<32x32xf32>
    %cst_284 = arith.constant dense<0.000000e+00> : vector<32xf32>
    %589 = vector.multi_reduction <add>, %588, %cst_284 [1] : vector<32x32xf32> to vector<32xf32>
    %590 = vector.shape_cast %589 : vector<32xf32> to vector<32x1xf32>
    %cst_285 = arith.constant 1.000000e-24 : f32
    %591 = vector.broadcast %cst_285 : f32 to vector<32x1xf32>
    %592 = arith.maximumf %590, %591 : vector<32x1xf32>
    %593 = math.rsqrt %592 : vector<32x1xf32>
    %594 = vector.broadcast %593 : vector<32x1xf32> to vector<32x32xf32>
    %595 = arith.mulf %587, %594 : vector<32x32xf32>
    %c1_286 = arith.constant 1 : index
    %596 = memref.load %arg24[%c1_286] : memref<2xf32, #tpu.memory_space<smem>>
    %597 = arith.subf %595, %569 : vector<32x32xf32>
    %598 = vector.broadcast %596 : f32 to vector<32x32xf32>
    %599 = arith.mulf %598, %597 : vector<32x32xf32>
    %600 = arith.addf %569, %599 : vector<32x32xf32>
    %601 = arith.mulf %600, %600 : vector<32x32xf32>
    %cst_287 = arith.constant dense<0.000000e+00> : vector<32xf32>
    %602 = vector.multi_reduction <add>, %601, %cst_287 [1] : vector<32x32xf32> to vector<32xf32>
    %603 = vector.shape_cast %602 : vector<32xf32> to vector<32x1xf32>
    %cst_288 = arith.constant 1.000000e-24 : f32
    %604 = vector.broadcast %cst_288 : f32 to vector<32x1xf32>
    %605 = arith.maximumf %603, %604 : vector<32x1xf32>
    %606 = math.rsqrt %605 : vector<32x1xf32>
    %607 = vector.broadcast %606 : vector<32x1xf32> to vector<32x32xf32>
    %608 = arith.mulf %600, %607 : vector<32x32xf32>
    %609 = vector.shape_cast %608 : vector<32x32xf32> to vector<4x8x32xf32>
    %cst_289 = arith.constant dense<0.000000e+00> : vector<8x32xf32>
    %610 = vector.multi_reduction <add>, %609, %cst_289 [0] : vector<4x8x32xf32> to vector<8x32xf32>
    %cst_290 = arith.constant 2.500000e-01 : f32
    %611 = vector.broadcast %cst_290 : f32 to vector<8x32xf32>
    %612 = arith.mulf %610, %611 : vector<8x32xf32>
    %c0_291 = arith.constant 0 : index
    %c0_292 = arith.constant 0 : index
    %613 = vector.load %arg27[%c0_291, %c0_292] : memref<32x32xbf16, #tpu.memory_space<vmem>>, vector<32x32xbf16>
    %614 = arith.truncf %612 : vector<8x32xf32> to vector<8x32xbf16>
    %cst_293 = arith.constant dense<0.000000e+00> : vector<8x32xf32>
    %615 = tpu.matmul %614, %613, %cst_293 {dimension_numbers = #tpu.dot_dimension_numbers<[1], [0], [0], [1], [0, 0, 1, 1], [], []>} : vector<8x32xbf16>, vector<32x32xbf16>, vector<8x32xf32> -> vector<8x32xf32>
    %c0_294 = arith.constant 0 : index
    %c0_295 = arith.constant 0 : index
    %616 = vector.load %arg28[%c0_294, %c0_295] : memref<1x32xf32, #tpu.memory_space<vmem>>, vector<1x32xf32>
    %617 = vector.broadcast %616 : vector<1x32xf32> to vector<8x32xf32>
    %618 = arith.addf %615, %617 : vector<8x32xf32>
    %cst_296 = arith.constant 0.000000e+00 : f32
    %619 = vector.broadcast %cst_296 : f32 to vector<8x32xf32>
    %620 = arith.maximumf %618, %619 : vector<8x32xf32>
    %c0_297 = arith.constant 0 : index
    %c0_298 = arith.constant 0 : index
    %621 = vector.load %arg25[%c0_297, %c0_298] : memref<32x128xbf16, #tpu.memory_space<vmem>>, vector<32x128xbf16>
    %622 = arith.truncf %612 : vector<8x32xf32> to vector<8x32xbf16>
    %cst_299 = arith.constant dense<0.000000e+00> : vector<8x128xf32>
    %623 = tpu.matmul %622, %621, %cst_299 {dimension_numbers = #tpu.dot_dimension_numbers<[1], [0], [0], [1], [0, 0, 1, 1], [], []>} : vector<8x32xbf16>, vector<32x128xbf16>, vector<8x128xf32> -> vector<8x128xf32>
    %c0_300 = arith.constant 0 : index
    %c0_301 = arith.constant 0 : index
    %624 = vector.load %arg29[%c0_300, %c0_301] : memref<32x128xbf16, #tpu.memory_space<vmem>>, vector<32x128xbf16>
    %625 = arith.truncf %620 : vector<8x32xf32> to vector<8x32xbf16>
    %cst_302 = arith.constant dense<0.000000e+00> : vector<8x128xf32>
    %626 = tpu.matmul %625, %624, %cst_302 {dimension_numbers = #tpu.dot_dimension_numbers<[1], [0], [0], [1], [0, 0, 1, 1], [], []>} : vector<8x32xbf16>, vector<32x128xbf16>, vector<8x128xf32> -> vector<8x128xf32>
    %627 = arith.addf %623, %626 : vector<8x128xf32>
    %c0_303 = arith.constant 0 : index
    %c0_304 = arith.constant 0 : index
    %628 = vector.load %arg26[%c0_303, %c0_304] : memref<1x128xf32, #tpu.memory_space<vmem>>, vector<1x128xf32>
    %629 = vector.broadcast %628 : vector<1x128xf32> to vector<8x128xf32>
    %630 = arith.addf %627, %629 : vector<8x128xf32>
    %c0_305 = arith.constant 0 : index
    %c0_306 = arith.constant 0 : index
    %631 = vector.load %arg30[%c0_305, %c0_306] : memref<8x128xf32, #tpu.memory_space<vmem>>, vector<8x128xf32>
    tpu.vector_store %arg30[%c0_305, %c0_306], %630 {strides = array<i32>} : memref<8x128xf32, #tpu.memory_space<vmem>>, vector<8x128xf32>,
    return
  }
  func.func @transform_0(%arg0: i32) -> (i32, i32) {
    %c0_i32 = arith.constant 0 : i32
    %c0_i32_0 = arith.constant 0 : i32
    return %arg0, %c0_i32 : i32, i32
  }
  func.func @transform_1(%arg0: i32) -> (i32, i32) {
    %c0_i32 = arith.constant 0 : i32
    %c0_i32_0 = arith.constant 0 : i32
    %c0_i32_1 = arith.constant 0 : i32
    return %c0_i32, %c0_i32_0 : i32, i32
  }
  func.func @transform_2(%arg0: i32) -> (i32, i32) {
    %c0_i32 = arith.constant 0 : i32
    %c0_i32_0 = arith.constant 0 : i32
    %c0_i32_1 = arith.constant 0 : i32
    return %c0_i32, %c0_i32_0 : i32, i32
  }
  func.func @transform_3(%arg0: i32) -> (i32, i32, i32) {
    %c0_i32 = arith.constant 0 : i32
    %c0_i32_0 = arith.constant 0 : i32
    %c0_i32_1 = arith.constant 0 : i32
    %c0_i32_2 = arith.constant 0 : i32
    return %c0_i32, %c0_i32_0, %c0_i32_1 : i32, i32, i32
  }
  func.func @transform_4(%arg0: i32) -> (i32, i32, i32) {
    %c0_i32 = arith.constant 0 : i32
    %c0_i32_0 = arith.constant 0 : i32
    %c0_i32_1 = arith.constant 0 : i32
    %c0_i32_2 = arith.constant 0 : i32
    return %c0_i32, %c0_i32_0, %c0_i32_1 : i32, i32, i32
  }
  func.func @transform_5(%arg0: i32) -> (i32, i32, i32) {
    %c0_i32 = arith.constant 0 : i32
    %c0_i32_0 = arith.constant 0 : i32
    %c0_i32_1 = arith.constant 0 : i32
    %c0_i32_2 = arith.constant 0 : i32
    return %c0_i32, %c0_i32_0, %c0_i32_1 : i32, i32, i32
  }
  func.func @transform_6(%arg0: i32) -> (i32, i32, i32) {
    %c0_i32 = arith.constant 0 : i32
    %c0_i32_0 = arith.constant 0 : i32
    %c0_i32_1 = arith.constant 0 : i32
    %c0_i32_2 = arith.constant 0 : i32
    return %c0_i32, %c0_i32_0, %c0_i32_1 : i32, i32, i32
  }
  func.func @transform_7(%arg0: i32) -> (i32, i32, i32) {
    %c0_i32 = arith.constant 0 : i32
    %c0_i32_0 = arith.constant 0 : i32
    %c0_i32_1 = arith.constant 0 : i32
    %c0_i32_2 = arith.constant 0 : i32
    return %c0_i32, %c0_i32_0, %c0_i32_1 : i32, i32, i32
  }
  func.func @transform_8(%arg0: i32) -> (i32, i32, i32) {
    %c0_i32 = arith.constant 0 : i32
    %c0_i32_0 = arith.constant 0 : i32
    %c0_i32_1 = arith.constant 0 : i32
    %c0_i32_2 = arith.constant 0 : i32
    return %c0_i32, %c0_i32_0, %c0_i32_1 : i32, i32, i32
  }
  func.func @transform_9(%arg0: i32) -> (i32, i32, i32) {
    %c0_i32 = arith.constant 0 : i32
    %c0_i32_0 = arith.constant 0 : i32
    %c0_i32_1 = arith.constant 0 : i32
    %c0_i32_2 = arith.constant 0 : i32
    return %c0_i32, %c0_i32_0, %c0_i32_1 : i32, i32, i32
  }
  func.func @transform_10(%arg0: i32) -> (i32, i32, i32) {
    %c0_i32 = arith.constant 0 : i32
    %c0_i32_0 = arith.constant 0 : i32
    %c0_i32_1 = arith.constant 0 : i32
    %c0_i32_2 = arith.constant 0 : i32
    return %c0_i32, %c0_i32_0, %c0_i32_1 : i32, i32, i32
  }
  func.func @transform_11(%arg0: i32) -> (i32, i32, i32) {
    %c0_i32 = arith.constant 0 : i32
    %c0_i32_0 = arith.constant 0 : i32
    %c0_i32_1 = arith.constant 0 : i32
    %c0_i32_2 = arith.constant 0 : i32
    return %c0_i32, %c0_i32_0, %c0_i32_1 : i32, i32, i32
  }
  func.func @transform_12(%arg0: i32) -> (i32, i32, i32) {
    %c0_i32 = arith.constant 0 : i32
    %c0_i32_0 = arith.constant 0 : i32
    %c0_i32_1 = arith.constant 0 : i32
    %c0_i32_2 = arith.constant 0 : i32
    return %c0_i32, %c0_i32_0, %c0_i32_1 : i32, i32, i32
  }
  func.func @transform_13(%arg0: i32) -> (i32, i32, i32) {
    %c0_i32 = arith.constant 0 : i32
    %c0_i32_0 = arith.constant 0 : i32
    %c0_i32_1 = arith.constant 0 : i32
    %c0_i32_2 = arith.constant 0 : i32
    return %c0_i32, %c0_i32_0, %c0_i32_1 : i32, i32, i32
  }
  func.func @transform_14(%arg0: i32) -> (i32, i32) {
    %c0_i32 = arith.constant 0 : i32
    %c0_i32_0 = arith.constant 0 : i32
    %c0_i32_1 = arith.constant 0 : i32
    return %c0_i32, %c0_i32_0 : i32, i32
  }
  func.func @transform_15(%arg0: i32) -> (i32, i32) {
    %c0_i32 = arith.constant 0 : i32
    %c0_i32_0 = arith.constant 0 : i32
    %c0_i32_1 = arith.constant 0 : i32
    return %c0_i32, %c0_i32_0 : i32, i32
  }
  func.func @transform_16(%arg0: i32) -> (i32, i32, i32) {
    %c0_i32 = arith.constant 0 : i32
    %c0_i32_0 = arith.constant 0 : i32
    %c0_i32_1 = arith.constant 0 : i32
    %c0_i32_2 = arith.constant 0 : i32
    return %c0_i32, %c0_i32_0, %c0_i32_1 : i32, i32, i32
  }
  func.func @transform_17(%arg0: i32) -> (i32, i32, i32) {
    %c0_i32 = arith.constant 0 : i32
    %c0_i32_0 = arith.constant 0 : i32
    %c0_i32_1 = arith.constant 0 : i32
    %c0_i32_2 = arith.constant 0 : i32
    return %c0_i32, %c0_i32_0, %c0_i32_1 : i32, i32, i32
  }
  func.func @transform_18(%arg0: i32) -> (i32, i32, i32) {
    %c0_i32 = arith.constant 0 : i32
    %c0_i32_0 = arith.constant 0 : i32
    %c0_i32_1 = arith.constant 0 : i32
    %c0_i32_2 = arith.constant 0 : i32
    return %c0_i32, %c0_i32_0, %c0_i32_1 : i32, i32, i32
  }
  func.func @transform_19(%arg0: i32) -> (i32, i32, i32) {
    %c0_i32 = arith.constant 0 : i32
    %c0_i32_0 = arith.constant 0 : i32
    %c0_i32_1 = arith.constant 0 : i32
    %c0_i32_2 = arith.constant 0 : i32
    return %c0_i32, %c0_i32_0, %c0_i32_1 : i32, i32, i32
  }
  func.func @transform_20(%arg0: i32) -> (i32, i32, i32) {
    %c0_i32 = arith.constant 0 : i32
    %c0_i32_0 = arith.constant 0 : i32
    %c0_i32_1 = arith.constant 0 : i32
    %c0_i32_2 = arith.constant 0 : i32
    return %c0_i32, %c0_i32_0, %c0_i32_1 : i32, i32, i32
  }
  func.func @transform_21(%arg0: i32) -> (i32, i32, i32) {
    %c0_i32 = arith.constant 0 : i32
    %c0_i32_0 = arith.constant 0 : i32
    %c0_i32_1 = arith.constant 0 : i32
    %c0_i32_2 = arith.constant 0 : i32
    return %c0_i32, %c0_i32_0, %c0_i32_1 : i32, i32, i32
  }
  func.func @transform_22(%arg0: i32) -> i32 {
    %c0_i32 = arith.constant 0 : i32
    %c0_i32_0 = arith.constant 0 : i32
    return %c0_i32 : i32
  }
  func.func @transform_23(%arg0: i32) -> i32 {
    %c0_i32 = arith.constant 0 : i32
    %c0_i32_0 = arith.constant 0 : i32
    return %c0_i32 : i32
  }
  func.func @transform_24(%arg0: i32) -> (i32, i32) {
    %c0_i32 = arith.constant 0 : i32
    %c0_i32_0 = arith.constant 0 : i32
    %c0_i32_1 = arith.constant 0 : i32
    return %c0_i32, %c0_i32_0 : i32, i32
  }
  func.func @transform_25(%arg0: i32) -> (i32, i32) {
    %c0_i32 = arith.constant 0 : i32
    %c0_i32_0 = arith.constant 0 : i32
    %c0_i32_1 = arith.constant 0 : i32
    return %c0_i32, %c0_i32_0 : i32, i32
  }
  func.func @transform_26(%arg0: i32) -> (i32, i32) {
    %c0_i32 = arith.constant 0 : i32
    %c0_i32_0 = arith.constant 0 : i32
    %c0_i32_1 = arith.constant 0 : i32
    return %c0_i32, %c0_i32_0 : i32, i32
  }
  func.func @transform_27(%arg0: i32) -> (i32, i32) {
    %c0_i32 = arith.constant 0 : i32
    %c0_i32_0 = arith.constant 0 : i32
    %c0_i32_1 = arith.constant 0 : i32
    return %c0_i32, %c0_i32_0 : i32, i32
  }
  func.func @transform_28(%arg0: i32) -> (i32, i32) {
    %c0_i32 = arith.constant 0 : i32
    %c0_i32_0 = arith.constant 0 : i32
    %c0_i32_1 = arith.constant 0 : i32
    return %c0_i32, %c0_i32_0 : i32, i32
  }
  func.func @transform_29(%arg0: i32) -> (i32, i32) {
    %c0_i32 = arith.constant 0 : i32
    %c0_i32_0 = arith.constant 0 : i32
    return %arg0, %c0_i32 : i32, i32
  }
}

</mosaic_0001>

<llo_original>
// kernel: tpu_custom_call.1
$region0: #{tpu_custom_call.1}
  #allocation0 [shape = 'u32[]', space=smem, size = 0x4, offset = 0x4, fixed_abs, tag = 'smem constant byte address 0x4 - core index']
  #allocation1 [shape = 'u32[144,128]{1,0:T(1,128)}', space=vmem, size = 0x12000, scoped, tag = 'internal scratch']
  #allocation2 [shape = 'f32[32,32]{1,0:T(8,128)}', space=vmem, size = 0x4000, scoped, tag = 'scratch operand']
  %s0 = inlined_call_operand.smem [shape: u32[30], index: -1, kind: input, shape index: {}]
  %s1 = sld [smem:[%s0]]
  %s2 = scalar_lea.smem %s0, 1
  %s3 = sld [smem:[%s2]]
  %s4 = scalar_lea.smem %s0, 2
  %s5 = sld [smem:[%s4]]
  %s6 = scalar_lea.smem %s0, 3
  %s7 = sld [smem:[%s6]]
  %s8 = scalar_lea.smem %s0, 4
  %s9 = sld [smem:[%s8]]
  %s10 = scalar_lea.smem %s0, 5
  %s11 = sld [smem:[%s10]]
  %s12 = scalar_lea.smem %s0, 6
  %s13 = sld [smem:[%s12]]
  %s14 = scalar_lea.smem %s0, 7
  %s15 = sld [smem:[%s14]]
  %s16 = scalar_lea.smem %s0, 8
  %s17 = sld [smem:[%s16]]
  %s18 = scalar_lea.smem %s0, 9
  %s19 = sld [smem:[%s18]]
  %s20 = scalar_lea.smem %s0, 10
  %s21 = sld [smem:[%s20]]
  %s22 = scalar_lea.smem %s0, 11
  %s23 = sld [smem:[%s22]]
  %s24 = scalar_lea.smem %s0, 12
  %s25 = sld [smem:[%s24]]
  %s26 = scalar_lea.smem %s0, 13
  %s27 = sld [smem:[%s26]]
  %s28 = scalar_lea.smem %s0, 14
  %s29 = sld [smem:[%s28]]
  %s30 = scalar_lea.smem %s0, 15
  %s31 = sld [smem:[%s30]]
  %s32 = scalar_lea.smem %s0, 16
  %s33 = sld [smem:[%s32]]
  %s34 = scalar_lea.smem %s0, 17
  %s35 = sld [smem:[%s34]]
  %s36 = scalar_lea.smem %s0, 18
  %s37 = sld [smem:[%s36]]
  %s38 = scalar_lea.smem %s0, 19
  %s39 = sld [smem:[%s38]]
  %s40 = scalar_lea.smem %s0, 20
  %s41 = sld [smem:[%s40]]
  %s42 = scalar_lea.smem %s0, 21
  %s43 = sld [smem:[%s42]]
  %s44 = scalar_lea.smem %s0, 22
  %s45 = sld [smem:[%s44]]
  %s46 = scalar_lea.smem %s0, 23
  %s47 = sld [smem:[%s46]]
  %s48 = scalar_lea.smem %s0, 24
  %s49 = sld [smem:[%s48]]
  %s50 = scalar_lea.smem %s0, 25
  %s51 = sld [smem:[%s50]]
  %s52 = scalar_lea.smem %s0, 26
  %s53 = sld [smem:[%s52]]
  %s54 = scalar_lea.smem %s0, 27
  %s55 = sld [smem:[%s54]]
  %s56 = scalar_lea.smem %s0, 28
  %s57 = sld [smem:[%s56]]
  %s58 = scalar_lea.smem %s0, 29
  %s59 = sld [smem:[%s58]]
  %s60 = sld [smem:[#allocation0]]
  $region242: #{tpu_custom_call.1} parent=0
    _
  %s62 = ssub.s32 1, %s60
  %s63 = scalar_select 0, %s62, %s60
  $region1: #{tpu_custom_call.1} parent=0
    #allocation3 [shape = 'u8[4096]{0}', space=vmem, size = 0x1000, scoped, tag = 'input window, operand 0, single buffered']
    #allocation4 [shape = 's32[1]{0}', space=sflag, size = 0x4, scoped, tag = 'scoped memory for tpu_custom_call.1']
    #allocation5 [shape = 's32[1]{0}', space=sflag, size = 0x4, scoped, tag = 'scoped memory for tpu_custom_call.1']
    #allocation6 [shape = 's32[1]{0}', space=sflag, size = 0x4, scoped, tag = 'scoped memory for tpu_custom_call.1']
    #allocation7 [shape = 'u8[4096]{0}', space=vmem, size = 0x1000, scoped, tag = 'input window, operand 1, single buffered']
    #allocation8 [shape = 's32[1]{0}', space=sflag, size = 0x4, scoped, tag = 'scoped memory for tpu_custom_call.1']
    #allocation9 [shape = 'u8[512]{0}', space=vmem, size = 0x400, scoped, tag = 'input window, operand 2, single buffered']
    #allocation10 [shape = 'u8[32768]{0}', space=vmem, size = 0x8000, scoped, tag = 'input window, operand 3, single buffered']
    #allocation11 [shape = 's32[1]{0}', space=sflag, size = 0x4, scoped, tag = 'scoped memory for tpu_custom_call.1']
    #allocation12 [shape = 'u8[2048]{0}', space=vmem, size = 0x800, scoped, tag = 'input window, operand 4, single buffered']
    #allocation13 [shape = 'u8[2048]{0}', space=vmem, size = 0x800, scoped, tag = 'input window, operand 5, single buffered']
    #allocation14 [shape = 's32[1]{0}', space=sflag, size = 0x4, scoped, tag = 'scoped memory for tpu_custom_call.1']
    #allocation15 [shape = 'u8[2048]{0}', space=vmem, size = 0x800, scoped, tag = 'input window, operand 6, single buffered']
    #allocation16 [shape = 'u8[2048]{0}', space=vmem, size = 0x800, scoped, tag = 'input window, operand 7, single buffered']
    #allocation17 [shape = 's32[1]{0}', space=sflag, size = 0x4, scoped, tag = 'scoped memory for tpu_custom_call.1']
    #allocation18 [shape = 'u8[16384]{0}', space=vmem, size = 0x4000, scoped, tag = 'input window, operand 8, single buffered']
    #allocation19 [shape = 'u8[1024]{0}', space=vmem, size = 0x400, scoped, tag = 'input window, operand 9, single buffered']
    #allocation20 [shape = 's32[1]{0}', space=sflag, size = 0x4, scoped, tag = 'scoped memory for tpu_custom_call.1']
    #allocation21 [shape = 'u8[16384]{0}', space=vmem, size = 0x4000, scoped, tag = 'input window, operand 10, single buffered']
    #allocation22 [shape = 'u8[1024]{0}', space=vmem, size = 0x400, scoped, tag = 'input window, operand 11, single buffered']
    #allocation23 [shape = 's32[1]{0}', space=sflag, size = 0x4, scoped, tag = 'scoped memory for tpu_custom_call.1']
    #allocation24 [shape = 'u8[16384]{0}', space=vmem, size = 0x4000, scoped, tag = 'input window, operand 12, single buffered']
    #allocation25 [shape = 'u8[1024]{0}', space=vmem, size = 0x400, scoped, tag = 'input window, operand 13, single buffered']
    #allocation26 [shape = 's32[1]{0}', space=sflag, size = 0x4, scoped, tag = 'scoped memory for tpu_custom_call.1']
    #allocation27 [shape = 'u8[8192]{0}', space=vmem, size = 0x2000, scoped, tag = 'input window, operand 14, single buffered']
    #allocation28 [shape = 'u8[1024]{0}', space=vmem, size = 0x400, scoped, tag = 'input window, operand 15, single buffered']
    #allocation29 [shape = 's32[1]{0}', space=sflag, size = 0x4, scoped, tag = 'scoped memory for tpu_custom_call.1']
    #allocation30 [shape = 'u8[16384]{0}', space=vmem, size = 0x4000, scoped, tag = 'input window, operand 16, single buffered']
    #allocation31 [shape = 'u8[1024]{0}', space=vmem, size = 0x400, scoped, tag = 'input window, operand 17, single buffered']
    #allocation32 [shape = 's32[1]{0}', space=sflag, size = 0x4, scoped, tag = 'scoped memory for tpu_custom_call.1']
    #allocation33 [shape = 'u8[16384]{0}', space=vmem, size = 0x4000, scoped, tag = 'input window, operand 18, single buffered']
    #allocation34 [shape = 'u8[1024]{0}', space=vmem, size = 0x400, scoped, tag = 'input window, operand 19, single buffered']
    #allocation35 [shape = 's32[1]{0}', space=sflag, size = 0x4, scoped, tag = 'scoped memory for tpu_custom_call.1']
    #allocation36 [shape = 'u8[32768]{0}', space=vmem, size = 0x8000, scoped, tag = 'input window, operand 20, single buffered']
    #allocation37 [shape = 'u8[1024]{0}', space=vmem, size = 0x400, scoped, tag = 'input window, operand 21, single buffered']
    #allocation38 [shape = 's32[1]{0}', space=sflag, size = 0x4, scoped, tag = 'scoped memory for tpu_custom_call.1']
    #allocation39 [shape = 'u8[512]{0}', space=smem, size = 0x200, scoped, tag = 'input window, operand 22, single buffered']
    #allocation40 [shape = 'u8[512]{0}', space=smem, size = 0x200, scoped, tag = 'input window, operand 23, single buffered']
    #allocation41 [shape = 's32[1]{0}', space=sflag, size = 0x4, scoped, tag = 'scoped memory for tpu_custom_call.1']
    #allocation42 [shape = 'u8[8192]{0}', space=vmem, size = 0x2000, scoped, tag = 'input window, operand 24, single buffered']
    #allocation43 [shape = 'u8[512]{0}', space=vmem, size = 0x400, scoped, tag = 'input window, operand 25, single buffered']
    #allocation44 [shape = 's32[1]{0}', space=sflag, size = 0x4, scoped, tag = 'scoped memory for tpu_custom_call.1']
    #allocation45 [shape = 'u8[8192]{0}', space=vmem, size = 0x2000, scoped, tag = 'input window, operand 26, single buffered']
    #allocation46 [shape = 'u8[512]{0}', space=vmem, size = 0x400, scoped, tag = 'input window, operand 27, single buffered']
    #allocation47 [shape = 's32[1]{0}', space=sflag, size = 0x4, scoped, tag = 'scoped memory for tpu_custom_call.1']
    #allocation48 [shape = 'u8[8192]{0}', space=vmem, size = 0x2000, scoped, tag = 'input window, operand 28, single buffered']
    #allocation49 [shape = 'u8[4096]{0}', space=vmem, size = 0x1000, scoped, tag = 'output window, operand 0, single buffered']
    %64 = vsyncpa [#allocation4], 0
    %65 = vsyncpa [#allocation8], 0
    %66 = vsyncpa [#allocation11], 0
    %67 = vsyncpa [#allocation14], 0
    %68 = vsyncpa [#allocation17], 0
    %69 = vsyncpa [#allocation20], 0
    %70 = vsyncpa [#allocation23], 0
    %71 = vsyncpa [#allocation26], 0
    %72 = vsyncpa [#allocation29], 0
    %73 = vsyncpa [#allocation32], 0
    %74 = vsyncpa [#allocation35], 0
    %75 = vsyncpa [#allocation38], 0
    %76 = vsyncpa [#allocation6], 0
    %77 = vsyncpa [#allocation41], 0
    %78 = vsyncpa [#allocation44], 0
    %79 = vsyncpa [#allocation47], 0
    %80 = vsyncpa [#allocation5], 0
    // Predicated region
    $region2: #{tpu_custom_call.1} parent=1 // pred_check
      _
    $region3: #{tpu_custom_call.1} parent=1 // pred_check_branch
      %82 = sbr.rel (0) target = $region5
    $region4: #{tpu_custom_call.1} parent=1 // pred_region
      %s84 = ssub.s32 128, 128
      %85 = vsyncadd [#allocation4], %s84
      %s87 = sshll.u32 [#allocation3], 4
      %s88 = int_to_ptr.vmem [resolvable:$true] %s87
      %90 = dma.hbm_to_vmem [thread:$0]  %s1, 128, %s88, [#allocation4]
    $region5: #{tpu_custom_call.1} parent=1 // pred_fallthru
      _
    // Predicated region
    $region6: #{tpu_custom_call.1} parent=1 // pred_check
      _
    $region7: #{tpu_custom_call.1} parent=1 // pred_check_branch
      %92 = sbr.rel (0) target = $region9
    $region8: #{tpu_custom_call.1} parent=1 // pred_region
      %s94 = ssub.s32 128, 128
      %95 = vsyncadd [#allocation8], %s94
      %s96 = sshll.u32 [#allocation7], 4
      %s97 = int_to_ptr.vmem [resolvable:$true] %s96
      %102 = dma.hbm_to_vmem [thread:$0]  %s3, 128, %s97, [#allocation8], 64, 64, 4
    $region9: #{tpu_custom_call.1} parent=1 // pred_fallthru
      _
    // Predicated region
    $region10: #{tpu_custom_call.1} parent=1 // pred_check
      _
    $region11: #{tpu_custom_call.1} parent=1 // pred_check_branch
      %104 = sbr.rel (0) target = $region13
    $region12: #{tpu_custom_call.1} parent=1 // pred_region
      %s106 = ssub.s32 16, 16
      %107 = vsyncadd [#allocation8], %s106
      %s109 = sshll.u32 [#allocation9], 4
      %s110 = int_to_ptr.vmem [resolvable:$true] %s109
      %112 = dma.hbm_to_vmem [thread:$0]  %s5, 16, %s110, [#allocation8]
    $region13: #{tpu_custom_call.1} parent=1 // pred_fallthru
      _
    // Predicated region
    $region14: #{tpu_custom_call.1} parent=1 // pred_check
      _
    $region15: #{tpu_custom_call.1} parent=1 // pred_check_branch
      %114 = sbr.rel (0) target = $region17
    $region16: #{tpu_custom_call.1} parent=1 // pred_region
      %s116 = ssub.s32 1024, 1024
      %117 = vsyncadd [#allocation11], %s116
      %s118 = sshll.u32 [#allocation10], 4
      %s119 = int_to_ptr.vmem [resolvable:$true] %s118
      %124 = dma.hbm_to_vmem [thread:$0]  %s7, 1024, %s119, [#allocation11], 64, 64, 4
    $region17: #{tpu_custom_call.1} parent=1 // pred_fallthru
      _
    // Predicated region
    $region18: #{tpu_custom_call.1} parent=1 // pred_check
      _
    $region19: #{tpu_custom_call.1} parent=1 // pred_check_branch
      %126 = sbr.rel (0) target = $region21
    $region20: #{tpu_custom_call.1} parent=1 // pred_region
      %s128 = ssub.s32 64, 64
      %129 = vsyncadd [#allocation11], %s128
      %s130 = sshll.u32 [#allocation12], 4
      %s131 = int_to_ptr.vmem [resolvable:$true] %s130
      %136 = dma.hbm_to_vmem [thread:$0]  %s9, 64, %s131, [#allocation11], 16, 16, 1
    $region21: #{tpu_custom_call.1} parent=1 // pred_fallthru
      _
    // Predicated region
    $region22: #{tpu_custom_call.1} parent=1 // pred_check
      _
    $region23: #{tpu_custom_call.1} parent=1 // pred_check_branch
      %138 = sbr.rel (0) target = $region25
    $region24: #{tpu_custom_call.1} parent=1 // pred_region
      %s140 = ssub.s32 64, 64
      %141 = vsyncadd [#allocation14], %s140
      %s142 = sshll.u32 [#allocation13], 4
      %s143 = int_to_ptr.vmem [resolvable:$true] %s142
      %148 = dma.hbm_to_vmem [thread:$0]  %s11, 64, %s143, [#allocation14], 16, 16, 1
    $region25: #{tpu_custom_call.1} parent=1 // pred_fallthru
      _
    // Predicated region
    $region26: #{tpu_custom_call.1} parent=1 // pred_check
      _
    $region27: #{tpu_custom_call.1} parent=1 // pred_check_branch
      %150 = sbr.rel (0) target = $region29
    $region28: #{tpu_custom_call.1} parent=1 // pred_region
      %s152 = ssub.s32 64, 64
      %153 = vsyncadd [#allocation14], %s152
      %s154 = sshll.u32 [#allocation15], 4
      %s155 = int_to_ptr.vmem [resolvable:$true] %s154
      %160 = dma.hbm_to_vmem [thread:$0]  %s13, 64, %s155, [#allocation14], 16, 16, 1
    $region29: #{tpu_custom_call.1} parent=1 // pred_fallthru
      _
    // Predicated region
    $region30: #{tpu_custom_call.1} parent=1 // pred_check
      _
    $region31: #{tpu_custom_call.1} parent=1 // pred_check_branch
      %162 = sbr.rel (0) target = $region33
    $region32: #{tpu_custom_call.1} parent=1 // pred_region
      %s164 = ssub.s32 64, 64
      %165 = vsyncadd [#allocation17], %s164
      %s166 = sshll.u32 [#allocation16], 4
      %s167 = int_to_ptr.vmem [resolvable:$true] %s166
      %172 = dma.hbm_to_vmem [thread:$0]  %s15, 64, %s167, [#allocation17], 16, 16, 1
    $region33: #{tpu_custom_call.1} parent=1 // pred_fallthru
      _
    // Predicated region
    $region34: #{tpu_custom_call.1} parent=1 // pred_check
      _
    $region35: #{tpu_custom_call.1} parent=1 // pred_check_branch
      %174 = sbr.rel (0) target = $region37
    $region36: #{tpu_custom_call.1} parent=1 // pred_region
      %s176 = ssub.s32 512, 512
      %177 = vsyncadd [#allocation17], %s176
      %s178 = sshll.u32 [#allocation18], 4
      %s179 = int_to_ptr.vmem [resolvable:$true] %s178
      %184 = dma.hbm_to_vmem [thread:$0]  %s17, 512, %s179, [#allocation17], 64, 64, 4
    $region37: #{tpu_custom_call.1} parent=1 // pred_fallthru
      _
    // Predicated region
    $region38: #{tpu_custom_call.1} parent=1 // pred_check
      _
    $region39: #{tpu_custom_call.1} parent=1 // pred_check_branch
      %186 = sbr.rel (0) target = $region41
    $region40: #{tpu_custom_call.1} parent=1 // pred_region
      %s188 = ssub.s32 32, 32
      %189 = vsyncadd [#allocation20], %s188
      %s190 = sshll.u32 [#allocation19], 4
      %s191 = int_to_ptr.vmem [resolvable:$true] %s190
      %196 = dma.hbm_to_vmem [thread:$0]  %s19, 32, %s191, [#allocation20], 16, 16, 1
    $region41: #{tpu_custom_call.1} parent=1 // pred_fallthru
      _
    // Predicated region
    $region42: #{tpu_custom_call.1} parent=1 // pred_check
      _
    $region43: #{tpu_custom_call.1} parent=1 // pred_check_branch
      %198 = sbr.rel (0) target = $region45
    $region44: #{tpu_custom_call.1} parent=1 // pred_region
      %s200 = ssub.s32 512, 512
      %201 = vsyncadd [#allocation20], %s200
      %s202 = sshll.u32 [#allocation21], 4
      %s203 = int_to_ptr.vmem [resolvable:$true] %s202
      %208 = dma.hbm_to_vmem [thread:$0]  %s21, 512, %s203, [#allocation20], 64, 64, 4
    $region45: #{tpu_custom_call.1} parent=1 // pred_fallthru
      _
    // Predicated region
    $region46: #{tpu_custom_call.1} parent=1 // pred_check
      _
    $region47: #{tpu_custom_call.1} parent=1 // pred_check_branch
      %210 = sbr.rel (0) target = $region49
    $region48: #{tpu_custom_call.1} parent=1 // pred_region
      %s212 = ssub.s32 32, 32
      %213 = vsyncadd [#allocation23], %s212
      %s214 = sshll.u32 [#allocation22], 4
      %s215 = int_to_ptr.vmem [resolvable:$true] %s214
      %220 = dma.hbm_to_vmem [thread:$0]  %s23, 32, %s215, [#allocation23], 16, 16, 1
    $region49: #{tpu_custom_call.1} parent=1 // pred_fallthru
      _
    // Predicated region
    $region50: #{tpu_custom_call.1} parent=1 // pred_check
      _
    $region51: #{tpu_custom_call.1} parent=1 // pred_check_branch
      %222 = sbr.rel (0) target = $region53
    $region52: #{tpu_custom_call.1} parent=1 // pred_region
      %s224 = ssub.s32 512, 512
      %225 = vsyncadd [#allocation23], %s224
      %s226 = sshll.u32 [#allocation24], 4
      %s227 = int_to_ptr.vmem [resolvable:$true] %s226
      %232 = dma.hbm_to_vmem [thread:$0]  %s25, 512, %s227, [#allocation23], 64, 64, 4
    $region53: #{tpu_custom_call.1} parent=1 // pred_fallthru
      _
    // Predicated region
    $region54: #{tpu_custom_call.1} parent=1 // pred_check
      _
    $region55: #{tpu_custom_call.1} parent=1 // pred_check_branch
      %234 = sbr.rel (0) target = $region57
    $region56: #{tpu_custom_call.1} parent=1 // pred_region
      %s236 = ssub.s32 32, 32
      %237 = vsyncadd [#allocation26], %s236
      %s238 = sshll.u32 [#allocation25], 4
      %s239 = int_to_ptr.vmem [resolvable:$true] %s238
      %244 = dma.hbm_to_vmem [thread:$0]  %s27, 32, %s239, [#allocation26], 16, 16, 1
    $region57: #{tpu_custom_call.1} parent=1 // pred_fallthru
      _
    // Predicated region
    $region58: #{tpu_custom_call.1} parent=1 // pred_check
      _
    $region59: #{tpu_custom_call.1} parent=1 // pred_check_branch
      %246 = sbr.rel (0) target = $region61
    $region60: #{tpu_custom_call.1} parent=1 // pred_region
      %s248 = ssub.s32 256, 256
      %249 = vsyncadd [#allocation26], %s248
      %s250 = sshll.u32 [#allocation27], 4
      %s251 = int_to_ptr.vmem [resolvable:$true] %s250
      %256 = dma.hbm_to_vmem [thread:$0]  %s29, 256, %s251, [#allocation26], 64, 64, 4
    $region61: #{tpu_custom_call.1} parent=1 // pred_fallthru
      _
    // Predicated region
    $region62: #{tpu_custom_call.1} parent=1 // pred_check
      _
    $region63: #{tpu_custom_call.1} parent=1 // pred_check_branch
      %258 = sbr.rel (0) target = $region65
    $region64: #{tpu_custom_call.1} parent=1 // pred_region
      %s260 = ssub.s32 32, 32
      %261 = vsyncadd [#allocation29], %s260
      %s263 = sshll.u32 [#allocation28], 4
      %s264 = int_to_ptr.vmem [resolvable:$true] %s263
      %266 = dma.hbm_to_vmem [thread:$0]  %s31, 32, %s264, [#allocation29]
    $region65: #{tpu_custom_call.1} parent=1 // pred_fallthru
      _
    // Predicated region
    $region66: #{tpu_custom_call.1} parent=1 // pred_check
      _
    $region67: #{tpu_custom_call.1} parent=1 // pred_check_branch
      %268 = sbr.rel (0) target = $region69
    $region68: #{tpu_custom_call.1} parent=1 // pred_region
      %s270 = ssub.s32 512, 512
      %271 = vsyncadd [#allocation29], %s270
      %s272 = sshll.u32 [#allocation30], 4
      %s273 = int_to_ptr.vmem [resolvable:$true] %s272
      %278 = dma.hbm_to_vmem [thread:$0]  %s33, 512, %s273, [#allocation29], 64, 64, 4
    $region69: #{tpu_custom_call.1} parent=1 // pred_fallthru
      _
    // Predicated region
    $region70: #{tpu_custom_call.1} parent=1 // pred_check
      _
    $region71: #{tpu_custom_call.1} parent=1 // pred_check_branch
      %280 = sbr.rel (0) target = $region73
    $region72: #{tpu_custom_call.1} parent=1 // pred_region
      %s282 = ssub.s32 32, 32
      %283 = vsyncadd [#allocation32], %s282
      %s284 = sshll.u32 [#allocation31], 4
      %s285 = int_to_ptr.vmem [resolvable:$true] %s284
      %290 = dma.hbm_to_vmem [thread:$0]  %s35, 32, %s285, [#allocation32], 16, 16, 1
    $region73: #{tpu_custom_call.1} parent=1 // pred_fallthru
      _
    // Predicated region
    $region74: #{tpu_custom_call.1} parent=1 // pred_check
      _
    $region75: #{tpu_custom_call.1} parent=1 // pred_check_branch
      %292 = sbr.rel (0) target = $region77
    $region76: #{tpu_custom_call.1} parent=1 // pred_region
      %s294 = ssub.s32 512, 512
      %295 = vsyncadd [#allocation32], %s294
      %s296 = sshll.u32 [#allocation33], 4
      %s297 = int_to_ptr.vmem [resolvable:$true] %s296
      %302 = dma.hbm_to_vmem [thread:$0]  %s37, 512, %s297, [#allocation32], 64, 64, 4
    $region77: #{tpu_custom_call.1} parent=1 // pred_fallthru
      _
    // Predicated region
    $region78: #{tpu_custom_call.1} parent=1 // pred_check
      _
    $region79: #{tpu_custom_call.1} parent=1 // pred_check_branch
      %304 = sbr.rel (0) target = $region81
    $region80: #{tpu_custom_call.1} parent=1 // pred_region
      %s306 = ssub.s32 32, 32
      %307 = vsyncadd [#allocation35], %s306
      %s308 = sshll.u32 [#allocation34], 4
      %s309 = int_to_ptr.vmem [resolvable:$true] %s308
      %314 = dma.hbm_to_vmem [thread:$0]  %s39, 32, %s309, [#allocation35], 16, 16, 1
    $region81: #{tpu_custom_call.1} parent=1 // pred_fallthru
      _
    // Predicated region
    $region82: #{tpu_custom_call.1} parent=1 // pred_check
      _
    $region83: #{tpu_custom_call.1} parent=1 // pred_check_branch
      %316 = sbr.rel (0) target = $region85
    $region84: #{tpu_custom_call.1} parent=1 // pred_region
      %s318 = ssub.s32 1024, 1024
      %319 = vsyncadd [#allocation35], %s318
      %s320 = sshll.u32 [#allocation36], 4
      %s321 = int_to_ptr.vmem [resolvable:$true] %s320
      %326 = dma.hbm_to_vmem [thread:$0]  %s41, 1024, %s321, [#allocation35], 64, 64, 4
    $region85: #{tpu_custom_call.1} parent=1 // pred_fallthru
      _
    // Predicated region
    $region86: #{tpu_custom_call.1} parent=1 // pred_check
      _
    $region87: #{tpu_custom_call.1} parent=1 // pred_check_branch
      %328 = sbr.rel (0) target = $region89
    $region88: #{tpu_custom_call.1} parent=1 // pred_region
      %s330 = ssub.s32 32, 32
      %331 = vsyncadd [#allocation38], %s330
      %s332 = sshll.u32 [#allocation37], 4
      %s333 = int_to_ptr.vmem [resolvable:$true] %s332
      %338 = dma.hbm_to_vmem [thread:$0]  %s43, 32, %s333, [#allocation38], 16, 16, 1
    $region89: #{tpu_custom_call.1} parent=1 // pred_fallthru
      _
    // Predicated region
    $region90: #{tpu_custom_call.1} parent=1 // pred_check
      _
    $region91: #{tpu_custom_call.1} parent=1 // pred_check_branch
      %340 = sbr.rel (0) target = $region93
    $region92: #{tpu_custom_call.1} parent=1 // pred_region
      %s342 = ssub.s32 16, 16
      %343 = vsyncadd [#allocation6], %s342
      %346 = dma.hbm_to_smem %s45, 16, [#allocation39], [#allocation6]
    $region93: #{tpu_custom_call.1} parent=1 // pred_fallthru
      _
    // Predicated region
    $region94: #{tpu_custom_call.1} parent=1 // pred_check
      _
    $region95: #{tpu_custom_call.1} parent=1 // pred_check_branch
      %348 = sbr.rel (0) target = $region97
    $region96: #{tpu_custom_call.1} parent=1 // pred_region
      %s350 = ssub.s32 16, 16
      %351 = vsyncadd [#allocation41], %s350
      %354 = dma.hbm_to_smem %s47, 16, [#allocation40], [#allocation41]
    $region97: #{tpu_custom_call.1} parent=1 // pred_fallthru
      _
    // Predicated region
    $region98: #{tpu_custom_call.1} parent=1 // pred_check
      _
    $region99: #{tpu_custom_call.1} parent=1 // pred_check_branch
      %356 = sbr.rel (0) target = $region101
    $region100: #{tpu_custom_call.1} parent=1 // pred_region
      %s358 = ssub.s32 256, 256
      %359 = vsyncadd [#allocation38], %s358
      %s360 = sshll.u32 [#allocation42], 4
      %s361 = int_to_ptr.vmem [resolvable:$true] %s360
      %366 = dma.hbm_to_vmem [thread:$0]  %s49, 256, %s361, [#allocation38], 64, 64, 4
    $region101: #{tpu_custom_call.1} parent=1 // pred_fallthru
      _
    // Predicated region
    $region102: #{tpu_custom_call.1} parent=1 // pred_check
      _
    $region103: #{tpu_custom_call.1} parent=1 // pred_check_branch
      %368 = sbr.rel (0) target = $region105
    $region104: #{tpu_custom_call.1} parent=1 // pred_region
      %s370 = ssub.s32 16, 16
      %371 = vsyncadd [#allocation44], %s370
      %s373 = sshll.u32 [#allocation43], 4
      %s374 = int_to_ptr.vmem [resolvable:$true] %s373
      %376 = dma.hbm_to_vmem [thread:$0]  %s51, 16, %s374, [#allocation44]
    $region105: #{tpu_custom_call.1} parent=1 // pred_fallthru
      _
    // Predicated region
    $region106: #{tpu_custom_call.1} parent=1 // pred_check
      _
    $region107: #{tpu_custom_call.1} parent=1 // pred_check_branch
      %378 = sbr.rel (0) target = $region109
    $region108: #{tpu_custom_call.1} parent=1 // pred_region
      %s380 = ssub.s32 256, 256
      %381 = vsyncadd [#allocation44], %s380
      %s382 = sshll.u32 [#allocation45], 4
      %s383 = int_to_ptr.vmem [resolvable:$true] %s382
      %388 = dma.hbm_to_vmem [thread:$0]  %s53, 256, %s383, [#allocation44], 64, 64, 4
    $region109: #{tpu_custom_call.1} parent=1 // pred_fallthru
      _
    // Predicated region
    $region110: #{tpu_custom_call.1} parent=1 // pred_check
      _
    $region111: #{tpu_custom_call.1} parent=1 // pred_check_branch
      %390 = sbr.rel (0) target = $region113
    $region112: #{tpu_custom_call.1} parent=1 // pred_region
      %s392 = ssub.s32 16, 16
      %393 = vsyncadd [#allocation47], %s392
      %s395 = sshll.u32 [#allocation46], 4
      %s396 = int_to_ptr.vmem [resolvable:$true] %s395
      %398 = dma.hbm_to_vmem [thread:$0]  %s55, 16, %s396, [#allocation47]
    $region113: #{tpu_custom_call.1} parent=1 // pred_fallthru
      _
    // Predicated region
    $region114: #{tpu_custom_call.1} parent=1 // pred_check
      _
    $region115: #{tpu_custom_call.1} parent=1 // pred_check_branch
      %400 = sbr.rel (0) target = $region117
    $region116: #{tpu_custom_call.1} parent=1 // pred_region
      %s402 = ssub.s32 256, 256
      %403 = vsyncadd [#allocation47], %s402
      %s404 = sshll.u32 [#allocation48], 4
      %s405 = int_to_ptr.vmem [resolvable:$true] %s404
      %410 = dma.hbm_to_vmem [thread:$0]  %s57, 256, %s405, [#allocation47], 64, 64, 4
    $region117: #{tpu_custom_call.1} parent=1 // pred_fallthru
      _
    // Predicated region
    $region118: #{tpu_custom_call.1} parent=1 // pred_check
      _
    $region119: #{tpu_custom_call.1} parent=1 // pred_check_branch
      %412 = sbr.rel (0) target = $region121
    $region120: #{tpu_custom_call.1} parent=1 // pred_region
      %413 = dma.done [#allocation4], 128
    $region121: #{tpu_custom_call.1} parent=1 // pred_fallthru
      _
    // Predicated region
    $region122: #{tpu_custom_call.1} parent=1 // pred_check
      _
    $region123: #{tpu_custom_call.1} parent=1 // pred_check_branch
      %415 = sbr.rel (0) target = $region125
    $region124: #{tpu_custom_call.1} parent=1 // pred_region
      %416 = dma.done [#allocation8], 128
    $region125: #{tpu_custom_call.1} parent=1 // pred_fallthru
      _
    // Predicated region
    $region126: #{tpu_custom_call.1} parent=1 // pred_check
      _
    $region127: #{tpu_custom_call.1} parent=1 // pred_check_branch
      %418 = sbr.rel (0) target = $region129
    $region128: #{tpu_custom_call.1} parent=1 // pred_region
      %419 = dma.done [#allocation8], 16
    $region129: #{tpu_custom_call.1} parent=1 // pred_fallthru
      _
    // Predicated region
    $region130: #{tpu_custom_call.1} parent=1 // pred_check
      _
    $region131: #{tpu_custom_call.1} parent=1 // pred_check_branch
      %421 = sbr.rel (0) target = $region133
    $region132: #{tpu_custom_call.1} parent=1 // pred_region
      %422 = dma.done [#allocation11], 1024
    $region133: #{tpu_custom_call.1} parent=1 // pred_fallthru
      _
    // Predicated region
    $region134: #{tpu_custom_call.1} parent=1 // pred_check
      _
    $region135: #{tpu_custom_call.1} parent=1 // pred_check_branch
      %424 = sbr.rel (0) target = $region137
    $region136: #{tpu_custom_call.1} parent=1 // pred_region
      %425 = dma.done [#allocation11], 64
    $region137: #{tpu_custom_call.1} parent=1 // pred_fallthru
      _
    // Predicated region
    $region138: #{tpu_custom_call.1} parent=1 // pred_check
      _
    $region139: #{tpu_custom_call.1} parent=1 // pred_check_branch
      %427 = sbr.rel (0) target = $region141
    $region140: #{tpu_custom_call.1} parent=1 // pred_region
      %428 = dma.done [#allocation14], 64
    $region141: #{tpu_custom_call.1} parent=1 // pred_fallthru
      _
    // Predicated region
    $region142: #{tpu_custom_call.1} parent=1 // pred_check
      _
    $region143: #{tpu_custom_call.1} parent=1 // pred_check_branch
      %430 = sbr.rel (0) target = $region145
    $region144: #{tpu_custom_call.1} parent=1 // pred_region
      %431 = dma.done [#allocation14], 64
    $region145: #{tpu_custom_call.1} parent=1 // pred_fallthru
      _
    // Predicated region
    $region146: #{tpu_custom_call.1} parent=1 // pred_check
      _
    $region147: #{tpu_custom_call.1} parent=1 // pred_check_branch
      %433 = sbr.rel (0) target = $region149
    $region148: #{tpu_custom_call.1} parent=1 // pred_region
      %434 = dma.done [#allocation17], 64
    $region149: #{tpu_custom_call.1} parent=1 // pred_fallthru
      _
    // Predicated region
    $region150: #{tpu_custom_call.1} parent=1 // pred_check
      _
    $region151: #{tpu_custom_call.1} parent=1 // pred_check_branch
      %436 = sbr.rel (0) target = $region153
    $region152: #{tpu_custom_call.1} parent=1 // pred_region
      %437 = dma.done [#allocation17], 512
    $region153: #{tpu_custom_call.1} parent=1 // pred_fallthru
      _
    // Predicated region
    $region154: #{tpu_custom_call.1} parent=1 // pred_check
      _
    $region155: #{tpu_custom_call.1} parent=1 // pred_check_branch
      %439 = sbr.rel (0) target = $region157
    $region156: #{tpu_custom_call.1} parent=1 // pred_region
      %440 = dma.done [#allocation20], 32
    $region157: #{tpu_custom_call.1} parent=1 // pred_fallthru
      _
    // Predicated region
    $region158: #{tpu_custom_call.1} parent=1 // pred_check
      _
    $region159: #{tpu_custom_call.1} parent=1 // pred_check_branch
      %442 = sbr.rel (0) target = $region161
    $region160: #{tpu_custom_call.1} parent=1 // pred_region
      %443 = dma.done [#allocation20], 512
    $region161: #{tpu_custom_call.1} parent=1 // pred_fallthru
      _
    // Predicated region
    $region162: #{tpu_custom_call.1} parent=1 // pred_check
      _
    $region163: #{tpu_custom_call.1} parent=1 // pred_check_branch
      %445 = sbr.rel (0) target = $region165
    $region164: #{tpu_custom_call.1} parent=1 // pred_region
      %446 = dma.done [#allocation23], 32
    $region165: #{tpu_custom_call.1} parent=1 // pred_fallthru
      _
    // Predicated region
    $region166: #{tpu_custom_call.1} parent=1 // pred_check
      _
    $region167: #{tpu_custom_call.1} parent=1 // pred_check_branch
      %448 = sbr.rel (0) target = $region169
    $region168: #{tpu_custom_call.1} parent=1 // pred_region
      %449 = dma.done [#allocation23], 512
    $region169: #{tpu_custom_call.1} parent=1 // pred_fallthru
      _
    // Predicated region
    $region170: #{tpu_custom_call.1} parent=1 // pred_check
      _
    $region171: #{tpu_custom_call.1} parent=1 // pred_check_branch
      %451 = sbr.rel (0) target = $region173
    $region172: #{tpu_custom_call.1} parent=1 // pred_region
      %452 = dma.done [#allocation26], 32
    $region173: #{tpu_custom_call.1} parent=1 // pred_fallthru
      _
    // Predicated region
    $region174: #{tpu_custom_call.1} parent=1 // pred_check
      _
    $region175: #{tpu_custom_call.1} parent=1 // pred_check_branch
      %454 = sbr.rel (0) target = $region177
    $region176: #{tpu_custom_call.1} parent=1 // pred_region
      %455 = dma.done [#allocation26], 256
    $region177: #{tpu_custom_call.1} parent=1 // pred_fallthru
      _
    // Predicated region
    $region178: #{tpu_custom_call.1} parent=1 // pred_check
      _
    $region179: #{tpu_custom_call.1} parent=1 // pred_check_branch
      %457 = sbr.rel (0) target = $region181
    $region180: #{tpu_custom_call.1} parent=1 // pred_region
      %458 = dma.done [#allocation29], 32
    $region181: #{tpu_custom_call.1} parent=1 // pred_fallthru
      _
    // Predicated region
    $region182: #{tpu_custom_call.1} parent=1 // pred_check
      _
    $region183: #{tpu_custom_call.1} parent=1 // pred_check_branch
      %460 = sbr.rel (0) target = $region185
    $region184: #{tpu_custom_call.1} parent=1 // pred_region
      %461 = dma.done [#allocation29], 512
    $region185: #{tpu_custom_call.1} parent=1 // pred_fallthru
      _
    // Predicated region
    $region186: #{tpu_custom_call.1} parent=1 // pred_check
      _
    $region187: #{tpu_custom_call.1} parent=1 // pred_check_branch
      %463 = sbr.rel (0) target = $region189
    $region188: #{tpu_custom_call.1} parent=1 // pred_region
      %464 = dma.done [#allocation32], 32
    $region189: #{tpu_custom_call.1} parent=1 // pred_fallthru
      _
    // Predicated region
    $region190: #{tpu_custom_call.1} parent=1 // pred_check
      _
    $region191: #{tpu_custom_call.1} parent=1 // pred_check_branch
      %466 = sbr.rel (0) target = $region193
    $region192: #{tpu_custom_call.1} parent=1 // pred_region
      %467 = dma.done [#allocation32], 512
    $region193: #{tpu_custom_call.1} parent=1 // pred_fallthru
      _
    // Predicated region
    $region194: #{tpu_custom_call.1} parent=1 // pred_check
      _
    $region195: #{tpu_custom_call.1} parent=1 // pred_check_branch
      %469 = sbr.rel (0) target = $region197
    $region196: #{tpu_custom_call.1} parent=1 // pred_region
      %470 = dma.done [#allocation35], 32
    $region197: #{tpu_custom_call.1} parent=1 // pred_fallthru
      _
    // Predicated region
    $region198: #{tpu_custom_call.1} parent=1 // pred_check
      _
    $region199: #{tpu_custom_call.1} parent=1 // pred_check_branch
      %472 = sbr.rel (0) target = $region201
    $region200: #{tpu_custom_call.1} parent=1 // pred_region
      %473 = dma.done [#allocation35], 1024
    $region201: #{tpu_custom_call.1} parent=1 // pred_fallthru
      _
    // Predicated region
    $region202: #{tpu_custom_call.1} parent=1 // pred_check
      _
    $region203: #{tpu_custom_call.1} parent=1 // pred_check_branch
      %475 = sbr.rel (0) target = $region205
    $region204: #{tpu_custom_call.1} parent=1 // pred_region
      %476 = dma.done [#allocation38], 32
    $region205: #{tpu_custom_call.1} parent=1 // pred_fallthru
      _
    // Predicated region
    $region206: #{tpu_custom_call.1} parent=1 // pred_check
      _
    $region207: #{tpu_custom_call.1} parent=1 // pred_check_branch
      %478 = sbr.rel (0) target = $region209
    $region208: #{tpu_custom_call.1} parent=1 // pred_region
      %479 = dma.done [#allocation6], 16
    $region209: #{tpu_custom_call.1} parent=1 // pred_fallthru
      _
    // Predicated region
    $region210: #{tpu_custom_call.1} parent=1 // pred_check
      _
    $region211: #{tpu_custom_call.1} parent=1 // pred_check_branch
      %481 = sbr.rel (0) target = $region213
    $region212: #{tpu_custom_call.1} parent=1 // pred_region
      %482 = dma.done [#allocation41], 16
    $region213: #{tpu_custom_call.1} parent=1 // pred_fallthru
      _
    // Predicated region
    $region214: #{tpu_custom_call.1} parent=1 // pred_check
      _
    $region215: #{tpu_custom_call.1} parent=1 // pred_check_branch
      %484 = sbr.rel (0) target = $region217
    $region216: #{tpu_custom_call.1} parent=1 // pred_region
      %485 = dma.done [#allocation38], 256
    $region217: #{tpu_custom_call.1} parent=1 // pred_fallthru
      _
    // Predicated region
    $region218: #{tpu_custom_call.1} parent=1 // pred_check
      _
    $region219: #{tpu_custom_call.1} parent=1 // pred_check_branch
      %487 = sbr.rel (0) target = $region221
    $region220: #{tpu_custom_call.1} parent=1 // pred_region
      %488 = dma.done [#allocation44], 16
    $region221: #{tpu_custom_call.1} parent=1 // pred_fallthru
      _
    // Predicated region
    $region222: #{tpu_custom_call.1} parent=1 // pred_check
      _
    $region223: #{tpu_custom_call.1} parent=1 // pred_check_branch
      %490 = sbr.rel (0) target = $region225
    $region224: #{tpu_custom_call.1} parent=1 // pred_region
      %491 = dma.done [#allocation44], 256
    $region225: #{tpu_custom_call.1} parent=1 // pred_fallthru
      _
    // Predicated region
    $region226: #{tpu_custom_call.1} parent=1 // pred_check
      _
    $region227: #{tpu_custom_call.1} parent=1 // pred_check_branch
      %493 = sbr.rel (0) target = $region229
    $region228: #{tpu_custom_call.1} parent=1 // pred_region
      %494 = dma.done [#allocation47], 16
    $region229: #{tpu_custom_call.1} parent=1 // pred_fallthru
      _
    // Predicated region
    $region230: #{tpu_custom_call.1} parent=1 // pred_check
      _
    $region231: #{tpu_custom_call.1} parent=1 // pred_check_branch
      %496 = sbr.rel (0) target = $region233
    $region232: #{tpu_custom_call.1} parent=1 // pred_region
      %497 = dma.done [#allocation47], 256
    $region233: #{tpu_custom_call.1} parent=1 // pred_fallthru
      _
    %498 = sfence
    %v500 = vld [vmem:[#allocation3] sm:$0xff]
    %v501 = vld [vmem:[#allocation7] sm:$0xf]
    %v502 = vld [vmem:[#allocation7 + $0x4] sm:$0xf]
    %v503 = vpack.c.bf16 %v500, %v500
    %v504 = vld [vmem:[#allocation9] sm:$0x1]
    %v506 = vlaneseq
    %v507 = vshrl.u32 %v506, 7
    %v508 = vsub.s32 0, %v507
    %v509 = vrot.slane %v504, %v508
    %v513 = vunpack.c.l.b16 %v501
    %v514 = vunpack.c.l.b16 %v502
    %v515 = vpack.c.b16 %v514, %v513
    %vm517 = vcmask 130048
    %v519 = vsel %vm517, %v503, 0
    %521 = vmatprep.subr.bf16.mxu0 0
    %522 = vmatpush1.bf16.msra.mxu0 %v515
    %523 = vmatprep.subr.bf16.mxu0 0
    %524 = vmatpush1.bf16.msra.mxu0 0
    %525 = vmatprep.subr.bf16.mxu0 0
    %526 = vmatpush1.bf16.msra.mxu0 0
    %527 = vmatprep.subr.bf16.mxu0 0
    %528 = vmatpush1.bf16.msra.mxu0 0
    %529 = vmatprep.subr.bf16.mxu0 0
    %530 = vmatpush1.bf16.msra.mxu0 0
    %531 = vmatprep.subr.bf16.mxu0 0
    %532 = vmatpush1.bf16.msra.mxu0 0
    %533 = vmatprep.subr.bf16.mxu0 0
    %534 = vmatpush1.bf16.msra.mxu0 0
    %535 = vmatprep.subr.bf16.mxu0 0
    %536 = vmatpush1.bf16.msra.mxu0 0
    %537 = vmatprep.subr.bf16.mxu0 0
    %538 = vmatpush1.bf16.msra.mxu0 0
    %539 = vmatprep.subr.bf16.mxu0 0
    %540 = vmatpush1.bf16.msra.mxu0 0
    %541 = vmatprep.subr.bf16.mxu0 0
    %542 = vmatpush1.bf16.msra.mxu0 0
    %543 = vmatprep.subr.bf16.mxu0 0
    %544 = vmatpush1.bf16.msra.mxu0 0
    %545 = vmatprep.subr.bf16.mxu0 0
    %546 = vmatpush1.bf16.msra.mxu0 0
    %547 = vmatprep.subr.bf16.mxu0 0
    %548 = vmatpush1.bf16.msra.mxu0 0
    %549 = vmatprep.subr.bf16.mxu0 0
    %550 = vmatpush1.bf16.msra.mxu0 0
    %551 = vmatprep.subr.bf16.mxu0 0
    %552 = vmatpush1.bf16.msra.mxu0 0
    %553 = vmatprep.mubr.bf16.mxu0 0
    %554 = vmatmul.mubr.bf16.gmra.mrb[0].mxu0 %v519
    %v555 = vpop.f32.mrb[0].mxu0
    %v556 = vadd.f32 %v509, %v555
    %v557 = vpop.f32.mrb[0].mxu0
    %v558 = vpop.f32.mrb[0].mxu0
    %v559 = vpop.f32.mrb[0].mxu0
    %560 = vdwg.mxu0
    %v561 = vmul.f32 %v556, %v556
    %vm562 = vcmask 261120
    %v563 = vsel %vm562, %v561, 0.0
    %564 = vadd.xlane.f32.xlu0 %v563
    %v565 = vpop.xlane.xlu0 %564
    %v566 = vmax.f32 %v565, 1e-24
    %v567 = vrsqrt.pop %v566
    %v568 = vmul.f32 %v556, %v567
    %v569 = vld [vmem:[#allocation10] sm:$0xf]
    %v570 = vld [vmem:[#allocation10 + $0x4] sm:$0xf]
    %v571 = vld [vmem:[#allocation10 + $0x8] sm:$0xf]
    %v572 = vld [vmem:[#allocation10 + $0xc] sm:$0xf]
    %v573 = vpack.c.bf16 %v568, %v568
    %v574 = vld [vmem:[#allocation12] sm:$0x1]
    %v576 = vlaneseq
    %v577 = vshrl.u32 %v576, 7
    %v578 = vsub.s32 0, %v577
    %v579 = vrot.slane %v574, %v578
    %v585 = vunpack.c.l.b16 %v569
    %v586 = vunpack.c.l.b16 %v570
    %v587 = vunpack.c.l.b16 %v571
    %v588 = vunpack.c.l.b16 %v572
    %v589 = vpack.c.b16 %v586, %v585
    %v590 = vpack.c.b16 %v588, %v587
    %v594 = vsel %vm562, %v573, 0
    %596 = vmatprep.subr.bf16.mxu0 0
    %597 = vmatpush1.bf16.msra.mxu0 %v589
    %598 = vmatprep.subr.bf16.mxu0 0
    %599 = vmatpush1.bf16.msra.mxu0 %v590
    %600 = vmatprep.subr.bf16.mxu0 0
    %601 = vmatpush1.bf16.msra.mxu0 0
    %602 = vmatprep.subr.bf16.mxu0 0
    %603 = vmatpush1.bf16.msra.mxu0 0
    %604 = vmatprep.subr.bf16.mxu0 0
    %605 = vmatpush1.bf16.msra.mxu0 0
    %606 = vmatprep.subr.bf16.mxu0 0
    %607 = vmatpush1.bf16.msra.mxu0 0
    %608 = vmatprep.subr.bf16.mxu0 0
    %609 = vmatpush1.bf16.msra.mxu0 0
    %610 = vmatprep.subr.bf16.mxu0 0
    %611 = vmatpush1.bf16.msra.mxu0 0
    %612 = vmatprep.subr.bf16.mxu0 0
    %613 = vmatpush1.bf16.msra.mxu0 0
    %614 = vmatprep.subr.bf16.mxu0 0
    %615 = vmatpush1.bf16.msra.mxu0 0
    %616 = vmatprep.subr.bf16.mxu0 0
    %617 = vmatpush1.bf16.msra.mxu0 0
    %618 = vmatprep.subr.bf16.mxu0 0
    %619 = vmatpush1.bf16.msra.mxu0 0
    %620 = vmatprep.subr.bf16.mxu0 0
    %621 = vmatpush1.bf16.msra.mxu0 0
    %622 = vmatprep.subr.bf16.mxu0 0
    %623 = vmatpush1.bf16.msra.mxu0 0
    %624 = vmatprep.subr.bf16.mxu0 0
    %625 = vmatpush1.bf16.msra.mxu0 0
    %626 = vmatprep.subr.bf16.mxu0 0
    %627 = vmatpush1.bf16.msra.mxu0 0
    %628 = vmatprep.mubr.bf16.mxu0 0
    %629 = vmatmul.mubr.bf16.gmra.mrb[0].mxu0 %v594
    %v630 = vpop.f32.mrb[0].mxu0
    %v631 = vadd.f32 %v579, %v630
    %v632 = vpop.f32.mrb[0].mxu0
    %v633 = vpop.f32.mrb[0].mxu0
    %v634 = vpop.f32.mrb[0].mxu0
    %635 = vdwg.mxu0
    %636 = vst.msk [vmem:[#allocation2] sm:$0xff] %vm562, %v631
    %v637 = vsel %vm562, %v631, 0.0
    %638 = vadd.xlane.f32.xlu0 %v637
    %v639 = vpop.xlane.xlu0 %638
    %v640 = vadd.f32 %v639, 0.0
    %v641 = vmul.f32 %v631, %v631
    %v642 = vsel %vm562, %v641, 0.0
    %643 = vadd.xlane.f32.xlu0 %v642
    %v644 = vpop.xlane.xlu0 %643
    %v645 = vadd.f32 %v644, 0.0
    %s646 = scalar_lea.vmem [#allocation10], 16
    %v647 = vld [vmem:[%s646] sm:$0xf]
    %v648 = vld [vmem:[%s646 + $0x4] sm:$0xf]
    %v649 = vld [vmem:[%s646 + $0x8] sm:$0xf]
    %v650 = vld [vmem:[%s646 + $0xc] sm:$0xf]
    %s651 = scalar_lea.vmem [#allocation12], 1
    %v652 = vld [vmem:[%s651] sm:$0x1]
    %v654 = vlaneseq
    %v655 = vshrl.u32 %v654, 7
    %v656 = vsub.s32 0, %v655
    %v657 = vrot.slane %v652, %v656
    %v663 = vunpack.c.l.b16 %v647
    %v664 = vunpack.c.l.b16 %v648
    %v665 = vunpack.c.l.b16 %v649
    %v666 = vunpack.c.l.b16 %v650
    %v667 = vpack.c.b16 %v664, %v663
    %v668 = vpack.c.b16 %v666, %v665
    %671 = vmatprep.subr.bf16.mxu0 0
    %672 = vmatpush1.bf16.msra.mxu0 %v667
    %673 = vmatprep.subr.bf16.mxu0 0
    %674 = vmatpush1.bf16.msra.mxu0 %v668
    %675 = vmatprep.subr.bf16.mxu0 0
    %676 = vmatpush1.bf16.msra.mxu0 0
    %677 = vmatprep.subr.bf16.mxu0 0
    %678 = vmatpush1.bf16.msra.mxu0 0
    %679 = vmatprep.subr.bf16.mxu0 0
    %680 = vmatpush1.bf16.msra.mxu0 0
    %681 = vmatprep.subr.bf16.mxu0 0
    %682 = vmatpush1.bf16.msra.mxu0 0
    %683 = vmatprep.subr.bf16.mxu0 0
    %684 = vmatpush1.bf16.msra.mxu0 0
    %685 = vmatprep.subr.bf16.mxu0 0
    %686 = vmatpush1.bf16.msra.mxu0 0
    %687 = vmatprep.subr.bf16.mxu0 0
    %688 = vmatpush1.bf16.msra.mxu0 0
    %689 = vmatprep.subr.bf16.mxu0 0
    %690 = vmatpush1.bf16.msra.mxu0 0
    %691 = vmatprep.subr.bf16.mxu0 0
    %692 = vmatpush1.bf16.msra.mxu0 0
    %693 = vmatprep.subr.bf16.mxu0 0
    %694 = vmatpush1.bf16.msra.mxu0 0
    %695 = vmatprep.subr.bf16.mxu0 0
    %696 = vmatpush1.bf16.msra.mxu0 0
    %697 = vmatprep.subr.bf16.mxu0 0
    %698 = vmatpush1.bf16.msra.mxu0 0
    %699 = vmatprep.subr.bf16.mxu0 0
    %700 = vmatpush1.bf16.msra.mxu0 0
    %701 = vmatprep.subr.bf16.mxu0 0
    %702 = vmatpush1.bf16.msra.mxu0 0
    %703 = vmatprep.mubr.bf16.mxu0 0
    %704 = vmatmul.mubr.bf16.gmra.mrb[0].mxu0 %v594
    %v705 = vpop.f32.mrb[0].mxu0
    %v706 = vadd.f32 %v657, %v705
    %v707 = vpop.f32.mrb[0].mxu0
    %v708 = vpop.f32.mrb[0].mxu0
    %v709 = vpop.f32.mrb[0].mxu0
    %710 = vdwg.mxu0
    %711 = vst.msk [vmem:[#allocation2 + $0x8] sm:$0xff] %vm562, %v706
    %v712 = vsel %vm562, %v706, 0.0
    %713 = vadd.xlane.f32.xlu0 %v712
    %v714 = vpop.xlane.xlu0 %713
    %v715 = vadd.f32 %v640, %v714
    %v716 = vmul.f32 %v706, %v706
    %v717 = vsel %vm562, %v716, 0.0
    %718 = vadd.xlane.f32.xlu0 %v717
    %v719 = vpop.xlane.xlu0 %718
    %v720 = vadd.f32 %v645, %v719
    %s721 = scalar_lea.vmem [#allocation10], 32
    %v722 = vld [vmem:[%s721] sm:$0xf]
    %v723 = vld [vmem:[%s721 + $0x4] sm:$0xf]
    %v724 = vld [vmem:[%s721 + $0x8] sm:$0xf]
    %v725 = vld [vmem:[%s721 + $0xc] sm:$0xf]
    %s726 = scalar_lea.vmem [#allocation12], 2
    %v727 = vld [vmem:[%s726] sm:$0x1]
    %v729 = vlaneseq
    %v730 = vshrl.u32 %v729, 7
    %v731 = vsub.s32 0, %v730
    %v732 = vrot.slane %v727, %v731
    %v738 = vunpack.c.l.b16 %v722
    %v739 = vunpack.c.l.b16 %v723
    %v740 = vunpack.c.l.b16 %v724
    %v741 = vunpack.c.l.b16 %v725
    %v742 = vpack.c.b16 %v739, %v738
    %v743 = vpack.c.b16 %v741, %v740
    %746 = vmatprep.subr.bf16.mxu0 0
    %747 = vmatpush1.bf16.msra.mxu0 %v742
    %748 = vmatprep.subr.bf16.mxu0 0
    %749 = vmatpush1.bf16.msra.mxu0 %v743
    %750 = vmatprep.subr.bf16.mxu0 0
    %751 = vmatpush1.bf16.msra.mxu0 0
    %752 = vmatprep.subr.bf16.mxu0 0
    %753 = vmatpush1.bf16.msra.mxu0 0
    %754 = vmatprep.subr.bf16.mxu0 0
    %755 = vmatpush1.bf16.msra.mxu0 0
    %756 = vmatprep.subr.bf16.mxu0 0
    %757 = vmatpush1.bf16.msra.mxu0 0
    %758 = vmatprep.subr.bf16.mxu0 0
    %759 = vmatpush1.bf16.msra.mxu0 0
    %760 = vmatprep.subr.bf16.mxu0 0
    %761 = vmatpush1.bf16.msra.mxu0 0
    %762 = vmatprep.subr.bf16.mxu0 0
    %763 = vmatpush1.bf16.msra.mxu0 0
    %764 = vmatprep.subr.bf16.mxu0 0
    %765 = vmatpush1.bf16.msra.mxu0 0
    %766 = vmatprep.subr.bf16.mxu0 0
    %767 = vmatpush1.bf16.msra.mxu0 0
    %768 = vmatprep.subr.bf16.mxu0 0
    %769 = vmatpush1.bf16.msra.mxu0 0
    %770 = vmatprep.subr.bf16.mxu0 0
    %771 = vmatpush1.bf16.msra.mxu0 0
    %772 = vmatprep.subr.bf16.mxu0 0
    %773 = vmatpush1.bf16.msra.mxu0 0
    %774 = vmatprep.subr.bf16.mxu0 0
    %775 = vmatpush1.bf16.msra.mxu0 0
    %776 = vmatprep.subr.bf16.mxu0 0
    %777 = vmatpush1.bf16.msra.mxu0 0
    %778 = vmatprep.mubr.bf16.mxu0 0
    %779 = vmatmul.mubr.bf16.gmra.mrb[0].mxu0 %v594
    %v780 = vpop.f32.mrb[0].mxu0
    %v781 = vadd.f32 %v732, %v780
    %v782 = vpop.f32.mrb[0].mxu0
    %v783 = vpop.f32.mrb[0].mxu0
    %v784 = vpop.f32.mrb[0].mxu0
    %785 = vdwg.mxu0
    %786 = vst.msk [vmem:[#allocation2 + $0x10] sm:$0xff] %vm562, %v781
    %v787 = vsel %vm562, %v781, 0.0
    %788 = vadd.xlane.f32.xlu0 %v787
    %v789 = vpop.xlane.xlu0 %788
    %v790 = vadd.f32 %v715, %v789
    %v791 = vmul.f32 %v781, %v781
    %v792 = vsel %vm562, %v791, 0.0
    %793 = vadd.xlane.f32.xlu0 %v792
    %v794 = vpop.xlane.xlu0 %793
    %v795 = vadd.f32 %v720, %v794
    %s796 = scalar_lea.vmem [#allocation10], 48
    %v797 = vld [vmem:[%s796] sm:$0xf]
    %v798 = vld [vmem:[%s796 + $0x4] sm:$0xf]
    %v799 = vld [vmem:[%s796 + $0x8] sm:$0xf]
    %v800 = vld [vmem:[%s796 + $0xc] sm:$0xf]
    %s801 = scalar_lea.vmem [#allocation12], 3
    %v802 = vld [vmem:[%s801] sm:$0x1]
    %v804 = vlaneseq
    %v805 = vshrl.u32 %v804, 7
    %v806 = vsub.s32 0, %v805
    %v807 = vrot.slane %v802, %v806
    %v813 = vunpack.c.l.b16 %v797
    %v814 = vunpack.c.l.b16 %v798
    %v815 = vunpack.c.l.b16 %v799
    %v816 = vunpack.c.l.b16 %v800
    %v817 = vpack.c.b16 %v814, %v813
    %v818 = vpack.c.b16 %v816, %v815
    %821 = vmatprep.subr.bf16.mxu0 0
    %822 = vmatpush1.bf16.msra.mxu0 %v817
    %823 = vmatprep.subr.bf16.mxu0 0
    %824 = vmatpush1.bf16.msra.mxu0 %v818
    %825 = vmatprep.subr.bf16.mxu0 0
    %826 = vmatpush1.bf16.msra.mxu0 0
    %827 = vmatprep.subr.bf16.mxu0 0
    %828 = vmatpush1.bf16.msra.mxu0 0
    %829 = vmatprep.subr.bf16.mxu0 0
    %830 = vmatpush1.bf16.msra.mxu0 0
    %831 = vmatprep.subr.bf16.mxu0 0
    %832 = vmatpush1.bf16.msra.mxu0 0
    %833 = vmatprep.subr.bf16.mxu0 0
    %834 = vmatpush1.bf16.msra.mxu0 0
    %835 = vmatprep.subr.bf16.mxu0 0
    %836 = vmatpush1.bf16.msra.mxu0 0
    %837 = vmatprep.subr.bf16.mxu0 0
    %838 = vmatpush1.bf16.msra.mxu0 0
    %839 = vmatprep.subr.bf16.mxu0 0
    %840 = vmatpush1.bf16.msra.mxu0 0
    %841 = vmatprep.subr.bf16.mxu0 0
    %842 = vmatpush1.bf16.msra.mxu0 0
    %843 = vmatprep.subr.bf16.mxu0 0
    %844 = vmatpush1.bf16.msra.mxu0 0
    %845 = vmatprep.subr.bf16.mxu0 0
    %846 = vmatpush1.bf16.msra.mxu0 0
    %847 = vmatprep.subr.bf16.mxu0 0
    %848 = vmatpush1.bf16.msra.mxu0 0
    %849 = vmatprep.subr.bf16.mxu0 0
    %850 = vmatpush1.bf16.msra.mxu0 0
    %851 = vmatprep.subr.bf16.mxu0 0
    %852 = vmatpush1.bf16.msra.mxu0 0
    %853 = vmatprep.mubr.bf16.mxu0 0
    %854 = vmatmul.mubr.bf16.gmra.mrb[0].mxu0 %v594
    %v855 = vpop.f32.mrb[0].mxu0
    %v856 = vadd.f32 %v807, %v855
    %v857 = vpop.f32.mrb[0].mxu0
    %v858 = vpop.f32.mrb[0].mxu0
    %v859 = vpop.f32.mrb[0].mxu0
    %860 = vdwg.mxu0
    %861 = vst.msk [vmem:[#allocation2 + $0x18] sm:$0xff] %vm562, %v856
    %v862 = vsel %vm562, %v856, 0.0
    %863 = vadd.xlane.f32.xlu0 %v862
    %v864 = vpop.xlane.xlu0 %863
    %v865 = vadd.f32 %v790, %v864
    %v866 = vmul.f32 %v856, %v856
    %v867 = vsel %vm562, %v866, 0.0
    %868 = vadd.xlane.f32.xlu0 %v867
    %v869 = vpop.xlane.xlu0 %868
    %v870 = vadd.f32 %v795, %v869
    %v871 = vmul.f32 %v865, 0.0078125
    %v872 = vmul.f32 %v870, 0.0078125
    %v873 = vmul.f32 %v871, %v871
    %v874 = vsub.f32 %v872, %v873
    %v875 = vmax.f32 %v874, 0.0
    %v876 = vadd.f32 %v875, 1e-05
    %v877 = vrsqrt.pop %v876
    %v878 = vld [vmem:[#allocation2] sm:$0xff]
    %v879 = vsub.f32 %v878, %v871
    %v880 = vmul.f32 %v879, %v877
    %v881 = vld [vmem:[#allocation13] sm:$0x1]
    %v883 = vlaneseq
    %v884 = vshrl.u32 %v883, 7
    %v885 = vsub.s32 0, %v884
    %v886 = vrot.slane %v881, %v885
    %v888 = vmul.f32 %v880, %v886
    %v889 = vld [vmem:[#allocation15] sm:$0x1]
    %v891 = vlaneseq
    %v892 = vshrl.u32 %v891, 7
    %v893 = vsub.s32 0, %v892
    %v894 = vrot.slane %v889, %v893
    %v896 = vadd.f32 %v888, %v894
    %v897 = vmul.f32 %v896, %v896
    %v898 = vsel %vm562, %v897, 0.0
    %899 = vadd.xlane.f32.xlu0 %v898
    %v900 = vpop.xlane.xlu0 %899
    %v901 = vmax.f32 %v900, 1e-24
    %v902 = vrsqrt.pop %v901
    %v903 = vmul.f32 %v896, %v902
    %v904 = vld [vmem:[#allocation16] sm:$0x1]
    %v906 = vlaneseq
    %v907 = vshrl.u32 %v906, 7
    %v908 = vsub.s32 0, %v907
    %v909 = vrot.slane %v904, %v908
    %v911 = vadd.f32 %v903, %v909
    %912 = vst.msk [vmem:[#allocation2] sm:$0xff] %vm562, %v911
    %v913 = vld [vmem:[#allocation2 + $0x8] sm:$0xff]
    %v914 = vsub.f32 %v913, %v871
    %v915 = vmul.f32 %v914, %v877
    %s916 = scalar_lea.vmem [#allocation13], 1
    %v917 = vld [vmem:[%s916] sm:$0x1]
    %v919 = vlaneseq
    %v920 = vshrl.u32 %v919, 7
    %v921 = vsub.s32 0, %v920
    %v922 = vrot.slane %v917, %v921
    %v924 = vmul.f32 %v915, %v922
    %s925 = scalar_lea.vmem [#allocation15], 1
    %v926 = vld [vmem:[%s925] sm:$0x1]
    %v928 = vlaneseq
    %v929 = vshrl.u32 %v928, 7
    %v930 = vsub.s32 0, %v929
    %v931 = vrot.slane %v926, %v930
    %v933 = vadd.f32 %v924, %v931
    %v934 = vmul.f32 %v933, %v933
    %v935 = vsel %vm562, %v934, 0.0
    %936 = vadd.xlane.f32.xlu0 %v935
    %v937 = vpop.xlane.xlu0 %936
    %v938 = vmax.f32 %v937, 1e-24
    %v939 = vrsqrt.pop %v938
    %v940 = vmul.f32 %v933, %v939
    %s941 = scalar_lea.vmem [#allocation16], 1
    %v942 = vld [vmem:[%s941] sm:$0x1]
    %v944 = vlaneseq
    %v945 = vshrl.u32 %v944, 7
    %v946 = vsub.s32 0, %v945
    %v947 = vrot.slane %v942, %v946
    %v949 = vadd.f32 %v940, %v947
    %950 = vst.msk [vmem:[#allocation2 + $0x8] sm:$0xff] %vm562, %v949
    %v951 = vld [vmem:[#allocation2 + $0x10] sm:$0xff]
    %v952 = vsub.f32 %v951, %v871
    %v953 = vmul.f32 %v952, %v877
    %s954 = scalar_lea.vmem [#allocation13], 2
    %v955 = vld [vmem:[%s954] sm:$0x1]
    %v957 = vlaneseq
    %v958 = vshrl.u32 %v957, 7
    %v959 = vsub.s32 0, %v958
    %v960 = vrot.slane %v955, %v959
    %v962 = vmul.f32 %v953, %v960
    %s963 = scalar_lea.vmem [#allocation15], 2
    %v964 = vld [vmem:[%s963] sm:$0x1]
    %v966 = vlaneseq
    %v967 = vshrl.u32 %v966, 7
    %v968 = vsub.s32 0, %v967
    %v969 = vrot.slane %v964, %v968
    %v971 = vadd.f32 %v962, %v969
    %v972 = vmul.f32 %v971, %v971
    %v973 = vsel %vm562, %v972, 0.0
    %974 = vadd.xlane.f32.xlu0 %v973
    %v975 = vpop.xlane.xlu0 %974
    %v976 = vmax.f32 %v975, 1e-24
    %v977 = vrsqrt.pop %v976
    %v978 = vmul.f32 %v971, %v977
    %s979 = scalar_lea.vmem [#allocation16], 2
    %v980 = vld [vmem:[%s979] sm:$0x1]
    %v982 = vlaneseq
    %v983 = vshrl.u32 %v982, 7
    %v984 = vsub.s32 0, %v983
    %v985 = vrot.slane %v980, %v984
    %v987 = vadd.f32 %v978, %v985
    %988 = vst.msk [vmem:[#allocation2 + $0x10] sm:$0xff] %vm562, %v987
    %v989 = vld [vmem:[#allocation2 + $0x18] sm:$0xff]
    %v990 = vsub.f32 %v989, %v871
    %v991 = vmul.f32 %v990, %v877
    %s992 = scalar_lea.vmem [#allocation13], 3
    %v993 = vld [vmem:[%s992] sm:$0x1]
    %v995 = vlaneseq
    %v996 = vshrl.u32 %v995, 7
    %v997 = vsub.s32 0, %v996
    %v998 = vrot.slane %v993, %v997
    %v1000 = vmul.f32 %v991, %v998
    %s1001 = scalar_lea.vmem [#allocation15], 3
    %v1002 = vld [vmem:[%s1001] sm:$0x1]
    %v1004 = vlaneseq
    %v1005 = vshrl.u32 %v1004, 7
    %v1006 = vsub.s32 0, %v1005
    %v1007 = vrot.slane %v1002, %v1006
    %v1009 = vadd.f32 %v1000, %v1007
    %v1010 = vmul.f32 %v1009, %v1009
    %v1011 = vsel %vm562, %v1010, 0.0
    %1012 = vadd.xlane.f32.xlu0 %v1011
    %v1013 = vpop.xlane.xlu0 %1012
    %v1014 = vmax.f32 %v1013, 1e-24
    %v1015 = vrsqrt.pop %v1014
    %v1016 = vmul.f32 %v1009, %v1015
    %s1017 = scalar_lea.vmem [#allocation16], 3
    %v1018 = vld [vmem:[%s1017] sm:$0x1]
    %v1020 = vlaneseq
    %v1021 = vshrl.u32 %v1020, 7
    %v1022 = vsub.s32 0, %v1021
    %v1023 = vrot.slane %v1018, %v1022
    %v1025 = vadd.f32 %v1016, %v1023
    %1026 = vst.msk [vmem:[#allocation2 + $0x18] sm:$0xff] %vm562, %v1025
    %v1027 = vld [vmem:[#allocation2] sm:$0xff]
    %v1028 = vld [vmem:[#allocation2 + $0x8] sm:$0xff]
    %v1029 = vld [vmem:[#allocation2 + $0x10] sm:$0xff]
    %v1030 = vld [vmem:[#allocation2 + $0x18] sm:$0xff]
    %v1031 = vld [vmem:[#allocation27] sm:$0xf]
    %v1032 = vld [vmem:[#allocation27 + $0x4] sm:$0xf]
    %v1033 = vld [vmem:[#allocation27 + $0x8] sm:$0xf]
    %v1034 = vld [vmem:[#allocation27 + $0xc] sm:$0xf]
    %v1035 = vld [vmem:[#allocation28] sm:$0x3]
    %v1036 = vmul.f32 %v1027, %v1027
    %v1037 = vmul.f32 %v1028, %v1028
    %v1038 = vmul.f32 %v1029, %v1029
    %v1039 = vmul.f32 %v1030, %v1030
    %v1040 = vsel %vm562, %v1036, 0.0
    %1041 = vadd.xlane.f32.xlu0 %v1040
    %v1042 = vpop.xlane.xlu0 %1041
    %v1043 = vsel %vm562, %v1037, 0.0
    %1044 = vadd.xlane.f32.xlu0 %v1043
    %v1045 = vpop.xlane.xlu0 %1044
    %v1046 = vsel %vm562, %v1038, 0.0
    %1047 = vadd.xlane.f32.xlu0 %v1046
    %v1048 = vpop.xlane.xlu0 %1047
    %v1049 = vsel %vm562, %v1039, 0.0
    %1050 = vadd.xlane.f32.xlu0 %v1049
    %v1051 = vpop.xlane.xlu0 %1050
    %v1052 = vmax.f32 %v1042, 1e-24
    %v1053 = vmax.f32 %v1045, 1e-24
    %v1054 = vmax.f32 %v1048, 1e-24
    %v1055 = vmax.f32 %v1051, 1e-24
    %v1056 = vrsqrt.pop %v1052
    %v1057 = vrsqrt.pop %v1053
    %v1058 = vrsqrt.pop %v1054
    %v1059 = vrsqrt.pop %v1055
    %v1060 = vmul.f32 %v1027, %v1056
    %v1061 = vmul.f32 %v1028, %v1057
    %v1062 = vmul.f32 %v1029, %v1058
    %v1063 = vmul.f32 %v1030, %v1059
    %v1064 = vld [vmem:[#allocation18] sm:$0xf]
    %v1065 = vld [vmem:[#allocation18 + $0x4] sm:$0xf]
    %v1066 = vld [vmem:[#allocation18 + $0x8] sm:$0xf]
    %v1067 = vld [vmem:[#allocation18 + $0xc] sm:$0xf]
    %v1068 = vpack.c.bf16 %v1061, %v1060
    %v1069 = vpack.c.bf16 %v1063, %v1062
    %v1070 = vld [vmem:[#allocation19] sm:$0x1]
    %v1072 = vlaneseq
    %v1073 = vshrl.u32 %v1072, 7
    %v1074 = vsub.s32 0, %v1073
    %v1075 = vrot.slane %v1070, %v1074
    %v1081 = vunpack.c.l.b16 %v1064
    %v1082 = vunpack.c.l.b16 %v1065
    %v1083 = vunpack.c.l.b16 %v1066
    %v1084 = vunpack.c.l.b16 %v1067
    %v1085 = vpack.c.b16 %v1082, %v1081
    %v1086 = vpack.c.b16 %v1084, %v1083
    %v1090 = vsel %vm562, %v1068, 0
    %v1093 = vsel %vm562, %v1069, 0
    %1095 = vmatprep.subr.bf16.mxu0 0
    %1096 = vmatpush1.bf16.msra.mxu0 %v1085
    %1097 = vmatprep.subr.bf16.mxu0 0
    %1098 = vmatpush1.bf16.msra.mxu0 %v1086
    %1099 = vmatprep.subr.bf16.mxu0 0
    %1100 = vmatpush1.bf16.msra.mxu0 0
    %1101 = vmatprep.subr.bf16.mxu0 0
    %1102 = vmatpush1.bf16.msra.mxu0 0
    %1103 = vmatprep.subr.bf16.mxu0 0
    %1104 = vmatpush1.bf16.msra.mxu0 0
    %1105 = vmatprep.subr.bf16.mxu0 0
    %1106 = vmatpush1.bf16.msra.mxu0 0
    %1107 = vmatprep.subr.bf16.mxu0 0
    %1108 = vmatpush1.bf16.msra.mxu0 0
    %1109 = vmatprep.subr.bf16.mxu0 0
    %1110 = vmatpush1.bf16.msra.mxu0 0
    %1111 = vmatprep.subr.bf16.mxu0 0
    %1112 = vmatpush1.bf16.msra.mxu0 0
    %1113 = vmatprep.subr.bf16.mxu0 0
    %1114 = vmatpush1.bf16.msra.mxu0 0
    %1115 = vmatprep.subr.bf16.mxu0 0
    %1116 = vmatpush1.bf16.msra.mxu0 0
    %1117 = vmatprep.subr.bf16.mxu0 0
    %1118 = vmatpush1.bf16.msra.mxu0 0
    %1119 = vmatprep.subr.bf16.mxu0 0
    %1120 = vmatpush1.bf16.msra.mxu0 0
    %1121 = vmatprep.subr.bf16.mxu0 0
    %1122 = vmatpush1.bf16.msra.mxu0 0
    %1123 = vmatprep.subr.bf16.mxu0 0
    %1124 = vmatpush1.bf16.msra.mxu0 0
    %1125 = vmatprep.subr.bf16.mxu0 0
    %1126 = vmatpush1.bf16.msra.mxu0 0
    %1127 = vmatprep.mubr.bf16.mxu0 0
    %1128 = vmatmul.mubr.bf16.gmra.mrb[0].mxu0 %v1090
    %v1129 = vpop.f32.mrb[0].mxu0
    %v1130 = vadd.f32 %v1075, %v1129
    %v1131 = vpop.f32.mrb[0].mxu0
    %v1132 = vpop.f32.mrb[0].mxu0
    %v1133 = vadd.f32 %v1075, %v1132
    %v1134 = vpop.f32.mrb[0].mxu0
    %1135 = vmatprep.mubr.bf16.mxu0 0
    %1136 = vmatmul.mubr.bf16.gmra.mrb[0].mxu0 %v1093
    %v1137 = vpop.f32.mrb[0].mxu0
    %v1138 = vadd.f32 %v1075, %v1137
    %v1139 = vpop.f32.mrb[0].mxu0
    %v1140 = vpop.f32.mrb[0].mxu0
    %v1141 = vadd.f32 %v1075, %v1140
    %v1142 = vpop.f32.mrb[0].mxu0
    %1143 = vdwg.mxu0
    %v1144 = vmul.f32 %v1130, 0.35355338
    %v1145 = vmul.f32 %v1133, 0.35355338
    %v1146 = vmul.f32 %v1138, 0.35355338
    %v1147 = vmul.f32 %v1141, 0.35355338
    %v1148 = vld [vmem:[#allocation21] sm:$0xf]
    %v1149 = vld [vmem:[#allocation21 + $0x4] sm:$0xf]
    %v1150 = vld [vmem:[#allocation21 + $0x8] sm:$0xf]
    %v1151 = vld [vmem:[#allocation21 + $0xc] sm:$0xf]
    %v1152 = vld [vmem:[#allocation22] sm:$0x1]
    %v1154 = vlaneseq
    %v1155 = vshrl.u32 %v1154, 7
    %v1156 = vsub.s32 0, %v1155
    %v1157 = vrot.slane %v1152, %v1156
    %v1163 = vunpack.c.l.b16 %v1148
    %v1164 = vunpack.c.l.b16 %v1149
    %v1165 = vunpack.c.l.b16 %v1150
    %v1166 = vunpack.c.l.b16 %v1151
    %v1167 = vpack.c.b16 %v1164, %v1163
    %v1168 = vpack.c.b16 %v1166, %v1165
    %1171 = vmatprep.subr.bf16.mxu0 0
    %1172 = vmatpush1.bf16.msra.mxu0 %v1167
    %1173 = vmatprep.subr.bf16.mxu0 0
    %1174 = vmatpush1.bf16.msra.mxu0 %v1168
    %1175 = vmatprep.subr.bf16.mxu0 0
    %1176 = vmatpush1.bf16.msra.mxu0 0
    %1177 = vmatprep.subr.bf16.mxu0 0
    %1178 = vmatpush1.bf16.msra.mxu0 0
    %1179 = vmatprep.subr.bf16.mxu0 0
    %1180 = vmatpush1.bf16.msra.mxu0 0
    %1181 = vmatprep.subr.bf16.mxu0 0
    %1182 = vmatpush1.bf16.msra.mxu0 0
    %1183 = vmatprep.subr.bf16.mxu0 0
    %1184 = vmatpush1.bf16.msra.mxu0 0
    %1185 = vmatprep.subr.bf16.mxu0 0
    %1186 = vmatpush1.bf16.msra.mxu0 0
    %1187 = vmatprep.subr.bf16.mxu0 0
    %1188 = vmatpush1.bf16.msra.mxu0 0
    %1189 = vmatprep.subr.bf16.mxu0 0
    %1190 = vmatpush1.bf16.msra.mxu0 0
    %1191 = vmatprep.subr.bf16.mxu0 0
    %1192 = vmatpush1.bf16.msra.mxu0 0
    %1193 = vmatprep.subr.bf16.mxu0 0
    %1194 = vmatpush1.bf16.msra.mxu0 0
    %1195 = vmatprep.subr.bf16.mxu0 0
    %1196 = vmatpush1.bf16.msra.mxu0 0
    %1197 = vmatprep.subr.bf16.mxu0 0
    %1198 = vmatpush1.bf16.msra.mxu0 0
    %1199 = vmatprep.subr.bf16.mxu0 0
    %1200 = vmatpush1.bf16.msra.mxu0 0
    %1201 = vmatprep.subr.bf16.mxu0 0
    %1202 = vmatpush1.bf16.msra.mxu0 0
    %1203 = vmatprep.mubr.bf16.mxu0 0
    %1204 = vmatmul.mubr.bf16.gmra.mrb[0].mxu0 %v1090
    %v1205 = vpop.f32.mrb[0].mxu0
    %v1206 = vadd.f32 %v1157, %v1205
    %v1207 = vpop.f32.mrb[0].mxu0
    %v1208 = vpop.f32.mrb[0].mxu0
    %v1209 = vadd.f32 %v1157, %v1208
    %v1210 = vpop.f32.mrb[0].mxu0
    %1211 = vmatprep.mubr.bf16.mxu0 0
    %1212 = vmatmul.mubr.bf16.gmra.mrb[0].mxu0 %v1093
    %v1213 = vpop.f32.mrb[0].mxu0
    %v1214 = vadd.f32 %v1157, %v1213
    %v1215 = vpop.f32.mrb[0].mxu0
    %v1216 = vpop.f32.mrb[0].mxu0
    %v1217 = vadd.f32 %v1157, %v1216
    %v1218 = vpop.f32.mrb[0].mxu0
    %1219 = vdwg.mxu0
    %v1220 = vld [vmem:[#allocation24] sm:$0xf]
    %v1221 = vld [vmem:[#allocation24 + $0x4] sm:$0xf]
    %v1222 = vld [vmem:[#allocation24 + $0x8] sm:$0xf]
    %v1223 = vld [vmem:[#allocation24 + $0xc] sm:$0xf]
    %v1224 = vld [vmem:[#allocation25] sm:$0x1]
    %v1226 = vlaneseq
    %v1227 = vshrl.u32 %v1226, 7
    %v1228 = vsub.s32 0, %v1227
    %v1229 = vrot.slane %v1224, %v1228
    %v1235 = vunpack.c.l.b16 %v1220
    %v1236 = vunpack.c.l.b16 %v1221
    %v1237 = vunpack.c.l.b16 %v1222
    %v1238 = vunpack.c.l.b16 %v1223
    %v1239 = vpack.c.b16 %v1236, %v1235
    %v1240 = vpack.c.b16 %v1238, %v1237
    %1243 = vmatprep.subr.bf16.mxu0 0
    %1244 = vmatpush1.bf16.msra.mxu0 %v1239
    %1245 = vmatprep.subr.bf16.mxu0 0
    %1246 = vmatpush1.bf16.msra.mxu0 %v1240
    %1247 = vmatprep.subr.bf16.mxu0 0
    %1248 = vmatpush1.bf16.msra.mxu0 0
    %1249 = vmatprep.subr.bf16.mxu0 0
    %1250 = vmatpush1.bf16.msra.mxu0 0
    %1251 = vmatprep.subr.bf16.mxu0 0
    %1252 = vmatpush1.bf16.msra.mxu0 0
    %1253 = vmatprep.subr.bf16.mxu0 0
    %1254 = vmatpush1.bf16.msra.mxu0 0
    %1255 = vmatprep.subr.bf16.mxu0 0
    %1256 = vmatpush1.bf16.msra.mxu0 0
    %1257 = vmatprep.subr.bf16.mxu0 0
    %1258 = vmatpush1.bf16.msra.mxu0 0
    %1259 = vmatprep.subr.bf16.mxu0 0
    %1260 = vmatpush1.bf16.msra.mxu0 0
    %1261 = vmatprep.subr.bf16.mxu0 0
    %1262 = vmatpush1.bf16.msra.mxu0 0
    %1263 = vmatprep.subr.bf16.mxu0 0
    %1264 = vmatpush1.bf16.msra.mxu0 0
    %1265 = vmatprep.subr.bf16.mxu0 0
    %1266 = vmatpush1.bf16.msra.mxu0 0
    %1267 = vmatprep.subr.bf16.mxu0 0
    %1268 = vmatpush1.bf16.msra.mxu0 0
    %1269 = vmatprep.subr.bf16.mxu0 0
    %1270 = vmatpush1.bf16.msra.mxu0 0
    %1271 = vmatprep.subr.bf16.mxu0 0
    %1272 = vmatpush1.bf16.msra.mxu0 0
    %1273 = vmatprep.subr.bf16.mxu0 0
    %1274 = vmatpush1.bf16.msra.mxu0 0
    %1275 = vmatprep.mubr.bf16.mxu0 0
    %1276 = vmatmul.mubr.bf16.gmra.mrb[0].mxu0 %v1090
    %v1277 = vpop.f32.mrb[0].mxu0
    %v1278 = vadd.f32 %v1229, %v1277
    %v1279 = vpop.f32.mrb[0].mxu0
    %v1280 = vpop.f32.mrb[0].mxu0
    %v1281 = vadd.f32 %v1229, %v1280
    %v1282 = vpop.f32.mrb[0].mxu0
    %1283 = vmatprep.mubr.bf16.mxu0 0
    %1284 = vmatmul.mubr.bf16.gmra.mrb[0].mxu0 %v1093
    %v1285 = vpop.f32.mrb[0].mxu0
    %v1286 = vadd.f32 %v1229, %v1285
    %v1287 = vpop.f32.mrb[0].mxu0
    %v1288 = vpop.f32.mrb[0].mxu0
    %v1289 = vadd.f32 %v1229, %v1288
    %v1290 = vpop.f32.mrb[0].mxu0
    %1291 = vdwg.mxu0
    %v1292 = vmul.f32 %v1206, %v1144
    %v1293 = vmul.f32 %v1209, %v1144
    %v1294 = vmul.f32 %v1214, %v1144
    %v1295 = vmul.f32 %v1217, %v1144
    %v1296 = vpack.c.bf16 %v1293, %v1292
    %v1297 = vpack.c.bf16 %v1295, %v1294
    %v1302 = vunpack.c.l.b16 %v1031
    %v1303 = vunpack.c.l.b16 %v1032
    %v1304 = vunpack.c.l.b16 %v1033
    %v1305 = vunpack.c.l.b16 %v1034
    %v1306 = vpack.c.b16 %v1303, %v1302
    %v1307 = vpack.c.b16 %v1305, %v1304
    %v1311 = vsel %vm562, %v1296, 0
    %v1314 = vsel %vm562, %v1297, 0
    %1316 = vmatprep.subr.bf16.mxu0 0
    %1317 = vmatpush1.bf16.msra.mxu0 %v1306
    %1318 = vmatprep.subr.bf16.mxu0 0
    %1319 = vmatpush1.bf16.msra.mxu0 %v1307
    %1320 = vmatprep.subr.bf16.mxu0 0
    %1321 = vmatpush1.bf16.msra.mxu0 0
    %1322 = vmatprep.subr.bf16.mxu0 0
    %1323 = vmatpush1.bf16.msra.mxu0 0
    %1324 = vmatprep.subr.bf16.mxu0 0
    %1325 = vmatpush1.bf16.msra.mxu0 0
    %1326 = vmatprep.subr.bf16.mxu0 0
    %1327 = vmatpush1.bf16.msra.mxu0 0
    %1328 = vmatprep.subr.bf16.mxu0 0
    %1329 = vmatpush1.bf16.msra.mxu0 0
    %1330 = vmatprep.subr.bf16.mxu0 0
    %1331 = vmatpush1.bf16.msra.mxu0 0
    %1332 = vmatprep.subr.bf16.mxu0 0
    %1333 = vmatpush1.bf16.msra.mxu0 0
    %1334 = vmatprep.subr.bf16.mxu0 0
    %1335 = vmatpush1.bf16.msra.mxu0 0
    %1336 = vmatprep.subr.bf16.mxu0 0
    %1337 = vmatpush1.bf16.msra.mxu0 0
    %1338 = vmatprep.subr.bf16.mxu0 0
    %1339 = vmatpush1.bf16.msra.mxu0 0
    %1340 = vmatprep.subr.bf16.mxu0 0
    %1341 = vmatpush1.bf16.msra.mxu0 0
    %1342 = vmatprep.subr.bf16.mxu0 0
    %1343 = vmatpush1.bf16.msra.mxu0 0
    %1344 = vmatprep.subr.bf16.mxu0 0
    %1345 = vmatpush1.bf16.msra.mxu0 0
    %1346 = vmatprep.subr.bf16.mxu0 0
    %1347 = vmatpush1.bf16.msra.mxu0 0
    %1348 = vmatprep.mubr.bf16.mxu0 0
    %1349 = vmatmul.mubr.bf16.gmra.mrb[0].mxu0 %v1311
    %v1350 = vpop.f32.mrb[0].mxu0
    %v1351 = vadd.f32 0.0, %v1350
    %v1352 = vpop.f32.mrb[0].mxu0
    %v1353 = vpop.f32.mrb[0].mxu0
    %v1354 = vadd.f32 0.0, %v1353
    %v1355 = vpop.f32.mrb[0].mxu0
    %1356 = vmatprep.mubr.bf16.mxu0 0
    %1357 = vmatmul.mubr.bf16.gmra.mrb[0].mxu0 %v1314
    %v1358 = vpop.f32.mrb[0].mxu0
    %v1359 = vadd.f32 0.0, %v1358
    %v1360 = vpop.f32.mrb[0].mxu0
    %v1361 = vpop.f32.mrb[0].mxu0
    %v1362 = vadd.f32 0.0, %v1361
    %v1363 = vpop.f32.mrb[0].mxu0
    %1364 = vdwg.mxu0
    %vm1365 = vcmask 31744
    %v1366 = vsel %vm1365, %v1351, -inf
    %v1367 = vsel %vm1365, %v1354, -inf
    %v1368 = vsel %vm1365, %v1359, -inf
    %v1369 = vsel %vm1365, %v1362, -inf
    %v1370 = vmax.f32 %v1366, %v1367
    %v1371 = vmax.f32 %v1368, %v1369
    %v1372 = vmax.f32 %v1370, %v1371
    %v1373 = vsub.f32 %v1351, %v1372
    %v1374 = vsub.f32 %v1354, %v1372
    %v1375 = vsub.f32 %v1359, %v1372
    %v1376 = vsub.f32 %v1362, %v1372
    %v1377 = vmul.f32 %v1373, 1.442695
    %v1378 = vpow.pop %v1377
    %v1379 = vmul.f32 %v1374, 1.442695
    %v1380 = vpow.pop %v1379
    %v1381 = vmul.f32 %v1375, 1.442695
    %v1382 = vpow.pop %v1381
    %v1383 = vmul.f32 %v1376, 1.442695
    %v1384 = vpow.pop %v1383
    %v1385 = vsel %vm1365, %v1378, 0.0
    %v1386 = vsel %vm1365, %v1380, 0.0
    %v1387 = vadd.f32 %v1385, %v1386
    %v1388 = vsel %vm1365, %v1382, 0.0
    %v1389 = vadd.f32 %v1387, %v1388
    %v1390 = vsel %vm1365, %v1384, 0.0
    %v1391 = vadd.f32 %v1389, %v1390
    %v1392 = vrcp.pop %v1391
    %v1393 = vmul.f32 %v1378, %v1392
    %v1394 = vmul.f32 %v1380, %v1392
    %v1395 = vmul.f32 %v1382, %v1392
    %v1396 = vmul.f32 %v1384, %v1392
    %v1397 = vpack.c.bf16 %v1394, %v1393
    %v1398 = vpack.c.bf16 %v1396, %v1395
    %v1400 = vsel %vm1365, %v1397, 0
    %v1403 = vsel %vm1365, %v1398, 0
    %vm1405 = vcmask 1041408
    %v1407 = vsel %vm1405, %v1035, 0
    %1409 = vmatprep.subr.bf16.mxu0 0
    %1410 = vmatpush1.bf16.msra.mxu0 %v1407
    %1411 = vmatprep.subr.bf16.mxu0 0
    %1412 = vmatpush1.bf16.msra.mxu0 0
    %1413 = vmatprep.subr.bf16.mxu0 0
    %1414 = vmatpush1.bf16.msra.mxu0 0
    %1415 = vmatprep.subr.bf16.mxu0 0
    %1416 = vmatpush1.bf16.msra.mxu0 0
    %1417 = vmatprep.subr.bf16.mxu0 0
    %1418 = vmatpush1.bf16.msra.mxu0 0
    %1419 = vmatprep.subr.bf16.mxu0 0
    %1420 = vmatpush1.bf16.msra.mxu0 0
    %1421 = vmatprep.subr.bf16.mxu0 0
    %1422 = vmatpush1.bf16.msra.mxu0 0
    %1423 = vmatprep.subr.bf16.mxu0 0
    %1424 = vmatpush1.bf16.msra.mxu0 0
    %1425 = vmatprep.subr.bf16.mxu0 0
    %1426 = vmatpush1.bf16.msra.mxu0 0
    %1427 = vmatprep.subr.bf16.mxu0 0
    %1428 = vmatpush1.bf16.msra.mxu0 0
    %1429 = vmatprep.subr.bf16.mxu0 0
    %1430 = vmatpush1.bf16.msra.mxu0 0
    %1431 = vmatprep.subr.bf16.mxu0 0
    %1432 = vmatpush1.bf16.msra.mxu0 0
    %1433 = vmatprep.subr.bf16.mxu0 0
    %1434 = vmatpush1.bf16.msra.mxu0 0
    %1435 = vmatprep.subr.bf16.mxu0 0
    %1436 = vmatpush1.bf16.msra.mxu0 0
    %1437 = vmatprep.subr.bf16.mxu0 0
    %1438 = vmatpush1.bf16.msra.mxu0 0
    %1439 = vmatprep.subr.bf16.mxu0 0
    %1440 = vmatpush1.bf16.msra.mxu0 0
    %1441 = vmatprep.mubr.bf16.mxu0 0
    %1442 = vmatmul.mubr.bf16.gmra.mrb[0].mxu0 %v1400
    %v1443 = vpop.f32.mrb[0].mxu0
    %v1444 = vadd.f32 0.0, %v1443
    %v1445 = vpop.f32.mrb[0].mxu0
    %v1446 = vpop.f32.mrb[0].mxu0
    %v1447 = vadd.f32 0.0, %v1446
    %v1448 = vpop.f32.mrb[0].mxu0
    %1449 = vmatprep.mubr.bf16.mxu0 0
    %1450 = vmatmul.mubr.bf16.gmra.mrb[0].mxu0 %v1403
    %v1451 = vpop.f32.mrb[0].mxu0
    %v1452 = vadd.f32 0.0, %v1451
    %v1453 = vpop.f32.mrb[0].mxu0
    %v1454 = vpop.f32.mrb[0].mxu0
    %v1455 = vadd.f32 0.0, %v1454
    %v1456 = vpop.f32.mrb[0].mxu0
    %1457 = vdwg.mxu0
    %v1458 = vmul.f32 %v1444, %v1278
    %v1459 = vmul.f32 %v1447, %v1281
    %v1460 = vmul.f32 %v1452, %v1286
    %v1461 = vmul.f32 %v1455, %v1289
    %v1462 = vsel %vm562, %v1458, 0.0
    %v1463 = vsel %vm562, %v1459, 0.0
    %v1464 = vadd.f32 %v1462, %v1463
    %v1465 = vsel %vm562, %v1460, 0.0
    %v1466 = vadd.f32 %v1464, %v1465
    %v1467 = vsel %vm562, %v1461, 0.0
    %v1468 = vadd.f32 %v1466, %v1467
    %1469 = vst.msk [vmem:[#allocation2] sm:$0xff] %vm562, %v1468
    %v1470 = vmul.f32 %v1206, %v1145
    %v1471 = vmul.f32 %v1209, %v1145
    %v1472 = vmul.f32 %v1214, %v1145
    %v1473 = vmul.f32 %v1217, %v1145
    %v1474 = vpack.c.bf16 %v1471, %v1470
    %v1475 = vpack.c.bf16 %v1473, %v1472
    %v1477 = vsel %vm562, %v1474, 0
    %v1480 = vsel %vm562, %v1475, 0
    %1482 = vmatprep.subr.bf16.mxu0 0
    %1483 = vmatpush1.bf16.msra.mxu0 %v1306
    %1484 = vmatprep.subr.bf16.mxu0 0
    %1485 = vmatpush1.bf16.msra.mxu0 %v1307
    %1486 = vmatprep.subr.bf16.mxu0 0
    %1487 = vmatpush1.bf16.msra.mxu0 0
    %1488 = vmatprep.subr.bf16.mxu0 0
    %1489 = vmatpush1.bf16.msra.mxu0 0
    %1490 = vmatprep.subr.bf16.mxu0 0
    %1491 = vmatpush1.bf16.msra.mxu0 0
    %1492 = vmatprep.subr.bf16.mxu0 0
    %1493 = vmatpush1.bf16.msra.mxu0 0
    %1494 = vmatprep.subr.bf16.mxu0 0
    %1495 = vmatpush1.bf16.msra.mxu0 0
    %1496 = vmatprep.subr.bf16.mxu0 0
    %1497 = vmatpush1.bf16.msra.mxu0 0
    %1498 = vmatprep.subr.bf16.mxu0 0
    %1499 = vmatpush1.bf16.msra.mxu0 0
    %1500 = vmatprep.subr.bf16.mxu0 0
    %1501 = vmatpush1.bf16.msra.mxu0 0
    %1502 = vmatprep.subr.bf16.mxu0 0
    %1503 = vmatpush1.bf16.msra.mxu0 0
    %1504 = vmatprep.subr.bf16.mxu0 0
    %1505 = vmatpush1.bf16.msra.mxu0 0
    %1506 = vmatprep.subr.bf16.mxu0 0
    %1507 = vmatpush1.bf16.msra.mxu0 0
    %1508 = vmatprep.subr.bf16.mxu0 0
    %1509 = vmatpush1.bf16.msra.mxu0 0
    %1510 = vmatprep.subr.bf16.mxu0 0
    %1511 = vmatpush1.bf16.msra.mxu0 0
    %1512 = vmatprep.subr.bf16.mxu0 0
    %1513 = vmatpush1.bf16.msra.mxu0 0
    %1514 = vmatprep.mubr.bf16.mxu0 0
    %1515 = vmatmul.mubr.bf16.gmra.mrb[0].mxu0 %v1477
    %v1516 = vpop.f32.mrb[0].mxu0
    %v1517 = vadd.f32 0.0, %v1516
    %v1518 = vpop.f32.mrb[0].mxu0
    %v1519 = vpop.f32.mrb[0].mxu0
    %v1520 = vadd.f32 0.0, %v1519
    %v1521 = vpop.f32.mrb[0].mxu0
    %1522 = vmatprep.mubr.bf16.mxu0 0
    %1523 = vmatmul.mubr.bf16.gmra.mrb[0].mxu0 %v1480
    %v1524 = vpop.f32.mrb[0].mxu0
    %v1525 = vadd.f32 0.0, %v1524
    %v1526 = vpop.f32.mrb[0].mxu0
    %v1527 = vpop.f32.mrb[0].mxu0
    %v1528 = vadd.f32 0.0, %v1527
    %v1529 = vpop.f32.mrb[0].mxu0
    %1530 = vdwg.mxu0
    %v1531 = vsel %vm1365, %v1517, -inf
    %v1532 = vsel %vm1365, %v1520, -inf
    %v1533 = vsel %vm1365, %v1525, -inf
    %v1534 = vsel %vm1365, %v1528, -inf
    %v1535 = vmax.f32 %v1531, %v1532
    %v1536 = vmax.f32 %v1533, %v1534
    %v1537 = vmax.f32 %v1535, %v1536
    %v1538 = vsub.f32 %v1517, %v1537
    %v1539 = vsub.f32 %v1520, %v1537
    %v1540 = vsub.f32 %v1525, %v1537
    %v1541 = vsub.f32 %v1528, %v1537
    %v1542 = vmul.f32 %v1538, 1.442695
    %v1543 = vpow.pop %v1542
    %v1544 = vmul.f32 %v1539, 1.442695
    %v1545 = vpow.pop %v1544
    %v1546 = vmul.f32 %v1540, 1.442695
    %v1547 = vpow.pop %v1546
    %v1548 = vmul.f32 %v1541, 1.442695
    %v1549 = vpow.pop %v1548
    %v1550 = vsel %vm1365, %v1543, 0.0
    %v1551 = vsel %vm1365, %v1545, 0.0
    %v1552 = vadd.f32 %v1550, %v1551
    %v1553 = vsel %vm1365, %v1547, 0.0
    %v1554 = vadd.f32 %v1552, %v1553
    %v1555 = vsel %vm1365, %v1549, 0.0
    %v1556 = vadd.f32 %v1554, %v1555
    %v1557 = vrcp.pop %v1556
    %v1558 = vmul.f32 %v1543, %v1557
    %v1559 = vmul.f32 %v1545, %v1557
    %v1560 = vmul.f32 %v1547, %v1557
    %v1561 = vmul.f32 %v1549, %v1557
    %v1562 = vpack.c.bf16 %v1559, %v1558
    %v1563 = vpack.c.bf16 %v1561, %v1560
    %v1565 = vsel %vm1365, %v1562, 0
    %v1568 = vsel %vm1365, %v1563, 0
    %1570 = vmatprep.subr.bf16.mxu0 0
    %1571 = vmatpush1.bf16.msra.mxu0 %v1407
    %1572 = vmatprep.subr.bf16.mxu0 0
    %1573 = vmatpush1.bf16.msra.mxu0 0
    %1574 = vmatprep.subr.bf16.mxu0 0
    %1575 = vmatpush1.bf16.msra.mxu0 0
    %1576 = vmatprep.subr.bf16.mxu0 0
    %1577 = vmatpush1.bf16.msra.mxu0 0
    %1578 = vmatprep.subr.bf16.mxu0 0
    %1579 = vmatpush1.bf16.msra.mxu0 0
    %1580 = vmatprep.subr.bf16.mxu0 0
    %1581 = vmatpush1.bf16.msra.mxu0 0
    %1582 = vmatprep.subr.bf16.mxu0 0
    %1583 = vmatpush1.bf16.msra.mxu0 0
    %1584 = vmatprep.subr.bf16.mxu0 0
    %1585 = vmatpush1.bf16.msra.mxu0 0
    %1586 = vmatprep.subr.bf16.mxu0 0
    %1587 = vmatpush1.bf16.msra.mxu0 0
    %1588 = vmatprep.subr.bf16.mxu0 0
    %1589 = vmatpush1.bf16.msra.mxu0 0
    %1590 = vmatprep.subr.bf16.mxu0 0
    %1591 = vmatpush1.bf16.msra.mxu0 0
    %1592 = vmatprep.subr.bf16.mxu0 0
    %1593 = vmatpush1.bf16.msra.mxu0 0
    %1594 = vmatprep.subr.bf16.mxu0 0
    %1595 = vmatpush1.bf16.msra.mxu0 0
    %1596 = vmatprep.subr.bf16.mxu0 0
    %1597 = vmatpush1.bf16.msra.mxu0 0
    %1598 = vmatprep.subr.bf16.mxu0 0
    %1599 = vmatpush1.bf16.msra.mxu0 0
    %1600 = vmatprep.subr.bf16.mxu0 0
    %1601 = vmatpush1.bf16.msra.mxu0 0
    %1602 = vmatprep.mubr.bf16.mxu0 0
    %1603 = vmatmul.mubr.bf16.gmra.mrb[0].mxu0 %v1565
    %v1604 = vpop.f32.mrb[0].mxu0
    %v1605 = vadd.f32 0.0, %v1604
    %v1606 = vpop.f32.mrb[0].mxu0
    %v1607 = vpop.f32.mrb[0].mxu0
    %v1608 = vadd.f32 0.0, %v1607
    %v1609 = vpop.f32.mrb[0].mxu0
    %1610 = vmatprep.mubr.bf16.mxu0 0
    %1611 = vmatmul.mubr.bf16.gmra.mrb[0].mxu0 %v1568
    %v1612 = vpop.f32.mrb[0].mxu0
    %v1613 = vadd.f32 0.0, %v1612
    %v1614 = vpop.f32.mrb[0].mxu0
    %v1615 = vpop.f32.mrb[0].mxu0
    %v1616 = vadd.f32 0.0, %v1615
    %v1617 = vpop.f32.mrb[0].mxu0
    %1618 = vdwg.mxu0
    %v1619 = vmul.f32 %v1605, %v1278
    %v1620 = vmul.f32 %v1608, %v1281
    %v1621 = vmul.f32 %v1613, %v1286
    %v1622 = vmul.f32 %v1616, %v1289
    %v1623 = vsel %vm562, %v1619, 0.0
    %v1624 = vsel %vm562, %v1620, 0.0
    %v1625 = vadd.f32 %v1623, %v1624
    %v1626 = vsel %vm562, %v1621, 0.0
    %v1627 = vadd.f32 %v1625, %v1626
    %v1628 = vsel %vm562, %v1622, 0.0
    %v1629 = vadd.f32 %v1627, %v1628
    %1630 = vst.msk [vmem:[#allocation2 + $0x8] sm:$0xff] %vm562, %v1629
    %v1631 = vmul.f32 %v1206, %v1146
    %v1632 = vmul.f32 %v1209, %v1146
    %v1633 = vmul.f32 %v1214, %v1146
    %v1634 = vmul.f32 %v1217, %v1146
    %v1635 = vpack.c.bf16 %v1632, %v1631
    %v1636 = vpack.c.bf16 %v1634, %v1633
    %v1638 = vsel %vm562, %v1635, 0
    %v1641 = vsel %vm562, %v1636, 0
    %1643 = vmatprep.subr.bf16.mxu0 0
    %1644 = vmatpush1.bf16.msra.mxu0 %v1306
    %1645 = vmatprep.subr.bf16.mxu0 0
    %1646 = vmatpush1.bf16.msra.mxu0 %v1307
    %1647 = vmatprep.subr.bf16.mxu0 0
    %1648 = vmatpush1.bf16.msra.mxu0 0
    %1649 = vmatprep.subr.bf16.mxu0 0
    %1650 = vmatpush1.bf16.msra.mxu0 0
    %1651 = vmatprep.subr.bf16.mxu0 0
    %1652 = vmatpush1.bf16.msra.mxu0 0
    %1653 = vmatprep.subr.bf16.mxu0 0
    %1654 = vmatpush1.bf16.msra.mxu0 0
    %1655 = vmatprep.subr.bf16.mxu0 0
    %1656 = vmatpush1.bf16.msra.mxu0 0
    %1657 = vmatprep.subr.bf16.mxu0 0
    %1658 = vmatpush1.bf16.msra.mxu0 0
    %1659 = vmatprep.subr.bf16.mxu0 0
    %1660 = vmatpush1.bf16.msra.mxu0 0
    %1661 = vmatprep.subr.bf16.mxu0 0
    %1662 = vmatpush1.bf16.msra.mxu0 0
    %1663 = vmatprep.subr.bf16.mxu0 0
    %1664 = vmatpush1.bf16.msra.mxu0 0
    %1665 = vmatprep.subr.bf16.mxu0 0
    %1666 = vmatpush1.bf16.msra.mxu0 0
    %1667 = vmatprep.subr.bf16.mxu0 0
    %1668 = vmatpush1.bf16.msra.mxu0 0
    %1669 = vmatprep.subr.bf16.mxu0 0
    %1670 = vmatpush1.bf16.msra.mxu0 0
    %1671 = vmatprep.subr.bf16.mxu0 0
    %1672 = vmatpush1.bf16.msra.mxu0 0
    %1673 = vmatprep.subr.bf16.mxu0 0
    %1674 = vmatpush1.bf16.msra.mxu0 0
    %1675 = vmatprep.mubr.bf16.mxu0 0
    %1676 = vmatmul.mubr.bf16.gmra.mrb[0].mxu0 %v1638
    %v1677 = vpop.f32.mrb[0].mxu0
    %v1678 = vadd.f32 0.0, %v1677
    %v1679 = vpop.f32.mrb[0].mxu0
    %v1680 = vpop.f32.mrb[0].mxu0
    %v1681 = vadd.f32 0.0, %v1680
    %v1682 = vpop.f32.mrb[0].mxu0
    %1683 = vmatprep.mubr.bf16.mxu0 0
    %1684 = vmatmul.mubr.bf16.gmra.mrb[0].mxu0 %v1641
    %v1685 = vpop.f32.mrb[0].mxu0
    %v1686 = vadd.f32 0.0, %v1685
    %v1687 = vpop.f32.mrb[0].mxu0
    %v1688 = vpop.f32.mrb[0].mxu0
    %v1689 = vadd.f32 0.0, %v1688
    %v1690 = vpop.f32.mrb[0].mxu0
    %1691 = vdwg.mxu0
    %v1692 = vsel %vm1365, %v1678, -inf
    %v1693 = vsel %vm1365, %v1681, -inf
    %v1694 = vsel %vm1365, %v1686, -inf
    %v1695 = vsel %vm1365, %v1689, -inf
    %v1696 = vmax.f32 %v1692, %v1693
    %v1697 = vmax.f32 %v1694, %v1695
    %v1698 = vmax.f32 %v1696, %v1697
    %v1699 = vsub.f32 %v1678, %v1698
    %v1700 = vsub.f32 %v1681, %v1698
    %v1701 = vsub.f32 %v1686, %v1698
    %v1702 = vsub.f32 %v1689, %v1698
    %v1703 = vmul.f32 %v1699, 1.442695
    %v1704 = vpow.pop %v1703
    %v1705 = vmul.f32 %v1700, 1.442695
    %v1706 = vpow.pop %v1705
    %v1707 = vmul.f32 %v1701, 1.442695
    %v1708 = vpow.pop %v1707
    %v1709 = vmul.f32 %v1702, 1.442695
    %v1710 = vpow.pop %v1709
    %v1711 = vsel %vm1365, %v1704, 0.0
    %v1712 = vsel %vm1365, %v1706, 0.0
    %v1713 = vadd.f32 %v1711, %v1712
    %v1714 = vsel %vm1365, %v1708, 0.0
    %v1715 = vadd.f32 %v1713, %v1714
    %v1716 = vsel %vm1365, %v1710, 0.0
    %v1717 = vadd.f32 %v1715, %v1716
    %v1718 = vrcp.pop %v1717
    %v1719 = vmul.f32 %v1704, %v1718
    %v1720 = vmul.f32 %v1706, %v1718
    %v1721 = vmul.f32 %v1708, %v1718
    %v1722 = vmul.f32 %v1710, %v1718
    %v1723 = vpack.c.bf16 %v1720, %v1719
    %v1724 = vpack.c.bf16 %v1722, %v1721
    %v1726 = vsel %vm1365, %v1723, 0
    %v1729 = vsel %vm1365, %v1724, 0
    %1731 = vmatprep.subr.bf16.mxu0 0
    %1732 = vmatpush1.bf16.msra.mxu0 %v1407
    %1733 = vmatprep.subr.bf16.mxu0 0
    %1734 = vmatpush1.bf16.msra.mxu0 0
    %1735 = vmatprep.subr.bf16.mxu0 0
    %1736 = vmatpush1.bf16.msra.mxu0 0
    %1737 = vmatprep.subr.bf16.mxu0 0
    %1738 = vmatpush1.bf16.msra.mxu0 0
    %1739 = vmatprep.subr.bf16.mxu0 0
    %1740 = vmatpush1.bf16.msra.mxu0 0
    %1741 = vmatprep.subr.bf16.mxu0 0
    %1742 = vmatpush1.bf16.msra.mxu0 0
    %1743 = vmatprep.subr.bf16.mxu0 0
    %1744 = vmatpush1.bf16.msra.mxu0 0
    %1745 = vmatprep.subr.bf16.mxu0 0
    %1746 = vmatpush1.bf16.msra.mxu0 0
    %1747 = vmatprep.subr.bf16.mxu0 0
    %1748 = vmatpush1.bf16.msra.mxu0 0
    %1749 = vmatprep.subr.bf16.mxu0 0
    %1750 = vmatpush1.bf16.msra.mxu0 0
    %1751 = vmatprep.subr.bf16.mxu0 0
    %1752 = vmatpush1.bf16.msra.mxu0 0
    %1753 = vmatprep.subr.bf16.mxu0 0
    %1754 = vmatpush1.bf16.msra.mxu0 0
    %1755 = vmatprep.subr.bf16.mxu0 0
    %1756 = vmatpush1.bf16.msra.mxu0 0
    %1757 = vmatprep.subr.bf16.mxu0 0
    %1758 = vmatpush1.bf16.msra.mxu0 0
    %1759 = vmatprep.subr.bf16.mxu0 0
    %1760 = vmatpush1.bf16.msra.mxu0 0
    %1761 = vmatprep.subr.bf16.mxu0 0
    %1762 = vmatpush1.bf16.msra.mxu0 0
    %1763 = vmatprep.mubr.bf16.mxu0 0
    %1764 = vmatmul.mubr.bf16.gmra.mrb[0].mxu0 %v1726
    %v1765 = vpop.f32.mrb[0].mxu0
    %v1766 = vadd.f32 0.0, %v1765
    %v1767 = vpop.f32.mrb[0].mxu0
    %v1768 = vpop.f32.mrb[0].mxu0
    %v1769 = vadd.f32 0.0, %v1768
    %v1770 = vpop.f32.mrb[0].mxu0
    %1771 = vmatprep.mubr.bf16.mxu0 0
    %1772 = vmatmul.mubr.bf16.gmra.mrb[0].mxu0 %v1729
    %v1773 = vpop.f32.mrb[0].mxu0
    %v1774 = vadd.f32 0.0, %v1773
    %v1775 = vpop.f32.mrb[0].mxu0
    %v1776 = vpop.f32.mrb[0].mxu0
    %v1777 = vadd.f32 0.0, %v1776
    %v1778 = vpop.f32.mrb[0].mxu0
    %1779 = vdwg.mxu0
    %v1780 = vmul.f32 %v1766, %v1278
    %v1781 = vmul.f32 %v1769, %v1281
    %v1782 = vmul.f32 %v1774, %v1286
    %v1783 = vmul.f32 %v1777, %v1289
    %v1784 = vsel %vm562, %v1780, 0.0
    %v1785 = vsel %vm562, %v1781, 0.0
    %v1786 = vadd.f32 %v1784, %v1785
    %v1787 = vsel %vm562, %v1782, 0.0
    %v1788 = vadd.f32 %v1786, %v1787
    %v1789 = vsel %vm562, %v1783, 0.0
    %v1790 = vadd.f32 %v1788, %v1789
    %1791 = vst.msk [vmem:[#allocation2 + $0x10] sm:$0xff] %vm562, %v1790
    %v1792 = vmul.f32 %v1206, %v1147
    %v1793 = vmul.f32 %v1209, %v1147
    %v1794 = vmul.f32 %v1214, %v1147
    %v1795 = vmul.f32 %v1217, %v1147
    %v1796 = vpack.c.bf16 %v1793, %v1792
    %v1797 = vpack.c.bf16 %v1795, %v1794
    %v1799 = vsel %vm562, %v1796, 0
    %v1802 = vsel %vm562, %v1797, 0
    %1804 = vmatprep.subr.bf16.mxu0 0
    %1805 = vmatpush1.bf16.msra.mxu0 %v1306
    %1806 = vmatprep.subr.bf16.mxu0 0
    %1807 = vmatpush1.bf16.msra.mxu0 %v1307
    %1808 = vmatprep.subr.bf16.mxu0 0
    %1809 = vmatpush1.bf16.msra.mxu0 0
    %1810 = vmatprep.subr.bf16.mxu0 0
    %1811 = vmatpush1.bf16.msra.mxu0 0
    %1812 = vmatprep.subr.bf16.mxu0 0
    %1813 = vmatpush1.bf16.msra.mxu0 0
    %1814 = vmatprep.subr.bf16.mxu0 0
    %1815 = vmatpush1.bf16.msra.mxu0 0
    %1816 = vmatprep.subr.bf16.mxu0 0
    %1817 = vmatpush1.bf16.msra.mxu0 0
    %1818 = vmatprep.subr.bf16.mxu0 0
    %1819 = vmatpush1.bf16.msra.mxu0 0
    %1820 = vmatprep.subr.bf16.mxu0 0
    %1821 = vmatpush1.bf16.msra.mxu0 0
    %1822 = vmatprep.subr.bf16.mxu0 0
    %1823 = vmatpush1.bf16.msra.mxu0 0
    %1824 = vmatprep.subr.bf16.mxu0 0
    %1825 = vmatpush1.bf16.msra.mxu0 0
    %1826 = vmatprep.subr.bf16.mxu0 0
    %1827 = vmatpush1.bf16.msra.mxu0 0
    %1828 = vmatprep.subr.bf16.mxu0 0
    %1829 = vmatpush1.bf16.msra.mxu0 0
    %1830 = vmatprep.subr.bf16.mxu0 0
    %1831 = vmatpush1.bf16.msra.mxu0 0
    %1832 = vmatprep.subr.bf16.mxu0 0
    %1833 = vmatpush1.bf16.msra.mxu0 0
    %1834 = vmatprep.subr.bf16.mxu0 0
    %1835 = vmatpush1.bf16.msra.mxu0 0
    %1836 = vmatprep.mubr.bf16.mxu0 0
    %1837 = vmatmul.mubr.bf16.gmra.mrb[0].mxu0 %v1799
    %v1838 = vpop.f32.mrb[0].mxu0
    %v1839 = vadd.f32 0.0, %v1838
    %v1840 = vpop.f32.mrb[0].mxu0
    %v1841 = vpop.f32.mrb[0].mxu0
    %v1842 = vadd.f32 0.0, %v1841
    %v1843 = vpop.f32.mrb[0].mxu0
    %1844 = vmatprep.mubr.bf16.mxu0 0
    %1845 = vmatmul.mubr.bf16.gmra.mrb[0].mxu0 %v1802
    %v1846 = vpop.f32.mrb[0].mxu0
    %v1847 = vadd.f32 0.0, %v1846
    %v1848 = vpop.f32.mrb[0].mxu0
    %v1849 = vpop.f32.mrb[0].mxu0
    %v1850 = vadd.f32 0.0, %v1849
    %v1851 = vpop.f32.mrb[0].mxu0
    %1852 = vdwg.mxu0
    %v1853 = vsel %vm1365, %v1839, -inf
    %v1854 = vsel %vm1365, %v1842, -inf
    %v1855 = vsel %vm1365, %v1847, -inf
    %v1856 = vsel %vm1365, %v1850, -inf
    %v1857 = vmax.f32 %v1853, %v1854
    %v1858 = vmax.f32 %v1855, %v1856
    %v1859 = vmax.f32 %v1857, %v1858
    %v1860 = vsub.f32 %v1839, %v1859
    %v1861 = vsub.f32 %v1842, %v1859
    %v1862 = vsub.f32 %v1847, %v1859
    %v1863 = vsub.f32 %v1850, %v1859
    %v1864 = vmul.f32 %v1860, 1.442695
    %v1865 = vpow.pop %v1864
    %v1866 = vmul.f32 %v1861, 1.442695
    %v1867 = vpow.pop %v1866
    %v1868 = vmul.f32 %v1862, 1.442695
    %v1869 = vpow.pop %v1868
    %v1870 = vmul.f32 %v1863, 1.442695
    %v1871 = vpow.pop %v1870
    %v1872 = vsel %vm1365, %v1865, 0.0
    %v1873 = vsel %vm1365, %v1867, 0.0
    %v1874 = vadd.f32 %v1872, %v1873
    %v1875 = vsel %vm1365, %v1869, 0.0
    %v1876 = vadd.f32 %v1874, %v1875
    %v1877 = vsel %vm1365, %v1871, 0.0
    %v1878 = vadd.f32 %v1876, %v1877
    %v1879 = vrcp.pop %v1878
    %v1880 = vmul.f32 %v1865, %v1879
    %v1881 = vmul.f32 %v1867, %v1879
    %v1882 = vmul.f32 %v1869, %v1879
    %v1883 = vmul.f32 %v1871, %v1879
    %v1884 = vpack.c.bf16 %v1881, %v1880
    %v1885 = vpack.c.bf16 %v1883, %v1882
    %v1887 = vsel %vm1365, %v1884, 0
    %v1890 = vsel %vm1365, %v1885, 0
    %1892 = vmatprep.subr.bf16.mxu0 0
    %1893 = vmatpush1.bf16.msra.mxu0 %v1407
    %1894 = vmatprep.subr.bf16.mxu0 0
    %1895 = vmatpush1.bf16.msra.mxu0 0
    %1896 = vmatprep.subr.bf16.mxu0 0
    %1897 = vmatpush1.bf16.msra.mxu0 0
    %1898 = vmatprep.subr.bf16.mxu0 0
    %1899 = vmatpush1.bf16.msra.mxu0 0
    %1900 = vmatprep.subr.bf16.mxu0 0
    %1901 = vmatpush1.bf16.msra.mxu0 0
    %1902 = vmatprep.subr.bf16.mxu0 0
    %1903 = vmatpush1.bf16.msra.mxu0 0
    %1904 = vmatprep.subr.bf16.mxu0 0
    %1905 = vmatpush1.bf16.msra.mxu0 0
    %1906 = vmatprep.subr.bf16.mxu0 0
    %1907 = vmatpush1.bf16.msra.mxu0 0
    %1908 = vmatprep.subr.bf16.mxu0 0
    %1909 = vmatpush1.bf16.msra.mxu0 0
    %1910 = vmatprep.subr.bf16.mxu0 0
    %1911 = vmatpush1.bf16.msra.mxu0 0
    %1912 = vmatprep.subr.bf16.mxu0 0
    %1913 = vmatpush1.bf16.msra.mxu0 0
    %1914 = vmatprep.subr.bf16.mxu0 0
    %1915 = vmatpush1.bf16.msra.mxu0 0
    %1916 = vmatprep.subr.bf16.mxu0 0
    %1917 = vmatpush1.bf16.msra.mxu0 0
    %1918 = vmatprep.subr.bf16.mxu0 0
    %1919 = vmatpush1.bf16.msra.mxu0 0
    %1920 = vmatprep.subr.bf16.mxu0 0
    %1921 = vmatpush1.bf16.msra.mxu0 0
    %1922 = vmatprep.subr.bf16.mxu0 0
    %1923 = vmatpush1.bf16.msra.mxu0 0
    %1924 = vmatprep.mubr.bf16.mxu0 0
    %1925 = vmatmul.mubr.bf16.gmra.mrb[0].mxu0 %v1887
    %v1926 = vpop.f32.mrb[0].mxu0
    %v1927 = vadd.f32 0.0, %v1926
    %v1928 = vpop.f32.mrb[0].mxu0
    %v1929 = vpop.f32.mrb[0].mxu0
    %v1930 = vadd.f32 0.0, %v1929
    %v1931 = vpop.f32.mrb[0].mxu0
    %1932 = vmatprep.mubr.bf16.mxu0 0
    %1933 = vmatmul.mubr.bf16.gmra.mrb[0].mxu0 %v1890
    %v1934 = vpop.f32.mrb[0].mxu0
    %v1935 = vadd.f32 0.0, %v1934
    %v1936 = vpop.f32.mrb[0].mxu0
    %v1937 = vpop.f32.mrb[0].mxu0
    %v1938 = vadd.f32 0.0, %v1937
    %v1939 = vpop.f32.mrb[0].mxu0
    %1940 = vdwg.mxu0
    %v1941 = vmul.f32 %v1927, %v1278
    %v1942 = vmul.f32 %v1930, %v1281
    %v1943 = vmul.f32 %v1935, %v1286
    %v1944 = vmul.f32 %v1938, %v1289
    %v1945 = vsel %vm562, %v1941, 0.0
    %v1946 = vsel %vm562, %v1942, 0.0
    %v1947 = vadd.f32 %v1945, %v1946
    %v1948 = vsel %vm562, %v1943, 0.0
    %v1949 = vadd.f32 %v1947, %v1948
    %v1950 = vsel %vm562, %v1944, 0.0
    %v1951 = vadd.f32 %v1949, %v1950
    %1952 = vst.msk [vmem:[#allocation2 + $0x18] sm:$0xff] %vm562, %v1951
    %v1953 = vld [vmem:[#allocation2] sm:$0xff]
    %v1954 = vld [vmem:[#allocation2 + $0x8] sm:$0xff]
    %v1955 = vld [vmem:[#allocation2 + $0x10] sm:$0xff]
    %v1956 = vld [vmem:[#allocation2 + $0x18] sm:$0xff]
    %v1957 = vld [vmem:[#allocation30] sm:$0xf]
    %v1958 = vld [vmem:[#allocation30 + $0x4] sm:$0xf]
    %v1959 = vld [vmem:[#allocation30 + $0x8] sm:$0xf]
    %v1960 = vld [vmem:[#allocation30 + $0xc] sm:$0xf]
    %v1961 = vpack.c.bf16 %v1954, %v1953
    %v1962 = vpack.c.bf16 %v1956, %v1955
    %v1963 = vld [vmem:[#allocation31] sm:$0x1]
    %v1965 = vlaneseq
    %v1966 = vshrl.u32 %v1965, 7
    %v1967 = vsub.s32 0, %v1966
    %v1968 = vrot.slane %v1963, %v1967
    %v1974 = vunpack.c.l.b16 %v1957
    %v1975 = vunpack.c.l.b16 %v1958
    %v1976 = vunpack.c.l.b16 %v1959
    %v1977 = vunpack.c.l.b16 %v1960
    %v1978 = vpack.c.b16 %v1975, %v1974
    %v1979 = vpack.c.b16 %v1977, %v1976
    %v1983 = vsel %vm562, %v1961, 0
    %v1986 = vsel %vm562, %v1962, 0
    %1988 = vmatprep.subr.bf16.mxu0 0
    %1989 = vmatpush1.bf16.msra.mxu0 %v1978
    %1990 = vmatprep.subr.bf16.mxu0 0
    %1991 = vmatpush1.bf16.msra.mxu0 %v1979
    %1992 = vmatprep.subr.bf16.mxu0 0
    %1993 = vmatpush1.bf16.msra.mxu0 0
    %1994 = vmatprep.subr.bf16.mxu0 0
    %1995 = vmatpush1.bf16.msra.mxu0 0
    %1996 = vmatprep.subr.bf16.mxu0 0
    %1997 = vmatpush1.bf16.msra.mxu0 0
    %1998 = vmatprep.subr.bf16.mxu0 0
    %1999 = vmatpush1.bf16.msra.mxu0 0
    %2000 = vmatprep.subr.bf16.mxu0 0
    %2001 = vmatpush1.bf16.msra.mxu0 0
    %2002 = vmatprep.subr.bf16.mxu0 0
    %2003 = vmatpush1.bf16.msra.mxu0 0
    %2004 = vmatprep.subr.bf16.mxu0 0
    %2005 = vmatpush1.bf16.msra.mxu0 0
    %2006 = vmatprep.subr.bf16.mxu0 0
    %2007 = vmatpush1.bf16.msra.mxu0 0
    %2008 = vmatprep.subr.bf16.mxu0 0
    %2009 = vmatpush1.bf16.msra.mxu0 0
    %2010 = vmatprep.subr.bf16.mxu0 0
    %2011 = vmatpush1.bf16.msra.mxu0 0
    %2012 = vmatprep.subr.bf16.mxu0 0
    %2013 = vmatpush1.bf16.msra.mxu0 0
    %2014 = vmatprep.subr.bf16.mxu0 0
    %2015 = vmatpush1.bf16.msra.mxu0 0
    %2016 = vmatprep.subr.bf16.mxu0 0
    %2017 = vmatpush1.bf16.msra.mxu0 0
    %2018 = vmatprep.subr.bf16.mxu0 0
    %2019 = vmatpush1.bf16.msra.mxu0 0
    %2020 = vmatprep.mubr.bf16.mxu0 0
    %2021 = vmatmul.mubr.bf16.gmra.mrb[0].mxu0 %v1983
    %v2022 = vpop.f32.mrb[0].mxu0
    %v2023 = vadd.f32 %v1968, %v2022
    %v2024 = vpop.f32.mrb[0].mxu0
    %v2025 = vpop.f32.mrb[0].mxu0
    %v2026 = vadd.f32 %v1968, %v2025
    %v2027 = vpop.f32.mrb[0].mxu0
    %2028 = vmatprep.mubr.bf16.mxu0 0
    %2029 = vmatmul.mubr.bf16.gmra.mrb[0].mxu0 %v1986
    %v2030 = vpop.f32.mrb[0].mxu0
    %v2031 = vadd.f32 %v1968, %v2030
    %v2032 = vpop.f32.mrb[0].mxu0
    %v2033 = vpop.f32.mrb[0].mxu0
    %v2034 = vadd.f32 %v1968, %v2033
    %v2035 = vpop.f32.mrb[0].mxu0
    %2036 = vdwg.mxu0
    %v2037 = vmul.f32 %v2023, %v2023
    %v2038 = vmul.f32 %v2026, %v2026
    %v2039 = vmul.f32 %v2031, %v2031
    %v2040 = vmul.f32 %v2034, %v2034
    %v2041 = vsel %vm562, %v2037, 0.0
    %2042 = vadd.xlane.f32.xlu0 %v2041
    %v2043 = vpop.xlane.xlu0 %2042
    %v2044 = vsel %vm562, %v2038, 0.0
    %2045 = vadd.xlane.f32.xlu0 %v2044
    %v2046 = vpop.xlane.xlu0 %2045
    %v2047 = vsel %vm562, %v2039, 0.0
    %2048 = vadd.xlane.f32.xlu0 %v2047
    %v2049 = vpop.xlane.xlu0 %2048
    %v2050 = vsel %vm562, %v2040, 0.0
    %2051 = vadd.xlane.f32.xlu0 %v2050
    %v2052 = vpop.xlane.xlu0 %2051
    %v2053 = vmax.f32 %v2043, 1e-24
    %v2054 = vmax.f32 %v2046, 1e-24
    %v2055 = vmax.f32 %v2049, 1e-24
    %v2056 = vmax.f32 %v2052, 1e-24
    %v2057 = vrsqrt.pop %v2053
    %v2058 = vrsqrt.pop %v2054
    %v2059 = vrsqrt.pop %v2055
    %v2060 = vrsqrt.pop %v2056
    %v2061 = vmul.f32 %v2023, %v2057
    %v2062 = vmul.f32 %v2026, %v2058
    %v2063 = vmul.f32 %v2031, %v2059
    %v2064 = vmul.f32 %v2034, %v2060
    %s2065 = sld [smem:[#allocation39]]
    %v2066 = vsub.f32 %v2061, %v1060
    %v2067 = vsub.f32 %v2062, %v1061
    %v2068 = vsub.f32 %v2063, %v1062
    %v2069 = vsub.f32 %v2064, %v1063
    %v2070 = vstv %s2065
    %v2071 = vmul.f32 %v2070, %v2066
    %v2072 = vmul.f32 %v2070, %v2067
    %v2073 = vmul.f32 %v2070, %v2068
    %v2074 = vmul.f32 %v2070, %v2069
    %v2075 = vadd.f32 %v1060, %v2071
    %v2076 = vadd.f32 %v1061, %v2072
    %v2077 = vadd.f32 %v1062, %v2073
    %v2078 = vadd.f32 %v1063, %v2074
    %v2079 = vmul.f32 %v2075, %v2075
    %v2080 = vmul.f32 %v2076, %v2076
    %v2081 = vmul.f32 %v2077, %v2077
    %v2082 = vmul.f32 %v2078, %v2078
    %v2083 = vsel %vm562, %v2079, 0.0
    %2084 = vadd.xlane.f32.xlu0 %v2083
    %v2085 = vpop.xlane.xlu0 %2084
    %v2086 = vsel %vm562, %v2080, 0.0
    %2087 = vadd.xlane.f32.xlu0 %v2086
    %v2088 = vpop.xlane.xlu0 %2087
    %v2089 = vsel %vm562, %v2081, 0.0
    %2090 = vadd.xlane.f32.xlu0 %v2089
    %v2091 = vpop.xlane.xlu0 %2090
    %v2092 = vsel %vm562, %v2082, 0.0
    %2093 = vadd.xlane.f32.xlu0 %v2092
    %v2094 = vpop.xlane.xlu0 %2093
    %v2095 = vmax.f32 %v2085, 1e-24
    %v2096 = vmax.f32 %v2088, 1e-24
    %v2097 = vmax.f32 %v2091, 1e-24
    %v2098 = vmax.f32 %v2094, 1e-24
    %v2099 = vrsqrt.pop %v2095
    %v2100 = vrsqrt.pop %v2096
    %v2101 = vrsqrt.pop %v2097
    %v2102 = vrsqrt.pop %v2098
    %v2103 = vmul.f32 %v2075, %v2099
    %v2104 = vmul.f32 %v2076, %v2100
    %v2105 = vmul.f32 %v2077, %v2101
    %v2106 = vmul.f32 %v2078, %v2102
    %v2107 = vld [vmem:[#allocation33] sm:$0xf]
    %v2108 = vld [vmem:[#allocation33 + $0x4] sm:$0xf]
    %v2109 = vld [vmem:[#allocation33 + $0x8] sm:$0xf]
    %v2110 = vld [vmem:[#allocation33 + $0xc] sm:$0xf]
    %v2111 = vpack.c.bf16 %v2104, %v2103
    %v2112 = vpack.c.bf16 %v2106, %v2105
    %v2113 = vld [vmem:[#allocation34] sm:$0x1]
    %v2115 = vlaneseq
    %v2116 = vshrl.u32 %v2115, 7
    %v2117 = vsub.s32 0, %v2116
    %v2118 = vrot.slane %v2113, %v2117
    %v2124 = vunpack.c.l.b16 %v2107
    %v2125 = vunpack.c.l.b16 %v2108
    %v2126 = vunpack.c.l.b16 %v2109
    %v2127 = vunpack.c.l.b16 %v2110
    %v2128 = vpack.c.b16 %v2125, %v2124
    %v2129 = vpack.c.b16 %v2127, %v2126
    %v2133 = vsel %vm562, %v2111, 0
    %v2136 = vsel %vm562, %v2112, 0
    %2138 = vmatprep.subr.bf16.mxu0 0
    %2139 = vmatpush1.bf16.msra.mxu0 %v2128
    %2140 = vmatprep.subr.bf16.mxu0 0
    %2141 = vmatpush1.bf16.msra.mxu0 %v2129
    %2142 = vmatprep.subr.bf16.mxu0 0
    %2143 = vmatpush1.bf16.msra.mxu0 0
    %2144 = vmatprep.subr.bf16.mxu0 0
    %2145 = vmatpush1.bf16.msra.mxu0 0
    %2146 = vmatprep.subr.bf16.mxu0 0
    %2147 = vmatpush1.bf16.msra.mxu0 0
    %2148 = vmatprep.subr.bf16.mxu0 0
    %2149 = vmatpush1.bf16.msra.mxu0 0
    %2150 = vmatprep.subr.bf16.mxu0 0
    %2151 = vmatpush1.bf16.msra.mxu0 0
    %2152 = vmatprep.subr.bf16.mxu0 0
    %2153 = vmatpush1.bf16.msra.mxu0 0
    %2154 = vmatprep.subr.bf16.mxu0 0
    %2155 = vmatpush1.bf16.msra.mxu0 0
    %2156 = vmatprep.subr.bf16.mxu0 0
    %2157 = vmatpush1.bf16.msra.mxu0 0
    %2158 = vmatprep.subr.bf16.mxu0 0
    %2159 = vmatpush1.bf16.msra.mxu0 0
    %2160 = vmatprep.subr.bf16.mxu0 0
    %2161 = vmatpush1.bf16.msra.mxu0 0
    %2162 = vmatprep.subr.bf16.mxu0 0
    %2163 = vmatpush1.bf16.msra.mxu0 0
    %2164 = vmatprep.subr.bf16.mxu0 0
    %2165 = vmatpush1.bf16.msra.mxu0 0
    %2166 = vmatprep.subr.bf16.mxu0 0
    %2167 = vmatpush1.bf16.msra.mxu0 0
    %2168 = vmatprep.subr.bf16.mxu0 0
    %2169 = vmatpush1.bf16.msra.mxu0 0
    %2170 = vmatprep.mubr.bf16.mxu0 0
    %2171 = vmatmul.mubr.bf16.gmra.mrb[0].mxu0 %v2133
    %v2172 = vpop.f32.mrb[0].mxu0
    %v2173 = vadd.f32 %v2118, %v2172
    %v2174 = vpop.f32.mrb[0].mxu0
    %v2175 = vpop.f32.mrb[0].mxu0
    %v2176 = vadd.f32 %v2118, %v2175
    %v2177 = vpop.f32.mrb[0].mxu0
    %2178 = vmatprep.mubr.bf16.mxu0 0
    %2179 = vmatmul.mubr.bf16.gmra.mrb[0].mxu0 %v2136
    %v2180 = vpop.f32.mrb[0].mxu0
    %v2181 = vadd.f32 %v2118, %v2180
    %v2182 = vpop.f32.mrb[0].mxu0
    %v2183 = vpop.f32.mrb[0].mxu0
    %v2184 = vadd.f32 %v2118, %v2183
    %v2185 = vpop.f32.mrb[0].mxu0
    %2186 = vdwg.mxu0
    %v2187 = vmax.f32 %v2173, 0.0
    %v2188 = vmax.f32 %v2176, 0.0
    %v2189 = vmax.f32 %v2181, 0.0
    %v2190 = vmax.f32 %v2184, 0.0
    %v2191 = vld [vmem:[#allocation36] sm:$0xf]
    %v2192 = vld [vmem:[#allocation36 + $0x4] sm:$0xf]
    %v2193 = vld [vmem:[#allocation36 + $0x8] sm:$0xf]
    %v2194 = vld [vmem:[#allocation36 + $0xc] sm:$0xf]
    %v2195 = vld [vmem:[#allocation36 + $0x10] sm:$0xf]
    %v2196 = vld [vmem:[#allocation36 + $0x14] sm:$0xf]
    %v2197 = vld [vmem:[#allocation36 + $0x18] sm:$0xf]
    %v2198 = vld [vmem:[#allocation36 + $0x1c] sm:$0xf]
    %v2199 = vpack.c.bf16 %v2188, %v2187
    %v2200 = vpack.c.bf16 %v2190, %v2189
    %v2201 = vld [vmem:[#allocation37] sm:$0x1]
    %v2203 = vlaneseq
    %v2204 = vshrl.u32 %v2203, 7
    %v2205 = vsub.s32 0, %v2204
    %v2206 = vrot.slane %v2201, %v2205
    %v2216 = vunpack.c.l.b16 %v2191
    %v2217 = vunpack.c.l.b16 %v2192
    %v2218 = vunpack.c.l.b16 %v2193
    %v2219 = vunpack.c.l.b16 %v2194
    %v2220 = vunpack.c.l.b16 %v2195
    %v2221 = vunpack.c.l.b16 %v2196
    %v2222 = vunpack.c.l.b16 %v2197
    %v2223 = vunpack.c.l.b16 %v2198
    %v2224 = vpack.c.b16 %v2217, %v2216
    %v2225 = vpack.c.b16 %v2219, %v2218
    %v2226 = vpack.c.b16 %v2221, %v2220
    %v2227 = vpack.c.b16 %v2223, %v2222
    %vm2232 = vcmask 523264
    %v2234 = vsel %vm2232, %v2199, 0
    %v2237 = vsel %vm2232, %v2200, 0
    %2239 = vmatprep.subr.bf16.mxu0 0
    %2240 = vmatpush1.bf16.msra.mxu0 %v2224
    %2241 = vmatprep.subr.bf16.mxu0 0
    %2242 = vmatpush1.bf16.msra.mxu0 %v2225
    %2243 = vmatprep.subr.bf16.mxu0 0
    %2244 = vmatpush1.bf16.msra.mxu0 %v2226
    %2245 = vmatprep.subr.bf16.mxu0 0
    %2246 = vmatpush1.bf16.msra.mxu0 %v2227
    %2247 = vmatprep.subr.bf16.mxu0 0
    %2248 = vmatpush1.bf16.msra.mxu0 0
    %2249 = vmatprep.subr.bf16.mxu0 0
    %2250 = vmatpush1.bf16.msra.mxu0 0
    %2251 = vmatprep.subr.bf16.mxu0 0
    %2252 = vmatpush1.bf16.msra.mxu0 0
    %2253 = vmatprep.subr.bf16.mxu0 0
    %2254 = vmatpush1.bf16.msra.mxu0 0
    %2255 = vmatprep.subr.bf16.mxu0 0
    %2256 = vmatpush1.bf16.msra.mxu0 0
    %2257 = vmatprep.subr.bf16.mxu0 0
    %2258 = vmatpush1.bf16.msra.mxu0 0
    %2259 = vmatprep.subr.bf16.mxu0 0
    %2260 = vmatpush1.bf16.msra.mxu0 0
    %2261 = vmatprep.subr.bf16.mxu0 0
    %2262 = vmatpush1.bf16.msra.mxu0 0
    %2263 = vmatprep.subr.bf16.mxu0 0
    %2264 = vmatpush1.bf16.msra.mxu0 0
    %2265 = vmatprep.subr.bf16.mxu0 0
    %2266 = vmatpush1.bf16.msra.mxu0 0
    %2267 = vmatprep.subr.bf16.mxu0 0
    %2268 = vmatpush1.bf16.msra.mxu0 0
    %2269 = vmatprep.subr.bf16.mxu0 0
    %2270 = vmatpush1.bf16.msra.mxu0 0
    %2271 = vmatprep.mubr.bf16.mxu0 0
    %2272 = vmatmul.mubr.bf16.gmra.mrb[0].mxu0 %v2234
    %v2273 = vpop.f32.mrb[0].mxu0
    %v2274 = vadd.f32 %v2206, %v2273
    %v2275 = vpop.f32.mrb[0].mxu0
    %v2276 = vpop.f32.mrb[0].mxu0
    %v2277 = vadd.f32 %v2206, %v2276
    %v2278 = vpop.f32.mrb[0].mxu0
    %2279 = vmatprep.mubr.bf16.mxu0 0
    %2280 = vmatmul.mubr.bf16.gmra.mrb[0].mxu0 %v2237
    %v2281 = vpop.f32.mrb[0].mxu0
    %v2282 = vadd.f32 %v2206, %v2281
    %v2283 = vpop.f32.mrb[0].mxu0
    %v2284 = vpop.f32.mrb[0].mxu0
    %v2285 = vadd.f32 %v2206, %v2284
    %v2286 = vpop.f32.mrb[0].mxu0
    %2287 = vdwg.mxu0
    %v2288 = vmul.f32 %v2274, %v2274
    %v2289 = vmul.f32 %v2277, %v2277
    %v2290 = vmul.f32 %v2282, %v2282
    %v2291 = vmul.f32 %v2285, %v2285
    %v2292 = vsel %vm562, %v2288, 0.0
    %2293 = vadd.xlane.f32.xlu0 %v2292
    %v2294 = vpop.xlane.xlu0 %2293
    %v2295 = vsel %vm562, %v2289, 0.0
    %2296 = vadd.xlane.f32.xlu0 %v2295
    %v2297 = vpop.xlane.xlu0 %2296
    %v2298 = vsel %vm562, %v2290, 0.0
    %2299 = vadd.xlane.f32.xlu0 %v2298
    %v2300 = vpop.xlane.xlu0 %2299
    %v2301 = vsel %vm562, %v2291, 0.0
    %2302 = vadd.xlane.f32.xlu0 %v2301
    %v2303 = vpop.xlane.xlu0 %2302
    %v2304 = vmax.f32 %v2294, 1e-24
    %v2305 = vmax.f32 %v2297, 1e-24
    %v2306 = vmax.f32 %v2300, 1e-24
    %v2307 = vmax.f32 %v2303, 1e-24
    %v2308 = vrsqrt.pop %v2304
    %v2309 = vrsqrt.pop %v2305
    %v2310 = vrsqrt.pop %v2306
    %v2311 = vrsqrt.pop %v2307
    %v2312 = vmul.f32 %v2274, %v2308
    %v2313 = vmul.f32 %v2277, %v2309
    %v2314 = vmul.f32 %v2282, %v2310
    %v2315 = vmul.f32 %v2285, %v2311
    %s2316 = sld [smem:[#allocation40]]
    %v2317 = vsub.f32 %v2312, %v2103
    %v2318 = vsub.f32 %v2313, %v2104
    %v2319 = vsub.f32 %v2314, %v2105
    %v2320 = vsub.f32 %v2315, %v2106
    %v2321 = vstv %s2316
    %v2322 = vmul.f32 %v2321, %v2317
    %v2323 = vmul.f32 %v2321, %v2318
    %v2324 = vmul.f32 %v2321, %v2319
    %v2325 = vmul.f32 %v2321, %v2320
    %v2326 = vadd.f32 %v2103, %v2322
    %v2327 = vadd.f32 %v2104, %v2323
    %v2328 = vadd.f32 %v2105, %v2324
    %v2329 = vadd.f32 %v2106, %v2325
    %v2330 = vmul.f32 %v2326, %v2326
    %v2331 = vmul.f32 %v2327, %v2327
    %v2332 = vmul.f32 %v2328, %v2328
    %v2333 = vmul.f32 %v2329, %v2329
    %v2334 = vsel %vm562, %v2330, 0.0
    %2335 = vadd.xlane.f32.xlu0 %v2334
    %v2336 = vpop.xlane.xlu0 %2335
    %v2337 = vsel %vm562, %v2331, 0.0
    %2338 = vadd.xlane.f32.xlu0 %v2337
    %v2339 = vpop.xlane.xlu0 %2338
    %v2340 = vsel %vm562, %v2332, 0.0
    %2341 = vadd.xlane.f32.xlu0 %v2340
    %v2342 = vpop.xlane.xlu0 %2341
    %v2343 = vsel %vm562, %v2333, 0.0
    %2344 = vadd.xlane.f32.xlu0 %v2343
    %v2345 = vpop.xlane.xlu0 %2344
    %v2346 = vmax.f32 %v2336, 1e-24
    %v2347 = vmax.f32 %v2339, 1e-24
    %v2348 = vmax.f32 %v2342, 1e-24
    %v2349 = vmax.f32 %v2345, 1e-24
    %v2350 = vrsqrt.pop %v2346
    %v2351 = vrsqrt.pop %v2347
    %v2352 = vrsqrt.pop %v2348
    %v2353 = vrsqrt.pop %v2349
    %v2354 = vmul.f32 %v2326, %v2350
    %v2355 = vmul.f32 %v2327, %v2351
    %v2356 = vmul.f32 %v2328, %v2352
    %v2357 = vmul.f32 %v2329, %v2353
    %v2358 = vmul.f32 %v2354, %v2354
    %v2359 = vmul.f32 %v2355, %v2355
    %v2360 = vmul.f32 %v2356, %v2356
    %v2361 = vmul.f32 %v2357, %v2357
    %v2362 = vsel %vm562, %v2358, 0.0
    %2363 = vadd.xlane.f32.xlu0 %v2362
    %v2364 = vpop.xlane.xlu0 %2363
    %v2365 = vsel %vm562, %v2359, 0.0
    %2366 = vadd.xlane.f32.xlu0 %v2365
    %v2367 = vpop.xlane.xlu0 %2366
    %v2368 = vsel %vm562, %v2360, 0.0
    %2369 = vadd.xlane.f32.xlu0 %v2368
    %v2370 = vpop.xlane.xlu0 %2369
    %v2371 = vsel %vm562, %v2361, 0.0
    %2372 = vadd.xlane.f32.xlu0 %v2371
    %v2373 = vpop.xlane.xlu0 %2372
    %v2374 = vmax.f32 %v2364, 1e-24
    %v2375 = vmax.f32 %v2367, 1e-24
    %v2376 = vmax.f32 %v2370, 1e-24
    %v2377 = vmax.f32 %v2373, 1e-24
    %v2378 = vrsqrt.pop %v2374
    %v2379 = vrsqrt.pop %v2375
    %v2380 = vrsqrt.pop %v2376
    %v2381 = vrsqrt.pop %v2377
    %v2382 = vmul.f32 %v2354, %v2378
    %v2383 = vmul.f32 %v2355, %v2379
    %v2384 = vmul.f32 %v2356, %v2380
    %v2385 = vmul.f32 %v2357, %v2381
    %s2386 = scalar_lea.vmem [#allocation18], 16
    %v2387 = vld [vmem:[%s2386] sm:$0xf]
    %v2388 = vld [vmem:[%s2386 + $0x4] sm:$0xf]
    %v2389 = vld [vmem:[%s2386 + $0x8] sm:$0xf]
    %v2390 = vld [vmem:[%s2386 + $0xc] sm:$0xf]
    %v2391 = vpack.c.bf16 %v2383, %v2382
    %v2392 = vpack.c.bf16 %v2385, %v2384
    %s2393 = scalar_lea.vmem [#allocation19], 1
    %v2394 = vld [vmem:[%s2393] sm:$0x1]
    %v2396 = vlaneseq
    %v2397 = vshrl.u32 %v2396, 7
    %v2398 = vsub.s32 0, %v2397
    %v2399 = vrot.slane %v2394, %v2398
    %v2405 = vunpack.c.l.b16 %v2387
    %v2406 = vunpack.c.l.b16 %v2388
    %v2407 = vunpack.c.l.b16 %v2389
    %v2408 = vunpack.c.l.b16 %v2390
    %v2409 = vpack.c.b16 %v2406, %v2405
    %v2410 = vpack.c.b16 %v2408, %v2407
    %v2414 = vsel %vm562, %v2391, 0
    %v2417 = vsel %vm562, %v2392, 0
    %2419 = vmatprep.subr.bf16.mxu0 0
    %2420 = vmatpush1.bf16.msra.mxu0 %v2409
    %2421 = vmatprep.subr.bf16.mxu0 0
    %2422 = vmatpush1.bf16.msra.mxu0 %v2410
    %2423 = vmatprep.subr.bf16.mxu0 0
    %2424 = vmatpush1.bf16.msra.mxu0 0
    %2425 = vmatprep.subr.bf16.mxu0 0
    %2426 = vmatpush1.bf16.msra.mxu0 0
    %2427 = vmatprep.subr.bf16.mxu0 0
    %2428 = vmatpush1.bf16.msra.mxu0 0
    %2429 = vmatprep.subr.bf16.mxu0 0
    %2430 = vmatpush1.bf16.msra.mxu0 0
    %2431 = vmatprep.subr.bf16.mxu0 0
    %2432 = vmatpush1.bf16.msra.mxu0 0
    %2433 = vmatprep.subr.bf16.mxu0 0
    %2434 = vmatpush1.bf16.msra.mxu0 0
    %2435 = vmatprep.subr.bf16.mxu0 0
    %2436 = vmatpush1.bf16.msra.mxu0 0
    %2437 = vmatprep.subr.bf16.mxu0 0
    %2438 = vmatpush1.bf16.msra.mxu0 0
    %2439 = vmatprep.subr.bf16.mxu0 0
    %2440 = vmatpush1.bf16.msra.mxu0 0
    %2441 = vmatprep.subr.bf16.mxu0 0
    %2442 = vmatpush1.bf16.msra.mxu0 0
    %2443 = vmatprep.subr.bf16.mxu0 0
    %2444 = vmatpush1.bf16.msra.mxu0 0
    %2445 = vmatprep.subr.bf16.mxu0 0
    %2446 = vmatpush1.bf16.msra.mxu0 0
    %2447 = vmatprep.subr.bf16.mxu0 0
    %2448 = vmatpush1.bf16.msra.mxu0 0
    %2449 = vmatprep.subr.bf16.mxu0 0
    %2450 = vmatpush1.bf16.msra.mxu0 0
    %2451 = vmatprep.mubr.bf16.mxu0 0
    %2452 = vmatmul.mubr.bf16.gmra.mrb[0].mxu0 %v2414
    %v2453 = vpop.f32.mrb[0].mxu0
    %v2454 = vadd.f32 %v2399, %v2453
    %v2455 = vpop.f32.mrb[0].mxu0
    %v2456 = vpop.f32.mrb[0].mxu0
    %v2457 = vadd.f32 %v2399, %v2456
    %v2458 = vpop.f32.mrb[0].mxu0
    %2459 = vmatprep.mubr.bf16.mxu0 0
    %2460 = vmatmul.mubr.bf16.gmra.mrb[0].mxu0 %v2417
    %v2461 = vpop.f32.mrb[0].mxu0
    %v2462 = vadd.f32 %v2399, %v2461
    %v2463 = vpop.f32.mrb[0].mxu0
    %v2464 = vpop.f32.mrb[0].mxu0
    %v2465 = vadd.f32 %v2399, %v2464
    %v2466 = vpop.f32.mrb[0].mxu0
    %2467 = vdwg.mxu0
    %v2468 = vmul.f32 %v2454, 0.35355338
    %v2469 = vmul.f32 %v2457, 0.35355338
    %v2470 = vmul.f32 %v2462, 0.35355338
    %v2471 = vmul.f32 %v2465, 0.35355338
    %s2472 = scalar_lea.vmem [#allocation21], 16
    %v2473 = vld [vmem:[%s2472] sm:$0xf]
    %v2474 = vld [vmem:[%s2472 + $0x4] sm:$0xf]
    %v2475 = vld [vmem:[%s2472 + $0x8] sm:$0xf]
    %v2476 = vld [vmem:[%s2472 + $0xc] sm:$0xf]
    %s2477 = scalar_lea.vmem [#allocation22], 1
    %v2478 = vld [vmem:[%s2477] sm:$0x1]
    %v2480 = vlaneseq
    %v2481 = vshrl.u32 %v2480, 7
    %v2482 = vsub.s32 0, %v2481
    %v2483 = vrot.slane %v2478, %v2482
    %v2489 = vunpack.c.l.b16 %v2473
    %v2490 = vunpack.c.l.b16 %v2474
    %v2491 = vunpack.c.l.b16 %v2475
    %v2492 = vunpack.c.l.b16 %v2476
    %v2493 = vpack.c.b16 %v2490, %v2489
    %v2494 = vpack.c.b16 %v2492, %v2491
    %2497 = vmatprep.subr.bf16.mxu0 0
    %2498 = vmatpush1.bf16.msra.mxu0 %v2493
    %2499 = vmatprep.subr.bf16.mxu0 0
    %2500 = vmatpush1.bf16.msra.mxu0 %v2494
    %2501 = vmatprep.subr.bf16.mxu0 0
    %2502 = vmatpush1.bf16.msra.mxu0 0
    %2503 = vmatprep.subr.bf16.mxu0 0
    %2504 = vmatpush1.bf16.msra.mxu0 0
    %2505 = vmatprep.subr.bf16.mxu0 0
    %2506 = vmatpush1.bf16.msra.mxu0 0
    %2507 = vmatprep.subr.bf16.mxu0 0
    %2508 = vmatpush1.bf16.msra.mxu0 0
    %2509 = vmatprep.subr.bf16.mxu0 0
    %2510 = vmatpush1.bf16.msra.mxu0 0
    %2511 = vmatprep.subr.bf16.mxu0 0
    %2512 = vmatpush1.bf16.msra.mxu0 0
    %2513 = vmatprep.subr.bf16.mxu0 0
    %2514 = vmatpush1.bf16.msra.mxu0 0
    %2515 = vmatprep.subr.bf16.mxu0 0
    %2516 = vmatpush1.bf16.msra.mxu0 0
    %2517 = vmatprep.subr.bf16.mxu0 0
    %2518 = vmatpush1.bf16.msra.mxu0 0
    %2519 = vmatprep.subr.bf16.mxu0 0
    %2520 = vmatpush1.bf16.msra.mxu0 0
    %2521 = vmatprep.subr.bf16.mxu0 0
    %2522 = vmatpush1.bf16.msra.mxu0 0
    %2523 = vmatprep.subr.bf16.mxu0 0
    %2524 = vmatpush1.bf16.msra.mxu0 0
    %2525 = vmatprep.subr.bf16.mxu0 0
    %2526 = vmatpush1.bf16.msra.mxu0 0
    %2527 = vmatprep.subr.bf16.mxu0 0
    %2528 = vmatpush1.bf16.msra.mxu0 0
    %2529 = vmatprep.mubr.bf16.mxu0 0
    %2530 = vmatmul.mubr.bf16.gmra.mrb[0].mxu0 %v2414
    %v2531 = vpop.f32.mrb[0].mxu0
    %v2532 = vadd.f32 %v2483, %v2531
    %v2533 = vpop.f32.mrb[0].mxu0
    %v2534 = vpop.f32.mrb[0].mxu0
    %v2535 = vadd.f32 %v2483, %v2534
    %v2536 = vpop.f32.mrb[0].mxu0
    %2537 = vmatprep.mubr.bf16.mxu0 0
    %2538 = vmatmul.mubr.bf16.gmra.mrb[0].mxu0 %v2417
    %v2539 = vpop.f32.mrb[0].mxu0
    %v2540 = vadd.f32 %v2483, %v2539
    %v2541 = vpop.f32.mrb[0].mxu0
    %v2542 = vpop.f32.mrb[0].mxu0
    %v2543 = vadd.f32 %v2483, %v2542
    %v2544 = vpop.f32.mrb[0].mxu0
    %2545 = vdwg.mxu0
    %s2546 = scalar_lea.vmem [#allocation24], 16
    %v2547 = vld [vmem:[%s2546] sm:$0xf]
    %v2548 = vld [vmem:[%s2546 + $0x4] sm:$0xf]
    %v2549 = vld [vmem:[%s2546 + $0x8] sm:$0xf]
    %v2550 = vld [vmem:[%s2546 + $0xc] sm:$0xf]
    %s2551 = scalar_lea.vmem [#allocation25], 1
    %v2552 = vld [vmem:[%s2551] sm:$0x1]
    %v2554 = vlaneseq
    %v2555 = vshrl.u32 %v2554, 7
    %v2556 = vsub.s32 0, %v2555
    %v2557 = vrot.slane %v2552, %v2556
    %v2563 = vunpack.c.l.b16 %v2547
    %v2564 = vunpack.c.l.b16 %v2548
    %v2565 = vunpack.c.l.b16 %v2549
    %v2566 = vunpack.c.l.b16 %v2550
    %v2567 = vpack.c.b16 %v2564, %v2563
    %v2568 = vpack.c.b16 %v2566, %v2565
    %2571 = vmatprep.subr.bf16.mxu0 0
    %2572 = vmatpush1.bf16.msra.mxu0 %v2567
    %2573 = vmatprep.subr.bf16.mxu0 0
    %2574 = vmatpush1.bf16.msra.mxu0 %v2568
    %2575 = vmatprep.subr.bf16.mxu0 0
    %2576 = vmatpush1.bf16.msra.mxu0 0
    %2577 = vmatprep.subr.bf16.mxu0 0
    %2578 = vmatpush1.bf16.msra.mxu0 0
    %2579 = vmatprep.subr.bf16.mxu0 0
    %2580 = vmatpush1.bf16.msra.mxu0 0
    %2581 = vmatprep.subr.bf16.mxu0 0
    %2582 = vmatpush1.bf16.msra.mxu0 0
    %2583 = vmatprep.subr.bf16.mxu0 0
    %2584 = vmatpush1.bf16.msra.mxu0 0
    %2585 = vmatprep.subr.bf16.mxu0 0
    %2586 = vmatpush1.bf16.msra.mxu0 0
    %2587 = vmatprep.subr.bf16.mxu0 0
    %2588 = vmatpush1.bf16.msra.mxu0 0
    %2589 = vmatprep.subr.bf16.mxu0 0
    %2590 = vmatpush1.bf16.msra.mxu0 0
    %2591 = vmatprep.subr.bf16.mxu0 0
    %2592 = vmatpush1.bf16.msra.mxu0 0
    %2593 = vmatprep.subr.bf16.mxu0 0
    %2594 = vmatpush1.bf16.msra.mxu0 0
    %2595 = vmatprep.subr.bf16.mxu0 0
    %2596 = vmatpush1.bf16.msra.mxu0 0
    %2597 = vmatprep.subr.bf16.mxu0 0
    %2598 = vmatpush1.bf16.msra.mxu0 0
    %2599 = vmatprep.subr.bf16.mxu0 0
    %2600 = vmatpush1.bf16.msra.mxu0 0
    %2601 = vmatprep.subr.bf16.mxu0 0
    %2602 = vmatpush1.bf16.msra.mxu0 0
    %2603 = vmatprep.mubr.bf16.mxu0 0
    %2604 = vmatmul.mubr.bf16.gmra.mrb[0].mxu0 %v2414
    %v2605 = vpop.f32.mrb[0].mxu0
    %v2606 = vadd.f32 %v2557, %v2605
    %v2607 = vpop.f32.mrb[0].mxu0
    %v2608 = vpop.f32.mrb[0].mxu0
    %v2609 = vadd.f32 %v2557, %v2608
    %v2610 = vpop.f32.mrb[0].mxu0
    %2611 = vmatprep.mubr.bf16.mxu0 0
    %2612 = vmatmul.mubr.bf16.gmra.mrb[0].mxu0 %v2417
    %v2613 = vpop.f32.mrb[0].mxu0
    %v2614 = vadd.f32 %v2557, %v2613
    %v2615 = vpop.f32.mrb[0].mxu0
    %v2616 = vpop.f32.mrb[0].mxu0
    %v2617 = vadd.f32 %v2557, %v2616
    %v2618 = vpop.f32.mrb[0].mxu0
    %2619 = vdwg.mxu0
    %v2620 = vmul.f32 %v2532, %v2468
    %v2621 = vmul.f32 %v2535, %v2468
    %v2622 = vmul.f32 %v2540, %v2468
    %v2623 = vmul.f32 %v2543, %v2468
    %v2624 = vpack.c.bf16 %v2621, %v2620
    %v2625 = vpack.c.bf16 %v2623, %v2622
    %v2627 = vsel %vm562, %v2624, 0
    %v2630 = vsel %vm562, %v2625, 0
    %2632 = vmatprep.subr.bf16.mxu0 0
    %2633 = vmatpush1.bf16.msra.mxu0 %v1306
    %2634 = vmatprep.subr.bf16.mxu0 0
    %2635 = vmatpush1.bf16.msra.mxu0 %v1307
    %2636 = vmatprep.subr.bf16.mxu0 0
    %2637 = vmatpush1.bf16.msra.mxu0 0
    %2638 = vmatprep.subr.bf16.mxu0 0
    %2639 = vmatpush1.bf16.msra.mxu0 0
    %2640 = vmatprep.subr.bf16.mxu0 0
    %2641 = vmatpush1.bf16.msra.mxu0 0
    %2642 = vmatprep.subr.bf16.mxu0 0
    %2643 = vmatpush1.bf16.msra.mxu0 0
    %2644 = vmatprep.subr.bf16.mxu0 0
    %2645 = vmatpush1.bf16.msra.mxu0 0
    %2646 = vmatprep.subr.bf16.mxu0 0
    %2647 = vmatpush1.bf16.msra.mxu0 0
    %2648 = vmatprep.subr.bf16.mxu0 0
    %2649 = vmatpush1.bf16.msra.mxu0 0
    %2650 = vmatprep.subr.bf16.mxu0 0
    %2651 = vmatpush1.bf16.msra.mxu0 0
    %2652 = vmatprep.subr.bf16.mxu0 0
    %2653 = vmatpush1.bf16.msra.mxu0 0
    %2654 = vmatprep.subr.bf16.mxu0 0
    %2655 = vmatpush1.bf16.msra.mxu0 0
    %2656 = vmatprep.subr.bf16.mxu0 0
    %2657 = vmatpush1.bf16.msra.mxu0 0
    %2658 = vmatprep.subr.bf16.mxu0 0
    %2659 = vmatpush1.bf16.msra.mxu0 0
    %2660 = vmatprep.subr.bf16.mxu0 0
    %2661 = vmatpush1.bf16.msra.mxu0 0
    %2662 = vmatprep.subr.bf16.mxu0 0
    %2663 = vmatpush1.bf16.msra.mxu0 0
    %2664 = vmatprep.mubr.bf16.mxu0 0
    %2665 = vmatmul.mubr.bf16.gmra.mrb[0].mxu0 %v2627
    %v2666 = vpop.f32.mrb[0].mxu0
    %v2667 = vadd.f32 0.0, %v2666
    %v2668 = vpop.f32.mrb[0].mxu0
    %v2669 = vpop.f32.mrb[0].mxu0
    %v2670 = vadd.f32 0.0, %v2669
    %v2671 = vpop.f32.mrb[0].mxu0
    %2672 = vmatprep.mubr.bf16.mxu0 0
    %2673 = vmatmul.mubr.bf16.gmra.mrb[0].mxu0 %v2630
    %v2674 = vpop.f32.mrb[0].mxu0
    %v2675 = vadd.f32 0.0, %v2674
    %v2676 = vpop.f32.mrb[0].mxu0
    %v2677 = vpop.f32.mrb[0].mxu0
    %v2678 = vadd.f32 0.0, %v2677
    %v2679 = vpop.f32.mrb[0].mxu0
    %2680 = vdwg.mxu0
    %v2681 = vsel %vm1365, %v2667, -inf
    %v2682 = vsel %vm1365, %v2670, -inf
    %v2683 = vsel %vm1365, %v2675, -inf
    %v2684 = vsel %vm1365, %v2678, -inf
    %v2685 = vmax.f32 %v2681, %v2682
    %v2686 = vmax.f32 %v2683, %v2684
    %v2687 = vmax.f32 %v2685, %v2686
    %v2688 = vsub.f32 %v2667, %v2687
    %v2689 = vsub.f32 %v2670, %v2687
    %v2690 = vsub.f32 %v2675, %v2687
    %v2691 = vsub.f32 %v2678, %v2687
    %v2692 = vmul.f32 %v2688, 1.442695
    %v2693 = vpow.pop %v2692
    %v2694 = vmul.f32 %v2689, 1.442695
    %v2695 = vpow.pop %v2694
    %v2696 = vmul.f32 %v2690, 1.442695
    %v2697 = vpow.pop %v2696
    %v2698 = vmul.f32 %v2691, 1.442695
    %v2699 = vpow.pop %v2698
    %v2700 = vsel %vm1365, %v2693, 0.0
    %v2701 = vsel %vm1365, %v2695, 0.0
    %v2702 = vadd.f32 %v2700, %v2701
    %v2703 = vsel %vm1365, %v2697, 0.0
    %v2704 = vadd.f32 %v2702, %v2703
    %v2705 = vsel %vm1365, %v2699, 0.0
    %v2706 = vadd.f32 %v2704, %v2705
    %v2707 = vrcp.pop %v2706
    %v2708 = vmul.f32 %v2693, %v2707
    %v2709 = vmul.f32 %v2695, %v2707
    %v2710 = vmul.f32 %v2697, %v2707
    %v2711 = vmul.f32 %v2699, %v2707
    %v2712 = vpack.c.bf16 %v2709, %v2708
    %v2713 = vpack.c.bf16 %v2711, %v2710
    %v2715 = vsel %vm1365, %v2712, 0
    %v2718 = vsel %vm1365, %v2713, 0
    %2720 = vmatprep.subr.bf16.mxu0 0
    %2721 = vmatpush1.bf16.msra.mxu0 %v1407
    %2722 = vmatprep.subr.bf16.mxu0 0
    %2723 = vmatpush1.bf16.msra.mxu0 0
    %2724 = vmatprep.subr.bf16.mxu0 0
    %2725 = vmatpush1.bf16.msra.mxu0 0
    %2726 = vmatprep.subr.bf16.mxu0 0
    %2727 = vmatpush1.bf16.msra.mxu0 0
    %2728 = vmatprep.subr.bf16.mxu0 0
    %2729 = vmatpush1.bf16.msra.mxu0 0
    %2730 = vmatprep.subr.bf16.mxu0 0
    %2731 = vmatpush1.bf16.msra.mxu0 0
    %2732 = vmatprep.subr.bf16.mxu0 0
    %2733 = vmatpush1.bf16.msra.mxu0 0
    %2734 = vmatprep.subr.bf16.mxu0 0
    %2735 = vmatpush1.bf16.msra.mxu0 0
    %2736 = vmatprep.subr.bf16.mxu0 0
    %2737 = vmatpush1.bf16.msra.mxu0 0
    %2738 = vmatprep.subr.bf16.mxu0 0
    %2739 = vmatpush1.bf16.msra.mxu0 0
    %2740 = vmatprep.subr.bf16.mxu0 0
    %2741 = vmatpush1.bf16.msra.mxu0 0
    %2742 = vmatprep.subr.bf16.mxu0 0
    %2743 = vmatpush1.bf16.msra.mxu0 0
    %2744 = vmatprep.subr.bf16.mxu0 0
    %2745 = vmatpush1.bf16.msra.mxu0 0
    %2746 = vmatprep.subr.bf16.mxu0 0
    %2747 = vmatpush1.bf16.msra.mxu0 0
    %2748 = vmatprep.subr.bf16.mxu0 0
    %2749 = vmatpush1.bf16.msra.mxu0 0
    %2750 = vmatprep.subr.bf16.mxu0 0
    %2751 = vmatpush1.bf16.msra.mxu0 0
    %2752 = vmatprep.mubr.bf16.mxu0 0
    %2753 = vmatmul.mubr.bf16.gmra.mrb[0].mxu0 %v2715
    %v2754 = vpop.f32.mrb[0].mxu0
    %v2755 = vadd.f32 0.0, %v2754
    %v2756 = vpop.f32.mrb[0].mxu0
    %v2757 = vpop.f32.mrb[0].mxu0
    %v2758 = vadd.f32 0.0, %v2757
    %v2759 = vpop.f32.mrb[0].mxu0
    %2760 = vmatprep.mubr.bf16.mxu0 0
    %2761 = vmatmul.mubr.bf16.gmra.mrb[0].mxu0 %v2718
    %v2762 = vpop.f32.mrb[0].mxu0
    %v2763 = vadd.f32 0.0, %v2762
    %v2764 = vpop.f32.mrb[0].mxu0
    %v2765 = vpop.f32.mrb[0].mxu0
    %v2766 = vadd.f32 0.0, %v2765
    %v2767 = vpop.f32.mrb[0].mxu0
    %2768 = vdwg.mxu0
    %v2769 = vmul.f32 %v2755, %v2606
    %v2770 = vmul.f32 %v2758, %v2609
    %v2771 = vmul.f32 %v2763, %v2614
    %v2772 = vmul.f32 %v2766, %v2617
    %v2773 = vsel %vm562, %v2769, 0.0
    %v2774 = vsel %vm562, %v2770, 0.0
    %v2775 = vadd.f32 %v2773, %v2774
    %v2776 = vsel %vm562, %v2771, 0.0
    %v2777 = vadd.f32 %v2775, %v2776
    %v2778 = vsel %vm562, %v2772, 0.0
    %v2779 = vadd.f32 %v2777, %v2778
    %2780 = vst.msk [vmem:[#allocation2] sm:$0xff] %vm562, %v2779
    %v2781 = vmul.f32 %v2532, %v2469
    %v2782 = vmul.f32 %v2535, %v2469
    %v2783 = vmul.f32 %v2540, %v2469
    %v2784 = vmul.f32 %v2543, %v2469
    %v2785 = vpack.c.bf16 %v2782, %v2781
    %v2786 = vpack.c.bf16 %v2784, %v2783
    %v2788 = vsel %vm562, %v2785, 0
    %v2791 = vsel %vm562, %v2786, 0
    %2793 = vmatprep.subr.bf16.mxu0 0
    %2794 = vmatpush1.bf16.msra.mxu0 %v1306
    %2795 = vmatprep.subr.bf16.mxu0 0
    %2796 = vmatpush1.bf16.msra.mxu0 %v1307
    %2797 = vmatprep.subr.bf16.mxu0 0
    %2798 = vmatpush1.bf16.msra.mxu0 0
    %2799 = vmatprep.subr.bf16.mxu0 0
    %2800 = vmatpush1.bf16.msra.mxu0 0
    %2801 = vmatprep.subr.bf16.mxu0 0
    %2802 = vmatpush1.bf16.msra.mxu0 0
    %2803 = vmatprep.subr.bf16.mxu0 0
    %2804 = vmatpush1.bf16.msra.mxu0 0
    %2805 = vmatprep.subr.bf16.mxu0 0
    %2806 = vmatpush1.bf16.msra.mxu0 0
    %2807 = vmatprep.subr.bf16.mxu0 0
    %2808 = vmatpush1.bf16.msra.mxu0 0
    %2809 = vmatprep.subr.bf16.mxu0 0
    %2810 = vmatpush1.bf16.msra.mxu0 0
    %2811 = vmatprep.subr.bf16.mxu0 0
    %2812 = vmatpush1.bf16.msra.mxu0 0
    %2813 = vmatprep.subr.bf16.mxu0 0
    %2814 = vmatpush1.bf16.msra.mxu0 0
    %2815 = vmatprep.subr.bf16.mxu0 0
    %2816 = vmatpush1.bf16.msra.mxu0 0
    %2817 = vmatprep.subr.bf16.mxu0 0
    %2818 = vmatpush1.bf16.msra.mxu0 0
    %2819 = vmatprep.subr.bf16.mxu0 0
    %2820 = vmatpush1.bf16.msra.mxu0 0
    %2821 = vmatprep.subr.bf16.mxu0 0
    %2822 = vmatpush1.bf16.msra.mxu0 0
    %2823 = vmatprep.subr.bf16.mxu0 0
    %2824 = vmatpush1.bf16.msra.mxu0 0
    %2825 = vmatprep.mubr.bf16.mxu0 0
    %2826 = vmatmul.mubr.bf16.gmra.mrb[0].mxu0 %v2788
    %v2827 = vpop.f32.mrb[0].mxu0
    %v2828 = vadd.f32 0.0, %v2827
    %v2829 = vpop.f32.mrb[0].mxu0
    %v2830 = vpop.f32.mrb[0].mxu0
    %v2831 = vadd.f32 0.0, %v2830
    %v2832 = vpop.f32.mrb[0].mxu0
    %2833 = vmatprep.mubr.bf16.mxu0 0
    %2834 = vmatmul.mubr.bf16.gmra.mrb[0].mxu0 %v2791
    %v2835 = vpop.f32.mrb[0].mxu0
    %v2836 = vadd.f32 0.0, %v2835
    %v2837 = vpop.f32.mrb[0].mxu0
    %v2838 = vpop.f32.mrb[0].mxu0
    %v2839 = vadd.f32 0.0, %v2838
    %v2840 = vpop.f32.mrb[0].mxu0
    %2841 = vdwg.mxu0
    %v2842 = vsel %vm1365, %v2828, -inf
    %v2843 = vsel %vm1365, %v2831, -inf
    %v2844 = vsel %vm1365, %v2836, -inf
    %v2845 = vsel %vm1365, %v2839, -inf
    %v2846 = vmax.f32 %v2842, %v2843
    %v2847 = vmax.f32 %v2844, %v2845
    %v2848 = vmax.f32 %v2846, %v2847
    %v2849 = vsub.f32 %v2828, %v2848
    %v2850 = vsub.f32 %v2831, %v2848
    %v2851 = vsub.f32 %v2836, %v2848
    %v2852 = vsub.f32 %v2839, %v2848
    %v2853 = vmul.f32 %v2849, 1.442695
    %v2854 = vpow.pop %v2853
    %v2855 = vmul.f32 %v2850, 1.442695
    %v2856 = vpow.pop %v2855
    %v2857 = vmul.f32 %v2851, 1.442695
    %v2858 = vpow.pop %v2857
    %v2859 = vmul.f32 %v2852, 1.442695
    %v2860 = vpow.pop %v2859
    %v2861 = vsel %vm1365, %v2854, 0.0
    %v2862 = vsel %vm1365, %v2856, 0.0
    %v2863 = vadd.f32 %v2861, %v2862
    %v2864 = vsel %vm1365, %v2858, 0.0
    %v2865 = vadd.f32 %v2863, %v2864
    %v2866 = vsel %vm1365, %v2860, 0.0
    %v2867 = vadd.f32 %v2865, %v2866
    %v2868 = vrcp.pop %v2867
    %v2869 = vmul.f32 %v2854, %v2868
    %v2870 = vmul.f32 %v2856, %v2868
    %v2871 = vmul.f32 %v2858, %v2868
    %v2872 = vmul.f32 %v2860, %v2868
    %v2873 = vpack.c.bf16 %v2870, %v2869
    %v2874 = vpack.c.bf16 %v2872, %v2871
    %v2876 = vsel %vm1365, %v2873, 0
    %v2879 = vsel %vm1365, %v2874, 0
    %2881 = vmatprep.subr.bf16.mxu0 0
    %2882 = vmatpush1.bf16.msra.mxu0 %v1407
    %2883 = vmatprep.subr.bf16.mxu0 0
    %2884 = vmatpush1.bf16.msra.mxu0 0
    %2885 = vmatprep.subr.bf16.mxu0 0
    %2886 = vmatpush1.bf16.msra.mxu0 0
    %2887 = vmatprep.subr.bf16.mxu0 0
    %2888 = vmatpush1.bf16.msra.mxu0 0
    %2889 = vmatprep.subr.bf16.mxu0 0
    %2890 = vmatpush1.bf16.msra.mxu0 0
    %2891 = vmatprep.subr.bf16.mxu0 0
    %2892 = vmatpush1.bf16.msra.mxu0 0
    %2893 = vmatprep.subr.bf16.mxu0 0
    %2894 = vmatpush1.bf16.msra.mxu0 0
    %2895 = vmatprep.subr.bf16.mxu0 0
    %2896 = vmatpush1.bf16.msra.mxu0 0
    %2897 = vmatprep.subr.bf16.mxu0 0
    %2898 = vmatpush1.bf16.msra.mxu0 0
    %2899 = vmatprep.subr.bf16.mxu0 0
    %2900 = vmatpush1.bf16.msra.mxu0 0
    %2901 = vmatprep.subr.bf16.mxu0 0
    %2902 = vmatpush1.bf16.msra.mxu0 0
    %2903 = vmatprep.subr.bf16.mxu0 0
    %2904 = vmatpush1.bf16.msra.mxu0 0
    %2905 = vmatprep.subr.bf16.mxu0 0
    %2906 = vmatpush1.bf16.msra.mxu0 0
    %2907 = vmatprep.subr.bf16.mxu0 0
    %2908 = vmatpush1.bf16.msra.mxu0 0
    %2909 = vmatprep.subr.bf16.mxu0 0
    %2910 = vmatpush1.bf16.msra.mxu0 0
    %2911 = vmatprep.subr.bf16.mxu0 0
    %2912 = vmatpush1.bf16.msra.mxu0 0
    %2913 = vmatprep.mubr.bf16.mxu0 0
    %2914 = vmatmul.mubr.bf16.gmra.mrb[0].mxu0 %v2876
    %v2915 = vpop.f32.mrb[0].mxu0
    %v2916 = vadd.f32 0.0, %v2915
    %v2917 = vpop.f32.mrb[0].mxu0
    %v2918 = vpop.f32.mrb[0].mxu0
    %v2919 = vadd.f32 0.0, %v2918
    %v2920 = vpop.f32.mrb[0].mxu0
    %2921 = vmatprep.mubr.bf16.mxu0 0
    %2922 = vmatmul.mubr.bf16.gmra.mrb[0].mxu0 %v2879
    %v2923 = vpop.f32.mrb[0].mxu0
    %v2924 = vadd.f32 0.0, %v2923
    %v2925 = vpop.f32.mrb[0].mxu0
    %v2926 = vpop.f32.mrb[0].mxu0
    %v2927 = vadd.f32 0.0, %v2926
    %v2928 = vpop.f32.mrb[0].mxu0
    %2929 = vdwg.mxu0
    %v2930 = vmul.f32 %v2916, %v2606
    %v2931 = vmul.f32 %v2919, %v2609
    %v2932 = vmul.f32 %v2924, %v2614
    %v2933 = vmul.f32 %v2927, %v2617
    %v2934 = vsel %vm562, %v2930, 0.0
    %v2935 = vsel %vm562, %v2931, 0.0
    %v2936 = vadd.f32 %v2934, %v2935
    %v2937 = vsel %vm562, %v2932, 0.0
    %v2938 = vadd.f32 %v2936, %v2937
    %v2939 = vsel %vm562, %v2933, 0.0
    %v2940 = vadd.f32 %v2938, %v2939
    %2941 = vst.msk [vmem:[#allocation2 + $0x8] sm:$0xff] %vm562, %v2940
    %v2942 = vmul.f32 %v2532, %v2470
    %v2943 = vmul.f32 %v2535, %v2470
    %v2944 = vmul.f32 %v2540, %v2470
    %v2945 = vmul.f32 %v2543, %v2470
    %v2946 = vpack.c.bf16 %v2943, %v2942
    %v2947 = vpack.c.bf16 %v2945, %v2944
    %v2949 = vsel %vm562, %v2946, 0
    %v2952 = vsel %vm562, %v2947, 0
    %2954 = vmatprep.subr.bf16.mxu0 0
    %2955 = vmatpush1.bf16.msra.mxu0 %v1306
    %2956 = vmatprep.subr.bf16.mxu0 0
    %2957 = vmatpush1.bf16.msra.mxu0 %v1307
    %2958 = vmatprep.subr.bf16.mxu0 0
    %2959 = vmatpush1.bf16.msra.mxu0 0
    %2960 = vmatprep.subr.bf16.mxu0 0
    %2961 = vmatpush1.bf16.msra.mxu0 0
    %2962 = vmatprep.subr.bf16.mxu0 0
    %2963 = vmatpush1.bf16.msra.mxu0 0
    %2964 = vmatprep.subr.bf16.mxu0 0
    %2965 = vmatpush1.bf16.msra.mxu0 0
    %2966 = vmatprep.subr.bf16.mxu0 0
    %2967 = vmatpush1.bf16.msra.mxu0 0
    %2968 = vmatprep.subr.bf16.mxu0 0
    %2969 = vmatpush1.bf16.msra.mxu0 0
    %2970 = vmatprep.subr.bf16.mxu0 0
    %2971 = vmatpush1.bf16.msra.mxu0 0
    %2972 = vmatprep.subr.bf16.mxu0 0
    %2973 = vmatpush1.bf16.msra.mxu0 0
    %2974 = vmatprep.subr.bf16.mxu0 0
    %2975 = vmatpush1.bf16.msra.mxu0 0
    %2976 = vmatprep.subr.bf16.mxu0 0
    %2977 = vmatpush1.bf16.msra.mxu0 0
    %2978 = vmatprep.subr.bf16.mxu0 0
    %2979 = vmatpush1.bf16.msra.mxu0 0
    %2980 = vmatprep.subr.bf16.mxu0 0
    %2981 = vmatpush1.bf16.msra.mxu0 0
    %2982 = vmatprep.subr.bf16.mxu0 0
    %2983 = vmatpush1.bf16.msra.mxu0 0
    %2984 = vmatprep.subr.bf16.mxu0 0
    %2985 = vmatpush1.bf16.msra.mxu0 0
    %2986 = vmatprep.mubr.bf16.mxu0 0
    %2987 = vmatmul.mubr.bf16.gmra.mrb[0].mxu0 %v2949
    %v2988 = vpop.f32.mrb[0].mxu0
    %v2989 = vadd.f32 0.0, %v2988
    %v2990 = vpop.f32.mrb[0].mxu0
    %v2991 = vpop.f32.mrb[0].mxu0
    %v2992 = vadd.f32 0.0, %v2991
    %v2993 = vpop.f32.mrb[0].mxu0
    %2994 = vmatprep.mubr.bf16.mxu0 0
    %2995 = vmatmul.mubr.bf16.gmra.mrb[0].mxu0 %v2952
    %v2996 = vpop.f32.mrb[0].mxu0
    %v2997 = vadd.f32 0.0, %v2996
    %v2998 = vpop.f32.mrb[0].mxu0
    %v2999 = vpop.f32.mrb[0].mxu0
    %v3000 = vadd.f32 0.0, %v2999
    %v3001 = vpop.f32.mrb[0].mxu0
    %3002 = vdwg.mxu0
    %v3003 = vsel %vm1365, %v2989, -inf
    %v3004 = vsel %vm1365, %v2992, -inf
    %v3005 = vsel %vm1365, %v2997, -inf
    %v3006 = vsel %vm1365, %v3000, -inf
    %v3007 = vmax.f32 %v3003, %v3004
    %v3008 = vmax.f32 %v3005, %v3006
    %v3009 = vmax.f32 %v3007, %v3008
    %v3010 = vsub.f32 %v2989, %v3009
    %v3011 = vsub.f32 %v2992, %v3009
    %v3012 = vsub.f32 %v2997, %v3009
    %v3013 = vsub.f32 %v3000, %v3009
    %v3014 = vmul.f32 %v3010, 1.442695
    %v3015 = vpow.pop %v3014
    %v3016 = vmul.f32 %v3011, 1.442695
    %v3017 = vpow.pop %v3016
    %v3018 = vmul.f32 %v3012, 1.442695
    %v3019 = vpow.pop %v3018
    %v3020 = vmul.f32 %v3013, 1.442695
    %v3021 = vpow.pop %v3020
    %v3022 = vsel %vm1365, %v3015, 0.0
    %v3023 = vsel %vm1365, %v3017, 0.0
    %v3024 = vadd.f32 %v3022, %v3023
    %v3025 = vsel %vm1365, %v3019, 0.0
    %v3026 = vadd.f32 %v3024, %v3025
    %v3027 = vsel %vm1365, %v3021, 0.0
    %v3028 = vadd.f32 %v3026, %v3027
    %v3029 = vrcp.pop %v3028
    %v3030 = vmul.f32 %v3015, %v3029
    %v3031 = vmul.f32 %v3017, %v3029
    %v3032 = vmul.f32 %v3019, %v3029
    %v3033 = vmul.f32 %v3021, %v3029
    %v3034 = vpack.c.bf16 %v3031, %v3030
    %v3035 = vpack.c.bf16 %v3033, %v3032
    %v3037 = vsel %vm1365, %v3034, 0
    %v3040 = vsel %vm1365, %v3035, 0
    %3042 = vmatprep.subr.bf16.mxu0 0
    %3043 = vmatpush1.bf16.msra.mxu0 %v1407
    %3044 = vmatprep.subr.bf16.mxu0 0
    %3045 = vmatpush1.bf16.msra.mxu0 0
    %3046 = vmatprep.subr.bf16.mxu0 0
    %3047 = vmatpush1.bf16.msra.mxu0 0
    %3048 = vmatprep.subr.bf16.mxu0 0
    %3049 = vmatpush1.bf16.msra.mxu0 0
    %3050 = vmatprep.subr.bf16.mxu0 0
    %3051 = vmatpush1.bf16.msra.mxu0 0
    %3052 = vmatprep.subr.bf16.mxu0 0
    %3053 = vmatpush1.bf16.msra.mxu0 0
    %3054 = vmatprep.subr.bf16.mxu0 0
    %3055 = vmatpush1.bf16.msra.mxu0 0
    %3056 = vmatprep.subr.bf16.mxu0 0
    %3057 = vmatpush1.bf16.msra.mxu0 0
    %3058 = vmatprep.subr.bf16.mxu0 0
    %3059 = vmatpush1.bf16.msra.mxu0 0
    %3060 = vmatprep.subr.bf16.mxu0 0
    %3061 = vmatpush1.bf16.msra.mxu0 0
    %3062 = vmatprep.subr.bf16.mxu0 0
    %3063 = vmatpush1.bf16.msra.mxu0 0
    %3064 = vmatprep.subr.bf16.mxu0 0
    %3065 = vmatpush1.bf16.msra.mxu0 0
    %3066 = vmatprep.subr.bf16.mxu0 0
    %3067 = vmatpush1.bf16.msra.mxu0 0
    %3068 = vmatprep.subr.bf16.mxu0 0
    %3069 = vmatpush1.bf16.msra.mxu0 0
    %3070 = vmatprep.subr.bf16.mxu0 0
    %3071 = vmatpush1.bf16.msra.mxu0 0
    %3072 = vmatprep.subr.bf16.mxu0 0
    %3073 = vmatpush1.bf16.msra.mxu0 0
    %3074 = vmatprep.mubr.bf16.mxu0 0
    %3075 = vmatmul.mubr.bf16.gmra.mrb[0].mxu0 %v3037
    %v3076 = vpop.f32.mrb[0].mxu0
    %v3077 = vadd.f32 0.0, %v3076
    %v3078 = vpop.f32.mrb[0].mxu0
    %v3079 = vpop.f32.mrb[0].mxu0
    %v3080 = vadd.f32 0.0, %v3079
    %v3081 = vpop.f32.mrb[0].mxu0
    %3082 = vmatprep.mubr.bf16.mxu0 0
    %3083 = vmatmul.mubr.bf16.gmra.mrb[0].mxu0 %v3040
    %v3084 = vpop.f32.mrb[0].mxu0
    %v3085 = vadd.f32 0.0, %v3084
    %v3086 = vpop.f32.mrb[0].mxu0
    %v3087 = vpop.f32.mrb[0].mxu0
    %v3088 = vadd.f32 0.0, %v3087
    %v3089 = vpop.f32.mrb[0].mxu0
    %3090 = vdwg.mxu0
    %v3091 = vmul.f32 %v3077, %v2606
    %v3092 = vmul.f32 %v3080, %v2609
    %v3093 = vmul.f32 %v3085, %v2614
    %v3094 = vmul.f32 %v3088, %v2617
    %v3095 = vsel %vm562, %v3091, 0.0
    %v3096 = vsel %vm562, %v3092, 0.0
    %v3097 = vadd.f32 %v3095, %v3096
    %v3098 = vsel %vm562, %v3093, 0.0
    %v3099 = vadd.f32 %v3097, %v3098
    %v3100 = vsel %vm562, %v3094, 0.0
    %v3101 = vadd.f32 %v3099, %v3100
    %3102 = vst.msk [vmem:[#allocation2 + $0x10] sm:$0xff] %vm562, %v3101
    %v3103 = vmul.f32 %v2532, %v2471
    %v3104 = vmul.f32 %v2535, %v2471
    %v3105 = vmul.f32 %v2540, %v2471
    %v3106 = vmul.f32 %v2543, %v2471
    %v3107 = vpack.c.bf16 %v3104, %v3103
    %v3108 = vpack.c.bf16 %v3106, %v3105
    %v3110 = vsel %vm562, %v3107, 0
    %v3113 = vsel %vm562, %v3108, 0
    %3115 = vmatprep.subr.bf16.mxu0 0
    %3116 = vmatpush1.bf16.msra.mxu0 %v1306
    %3117 = vmatprep.subr.bf16.mxu0 0
    %3118 = vmatpush1.bf16.msra.mxu0 %v1307
    %3119 = vmatprep.subr.bf16.mxu0 0
    %3120 = vmatpush1.bf16.msra.mxu0 0
    %3121 = vmatprep.subr.bf16.mxu0 0
    %3122 = vmatpush1.bf16.msra.mxu0 0
    %3123 = vmatprep.subr.bf16.mxu0 0
    %3124 = vmatpush1.bf16.msra.mxu0 0
    %3125 = vmatprep.subr.bf16.mxu0 0
    %3126 = vmatpush1.bf16.msra.mxu0 0
    %3127 = vmatprep.subr.bf16.mxu0 0
    %3128 = vmatpush1.bf16.msra.mxu0 0
    %3129 = vmatprep.subr.bf16.mxu0 0
    %3130 = vmatpush1.bf16.msra.mxu0 0
    %3131 = vmatprep.subr.bf16.mxu0 0
    %3132 = vmatpush1.bf16.msra.mxu0 0
    %3133 = vmatprep.subr.bf16.mxu0 0
    %3134 = vmatpush1.bf16.msra.mxu0 0
    %3135 = vmatprep.subr.bf16.mxu0 0
    %3136 = vmatpush1.bf16.msra.mxu0 0
    %3137 = vmatprep.subr.bf16.mxu0 0
    %3138 = vmatpush1.bf16.msra.mxu0 0
    %3139 = vmatprep.subr.bf16.mxu0 0
    %3140 = vmatpush1.bf16.msra.mxu0 0
    %3141 = vmatprep.subr.bf16.mxu0 0
    %3142 = vmatpush1.bf16.msra.mxu0 0
    %3143 = vmatprep.subr.bf16.mxu0 0
    %3144 = vmatpush1.bf16.msra.mxu0 0
    %3145 = vmatprep.subr.bf16.mxu0 0
    %3146 = vmatpush1.bf16.msra.mxu0 0
    %3147 = vmatprep.mubr.bf16.mxu0 0
    %3148 = vmatmul.mubr.bf16.gmra.mrb[0].mxu0 %v3110
    %v3149 = vpop.f32.mrb[0].mxu0
    %v3150 = vadd.f32 0.0, %v3149
    %v3151 = vpop.f32.mrb[0].mxu0
    %v3152 = vpop.f32.mrb[0].mxu0
    %v3153 = vadd.f32 0.0, %v3152
    %v3154 = vpop.f32.mrb[0].mxu0
    %3155 = vmatprep.mubr.bf16.mxu0 0
    %3156 = vmatmul.mubr.bf16.gmra.mrb[0].mxu0 %v3113
    %v3157 = vpop.f32.mrb[0].mxu0
    %v3158 = vadd.f32 0.0, %v3157
    %v3159 = vpop.f32.mrb[0].mxu0
    %v3160 = vpop.f32.mrb[0].mxu0
    %v3161 = vadd.f32 0.0, %v3160
    %v3162 = vpop.f32.mrb[0].mxu0
    %3163 = vdwg.mxu0
    %v3164 = vsel %vm1365, %v3150, -inf
    %v3165 = vsel %vm1365, %v3153, -inf
    %v3166 = vsel %vm1365, %v3158, -inf
    %v3167 = vsel %vm1365, %v3161, -inf
    %v3168 = vmax.f32 %v3164, %v3165
    %v3169 = vmax.f32 %v3166, %v3167
    %v3170 = vmax.f32 %v3168, %v3169
    %v3171 = vsub.f32 %v3150, %v3170
    %v3172 = vsub.f32 %v3153, %v3170
    %v3173 = vsub.f32 %v3158, %v3170
    %v3174 = vsub.f32 %v3161, %v3170
    %v3175 = vmul.f32 %v3171, 1.442695
    %v3176 = vpow.pop %v3175
    %v3177 = vmul.f32 %v3172, 1.442695
    %v3178 = vpow.pop %v3177
    %v3179 = vmul.f32 %v3173, 1.442695
    %v3180 = vpow.pop %v3179
    %v3181 = vmul.f32 %v3174, 1.442695
    %v3182 = vpow.pop %v3181
    %v3183 = vsel %vm1365, %v3176, 0.0
    %v3184 = vsel %vm1365, %v3178, 0.0
    %v3185 = vadd.f32 %v3183, %v3184
    %v3186 = vsel %vm1365, %v3180, 0.0
    %v3187 = vadd.f32 %v3185, %v3186
    %v3188 = vsel %vm1365, %v3182, 0.0
    %v3189 = vadd.f32 %v3187, %v3188
    %v3190 = vrcp.pop %v3189
    %v3191 = vmul.f32 %v3176, %v3190
    %v3192 = vmul.f32 %v3178, %v3190
    %v3193 = vmul.f32 %v3180, %v3190
    %v3194 = vmul.f32 %v3182, %v3190
    %v3195 = vpack.c.bf16 %v3192, %v3191
    %v3196 = vpack.c.bf16 %v3194, %v3193
    %v3198 = vsel %vm1365, %v3195, 0
    %v3201 = vsel %vm1365, %v3196, 0
    %3203 = vmatprep.subr.bf16.mxu0 0
    %3204 = vmatpush1.bf16.msra.mxu0 %v1407
    %3205 = vmatprep.subr.bf16.mxu0 0
    %3206 = vmatpush1.bf16.msra.mxu0 0
    %3207 = vmatprep.subr.bf16.mxu0 0
    %3208 = vmatpush1.bf16.msra.mxu0 0
    %3209 = vmatprep.subr.bf16.mxu0 0
    %3210 = vmatpush1.bf16.msra.mxu0 0
    %3211 = vmatprep.subr.bf16.mxu0 0
    %3212 = vmatpush1.bf16.msra.mxu0 0
    %3213 = vmatprep.subr.bf16.mxu0 0
    %3214 = vmatpush1.bf16.msra.mxu0 0
    %3215 = vmatprep.subr.bf16.mxu0 0
    %3216 = vmatpush1.bf16.msra.mxu0 0
    %3217 = vmatprep.subr.bf16.mxu0 0
    %3218 = vmatpush1.bf16.msra.mxu0 0
    %3219 = vmatprep.subr.bf16.mxu0 0
    %3220 = vmatpush1.bf16.msra.mxu0 0
    %3221 = vmatprep.subr.bf16.mxu0 0
    %3222 = vmatpush1.bf16.msra.mxu0 0
    %3223 = vmatprep.subr.bf16.mxu0 0
    %3224 = vmatpush1.bf16.msra.mxu0 0
    %3225 = vmatprep.subr.bf16.mxu0 0
    %3226 = vmatpush1.bf16.msra.mxu0 0
    %3227 = vmatprep.subr.bf16.mxu0 0
    %3228 = vmatpush1.bf16.msra.mxu0 0
    %3229 = vmatprep.subr.bf16.mxu0 0
    %3230 = vmatpush1.bf16.msra.mxu0 0
    %3231 = vmatprep.subr.bf16.mxu0 0
    %3232 = vmatpush1.bf16.msra.mxu0 0
    %3233 = vmatprep.subr.bf16.mxu0 0
    %3234 = vmatpush1.bf16.msra.mxu0 0
    %3235 = vmatprep.mubr.bf16.mxu0 0
    %3236 = vmatmul.mubr.bf16.gmra.mrb[0].mxu0 %v3198
    %v3237 = vpop.f32.mrb[0].mxu0
    %v3238 = vadd.f32 0.0, %v3237
    %v3239 = vpop.f32.mrb[0].mxu0
    %v3240 = vpop.f32.mrb[0].mxu0
    %v3241 = vadd.f32 0.0, %v3240
    %v3242 = vpop.f32.mrb[0].mxu0
    %3243 = vmatprep.mubr.bf16.mxu0 0
    %3244 = vmatmul.mubr.bf16.gmra.mrb[0].mxu0 %v3201
    %v3245 = vpop.f32.mrb[0].mxu0
    %v3246 = vadd.f32 0.0, %v3245
    %v3247 = vpop.f32.mrb[0].mxu0
    %v3248 = vpop.f32.mrb[0].mxu0
    %v3249 = vadd.f32 0.0, %v3248
    %v3250 = vpop.f32.mrb[0].mxu0
    %3251 = vdwg.mxu0
    %v3252 = vmul.f32 %v3238, %v2606
    %v3253 = vmul.f32 %v3241, %v2609
    %v3254 = vmul.f32 %v3246, %v2614
    %v3255 = vmul.f32 %v3249, %v2617
    %v3256 = vsel %vm562, %v3252, 0.0
    %v3257 = vsel %vm562, %v3253, 0.0
    %v3258 = vadd.f32 %v3256, %v3257
    %v3259 = vsel %vm562, %v3254, 0.0
    %v3260 = vadd.f32 %v3258, %v3259
    %v3261 = vsel %vm562, %v3255, 0.0
    %v3262 = vadd.f32 %v3260, %v3261
    %3263 = vst.msk [vmem:[#allocation2 + $0x18] sm:$0xff] %vm562, %v3262
    %v3264 = vld [vmem:[#allocation2] sm:$0xff]
    %v3265 = vld [vmem:[#allocation2 + $0x8] sm:$0xff]
    %v3266 = vld [vmem:[#allocation2 + $0x10] sm:$0xff]
    %v3267 = vld [vmem:[#allocation2 + $0x18] sm:$0xff]
    %s3268 = scalar_lea.vmem [#allocation30], 16
    %v3269 = vld [vmem:[%s3268] sm:$0xf]
    %v3270 = vld [vmem:[%s3268 + $0x4] sm:$0xf]
    %v3271 = vld [vmem:[%s3268 + $0x8] sm:$0xf]
    %v3272 = vld [vmem:[%s3268 + $0xc] sm:$0xf]
    %v3273 = vpack.c.bf16 %v3265, %v3264
    %v3274 = vpack.c.bf16 %v3267, %v3266
    %s3275 = scalar_lea.vmem [#allocation31], 1
    %v3276 = vld [vmem:[%s3275] sm:$0x1]
    %v3278 = vlaneseq
    %v3279 = vshrl.u32 %v3278, 7
    %v3280 = vsub.s32 0, %v3279
    %v3281 = vrot.slane %v3276, %v3280
    %v3287 = vunpack.c.l.b16 %v3269
    %v3288 = vunpack.c.l.b16 %v3270
    %v3289 = vunpack.c.l.b16 %v3271
    %v3290 = vunpack.c.l.b16 %v3272
    %v3291 = vpack.c.b16 %v3288, %v3287
    %v3292 = vpack.c.b16 %v3290, %v3289
    %v3296 = vsel %vm562, %v3273, 0
    %v3299 = vsel %vm562, %v3274, 0
    %3301 = vmatprep.subr.bf16.mxu0 0
    %3302 = vmatpush1.bf16.msra.mxu0 %v3291
    %3303 = vmatprep.subr.bf16.mxu0 0
    %3304 = vmatpush1.bf16.msra.mxu0 %v3292
    %3305 = vmatprep.subr.bf16.mxu0 0
    %3306 = vmatpush1.bf16.msra.mxu0 0
    %3307 = vmatprep.subr.bf16.mxu0 0
    %3308 = vmatpush1.bf16.msra.mxu0 0
    %3309 = vmatprep.subr.bf16.mxu0 0
    %3310 = vmatpush1.bf16.msra.mxu0 0
    %3311 = vmatprep.subr.bf16.mxu0 0
    %3312 = vmatpush1.bf16.msra.mxu0 0
    %3313 = vmatprep.subr.bf16.mxu0 0
    %3314 = vmatpush1.bf16.msra.mxu0 0
    %3315 = vmatprep.subr.bf16.mxu0 0
    %3316 = vmatpush1.bf16.msra.mxu0 0
    %3317 = vmatprep.subr.bf16.mxu0 0
    %3318 = vmatpush1.bf16.msra.mxu0 0
    %3319 = vmatprep.subr.bf16.mxu0 0
    %3320 = vmatpush1.bf16.msra.mxu0 0
    %3321 = vmatprep.subr.bf16.mxu0 0
    %3322 = vmatpush1.bf16.msra.mxu0 0
    %3323 = vmatprep.subr.bf16.mxu0 0
    %3324 = vmatpush1.bf16.msra.mxu0 0
    %3325 = vmatprep.subr.bf16.mxu0 0
    %3326 = vmatpush1.bf16.msra.mxu0 0
    %3327 = vmatprep.subr.bf16.mxu0 0
    %3328 = vmatpush1.bf16.msra.mxu0 0
    %3329 = vmatprep.subr.bf16.mxu0 0
    %3330 = vmatpush1.bf16.msra.mxu0 0
    %3331 = vmatprep.subr.bf16.mxu0 0
    %3332 = vmatpush1.bf16.msra.mxu0 0
    %3333 = vmatprep.mubr.bf16.mxu0 0
    %3334 = vmatmul.mubr.bf16.gmra.mrb[0].mxu0 %v3296
    %v3335 = vpop.f32.mrb[0].mxu0
    %v3336 = vadd.f32 %v3281, %v3335
    %v3337 = vpop.f32.mrb[0].mxu0
    %v3338 = vpop.f32.mrb[0].mxu0
    %v3339 = vadd.f32 %v3281, %v3338
    %v3340 = vpop.f32.mrb[0].mxu0
    %3341 = vmatprep.mubr.bf16.mxu0 0
    %3342 = vmatmul.mubr.bf16.gmra.mrb[0].mxu0 %v3299
    %v3343 = vpop.f32.mrb[0].mxu0
    %v3344 = vadd.f32 %v3281, %v3343
    %v3345 = vpop.f32.mrb[0].mxu0
    %v3346 = vpop.f32.mrb[0].mxu0
    %v3347 = vadd.f32 %v3281, %v3346
    %v3348 = vpop.f32.mrb[0].mxu0
    %3349 = vdwg.mxu0
    %v3350 = vmul.f32 %v3336, %v3336
    %v3351 = vmul.f32 %v3339, %v3339
    %v3352 = vmul.f32 %v3344, %v3344
    %v3353 = vmul.f32 %v3347, %v3347
    %v3354 = vsel %vm562, %v3350, 0.0
    %3355 = vadd.xlane.f32.xlu0 %v3354
    %v3356 = vpop.xlane.xlu0 %3355
    %v3357 = vsel %vm562, %v3351, 0.0
    %3358 = vadd.xlane.f32.xlu0 %v3357
    %v3359 = vpop.xlane.xlu0 %3358
    %v3360 = vsel %vm562, %v3352, 0.0
    %3361 = vadd.xlane.f32.xlu0 %v3360
    %v3362 = vpop.xlane.xlu0 %3361
    %v3363 = vsel %vm562, %v3353, 0.0
    %3364 = vadd.xlane.f32.xlu0 %v3363
    %v3365 = vpop.xlane.xlu0 %3364
    %v3366 = vmax.f32 %v3356, 1e-24
    %v3367 = vmax.f32 %v3359, 1e-24
    %v3368 = vmax.f32 %v3362, 1e-24
    %v3369 = vmax.f32 %v3365, 1e-24
    %v3370 = vrsqrt.pop %v3366
    %v3371 = vrsqrt.pop %v3367
    %v3372 = vrsqrt.pop %v3368
    %v3373 = vrsqrt.pop %v3369
    %v3374 = vmul.f32 %v3336, %v3370
    %v3375 = vmul.f32 %v3339, %v3371
    %v3376 = vmul.f32 %v3344, %v3372
    %v3377 = vmul.f32 %v3347, %v3373
    %s3378 = sld [smem:[#allocation39 + $0x1]]
    %v3379 = vsub.f32 %v3374, %v2382
    %v3380 = vsub.f32 %v3375, %v2383
    %v3381 = vsub.f32 %v3376, %v2384
    %v3382 = vsub.f32 %v3377, %v2385
    %v3383 = vstv %s3378
    %v3384 = vmul.f32 %v3383, %v3379
    %v3385 = vmul.f32 %v3383, %v3380
    %v3386 = vmul.f32 %v3383, %v3381
    %v3387 = vmul.f32 %v3383, %v3382
    %v3388 = vadd.f32 %v2382, %v3384
    %v3389 = vadd.f32 %v2383, %v3385
    %v3390 = vadd.f32 %v2384, %v3386
    %v3391 = vadd.f32 %v2385, %v3387
    %v3392 = vmul.f32 %v3388, %v3388
    %v3393 = vmul.f32 %v3389, %v3389
    %v3394 = vmul.f32 %v3390, %v3390
    %v3395 = vmul.f32 %v3391, %v3391
    %v3396 = vsel %vm562, %v3392, 0.0
    %3397 = vadd.xlane.f32.xlu0 %v3396
    %v3398 = vpop.xlane.xlu0 %3397
    %v3399 = vsel %vm562, %v3393, 0.0
    %3400 = vadd.xlane.f32.xlu0 %v3399
    %v3401 = vpop.xlane.xlu0 %3400
    %v3402 = vsel %vm562, %v3394, 0.0
    %3403 = vadd.xlane.f32.xlu0 %v3402
    %v3404 = vpop.xlane.xlu0 %3403
    %v3405 = vsel %vm562, %v3395, 0.0
    %3406 = vadd.xlane.f32.xlu0 %v3405
    %v3407 = vpop.xlane.xlu0 %3406
    %v3408 = vmax.f32 %v3398, 1e-24
    %v3409 = vmax.f32 %v3401, 1e-24
    %v3410 = vmax.f32 %v3404, 1e-24
    %v3411 = vmax.f32 %v3407, 1e-24
    %v3412 = vrsqrt.pop %v3408
    %v3413 = vrsqrt.pop %v3409
    %v3414 = vrsqrt.pop %v3410
    %v3415 = vrsqrt.pop %v3411
    %v3416 = vmul.f32 %v3388, %v3412
    %v3417 = vmul.f32 %v3389, %v3413
    %v3418 = vmul.f32 %v3390, %v3414
    %v3419 = vmul.f32 %v3391, %v3415
    %s3420 = scalar_lea.vmem [#allocation33], 16
    %v3421 = vld [vmem:[%s3420] sm:$0xf]
    %v3422 = vld [vmem:[%s3420 + $0x4] sm:$0xf]
    %v3423 = vld [vmem:[%s3420 + $0x8] sm:$0xf]
    %v3424 = vld [vmem:[%s3420 + $0xc] sm:$0xf]
    %v3425 = vpack.c.bf16 %v3417, %v3416
    %v3426 = vpack.c.bf16 %v3419, %v3418
    %s3427 = scalar_lea.vmem [#allocation34], 1
    %v3428 = vld [vmem:[%s3427] sm:$0x1]
    %v3430 = vlaneseq
    %v3431 = vshrl.u32 %v3430, 7
    %v3432 = vsub.s32 0, %v3431
    %v3433 = vrot.slane %v3428, %v3432
    %v3439 = vunpack.c.l.b16 %v3421
    %v3440 = vunpack.c.l.b16 %v3422
    %v3441 = vunpack.c.l.b16 %v3423
    %v3442 = vunpack.c.l.b16 %v3424
    %v3443 = vpack.c.b16 %v3440, %v3439
    %v3444 = vpack.c.b16 %v3442, %v3441
    %v3448 = vsel %vm562, %v3425, 0
    %v3451 = vsel %vm562, %v3426, 0
    %3453 = vmatprep.subr.bf16.mxu0 0
    %3454 = vmatpush1.bf16.msra.mxu0 %v3443
    %3455 = vmatprep.subr.bf16.mxu0 0
    %3456 = vmatpush1.bf16.msra.mxu0 %v3444
    %3457 = vmatprep.subr.bf16.mxu0 0
    %3458 = vmatpush1.bf16.msra.mxu0 0
    %3459 = vmatprep.subr.bf16.mxu0 0
    %3460 = vmatpush1.bf16.msra.mxu0 0
    %3461 = vmatprep.subr.bf16.mxu0 0
    %3462 = vmatpush1.bf16.msra.mxu0 0
    %3463 = vmatprep.subr.bf16.mxu0 0
    %3464 = vmatpush1.bf16.msra.mxu0 0
    %3465 = vmatprep.subr.bf16.mxu0 0
    %3466 = vmatpush1.bf16.msra.mxu0 0
    %3467 = vmatprep.subr.bf16.mxu0 0
    %3468 = vmatpush1.bf16.msra.mxu0 0
    %3469 = vmatprep.subr.bf16.mxu0 0
    %3470 = vmatpush1.bf16.msra.mxu0 0
    %3471 = vmatprep.subr.bf16.mxu0 0
    %3472 = vmatpush1.bf16.msra.mxu0 0
    %3473 = vmatprep.subr.bf16.mxu0 0
    %3474 = vmatpush1.bf16.msra.mxu0 0
    %3475 = vmatprep.subr.bf16.mxu0 0
    %3476 = vmatpush1.bf16.msra.mxu0 0
    %3477 = vmatprep.subr.bf16.mxu0 0
    %3478 = vmatpush1.bf16.msra.mxu0 0
    %3479 = vmatprep.subr.bf16.mxu0 0
    %3480 = vmatpush1.bf16.msra.mxu0 0
    %3481 = vmatprep.subr.bf16.mxu0 0
    %3482 = vmatpush1.bf16.msra.mxu0 0
    %3483 = vmatprep.subr.bf16.mxu0 0
    %3484 = vmatpush1.bf16.msra.mxu0 0
    %3485 = vmatprep.mubr.bf16.mxu0 0
    %3486 = vmatmul.mubr.bf16.gmra.mrb[0].mxu0 %v3448
    %v3487 = vpop.f32.mrb[0].mxu0
    %v3488 = vadd.f32 %v3433, %v3487
    %v3489 = vpop.f32.mrb[0].mxu0
    %v3490 = vpop.f32.mrb[0].mxu0
    %v3491 = vadd.f32 %v3433, %v3490
    %v3492 = vpop.f32.mrb[0].mxu0
    %3493 = vmatprep.mubr.bf16.mxu0 0
    %3494 = vmatmul.mubr.bf16.gmra.mrb[0].mxu0 %v3451
    %v3495 = vpop.f32.mrb[0].mxu0
    %v3496 = vadd.f32 %v3433, %v3495
    %v3497 = vpop.f32.mrb[0].mxu0
    %v3498 = vpop.f32.mrb[0].mxu0
    %v3499 = vadd.f32 %v3433, %v3498
    %v3500 = vpop.f32.mrb[0].mxu0
    %3501 = vdwg.mxu0
    %v3502 = vmax.f32 %v3488, 0.0
    %v3503 = vmax.f32 %v3491, 0.0
    %v3504 = vmax.f32 %v3496, 0.0
    %v3505 = vmax.f32 %v3499, 0.0
    %s3506 = scalar_lea.vmem [#allocation36], 32
    %v3507 = vld [vmem:[%s3506] sm:$0xf]
    %v3508 = vld [vmem:[%s3506 + $0x4] sm:$0xf]
    %v3509 = vld [vmem:[%s3506 + $0x8] sm:$0xf]
    %v3510 = vld [vmem:[%s3506 + $0xc] sm:$0xf]
    %v3511 = vld [vmem:[%s3506 + $0x10] sm:$0xf]
    %v3512 = vld [vmem:[%s3506 + $0x14] sm:$0xf]
    %v3513 = vld [vmem:[%s3506 + $0x18] sm:$0xf]
    %v3514 = vld [vmem:[%s3506 + $0x1c] sm:$0xf]
    %v3515 = vpack.c.bf16 %v3503, %v3502
    %v3516 = vpack.c.bf16 %v3505, %v3504
    %s3517 = scalar_lea.vmem [#allocation37], 1
    %v3518 = vld [vmem:[%s3517] sm:$0x1]
    %v3520 = vlaneseq
    %v3521 = vshrl.u32 %v3520, 7
    %v3522 = vsub.s32 0, %v3521
    %v3523 = vrot.slane %v3518, %v3522
    %v3533 = vunpack.c.l.b16 %v3507
    %v3534 = vunpack.c.l.b16 %v3508
    %v3535 = vunpack.c.l.b16 %v3509
    %v3536 = vunpack.c.l.b16 %v3510
    %v3537 = vunpack.c.l.b16 %v3511
    %v3538 = vunpack.c.l.b16 %v3512
    %v3539 = vunpack.c.l.b16 %v3513
    %v3540 = vunpack.c.l.b16 %v3514
    %v3541 = vpack.c.b16 %v3534, %v3533
    %v3542 = vpack.c.b16 %v3536, %v3535
    %v3543 = vpack.c.b16 %v3538, %v3537
    %v3544 = vpack.c.b16 %v3540, %v3539
    %v3550 = vsel %vm2232, %v3515, 0
    %v3553 = vsel %vm2232, %v3516, 0
    %3555 = vmatprep.subr.bf16.mxu0 0
    %3556 = vmatpush1.bf16.msra.mxu0 %v3541
    %3557 = vmatprep.subr.bf16.mxu0 0
    %3558 = vmatpush1.bf16.msra.mxu0 %v3542
    %3559 = vmatprep.subr.bf16.mxu0 0
    %3560 = vmatpush1.bf16.msra.mxu0 %v3543
    %3561 = vmatprep.subr.bf16.mxu0 0
    %3562 = vmatpush1.bf16.msra.mxu0 %v3544
    %3563 = vmatprep.subr.bf16.mxu0 0
    %3564 = vmatpush1.bf16.msra.mxu0 0
    %3565 = vmatprep.subr.bf16.mxu0 0
    %3566 = vmatpush1.bf16.msra.mxu0 0
    %3567 = vmatprep.subr.bf16.mxu0 0
    %3568 = vmatpush1.bf16.msra.mxu0 0
    %3569 = vmatprep.subr.bf16.mxu0 0
    %3570 = vmatpush1.bf16.msra.mxu0 0
    %3571 = vmatprep.subr.bf16.mxu0 0
    %3572 = vmatpush1.bf16.msra.mxu0 0
    %3573 = vmatprep.subr.bf16.mxu0 0
    %3574 = vmatpush1.bf16.msra.mxu0 0
    %3575 = vmatprep.subr.bf16.mxu0 0
    %3576 = vmatpush1.bf16.msra.mxu0 0
    %3577 = vmatprep.subr.bf16.mxu0 0
    %3578 = vmatpush1.bf16.msra.mxu0 0
    %3579 = vmatprep.subr.bf16.mxu0 0
    %3580 = vmatpush1.bf16.msra.mxu0 0
    %3581 = vmatprep.subr.bf16.mxu0 0
    %3582 = vmatpush1.bf16.msra.mxu0 0
    %3583 = vmatprep.subr.bf16.mxu0 0
    %3584 = vmatpush1.bf16.msra.mxu0 0
    %3585 = vmatprep.subr.bf16.mxu0 0
    %3586 = vmatpush1.bf16.msra.mxu0 0
    %3587 = vmatprep.mubr.bf16.mxu0 0
    %3588 = vmatmul.mubr.bf16.gmra.mrb[0].mxu0 %v3550
    %v3589 = vpop.f32.mrb[0].mxu0
    %v3590 = vadd.f32 %v3523, %v3589
    %v3591 = vpop.f32.mrb[0].mxu0
    %v3592 = vpop.f32.mrb[0].mxu0
    %v3593 = vadd.f32 %v3523, %v3592
    %v3594 = vpop.f32.mrb[0].mxu0
    %3595 = vmatprep.mubr.bf16.mxu0 0
    %3596 = vmatmul.mubr.bf16.gmra.mrb[0].mxu0 %v3553
    %v3597 = vpop.f32.mrb[0].mxu0
    %v3598 = vadd.f32 %v3523, %v3597
    %v3599 = vpop.f32.mrb[0].mxu0
    %v3600 = vpop.f32.mrb[0].mxu0
    %v3601 = vadd.f32 %v3523, %v3600
    %v3602 = vpop.f32.mrb[0].mxu0
    %3603 = vdwg.mxu0
    %v3604 = vmul.f32 %v3590, %v3590
    %v3605 = vmul.f32 %v3593, %v3593
    %v3606 = vmul.f32 %v3598, %v3598
    %v3607 = vmul.f32 %v3601, %v3601
    %v3608 = vsel %vm562, %v3604, 0.0
    %3609 = vadd.xlane.f32.xlu0 %v3608
    %v3610 = vpop.xlane.xlu0 %3609
    %v3611 = vsel %vm562, %v3605, 0.0
    %3612 = vadd.xlane.f32.xlu0 %v3611
    %v3613 = vpop.xlane.xlu0 %3612
    %v3614 = vsel %vm562, %v3606, 0.0
    %3615 = vadd.xlane.f32.xlu0 %v3614
    %v3616 = vpop.xlane.xlu0 %3615
    %v3617 = vsel %vm562, %v3607, 0.0
    %3618 = vadd.xlane.f32.xlu0 %v3617
    %v3619 = vpop.xlane.xlu0 %3618
    %v3620 = vmax.f32 %v3610, 1e-24
    %v3621 = vmax.f32 %v3613, 1e-24
    %v3622 = vmax.f32 %v3616, 1e-24
    %v3623 = vmax.f32 %v3619, 1e-24
    %v3624 = vrsqrt.pop %v3620
    %v3625 = vrsqrt.pop %v3621
    %v3626 = vrsqrt.pop %v3622
    %v3627 = vrsqrt.pop %v3623
    %v3628 = vmul.f32 %v3590, %v3624
    %v3629 = vmul.f32 %v3593, %v3625
    %v3630 = vmul.f32 %v3598, %v3626
    %v3631 = vmul.f32 %v3601, %v3627
    %s3632 = sld [smem:[#allocation40 + $0x1]]
    %v3633 = vsub.f32 %v3628, %v3416
    %v3634 = vsub.f32 %v3629, %v3417
    %v3635 = vsub.f32 %v3630, %v3418
    %v3636 = vsub.f32 %v3631, %v3419
    %v3637 = vstv %s3632
    %v3638 = vmul.f32 %v3637, %v3633
    %v3639 = vmul.f32 %v3637, %v3634
    %v3640 = vmul.f32 %v3637, %v3635
    %v3641 = vmul.f32 %v3637, %v3636
    %v3642 = vadd.f32 %v3416, %v3638
    %v3643 = vadd.f32 %v3417, %v3639
    %v3644 = vadd.f32 %v3418, %v3640
    %v3645 = vadd.f32 %v3419, %v3641
    %v3646 = vmul.f32 %v3642, %v3642
    %v3647 = vmul.f32 %v3643, %v3643
    %v3648 = vmul.f32 %v3644, %v3644
    %v3649 = vmul.f32 %v3645, %v3645
    %v3650 = vsel %vm562, %v3646, 0.0
    %3651 = vadd.xlane.f32.xlu0 %v3650
    %v3652 = vpop.xlane.xlu0 %3651
    %v3653 = vsel %vm562, %v3647, 0.0
    %3654 = vadd.xlane.f32.xlu0 %v3653
    %v3655 = vpop.xlane.xlu0 %3654
    %v3656 = vsel %vm562, %v3648, 0.0
    %3657 = vadd.xlane.f32.xlu0 %v3656
    %v3658 = vpop.xlane.xlu0 %3657
    %v3659 = vsel %vm562, %v3649, 0.0
    %3660 = vadd.xlane.f32.xlu0 %v3659
    %v3661 = vpop.xlane.xlu0 %3660
    %v3662 = vmax.f32 %v3652, 1e-24
    %v3663 = vmax.f32 %v3655, 1e-24
    %v3664 = vmax.f32 %v3658, 1e-24
    %v3665 = vmax.f32 %v3661, 1e-24
    %v3666 = vrsqrt.pop %v3662
    %v3667 = vrsqrt.pop %v3663
    %v3668 = vrsqrt.pop %v3664
    %v3669 = vrsqrt.pop %v3665
    %v3670 = vmul.f32 %v3642, %v3666
    %v3671 = vmul.f32 %v3643, %v3667
    %v3672 = vmul.f32 %v3644, %v3668
    %v3673 = vmul.f32 %v3645, %v3669
    %v3674 = vsel %vm562, %v3670, 0.0
    %v3675 = vsel %vm562, %v3671, 0.0
    %v3676 = vadd.f32 %v3674, %v3675
    %v3677 = vsel %vm562, %v3672, 0.0
    %v3678 = vadd.f32 %v3676, %v3677
    %v3679 = vsel %vm562, %v3673, 0.0
    %v3680 = vadd.f32 %v3678, %v3679
    %v3681 = vmul.f32 %v3680, 0.25
    %v3682 = vld [vmem:[#allocation45] sm:$0xf]
    %v3683 = vld [vmem:[#allocation45 + $0x4] sm:$0xf]
    %v3684 = vld [vmem:[#allocation45 + $0x8] sm:$0xf]
    %v3685 = vld [vmem:[#allocation45 + $0xc] sm:$0xf]
    %v3686 = vpack.c.bf16 %v3681, %v3681
    %v3687 = vld [vmem:[#allocation46] sm:$0x1]
    %v3689 = vlaneseq
    %v3690 = vshrl.u32 %v3689, 7
    %v3691 = vsub.s32 0, %v3690
    %v3692 = vrot.slane %v3687, %v3691
    %v3698 = vunpack.c.l.b16 %v3682
    %v3699 = vunpack.c.l.b16 %v3683
    %v3700 = vunpack.c.l.b16 %v3684
    %v3701 = vunpack.c.l.b16 %v3685
    %v3702 = vpack.c.b16 %v3699, %v3698
    %v3703 = vpack.c.b16 %v3701, %v3700
    %v3707 = vsel %vm562, %v3686, 0
    %3709 = vmatprep.subr.bf16.mxu0 0
    %3710 = vmatpush1.bf16.msra.mxu0 %v3702
    %3711 = vmatprep.subr.bf16.mxu0 0
    %3712 = vmatpush1.bf16.msra.mxu0 %v3703
    %3713 = vmatprep.subr.bf16.mxu0 0
    %3714 = vmatpush1.bf16.msra.mxu0 0
    %3715 = vmatprep.subr.bf16.mxu0 0
    %3716 = vmatpush1.bf16.msra.mxu0 0
    %3717 = vmatprep.subr.bf16.mxu0 0
    %3718 = vmatpush1.bf16.msra.mxu0 0
    %3719 = vmatprep.subr.bf16.mxu0 0
    %3720 = vmatpush1.bf16.msra.mxu0 0
    %3721 = vmatprep.subr.bf16.mxu0 0
    %3722 = vmatpush1.bf16.msra.mxu0 0
    %3723 = vmatprep.subr.bf16.mxu0 0
    %3724 = vmatpush1.bf16.msra.mxu0 0
    %3725 = vmatprep.subr.bf16.mxu0 0
    %3726 = vmatpush1.bf16.msra.mxu0 0
    %3727 = vmatprep.subr.bf16.mxu0 0
    %3728 = vmatpush1.bf16.msra.mxu0 0
    %3729 = vmatprep.subr.bf16.mxu0 0
    %3730 = vmatpush1.bf16.msra.mxu0 0
    %3731 = vmatprep.subr.bf16.mxu0 0
    %3732 = vmatpush1.bf16.msra.mxu0 0
    %3733 = vmatprep.subr.bf16.mxu0 0
    %3734 = vmatpush1.bf16.msra.mxu0 0
    %3735 = vmatprep.subr.bf16.mxu0 0
    %3736 = vmatpush1.bf16.msra.mxu0 0
    %3737 = vmatprep.subr.bf16.mxu0 0
    %3738 = vmatpush1.bf16.msra.mxu0 0
    %3739 = vmatprep.subr.bf16.mxu0 0
    %3740 = vmatpush1.bf16.msra.mxu0 0
    %3741 = vmatprep.mubr.bf16.mxu0 0
    %3742 = vmatmul.mubr.bf16.gmra.mrb[0].mxu0 %v3707
    %v3743 = vpop.f32.mrb[0].mxu0
    %v3744 = vadd.f32 %v3692, %v3743
    %v3745 = vpop.f32.mrb[0].mxu0
    %v3746 = vpop.f32.mrb[0].mxu0
    %v3747 = vpop.f32.mrb[0].mxu0
    %3748 = vdwg.mxu0
    %v3749 = vmax.f32 %v3744, 0.0
    %v3750 = vld [vmem:[#allocation42] sm:$0xf]
    %v3751 = vld [vmem:[#allocation42 + $0x4] sm:$0xf]
    %v3752 = vld [vmem:[#allocation42 + $0x8] sm:$0xf]
    %v3753 = vld [vmem:[#allocation42 + $0xc] sm:$0xf]
    %v3754 = vld [vmem:[#allocation48] sm:$0xf]
    %v3755 = vld [vmem:[#allocation48 + $0x4] sm:$0xf]
    %v3756 = vld [vmem:[#allocation48 + $0x8] sm:$0xf]
    %v3757 = vld [vmem:[#allocation48 + $0xc] sm:$0xf]
    %v3758 = vpack.c.bf16 %v3749, %v3749
    %v3763 = vunpack.c.l.b16 %v3754
    %v3764 = vunpack.c.l.b16 %v3755
    %v3765 = vunpack.c.l.b16 %v3756
    %v3766 = vunpack.c.l.b16 %v3757
    %v3767 = vpack.c.b16 %v3764, %v3763
    %v3768 = vpack.c.b16 %v3766, %v3765
    %v3772 = vsel %vm562, %v3758, 0
    %3774 = vmatprep.subr.bf16.mxu0 0
    %3775 = vmatpush1.bf16.msra.mxu0 %v3767
    %3776 = vmatprep.subr.bf16.mxu0 0
    %3777 = vmatpush1.bf16.msra.mxu0 %v3768
    %3778 = vmatprep.subr.bf16.mxu0 0
    %3779 = vmatpush1.bf16.msra.mxu0 0
    %3780 = vmatprep.subr.bf16.mxu0 0
    %3781 = vmatpush1.bf16.msra.mxu0 0
    %3782 = vmatprep.subr.bf16.mxu0 0
    %3783 = vmatpush1.bf16.msra.mxu0 0
    %3784 = vmatprep.subr.bf16.mxu0 0
    %3785 = vmatpush1.bf16.msra.mxu0 0
    %3786 = vmatprep.subr.bf16.mxu0 0
    %3787 = vmatpush1.bf16.msra.mxu0 0
    %3788 = vmatprep.subr.bf16.mxu0 0
    %3789 = vmatpush1.bf16.msra.mxu0 0
    %3790 = vmatprep.subr.bf16.mxu0 0
    %3791 = vmatpush1.bf16.msra.mxu0 0
    %3792 = vmatprep.subr.bf16.mxu0 0
    %3793 = vmatpush1.bf16.msra.mxu0 0
    %3794 = vmatprep.subr.bf16.mxu0 0
    %3795 = vmatpush1.bf16.msra.mxu0 0
    %3796 = vmatprep.subr.bf16.mxu0 0
    %3797 = vmatpush1.bf16.msra.mxu0 0
    %3798 = vmatprep.subr.bf16.mxu0 0
    %3799 = vmatpush1.bf16.msra.mxu0 0
    %3800 = vmatprep.subr.bf16.mxu0 0
    %3801 = vmatpush1.bf16.msra.mxu0 0
    %3802 = vmatprep.subr.bf16.mxu0 0
    %3803 = vmatpush1.bf16.msra.mxu0 0
    %3804 = vmatprep.subr.bf16.mxu0 0
    %3805 = vmatpush1.bf16.msra.mxu0 0
    %3806 = vmatprep.mubr.bf16.mxu0 0
    %3807 = vmatmul.mubr.bf16.gmra.mrb[0].mxu0 %v3772
    %v3808 = vpop.f32.mrb[0].mxu0
    %v3809 = vadd.f32 0.0, %v3808
    %v3810 = vpop.f32.mrb[0].mxu0
    %v3811 = vpop.f32.mrb[0].mxu0
    %v3812 = vpop.f32.mrb[0].mxu0
    %3813 = vdwg.mxu0
    %v3818 = vunpack.c.l.b16 %v3750
    %v3819 = vunpack.c.l.b16 %v3751
    %v3820 = vunpack.c.l.b16 %v3752
    %v3821 = vunpack.c.l.b16 %v3753
    %v3822 = vpack.c.b16 %v3819, %v3818
    %v3823 = vpack.c.b16 %v3821, %v3820
    %3826 = vmatprep.subr.bf16.mxu0 0
    %3827 = vmatpush1.bf16.msra.mxu0 %v3822
    %3828 = vmatprep.subr.bf16.mxu0 0
    %3829 = vmatpush1.bf16.msra.mxu0 %v3823
    %3830 = vmatprep.subr.bf16.mxu0 0
    %3831 = vmatpush1.bf16.msra.mxu0 0
    %3832 = vmatprep.subr.bf16.mxu0 0
    %3833 = vmatpush1.bf16.msra.mxu0 0
    %3834 = vmatprep.subr.bf16.mxu0 0
    %3835 = vmatpush1.bf16.msra.mxu0 0
    %3836 = vmatprep.subr.bf16.mxu0 0
    %3837 = vmatpush1.bf16.msra.mxu0 0
    %3838 = vmatprep.subr.bf16.mxu0 0
    %3839 = vmatpush1.bf16.msra.mxu0 0
    %3840 = vmatprep.subr.bf16.mxu0 0
    %3841 = vmatpush1.bf16.msra.mxu0 0
    %3842 = vmatprep.subr.bf16.mxu0 0
    %3843 = vmatpush1.bf16.msra.mxu0 0
    %3844 = vmatprep.subr.bf16.mxu0 0
    %3845 = vmatpush1.bf16.msra.mxu0 0
    %3846 = vmatprep.subr.bf16.mxu0 0
    %3847 = vmatpush1.bf16.msra.mxu0 0
    %3848 = vmatprep.subr.bf16.mxu0 0
    %3849 = vmatpush1.bf16.msra.mxu0 0
    %3850 = vmatprep.subr.bf16.mxu0 0
    %3851 = vmatpush1.bf16.msra.mxu0 0
    %3852 = vmatprep.subr.bf16.mxu0 0
    %3853 = vmatpush1.bf16.msra.mxu0 0
    %3854 = vmatprep.subr.bf16.mxu0 0
    %3855 = vmatpush1.bf16.msra.mxu0 0
    %3856 = vmatprep.subr.bf16.mxu0 0
    %3857 = vmatpush1.bf16.msra.mxu0 0
    %3858 = vmatprep.mubr.bf16.mxu0 0
    %3859 = vmatmul.mubr.bf16.gmra.mrb[0].mxu0 %v3707
    %v3860 = vpop.f32.mrb[0].mxu0
    %v3861 = vadd.f32 %v3809, %v3860
    %v3862 = vpop.f32.mrb[0].mxu0
    %v3863 = vpop.f32.mrb[0].mxu0
    %v3864 = vpop.f32.mrb[0].mxu0
    %3865 = vdwg.mxu0
    %v3866 = vld [vmem:[#allocation43] sm:$0x1]
    %v3868 = vlaneseq
    %v3869 = vshrl.u32 %v3868, 7
    %v3870 = vsub.s32 0, %v3869
    %v3871 = vrot.slane %v3866, %v3870
    %v3873 = vadd.f32 %v3861, %v3871
    %3874 = vst [vmem:[#allocation49] sm:$0xff] %v3873
    // Predicated region
    $region234: #{tpu_custom_call.1} parent=1 // pred_check
      _
    $region235: #{tpu_custom_call.1} parent=1 // pred_check_branch
      %3876 = sbr.rel (0) target = $region237
    $region236: #{tpu_custom_call.1} parent=1 // pred_region
      %s3878 = ssub.s32 128, 128
      %3879 = vsyncadd [#allocation5], %s3878
      %s3881 = sshll.u32 [#allocation49], 4
      %s3882 = int_to_ptr.vmem [resolvable:$true] %s3881
      %3884 = dma.vmem_to_hbm [thread:$0]  %s3882, 128, %s59, [#allocation5]
    $region237: #{tpu_custom_call.1} parent=1 // pred_fallthru
      _
    // Predicated region
    $region238: #{tpu_custom_call.1} parent=1 // pred_check
      _
    $region239: #{tpu_custom_call.1} parent=1 // pred_check_branch
      %3886 = sbr.rel (0) target = $region241
    $region240: #{tpu_custom_call.1} parent=1 // pred_region
      %3887 = dma.done [#allocation5], 128
    $region241: #{tpu_custom_call.1} parent=1 // pred_fallthru
      _
    %3888 = vsyncpa [#allocation4], 1
    %3889 = vsyncpa [#allocation8], 1
    %3890 = vsyncpa [#allocation11], 1
    %3891 = vsyncpa [#allocation14], 1
    %3892 = vsyncpa [#allocation17], 1
    %3893 = vsyncpa [#allocation20], 1
    %3894 = vsyncpa [#allocation23], 1
    %3895 = vsyncpa [#allocation26], 1
    %3896 = vsyncpa [#allocation29], 1
    %3897 = vsyncpa [#allocation32], 1
    %3898 = vsyncpa [#allocation35], 1
    %3899 = vsyncpa [#allocation38], 1
    %3900 = vsyncpa [#allocation44], 1
    %3901 = vsyncpa [#allocation47], 1
    %3902 = vsyncpa [#allocation5], 1
    %3903 = vsyncpa [#allocation6], 1
    %3904 = vsyncpa [#allocation41], 1

// kernel: tpu_custom_call.1
$region0: #{tpu_custom_call.1}
  #allocation0 [shape = 'u32[]', space=smem, size = 0x4, offset = 0x4, fixed_abs, tag = 'smem constant byte address 0x4 - core index']
  #allocation1 [shape = 'u32[144,128]{1,0:T(1,128)}', space=vmem, size = 0x12000, scoped, tag = 'internal scratch']
  #allocation2 [shape = 'f32[32,32]{1,0:T(8,128)}', space=vmem, size = 0x4000, scoped, tag = 'scratch operand']
  %s0 = inlined_call_operand.smem [shape: u32[30], index: -1, kind: input, shape index: {}]
  %s1 = sld [smem:[%s0]]
  %s2 = scalar_lea.smem %s0, 1
  %s3 = sld [smem:[%s2]]
  %s4 = scalar_lea.smem %s0, 2
  %s5 = sld [smem:[%s4]]
  %s6 = scalar_lea.smem %s0, 3
  %s7 = sld [smem:[%s6]]
  %s8 = scalar_lea.smem %s0, 4
  %s9 = sld [smem:[%s8]]
  %s10 = scalar_lea.smem %s0, 5
  %s11 = sld [smem:[%s10]]
  %s12 = scalar_lea.smem %s0, 6
  %s13 = sld [smem:[%s12]]
  %s14 = scalar_lea.smem %s0, 7
  %s15 = sld [smem:[%s14]]
  %s16 = scalar_lea.smem %s0, 8
  %s17 = sld [smem:[%s16]]
  %s18 = scalar_lea.smem %s0, 9
  %s19 = sld [smem:[%s18]]
  %s20 = scalar_lea.smem %s0, 10
  %s21 = sld [smem:[%s20]]
  %s22 = scalar_lea.smem %s0, 11
  %s23 = sld [smem:[%s22]]
  %s24 = scalar_lea.smem %s0, 12
  %s25 = sld [smem:[%s24]]
  %s26 = scalar_lea.smem %s0, 13
  %s27 = sld [smem:[%s26]]
  %s28 = scalar_lea.smem %s0, 14
  %s29 = sld [smem:[%s28]]
  %s30 = scalar_lea.smem %s0, 15
  %s31 = sld [smem:[%s30]]
  %s32 = scalar_lea.smem %s0, 16
  %s33 = sld [smem:[%s32]]
  %s34 = scalar_lea.smem %s0, 17
  %s35 = sld [smem:[%s34]]
  %s36 = scalar_lea.smem %s0, 18
  %s37 = sld [smem:[%s36]]
  %s38 = scalar_lea.smem %s0, 19
  %s39 = sld [smem:[%s38]]
  %s40 = scalar_lea.smem %s0, 20
  %s41 = sld [smem:[%s40]]
  %s42 = scalar_lea.smem %s0, 21
  %s43 = sld [smem:[%s42]]
  %s44 = scalar_lea.smem %s0, 22
  %s45 = sld [smem:[%s44]]
  %s46 = scalar_lea.smem %s0, 23
  %s47 = sld [smem:[%s46]]
  %s48 = scalar_lea.smem %s0, 24
  %s49 = sld [smem:[%s48]]
  %s50 = scalar_lea.smem %s0, 25
  %s51 = sld [smem:[%s50]]
  %s52 = scalar_lea.smem %s0, 26
  %s53 = sld [smem:[%s52]]
  %s54 = scalar_lea.smem %s0, 27
  %s55 = sld [smem:[%s54]]
  %s56 = scalar_lea.smem %s0, 28
  %s57 = sld [smem:[%s56]]
  %s58 = scalar_lea.smem %s0, 29
  %s59 = sld [smem:[%s58]]
  %s60 = sld [smem:[#allocation0]]
  $region242: #{tpu_custom_call.1} parent=0
    _
  %s62 = ssub.s32 1, %s60
  %s63 = scalar_select 0, %s62, %s60
  $region1: #{tpu_custom_call.1} parent=0
    #allocation3 [shape = 'u8[4096]{0}', space=vmem, size = 0x1000, scoped, tag = 'input window, operand 0, single buffered']
    #allocation4 [shape = 's32[1]{0}', space=sflag, size = 0x4, scoped, tag = 'scoped memory for tpu_custom_call.1']
    #allocation5 [shape = 's32[1]{0}', space=sflag, size = 0x4, scoped, tag = 'scoped memory for tpu_custom_call.1']
    #allocation6 [shape = 's32[1]{0}', space=sflag, size = 0x4, scoped, tag = 'scoped memory for tpu_custom_call.1']
    #allocation7 [shape = 'u8[4096]{0}', space=vmem, size = 0x1000, scoped, tag = 'input window, operand 1, single buffered']
    #allocation8 [shape = 's32[1]{0}', space=sflag, size = 0x4, scoped, tag = 'scoped memory for tpu_custom_call.1']
    #allocation9 [shape = 'u8[512]{0}', space=vmem, size = 0x400, scoped, tag = 'input window, operand 2, single buffered']
    #allocation10 [shape = 'u8[32768]{0}', space=vmem, size = 0x8000, scoped, tag = 'input window, operand 3, single buffered']
    #allocation11 [shape = 's32[1]{0}', space=sflag, size = 0x4, scoped, tag = 'scoped memory for tpu_custom_call.1']
    #allocation12 [shape = 'u8[2048]{0}', space=vmem, size = 0x800, scoped, tag = 'input window, operand 4, single buffered']
    #allocation13 [shape = 'u8[2048]{0}', space=vmem, size = 0x800, scoped, tag = 'input window, operand 5, single buffered']
    #allocation14 [shape = 's32[1]{0}', space=sflag, size = 0x4, scoped, tag = 'scoped memory for tpu_custom_call.1']
    #allocation15 [shape = 'u8[2048]{0}', space=vmem, size = 0x800, scoped, tag = 'input window, operand 6, single buffered']
    #allocation16 [shape = 'u8[2048]{0}', space=vmem, size = 0x800, scoped, tag = 'input window, operand 7, single buffered']
    #allocation17 [shape = 's32[1]{0}', space=sflag, size = 0x4, scoped, tag = 'scoped memory for tpu_custom_call.1']
    #allocation18 [shape = 'u8[16384]{0}', space=vmem, size = 0x4000, scoped, tag = 'input window, operand 8, single buffered']
    #allocation19 [shape = 'u8[1024]{0}', space=vmem, size = 0x400, scoped, tag = 'input window, operand 9, single buffered']
    #allocation20 [shape = 's32[1]{0}', space=sflag, size = 0x4, scoped, tag = 'scoped memory for tpu_custom_call.1']
    #allocation21 [shape = 'u8[16384]{0}', space=vmem, size = 0x4000, scoped, tag = 'input window, operand 10, single buffered']
    #allocation22 [shape = 'u8[1024]{0}', space=vmem, size = 0x400, scoped, tag = 'input window, operand 11, single buffered']
    #allocation23 [shape = 's32[1]{0}', space=sflag, size = 0x4, scoped, tag = 'scoped memory for tpu_custom_call.1']
    #allocation24 [shape = 'u8[16384]{0}', space=vmem, size = 0x4000, scoped, tag = 'input window, operand 12, single buffered']
    #allocation25 [shape = 'u8[1024]{0}', space=vmem, size = 0x400, scoped, tag = 'input window, operand 13, single buffered']
    #allocation26 [shape = 's32[1]{0}', space=sflag, size = 0x4, scoped, tag = 'scoped memory for tpu_custom_call.1']
    #allocation27 [shape = 'u8[8192]{0}', space=vmem, size = 0x2000, scoped, tag = 'input window, operand 14, single buffered']
    #allocation28 [shape = 'u8[1024]{0}', space=vmem, size = 0x400, scoped, tag = 'input window, operand 15, single buffered']
    #allocation29 [shape = 's32[1]{0}', space=sflag, size = 0x4, scoped, tag = 'scoped memory for tpu_custom_call.1']
    #allocation30 [shape = 'u8[16384]{0}', space=vmem, size = 0x4000, scoped, tag = 'input window, operand 16, single buffered']
    #allocation31 [shape = 'u8[1024]{0}', space=vmem, size = 0x400, scoped, tag = 'input window, operand 17, single buffered']
    #allocation32 [shape = 's32[1]{0}', space=sflag, size = 0x4, scoped, tag = 'scoped memory for tpu_custom_call.1']
    #allocation33 [shape = 'u8[16384]{0}', space=vmem, size = 0x4000, scoped, tag = 'input window, operand 18, single buffered']
    #allocation34 [shape = 'u8[1024]{0}', space=vmem, size = 0x400, scoped, tag = 'input window, operand 19, single buffered']
    #allocation35 [shape = 's32[1]{0}', space=sflag, size = 0x4, scoped, tag = 'scoped memory for tpu_custom_call.1']
    #allocation36 [shape = 'u8[32768]{0}', space=vmem, size = 0x8000, scoped, tag = 'input window, operand 20, single buffered']
    #allocation37 [shape = 'u8[1024]{0}', space=vmem, size = 0x400, scoped, tag = 'input window, operand 21, single buffered']
    #allocation38 [shape = 's32[1]{0}', space=sflag, size = 0x4, scoped, tag = 'scoped memory for tpu_custom_call.1']
    #allocation39 [shape = 'u8[512]{0}', space=smem, size = 0x200, scoped, tag = 'input window, operand 22, single buffered']
    #allocation40 [shape = 'u8[512]{0}', space=smem, size = 0x200, scoped, tag = 'input window, operand 23, single buffered']
    #allocation41 [shape = 's32[1]{0}', space=sflag, size = 0x4, scoped, tag = 'scoped memory for tpu_custom_call.1']
    #allocation42 [shape = 'u8[8192]{0}', space=vmem, size = 0x2000, scoped, tag = 'input window, operand 24, single buffered']
    #allocation43 [shape = 'u8[512]{0}', space=vmem, size = 0x400, scoped, tag = 'input window, operand 25, single buffered']
    #allocation44 [shape = 's32[1]{0}', space=sflag, size = 0x4, scoped, tag = 'scoped memory for tpu_custom_call.1']
    #allocation45 [shape = 'u8[8192]{0}', space=vmem, size = 0x2000, scoped, tag = 'input window, operand 26, single buffered']
    #allocation46 [shape = 'u8[512]{0}', space=vmem, size = 0x400, scoped, tag = 'input window, operand 27, single buffered']
    #allocation47 [shape = 's32[1]{0}', space=sflag, size = 0x4, scoped, tag = 'scoped memory for tpu_custom_call.1']
    #allocation48 [shape = 'u8[8192]{0}', space=vmem, size = 0x2000, scoped, tag = 'input window, operand 28, single buffered']
    #allocation49 [shape = 'u8[4096]{0}', space=vmem, size = 0x1000, scoped, tag = 'output window, operand 0, single buffered']
    %64 = vsyncpa [#allocation4], 0
    %65 = vsyncpa [#allocation8], 0
    %66 = vsyncpa [#allocation11], 0
    %67 = vsyncpa [#allocation14], 0
    %68 = vsyncpa [#allocation17], 0
    %69 = vsyncpa [#allocation20], 0
    %70 = vsyncpa [#allocation23], 0
    %71 = vsyncpa [#allocation26], 0
    %72 = vsyncpa [#allocation29], 0
    %73 = vsyncpa [#allocation32], 0
    %74 = vsyncpa [#allocation35], 0
    %75 = vsyncpa [#allocation38], 0
    %76 = vsyncpa [#allocation6], 0
    %77 = vsyncpa [#allocation41], 0
    %78 = vsyncpa [#allocation44], 0
    %79 = vsyncpa [#allocation47], 0
    %80 = vsyncpa [#allocation5], 0
    // Predicated region
    $region2: #{tpu_custom_call.1} parent=1 // pred_check
      _
    $region3: #{tpu_custom_call.1} parent=1 // pred_check_branch
      %82 = sbr.rel (0) target = $region5
    $region4: #{tpu_custom_call.1} parent=1 // pred_region
      %s84 = ssub.s32 128, 128
      %85 = vsyncadd [#allocation4], %s84
      %s87 = sshll.u32 [#allocation3], 4
      %s88 = int_to_ptr.vmem [resolvable:$true] %s87
      %90 = dma.hbm_to_vmem [thread:$0]  %s1, 128, %s88, [#allocation4]
    $region5: #{tpu_custom_call.1} parent=1 // pred_fallthru
      _
    // Predicated region
    $region6: #{tpu_custom_call.1} parent=1 // pred_check
      _
    $region7: #{tpu_custom_call.1} parent=1 // pred_check_branch
      %92 = sbr.rel (0) target = $region9
    $region8: #{tpu_custom_call.1} parent=1 // pred_region
      %s94 = ssub.s32 128, 128
      %95 = vsyncadd [#allocation8], %s94
      %s96 = sshll.u32 [#allocation7], 4
      %s97 = int_to_ptr.vmem [resolvable:$true] %s96
      %102 = dma.hbm_to_vmem [thread:$0]  %s3, 128, %s97, [#allocation8], 64, 64, 4
    $region9: #{tpu_custom_call.1} parent=1 // pred_fallthru
      _
    // Predicated region
    $region10: #{tpu_custom_call.1} parent=1 // pred_check
      _
    $region11: #{tpu_custom_call.1} parent=1 // pred_check_branch
      %104 = sbr.rel (0) target = $region13
    $region12: #{tpu_custom_call.1} parent=1 // pred_region
      %s106 = ssub.s32 16, 16
      %107 = vsyncadd [#allocation8], %s106
      %s109 = sshll.u32 [#allocation9], 4
      %s110 = int_to_ptr.vmem [resolvable:$true] %s109
      %112 = dma.hbm_to_vmem [thread:$0]  %s5, 16, %s110, [#allocation8]
    $region13: #{tpu_custom_call.1} parent=1 // pred_fallthru
      _
    // Predicated region
    $region14: #{tpu_custom_call.1} parent=1 // pred_check
      _
    $region15: #{tpu_custom_call.1} parent=1 // pred_check_branch
      %114 = sbr.rel (0) target = $region17
    $region16: #{tpu_custom_call.1} parent=1 // pred_region
      %s116 = ssub.s32 1024, 1024
      %117 = vsyncadd [#allocation11], %s116
      %s118 = sshll.u32 [#allocation10], 4
      %s119 = int_to_ptr.vmem [resolvable:$true] %s118
      %124 = dma.hbm_to_vmem [thread:$0]  %s7, 1024, %s119, [#allocation11], 64, 64, 4
    $region17: #{tpu_custom_call.1} parent=1 // pred_fallthru
      _
    // Predicated region
    $region18: #{tpu_custom_call.1} parent=1 // pred_check
      _
    $region19: #{tpu_custom_call.1} parent=1 // pred_check_branch
      %126 = sbr.rel (0) target = $region21
    $region20: #{tpu_custom_call.1} parent=1 // pred_region
      %s128 = ssub.s32 64, 64
      %129 = vsyncadd [#allocation11], %s128
      %s130 = sshll.u32 [#allocation12], 4
      %s131 = int_to_ptr.vmem [resolvable:$true] %s130
      %136 = dma.hbm_to_vmem [thread:$0]  %s9, 64, %s131, [#allocation11], 16, 16, 1
    $region21: #{tpu_custom_call.1} parent=1 // pred_fallthru
      _
    // Predicated region
    $region22: #{tpu_custom_call.1} parent=1 // pred_check
      _
    $region23: #{tpu_custom_call.1} parent=1 // pred_check_branch
      %138 = sbr.rel (0) target = $region25
    $region24: #{tpu_custom_call.1} parent=1 // pred_region
      %s140 = ssub.s32 64, 64
      %141 = vsyncadd [#allocation14], %s140
      %s142 = sshll.u32 [#allocation13], 4
      %s143 = int_to_ptr.vmem [resolvable:$true] %s142
      %148 = dma.hbm_to_vmem [thread:$0]  %s11, 64, %s143, [#allocation14], 16, 16, 1
    $region25: #{tpu_custom_call.1} parent=1 // pred_fallthru
      _
    // Predicated region
    $region26: #{tpu_custom_call.1} parent=1 // pred_check
      _
    $region27: #{tpu_custom_call.1} parent=1 // pred_check_branch
      %150 = sbr.rel (0) target = $region29
    $region28: #{tpu_custom_call.1} parent=1 // pred_region
      %s152 = ssub.s32 64, 64
      %153 = vsyncadd [#allocation14], %s152
      %s154 = sshll.u32 [#allocation15], 4
      %s155 = int_to_ptr.vmem [resolvable:$true] %s154
      %160 = dma.hbm_to_vmem [thread:$0]  %s13, 64, %s155, [#allocation14], 16, 16, 1
    $region29: #{tpu_custom_call.1} parent=1 // pred_fallthru
      _
    // Predicated region
    $region30: #{tpu_custom_call.1} parent=1 // pred_check
      _
    $region31: #{tpu_custom_call.1} parent=1 // pred_check_branch
      %162 = sbr.rel (0) target = $region33
    $region32: #{tpu_custom_call.1} parent=1 // pred_region
      %s164 = ssub.s32 64, 64
      %165 = vsyncadd [#allocation17], %s164
      %s166 = sshll.u32 [#allocation16], 4
      %s167 = int_to_ptr.vmem [resolvable:$true] %s166
      %172 = dma.hbm_to_vmem [thread:$0]  %s15, 64, %s167, [#allocation17], 16, 16, 1
    $region33: #{tpu_custom_call.1} parent=1 // pred_fallthru
      _
    // Predicated region
    $region34: #{tpu_custom_call.1} parent=1 // pred_check
      _
    $region35: #{tpu_custom_call.1} parent=1 // pred_check_branch
      %174 = sbr.rel (0) target = $region37
    $region36: #{tpu_custom_call.1} parent=1 // pred_region
      %s176 = ssub.s32 512, 512
      %177 = vsyncadd [#allocation17], %s176
      %s178 = sshll.u32 [#allocation18], 4
      %s179 = int_to_ptr.vmem [resolvable:$true] %s178
      %184 = dma.hbm_to_vmem [thread:$0]  %s17, 512, %s179, [#allocation17], 64, 64, 4
    $region37: #{tpu_custom_call.1} parent=1 // pred_fallthru
      _
    // Predicated region
    $region38: #{tpu_custom_call.1} parent=1 // pred_check
      _
    $region39: #{tpu_custom_call.1} parent=1 // pred_check_branch
      %186 = sbr.rel (0) target = $region41
    $region40: #{tpu_custom_call.1} parent=1 // pred_region
      %s188 = ssub.s32 32, 32
      %189 = vsyncadd [#allocation20], %s188
      %s190 = sshll.u32 [#allocation19], 4
      %s191 = int_to_ptr.vmem [resolvable:$true] %s190
      %196 = dma.hbm_to_vmem [thread:$0]  %s19, 32, %s191, [#allocation20], 16, 16, 1
    $region41: #{tpu_custom_call.1} parent=1 // pred_fallthru
      _
    // Predicated region
    $region42: #{tpu_custom_call.1} parent=1 // pred_check
      _
    $region43: #{tpu_custom_call.1} parent=1 // pred_check_branch
      %198 = sbr.rel (0) target = $region45
    $region44: #{tpu_custom_call.1} parent=1 // pred_region
      %s200 = ssub.s32 512, 512
      %201 = vsyncadd [#allocation20], %s200
      %s202 = sshll.u32 [#allocation21], 4
      %s203 = int_to_ptr.vmem [resolvable:$true] %s202
      %208 = dma.hbm_to_vmem [thread:$0]  %s21, 512, %s203, [#allocation20], 64, 64, 4
    $region45: #{tpu_custom_call.1} parent=1 // pred_fallthru
      _
    // Predicated region
    $region46: #{tpu_custom_call.1} parent=1 // pred_check
      _
    $region47: #{tpu_custom_call.1} parent=1 // pred_check_branch
      %210 = sbr.rel (0) target = $region49
    $region48: #{tpu_custom_call.1} parent=1 // pred_region
      %s212 = ssub.s32 32, 32
      %213 = vsyncadd [#allocation23], %s212
      %s214 = sshll.u32 [#allocation22], 4
      %s215 = int_to_ptr.vmem [resolvable:$true] %s214
      %220 = dma.hbm_to_vmem [thread:$0]  %s23, 32, %s215, [#allocation23], 16, 16, 1
    $region49: #{tpu_custom_call.1} parent=1 // pred_fallthru
      _
    // Predicated region
    $region50: #{tpu_custom_call.1} parent=1 // pred_check
      _
    $region51: #{tpu_custom_call.1} parent=1 // pred_check_branch
      %222 = sbr.rel (0) target = $region53
    $region52: #{tpu_custom_call.1} parent=1 // pred_region
      %s224 = ssub.s32 512, 512
      %225 = vsyncadd [#allocation23], %s224
      %s226 = sshll.u32 [#allocation24], 4
      %s227 = int_to_ptr.vmem [resolvable:$true] %s226
      %232 = dma.hbm_to_vmem [thread:$0]  %s25, 512, %s227, [#allocation23], 64, 64, 4
    $region53: #{tpu_custom_call.1} parent=1 // pred_fallthru
      _
    // Predicated region
    $region54: #{tpu_custom_call.1} parent=1 // pred_check
      _
    $region55: #{tpu_custom_call.1} parent=1 // pred_check_branch
      %234 = sbr.rel (0) target = $region57
    $region56: #{tpu_custom_call.1} parent=1 // pred_region
      %s236 = ssub.s32 32, 32
      %237 = vsyncadd [#allocation26], %s236
      %s238 = sshll.u32 [#allocation25], 4
      %s239 = int_to_ptr.vmem [resolvable:$true] %s238
      %244 = dma.hbm_to_vmem [thread:$0]  %s27, 32, %s239, [#allocation26], 16, 16, 1
    $region57: #{tpu_custom_call.1} parent=1 // pred_fallthru
      _
    // Predicated region
    $region58: #{tpu_custom_call.1} parent=1 // pred_check
      _
    $region59: #{tpu_custom_call.1} parent=1 // pred_check_branch
      %246 = sbr.rel (0) target = $region61
    $region60: #{tpu_custom_call.1} parent=1 // pred_region
      %s248 = ssub.s32 256, 256
      %249 = vsyncadd [#allocation26], %s248
      %s250 = sshll.u32 [#allocation27], 4
      %s251 = int_to_ptr.vmem [resolvable:$true] %s250
      %256 = dma.hbm_to_vmem [thread:$0]  %s29, 256, %s251, [#allocation26], 64, 64, 4
    $region61: #{tpu_custom_call.1} parent=1 // pred_fallthru
      _
    // Predicated region
    $region62: #{tpu_custom_call.1} parent=1 // pred_check
      _
    $region63: #{tpu_custom_call.1} parent=1 // pred_check_branch
      %258 = sbr.rel (0) target = $region65
    $region64: #{tpu_custom_call.1} parent=1 // pred_region
      %s260 = ssub.s32 32, 32
      %261 = vsyncadd [#allocation29], %s260
      %s263 = sshll.u32 [#allocation28], 4
      %s264 = int_to_ptr.vmem [resolvable:$true] %s263
      %266 = dma.hbm_to_vmem [thread:$0]  %s31, 32, %s264, [#allocation29]
    $region65: #{tpu_custom_call.1} parent=1 // pred_fallthru
      _
    // Predicated region
    $region66: #{tpu_custom_call.1} parent=1 // pred_check
      _
    $region67: #{tpu_custom_call.1} parent=1 // pred_check_branch
      %268 = sbr.rel (0) target = $region69
    $region68: #{tpu_custom_call.1} parent=1 // pred_region
      %s270 = ssub.s32 512, 512
      %271 = vsyncadd [#allocation29], %s270
      %s272 = sshll.u32 [#allocation30], 4
      %s273 = int_to_ptr.vmem [resolvable:$true] %s272
      %278 = dma.hbm_to_vmem [thread:$0]  %s33, 512, %s273, [#allocation29], 64, 64, 4
    $region69: #{tpu_custom_call.1} parent=1 // pred_fallthru
      _
    // Predicated region
    $region70: #{tpu_custom_call.1} parent=1 // pred_check
      _
    $region71: #{tpu_custom_call.1} parent=1 // pred_check_branch
      %280 = sbr.rel (0) target = $region73
    $region72: #{tpu_custom_call.1} parent=1 // pred_region
      %s282 = ssub.s32 32, 32
      %283 = vsyncadd [#allocation32], %s282
      %s284 = sshll.u32 [#allocation31], 4
      %s285 = int_to_ptr.vmem [resolvable:$true] %s284
      %290 = dma.hbm_to_vmem [thread:$0]  %s35, 32, %s285, [#allocation32], 16, 16, 1
    $region73: #{tpu_custom_call.1} parent=1 // pred_fallthru
      _
    // Predicated region
    $region74: #{tpu_custom_call.1} parent=1 // pred_check
      _
    $region75: #{tpu_custom_call.1} parent=1 // pred_check_branch
      %292 = sbr.rel (0) target = $region77
    $region76: #{tpu_custom_call.1} parent=1 // pred_region
      %s294 = ssub.s32 512, 512
      %295 = vsyncadd [#allocation32], %s294
      %s296 = sshll.u32 [#allocation33], 4
      %s297 = int_to_ptr.vmem [resolvable:$true] %s296
      %302 = dma.hbm_to_vmem [thread:$0]  %s37, 512, %s297, [#allocation32], 64, 64, 4
    $region77: #{tpu_custom_call.1} parent=1 // pred_fallthru
      _
    // Predicated region
    $region78: #{tpu_custom_call.1} parent=1 // pred_check
      _
    $region79: #{tpu_custom_call.1} parent=1 // pred_check_branch
      %304 = sbr.rel (0) target = $region81
    $region80: #{tpu_custom_call.1} parent=1 // pred_region
      %s306 = ssub.s32 32, 32
      %307 = vsyncadd [#allocation35], %s306
      %s308 = sshll.u32 [#allocation34], 4
      %s309 = int_to_ptr.vmem [resolvable:$true] %s308
      %314 = dma.hbm_to_vmem [thread:$0]  %s39, 32, %s309, [#allocation35], 16, 16, 1
    $region81: #{tpu_custom_call.1} parent=1 // pred_fallthru
      _
    // Predicated region
    $region82: #{tpu_custom_call.1} parent=1 // pred_check
      _
    $region83: #{tpu_custom_call.1} parent=1 // pred_check_branch
      %316 = sbr.rel (0) target = $region85
    $region84: #{tpu_custom_call.1} parent=1 // pred_region
      %s318 = ssub.s32 1024, 1024
      %319 = vsyncadd [#allocation35], %s318
      %s320 = sshll.u32 [#allocation36], 4
      %s321 = int_to_ptr.vmem [resolvable:$true] %s320
      %326 = dma.hbm_to_vmem [thread:$0]  %s41, 1024, %s321, [#allocation35], 64, 64, 4
    $region85: #{tpu_custom_call.1} parent=1 // pred_fallthru
      _
    // Predicated region
    $region86: #{tpu_custom_call.1} parent=1 // pred_check
      _
    $region87: #{tpu_custom_call.1} parent=1 // pred_check_branch
      %328 = sbr.rel (0) target = $region89
    $region88: #{tpu_custom_call.1} parent=1 // pred_region
      %s330 = ssub.s32 32, 32
      %331 = vsyncadd [#allocation38], %s330
      %s332 = sshll.u32 [#allocation37], 4
      %s333 = int_to_ptr.vmem [resolvable:$true] %s332
      %338 = dma.hbm_to_vmem [thread:$0]  %s43, 32, %s333, [#allocation38], 16, 16, 1
    $region89: #{tpu_custom_call.1} parent=1 // pred_fallthru
      _
    // Predicated region
    $region90: #{tpu_custom_call.1} parent=1 // pred_check
      _
    $region91: #{tpu_custom_call.1} parent=1 // pred_check_branch
      %340 = sbr.rel (0) target = $region93
    $region92: #{tpu_custom_call.1} parent=1 // pred_region
      %s342 = ssub.s32 16, 16
      %343 = vsyncadd [#allocation6], %s342
      %346 = dma.hbm_to_smem %s45, 16, [#allocation39], [#allocation6]
    $region93: #{tpu_custom_call.1} parent=1 // pred_fallthru
      _
    // Predicated region
    $region94: #{tpu_custom_call.1} parent=1 // pred_check
      _
    $region95: #{tpu_custom_call.1} parent=1 // pred_check_branch
      %348 = sbr.rel (0) target = $region97
    $region96: #{tpu_custom_call.1} parent=1 // pred_region
      %s350 = ssub.s32 16, 16
      %351 = vsyncadd [#allocation41], %s350
      %354 = dma.hbm_to_smem %s47, 16, [#allocation40], [#allocation41]
    $region97: #{tpu_custom_call.1} parent=1 // pred_fallthru
      _
    // Predicated region
    $region98: #{tpu_custom_call.1} parent=1 // pred_check
      _
    $region99: #{tpu_custom_call.1} parent=1 // pred_check_branch
      %356 = sbr.rel (0) target = $region101
    $region100: #{tpu_custom_call.1} parent=1 // pred_region
      %s358 = ssub.s32 256, 256
      %359 = vsyncadd [#allocation38], %s358
      %s360 = sshll.u32 [#allocation42], 4
      %s361 = int_to_ptr.vmem [resolvable:$true] %s360
      %366 = dma.hbm_to_vmem [thread:$0]  %s49, 256, %s361, [#allocation38], 64, 64, 4
    $region101: #{tpu_custom_call.1} parent=1 // pred_fallthru
      _
    // Predicated region
    $region102: #{tpu_custom_call.1} parent=1 // pred_check
      _
    $region103: #{tpu_custom_call.1} parent=1 // pred_check_branch
      %368 = sbr.rel (0) target = $region105
    $region104: #{tpu_custom_call.1} parent=1 // pred_region
      %s370 = ssub.s32 16, 16
      %371 = vsyncadd [#allocation44], %s370
      %s373 = sshll.u32 [#allocation43], 4
      %s374 = int_to_ptr.vmem [resolvable:$true] %s373
      %376 = dma.hbm_to_vmem [thread:$0]  %s51, 16, %s374, [#allocation44]
    $region105: #{tpu_custom_call.1} parent=1 // pred_fallthru
      _
    // Predicated region
    $region106: #{tpu_custom_call.1} parent=1 // pred_check
      _
    $region107: #{tpu_custom_call.1} parent=1 // pred_check_branch
      %378 = sbr.rel (0) target = $region109
    $region108: #{tpu_custom_call.1} parent=1 // pred_region
      %s380 = ssub.s32 256, 256
      %381 = vsyncadd [#allocation44], %s380
      %s382 = sshll.u32 [#allocation45], 4
      %s383 = int_to_ptr.vmem [resolvable:$true] %s382
      %388 = dma.hbm_to_vmem [thread:$0]  %s53, 256, %s383, [#allocation44], 64, 64, 4
    $region109: #{tpu_custom_call.1} parent=1 // pred_fallthru
      _
    // Predicated region
    $region110: #{tpu_custom_call.1} parent=1 // pred_check
      _
    $region111: #{tpu_custom_call.1} parent=1 // pred_check_branch
      %390 = sbr.rel (0) target = $region113
    $region112: #{tpu_custom_call.1} parent=1 // pred_region
      %s392 = ssub.s32 16, 16
      %393 = vsyncadd [#allocation47], %s392
      %s395 = sshll.u32 [#allocation46], 4
      %s396 = int_to_ptr.vmem [resolvable:$true] %s395
      %398 = dma.hbm_to_vmem [thread:$0]  %s55, 16, %s396, [#allocation47]
    $region113: #{tpu_custom_call.1} parent=1 // pred_fallthru
      _
    // Predicated region
    $region114: #{tpu_custom_call.1} parent=1 // pred_check
      _
    $region115: #{tpu_custom_call.1} parent=1 // pred_check_branch
      %400 = sbr.rel (0) target = $region117
    $region116: #{tpu_custom_call.1} parent=1 // pred_region
      %s402 = ssub.s32 256, 256
      %403 = vsyncadd [#allocation47], %s402
      %s404 = sshll.u32 [#allocation48], 4
      %s405 = int_to_ptr.vmem [resolvable:$true] %s404
      %410 = dma.hbm_to_vmem [thread:$0]  %s57, 256, %s405, [#allocation47], 64, 64, 4
    $region117: #{tpu_custom_call.1} parent=1 // pred_fallthru
      _
    // Predicated region
    $region118: #{tpu_custom_call.1} parent=1 // pred_check
      _
    $region119: #{tpu_custom_call.1} parent=1 // pred_check_branch
      %412 = sbr.rel (0) target = $region121
    $region120: #{tpu_custom_call.1} parent=1 // pred_region
      %413 = dma.done [#allocation4], 128
    $region121: #{tpu_custom_call.1} parent=1 // pred_fallthru
      _
    // Predicated region
    $region122: #{tpu_custom_call.1} parent=1 // pred_check
      _
    $region123: #{tpu_custom_call.1} parent=1 // pred_check_branch
      %415 = sbr.rel (0) target = $region125
    $region124: #{tpu_custom_call.1} parent=1 // pred_region
      %416 = dma.done [#allocation8], 128
    $region125: #{tpu_custom_call.1} parent=1 // pred_fallthru
      _
    // Predicated region
    $region126: #{tpu_custom_call.1} parent=1 // pred_check
      _
    $region127: #{tpu_custom_call.1} parent=1 // pred_check_branch
      %418 = sbr.rel (0) target = $region129
    $region128: #{tpu_custom_call.1} parent=1 // pred_region
      %419 = dma.done [#allocation8], 16
    $region129: #{tpu_custom_call.1} parent=1 // pred_fallthru
      _
    // Predicated region
    $region130: #{tpu_custom_call.1} parent=1 // pred_check
      _
    $region131: #{tpu_custom_call.1} parent=1 // pred_check_branch
      %421 = sbr.rel (0) target = $region133
    $region132: #{tpu_custom_call.1} parent=1 // pred_region
      %422 = dma.done [#allocation11], 1024
    $region133: #{tpu_custom_call.1} parent=1 // pred_fallthru
      _
    // Predicated region
    $region134: #{tpu_custom_call.1} parent=1 // pred_check
      _
    $region135: #{tpu_custom_call.1} parent=1 // pred_check_branch
      %424 = sbr.rel (0) target = $region137
    $region136: #{tpu_custom_call.1} parent=1 // pred_region
      %425 = dma.done [#allocation11], 64
    $region137: #{tpu_custom_call.1} parent=1 // pred_fallthru
      _
    // Predicated region
    $region138: #{tpu_custom_call.1} parent=1 // pred_check
      _
    $region139: #{tpu_custom_call.1} parent=1 // pred_check_branch
      %427 = sbr.rel (0) target = $region141
    $region140: #{tpu_custom_call.1} parent=1 // pred_region
      %428 = dma.done [#allocation14], 64
    $region141: #{tpu_custom_call.1} parent=1 // pred_fallthru
      _
    // Predicated region
    $region142: #{tpu_custom_call.1} parent=1 // pred_check
      _
    $region143: #{tpu_custom_call.1} parent=1 // pred_check_branch
      %430 = sbr.rel (0) target = $region145
    $region144: #{tpu_custom_call.1} parent=1 // pred_region
      %431 = dma.done [#allocation14], 64
    $region145: #{tpu_custom_call.1} parent=1 // pred_fallthru
      _
    // Predicated region
    $region146: #{tpu_custom_call.1} parent=1 // pred_check
      _
    $region147: #{tpu_custom_call.1} parent=1 // pred_check_branch
      %433 = sbr.rel (0) target = $region149
    $region148: #{tpu_custom_call.1} parent=1 // pred_region
      %434 = dma.done [#allocation17], 64
    $region149: #{tpu_custom_call.1} parent=1 // pred_fallthru
      _
    // Predicated region
    $region150: #{tpu_custom_call.1} parent=1 // pred_check
      _
    $region151: #{tpu_custom_call.1} parent=1 // pred_check_branch
      %436 = sbr.rel (0) target = $region153
    $region152: #{tpu_custom_call.1} parent=1 // pred_region
      %437 = dma.done [#allocation17], 512
    $region153: #{tpu_custom_call.1} parent=1 // pred_fallthru
      _
    // Predicated region
    $region154: #{tpu_custom_call.1} parent=1 // pred_check
      _
    $region155: #{tpu_custom_call.1} parent=1 // pred_check_branch
      %439 = sbr.rel (0) target = $region157
    $region156: #{tpu_custom_call.1} parent=1 // pred_region
      %440 = dma.done [#allocation20], 32
    $region157: #{tpu_custom_call.1} parent=1 // pred_fallthru
      _
    // Predicated region
    $region158: #{tpu_custom_call.1} parent=1 // pred_check
      _
    $region159: #{tpu_custom_call.1} parent=1 // pred_check_branch
      %442 = sbr.rel (0) target = $region161
    $region160: #{tpu_custom_call.1} parent=1 // pred_region
      %443 = dma.done [#allocation20], 512
    $region161: #{tpu_custom_call.1} parent=1 // pred_fallthru
      _
    // Predicated region
    $region162: #{tpu_custom_call.1} parent=1 // pred_check
      _
    $region163: #{tpu_custom_call.1} parent=1 // pred_check_branch
      %445 = sbr.rel (0) target = $region165
    $region164: #{tpu_custom_call.1} parent=1 // pred_region
      %446 = dma.done [#allocation23], 32
    $region165: #{tpu_custom_call.1} parent=1 // pred_fallthru
      _
    // Predicated region
    $region166: #{tpu_custom_call.1} parent=1 // pred_check
      _
    $region167: #{tpu_custom_call.1} parent=1 // pred_check_branch
      %448 = sbr.rel (0) target = $region169
    $region168: #{tpu_custom_call.1} parent=1 // pred_region
      %449 = dma.done [#allocation23], 512
    $region169: #{tpu_custom_call.1} parent=1 // pred_fallthru
      _
    // Predicated region
    $region170: #{tpu_custom_call.1} parent=1 // pred_check
      _
    $region171: #{tpu_custom_call.1} parent=1 // pred_check_branch
      %451 = sbr.rel (0) target = $region173
    $region172: #{tpu_custom_call.1} parent=1 // pred_region
      %452 = dma.done [#allocation26], 32
    $region173: #{tpu_custom_call.1} parent=1 // pred_fallthru
      _
    // Predicated region
    $region174: #{tpu_custom_call.1} parent=1 // pred_check
      _
    $region175: #{tpu_custom_call.1} parent=1 // pred_check_branch
      %454 = sbr.rel (0) target = $region177
    $region176: #{tpu_custom_call.1} parent=1 // pred_region
      %455 = dma.done [#allocation26], 256
    $region177: #{tpu_custom_call.1} parent=1 // pred_fallthru
      _
    // Predicated region
    $region178: #{tpu_custom_call.1} parent=1 // pred_check
      _
    $region179: #{tpu_custom_call.1} parent=1 // pred_check_branch
      %457 = sbr.rel (0) target = $region181
    $region180: #{tpu_custom_call.1} parent=1 // pred_region
      %458 = dma.done [#allocation29], 32
    $region181: #{tpu_custom_call.1} parent=1 // pred_fallthru
      _
    // Predicated region
    $region182: #{tpu_custom_call.1} parent=1 // pred_check
      _
    $region183: #{tpu_custom_call.1} parent=1 // pred_check_branch
      %460 = sbr.rel (0) target = $region185
    $region184: #{tpu_custom_call.1} parent=1 // pred_region
      %461 = dma.done [#allocation29], 512
    $region185: #{tpu_custom_call.1} parent=1 // pred_fallthru
      _
    // Predicated region
    $region186: #{tpu_custom_call.1} parent=1 // pred_check
      _
    $region187: #{tpu_custom_call.1} parent=1 // pred_check_branch
      %463 = sbr.rel (0) target = $region189
    $region188: #{tpu_custom_call.1} parent=1 // pred_region
      %464 = dma.done [#allocation32], 32
    $region189: #{tpu_custom_call.1} parent=1 // pred_fallthru
      _
    // Predicated region
    $region190: #{tpu_custom_call.1} parent=1 // pred_check
      _
    $region191: #{tpu_custom_call.1} parent=1 // pred_check_branch
      %466 = sbr.rel (0) target = $region193
    $region192: #{tpu_custom_call.1} parent=1 // pred_region
      %467 = dma.done [#allocation32], 512
    $region193: #{tpu_custom_call.1} parent=1 // pred_fallthru
      _
    // Predicated region
    $region194: #{tpu_custom_call.1} parent=1 // pred_check
      _
    $region195: #{tpu_custom_call.1} parent=1 // pred_check_branch
      %469 = sbr.rel (0) target = $region197
    $region196: #{tpu_custom_call.1} parent=1 // pred_region
      %470 = dma.done [#allocation35], 32
    $region197: #{tpu_custom_call.1} parent=1 // pred_fallthru
      _
    // Predicated region
    $region198: #{tpu_custom_call.1} parent=1 // pred_check
      _
    $region199: #{tpu_custom_call.1} parent=1 // pred_check_branch
      %472 = sbr.rel (0) target = $region201
    $region200: #{tpu_custom_call.1} parent=1 // pred_region
      %473 = dma.done [#allocation35], 1024
    $region201: #{tpu_custom_call.1} parent=1 // pred_fallthru
      _
    // Predicated region
    $region202: #{tpu_custom_call.1} parent=1 // pred_check
      _
    $region203: #{tpu_custom_call.1} parent=1 // pred_check_branch
      %475 = sbr.rel (0) target = $region205
    $region204: #{tpu_custom_call.1} parent=1 // pred_region
      %476 = dma.done [#allocation38], 32
    $region205: #{tpu_custom_call.1} parent=1 // pred_fallthru
      _
    // Predicated region
    $region206: #{tpu_custom_call.1} parent=1 // pred_check
      _
    $region207: #{tpu_custom_call.1} parent=1 // pred_check_branch
      %478 = sbr.rel (0) target = $region209
    $region208: #{tpu_custom_call.1} parent=1 // pred_region
      %479 = dma.done [#allocation6], 16
    $region209: #{tpu_custom_call.1} parent=1 // pred_fallthru
      _
    // Predicated region
    $region210: #{tpu_custom_call.1} parent=1 // pred_check
      _
    $region211: #{tpu_custom_call.1} parent=1 // pred_check_branch
      %481 = sbr.rel (0) target = $region213
    $region212: #{tpu_custom_call.1} parent=1 // pred_region
      %482 = dma.done [#allocation41], 16
    $region213: #{tpu_custom_call.1} parent=1 // pred_fallthru
      _
    // Predicated region
    $region214: #{tpu_custom_call.1} parent=1 // pred_check
      _
    $region215: #{tpu_custom_call.1} parent=1 // pred_check_branch
      %484 = sbr.rel (0) target = $region217
    $region216: #{tpu_custom_call.1} parent=1 // pred_region
      %485 = dma.done [#allocation38], 256
    $region217: #{tpu_custom_call.1} parent=1 // pred_fallthru
      _
    // Predicated region
    $region218: #{tpu_custom_call.1} parent=1 // pred_check
      _
    $region219: #{tpu_custom_call.1} parent=1 // pred_check_branch
      %487 = sbr.rel (0) target = $region221
    $region220: #{tpu_custom_call.1} parent=1 // pred_region
      %488 = dma.done [#allocation44], 16
    $region221: #{tpu_custom_call.1} parent=1 // pred_fallthru
      _
    // Predicated region
    $region222: #{tpu_custom_call.1} parent=1 // pred_check
      _
    $region223: #{tpu_custom_call.1} parent=1 // pred_check_branch
      %490 = sbr.rel (0) target = $region225
    $region224: #{tpu_custom_call.1} parent=1 // pred_region
      %491 = dma.done [#allocation44], 256
    $region225: #{tpu_custom_call.1} parent=1 // pred_fallthru
      _
    // Predicated region
    $region226: #{tpu_custom_call.1} parent=1 // pred_check
      _
    $region227: #{tpu_custom_call.1} parent=1 // pred_check_branch
      %493 = sbr.rel (0) target = $region229
    $region228: #{tpu_custom_call.1} parent=1 // pred_region
      %494 = dma.done [#allocation47], 16
    $region229: #{tpu_custom_call.1} parent=1 // pred_fallthru
      _
    // Predicated region
    $region230: #{tpu_custom_call.1} parent=1 // pred_check
      _
    $region231: #{tpu_custom_call.1} parent=1 // pred_check_branch
      %496 = sbr.rel (0) target = $region233
    $region232: #{tpu_custom_call.1} parent=1 // pred_region
      %497 = dma.done [#allocation47], 256
    $region233: #{tpu_custom_call.1} parent=1 // pred_fallthru
      _
    %498 = sfence
    %v500 = vld [vmem:[#allocation3] sm:$0xff]
    %v501 = vld [vmem:[#allocation7] sm:$0xf]
    %v502 = vld [vmem:[#allocation7 + $0x4] sm:$0xf]
    %v503 = vpack.c.bf16 %v500, %v500
    %v504 = vld [vmem:[#allocation9] sm:$0x1]
    %v506 = vlaneseq
    %v507 = vshrl.u32 %v506, 7
    %v508 = vsub.s32 0, %v507
    %v509 = vrot.slane %v504, %v508
    %v513 = vunpack.c.l.b16 %v501
    %v514 = vunpack.c.l.b16 %v502
    %v515 = vpack.c.b16 %v514, %v513
    %vm517 = vcmask 130048
    %v519 = vsel %vm517, %v503, 0
    %521 = vmatprep.subr.bf16.mxu0 0
    %522 = vmatpush1.bf16.msra.mxu0 %v515
    %523 = vmatprep.subr.bf16.mxu0 0
    %524 = vmatpush1.bf16.msra.mxu0 0
    %525 = vmatprep.subr.bf16.mxu0 0
    %526 = vmatpush1.bf16.msra.mxu0 0
    %527 = vmatprep.subr.bf16.mxu0 0
    %528 = vmatpush1.bf16.msra.mxu0 0
    %529 = vmatprep.subr.bf16.mxu0 0
    %530 = vmatpush1.bf16.msra.mxu0 0
    %531 = vmatprep.subr.bf16.mxu0 0
    %532 = vmatpush1.bf16.msra.mxu0 0
    %533 = vmatprep.subr.bf16.mxu0 0
    %534 = vmatpush1.bf16.msra.mxu0 0
    %535 = vmatprep.subr.bf16.mxu0 0
    %536 = vmatpush1.bf16.msra.mxu0 0
    %537 = vmatprep.subr.bf16.mxu0 0
    %538 = vmatpush1.bf16.msra.mxu0 0
    %539 = vmatprep.subr.bf16.mxu0 0
    %540 = vmatpush1.bf16.msra.mxu0 0
    %541 = vmatprep.subr.bf16.mxu0 0
    %542 = vmatpush1.bf16.msra.mxu0 0
    %543 = vmatprep.subr.bf16.mxu0 0
    %544 = vmatpush1.bf16.msra.mxu0 0
    %545 = vmatprep.subr.bf16.mxu0 0
    %546 = vmatpush1.bf16.msra.mxu0 0
    %547 = vmatprep.subr.bf16.mxu0 0
    %548 = vmatpush1.bf16.msra.mxu0 0
    %549 = vmatprep.subr.bf16.mxu0 0
    %550 = vmatpush1.bf16.msra.mxu0 0
    %551 = vmatprep.subr.bf16.mxu0 0
    %552 = vmatpush1.bf16.msra.mxu0 0
    %553 = vmatprep.mubr.bf16.mxu0 0
    %554 = vmatmul.mubr.bf16.gmra.mrb[0].mxu0 %v519
    %v555 = vpop.f32.mrb[0].mxu0
    %v556 = vadd.f32 %v509, %v555
    %v557 = vpop.f32.mrb[0].mxu0
    %v558 = vpop.f32.mrb[0].mxu0
    %v559 = vpop.f32.mrb[0].mxu0
    %560 = vdwg.mxu0
    %v561 = vmul.f32 %v556, %v556
    %vm562 = vcmask 261120
    %v563 = vsel %vm562, %v561, 0.0
    %564 = vadd.xlane.f32.xlu0 %v563
    %v565 = vpop.xlane.xlu0 %564
    %v566 = vmax.f32 %v565, 1e-24
    %v567 = vrsqrt.pop %v566
    %v568 = vmul.f32 %v556, %v567
    %v569 = vld [vmem:[#allocation10] sm:$0xf]
    %v570 = vld [vmem:[#allocation10 + $0x4] sm:$0xf]
    %v571 = vld [vmem:[#allocation10 + $0x8] sm:$0xf]
    %v572 = vld [vmem:[#allocation10 + $0xc] sm:$0xf]
    %v573 = vpack.c.bf16 %v568, %v568
    %v574 = vld [vmem:[#allocation12] sm:$0x1]
    %v576 = vlaneseq
    %v577 = vshrl.u32 %v576, 7
    %v578 = vsub.s32 0, %v577
    %v579 = vrot.slane %v574, %v578
    %v585 = vunpack.c.l.b16 %v569
    %v586 = vunpack.c.l.b16 %v570
    %v587 = vunpack.c.l.b16 %v571
    %v588 = vunpack.c.l.b16 %v572
    %v589 = vpack.c.b16 %v586, %v585
    %v590 = vpack.c.b16 %v588, %v587
    %v594 = vsel %vm562, %v573, 0
    %596 = vmatprep.subr.bf16.mxu0 0
    %597 = vmatpush1.bf16.msra.mxu0 %v589
    %598 = vmatprep.subr.bf16.mxu0 0
    %599 = vmatpush1.bf16.msra.mxu0 %v590
    %600 = vmatprep.subr.bf16.mxu0 0
    %601 = vmatpush1.bf16.msra.mxu0 0
    %602 = vmatprep.subr.bf16.mxu0 0
    %603 = vmatpush1.bf16.msra.mxu0 0
    %604 = vmatprep.subr.bf16.mxu0 0
    %605 = vmatpush1.bf16.msra.mxu0 0
    %606 = vmatprep.subr.bf16.mxu0 0
    %607 = vmatpush1.bf16.msra.mxu0 0
    %608 = vmatprep.subr.bf16.mxu0 0
    %609 = vmatpush1.bf16.msra.mxu0 0
    %610 = vmatprep.subr.bf16.mxu0 0
    %611 = vmatpush1.bf16.msra.mxu0 0
    %612 = vmatprep.subr.bf16.mxu0 0
    %613 = vmatpush1.bf16.msra.mxu0 0
    %614 = vmatprep.subr.bf16.mxu0 0
    %615 = vmatpush1.bf16.msra.mxu0 0
    %616 = vmatprep.subr.bf16.mxu0 0
    %617 = vmatpush1.bf16.msra.mxu0 0
    %618 = vmatprep.subr.bf16.mxu0 0
    %619 = vmatpush1.bf16.msra.mxu0 0
    %620 = vmatprep.subr.bf16.mxu0 0
    %621 = vmatpush1.bf16.msra.mxu0 0
    %622 = vmatprep.subr.bf16.mxu0 0
    %623 = vmatpush1.bf16.msra.mxu0 0
    %624 = vmatprep.subr.bf16.mxu0 0
    %625 = vmatpush1.bf16.msra.mxu0 0
    %626 = vmatprep.subr.bf16.mxu0 0
    %627 = vmatpush1.bf16.msra.mxu0 0
    %628 = vmatprep.mubr.bf16.mxu0 0
    %629 = vmatmul.mubr.bf16.gmra.mrb[0].mxu0 %v594
    %v630 = vpop.f32.mrb[0].mxu0
    %v631 = vadd.f32 %v579, %v630
    %v632 = vpop.f32.mrb[0].mxu0
    %v633 = vpop.f32.mrb[0].mxu0
    %v634 = vpop.f32.mrb[0].mxu0
    %635 = vdwg.mxu0
    %636 = vst.msk [vmem:[#allocation2] sm:$0xff] %vm562, %v631
    %v637 = vsel %vm562, %v631, 0.0
    %638 = vadd.xlane.f32.xlu0 %v637
    %v639 = vpop.xlane.xlu0 %638
    %v640 = vadd.f32 %v639, 0.0
    %v641 = vmul.f32 %v631, %v631
    %v642 = vsel %vm562, %v641, 0.0
    %643 = vadd.xlane.f32.xlu0 %v642
    %v644 = vpop.xlane.xlu0 %643
    %v645 = vadd.f32 %v644, 0.0
    %s646 = scalar_lea.vmem [#allocation10], 16
    %v647 = vld [vmem:[%s646] sm:$0xf]
    %v648 = vld [vmem:[%s646 + $0x4] sm:$0xf]
    %v649 = vld [vmem:[%s646 + $0x8] sm:$0xf]
    %v650 = vld [vmem:[%s646 + $0xc] sm:$0xf]
    %s651 = scalar_lea.vmem [#allocation12], 1
    %v652 = vld [vmem:[%s651] sm:$0x1]
    %v654 = vlaneseq
    %v655 = vshrl.u32 %v654, 7
    %v656 = vsub.s32 0, %v655
    %v657 = vrot.slane %v652, %v656
    %v663 = vunpack.c.l.b16 %v647
    %v664 = vunpack.c.l.b16 %v648
    %v665 = vunpack.c.l.b16 %v649
    %v666 = vunpack.c.l.b16 %v650
    %v667 = vpack.c.b16 %v664, %v663
    %v668 = vpack.c.b16 %v666, %v665
    %671 = vmatprep.subr.bf16.mxu0 0
    %672 = vmatpush1.bf16.msra.mxu0 %v667
    %673 = vmatprep.subr.bf16.mxu0 0
    %674 = vmatpush1.bf16.msra.mxu0 %v668
    %675 = vmatprep.subr.bf16.mxu0 0
    %676 = vmatpush1.bf16.msra.mxu0 0
    %677 = vmatprep.subr.bf16.mxu0 0
    %678 = vmatpush1.bf16.msra.mxu0 0
    %679 = vmatprep.subr.bf16.mxu0 0
    %680 = vmatpush1.bf16.msra.mxu0 0
    %681 = vmatprep.subr.bf16.mxu0 0
    %682 = vmatpush1.bf16.msra.mxu0 0
    %683 = vmatprep.subr.bf16.mxu0 0
    %684 = vmatpush1.bf16.msra.mxu0 0
    %685 = vmatprep.subr.bf16.mxu0 0
    %686 = vmatpush1.bf16.msra.mxu0 0
    %687 = vmatprep.subr.bf16.mxu0 0
    %688 = vmatpush1.bf16.msra.mxu0 0
    %689 = vmatprep.subr.bf16.mxu0 0
    %690 = vmatpush1.bf16.msra.mxu0 0
    %691 = vmatprep.subr.bf16.mxu0 0
    %692 = vmatpush1.bf16.msra.mxu0 0
    %693 = vmatprep.subr.bf16.mxu0 0
    %694 = vmatpush1.bf16.msra.mxu0 0
    %695 = vmatprep.subr.bf16.mxu0 0
    %696 = vmatpush1.bf16.msra.mxu0 0
    %697 = vmatprep.subr.bf16.mxu0 0
    %698 = vmatpush1.bf16.msra.mxu0 0
    %699 = vmatprep.subr.bf16.mxu0 0
    %700 = vmatpush1.bf16.msra.mxu0 0
    %701 = vmatprep.subr.bf16.mxu0 0
    %702 = vmatpush1.bf16.msra.mxu0 0
    %703 = vmatprep.mubr.bf16.mxu0 0
    %704 = vmatmul.mubr.bf16.gmra.mrb[0].mxu0 %v594
    %v705 = vpop.f32.mrb[0].mxu0
    %v706 = vadd.f32 %v657, %v705
    %v707 = vpop.f32.mrb[0].mxu0
    %v708 = vpop.f32.mrb[0].mxu0
    %v709 = vpop.f32.mrb[0].mxu0
    %710 = vdwg.mxu0
    %711 = vst.msk [vmem:[#allocation2 + $0x8] sm:$0xff] %vm562, %v706
    %v712 = vsel %vm562, %v706, 0.0
    %713 = vadd.xlane.f32.xlu0 %v712
    %v714 = vpop.xlane.xlu0 %713
    %v715 = vadd.f32 %v640, %v714
    %v716 = vmul.f32 %v706, %v706
    %v717 = vsel %vm562, %v716, 0.0
    %718 = vadd.xlane.f32.xlu0 %v717
    %v719 = vpop.xlane.xlu0 %718
    %v720 = vadd.f32 %v645, %v719
    %s721 = scalar_lea.vmem [#allocation10], 32
    %v722 = vld [vmem:[%s721] sm:$0xf]
    %v723 = vld [vmem:[%s721 + $0x4] sm:$0xf]
    %v724 = vld [vmem:[%s721 + $0x8] sm:$0xf]
    %v725 = vld [vmem:[%s721 + $0xc] sm:$0xf]
    %s726 = scalar_lea.vmem [#allocation12], 2
    %v727 = vld [vmem:[%s726] sm:$0x1]
    %v729 = vlaneseq
    %v730 = vshrl.u32 %v729, 7
    %v731 = vsub.s32 0, %v730
    %v732 = vrot.slane %v727, %v731
    %v738 = vunpack.c.l.b16 %v722
    %v739 = vunpack.c.l.b16 %v723
    %v740 = vunpack.c.l.b16 %v724
    %v741 = vunpack.c.l.b16 %v725
    %v742 = vpack.c.b16 %v739, %v738
    %v743 = vpack.c.b16 %v741, %v740
    %746 = vmatprep.subr.bf16.mxu0 0
    %747 = vmatpush1.bf16.msra.mxu0 %v742
    %748 = vmatprep.subr.bf16.mxu0 0
    %749 = vmatpush1.bf16.msra.mxu0 %v743
    %750 = vmatprep.subr.bf16.mxu0 0
    %751 = vmatpush1.bf16.msra.mxu0 0
    %752 = vmatprep.subr.bf16.mxu0 0
    %753 = vmatpush1.bf16.msra.mxu0 0
    %754 = vmatprep.subr.bf16.mxu0 0
    %755 = vmatpush1.bf16.msra.mxu0 0
    %756 = vmatprep.subr.bf16.mxu0 0
    %757 = vmatpush1.bf16.msra.mxu0 0
    %758 = vmatprep.subr.bf16.mxu0 0
    %759 = vmatpush1.bf16.msra.mxu0 0
    %760 = vmatprep.subr.bf16.mxu0 0
    %761 = vmatpush1.bf16.msra.mxu0 0
    %762 = vmatprep.subr.bf16.mxu0 0
    %763 = vmatpush1.bf16.msra.mxu0 0
    %764 = vmatprep.subr.bf16.mxu0 0
    %765 = vmatpush1.bf16.msra.mxu0 0
    %766 = vmatprep.subr.bf16.mxu0 0
    %767 = vmatpush1.bf16.msra.mxu0 0
    %768 = vmatprep.subr.bf16.mxu0 0
    %769 = vmatpush1.bf16.msra.mxu0 0
    %770 = vmatprep.subr.bf16.mxu0 0
    %771 = vmatpush1.bf16.msra.mxu0 0
    %772 = vmatprep.subr.bf16.mxu0 0
    %773 = vmatpush1.bf16.msra.mxu0 0
    %774 = vmatprep.subr.bf16.mxu0 0
    %775 = vmatpush1.bf16.msra.mxu0 0
    %776 = vmatprep.subr.bf16.mxu0 0
    %777 = vmatpush1.bf16.msra.mxu0 0
    %778 = vmatprep.mubr.bf16.mxu0 0
    %779 = vmatmul.mubr.bf16.gmra.mrb[0].mxu0 %v594
    %v780 = vpop.f32.mrb[0].mxu0
    %v781 = vadd.f32 %v732, %v780
    %v782 = vpop.f32.mrb[0].mxu0
    %v783 = vpop.f32.mrb[0].mxu0
    %v784 = vpop.f32.mrb[0].mxu0
    %785 = vdwg.mxu0
    %786 = vst.msk [vmem:[#allocation2 + $0x10] sm:$0xff] %vm562, %v781
    %v787 = vsel %vm562, %v781, 0.0
    %788 = vadd.xlane.f32.xlu0 %v787
    %v789 = vpop.xlane.xlu0 %788
    %v790 = vadd.f32 %v715, %v789
    %v791 = vmul.f32 %v781, %v781
    %v792 = vsel %vm562, %v791, 0.0
    %793 = vadd.xlane.f32.xlu0 %v792
    %v794 = vpop.xlane.xlu0 %793
    %v795 = vadd.f32 %v720, %v794
    %s796 = scalar_lea.vmem [#allocation10], 48
    %v797 = vld [vmem:[%s796] sm:$0xf]
    %v798 = vld [vmem:[%s796 + $0x4] sm:$0xf]
    %v799 = vld [vmem:[%s796 + $0x8] sm:$0xf]
    %v800 = vld [vmem:[%s796 + $0xc] sm:$0xf]
    %s801 = scalar_lea.vmem [#allocation12], 3
    %v802 = vld [vmem:[%s801] sm:$0x1]
    %v804 = vlaneseq
    %v805 = vshrl.u32 %v804, 7
    %v806 = vsub.s32 0, %v805
    %v807 = vrot.slane %v802, %v806
    %v813 = vunpack.c.l.b16 %v797
    %v814 = vunpack.c.l.b16 %v798
    %v815 = vunpack.c.l.b16 %v799
    %v816 = vunpack.c.l.b16 %v800
    %v817 = vpack.c.b16 %v814, %v813
    %v818 = vpack.c.b16 %v816, %v815
    %821 = vmatprep.subr.bf16.mxu0 0
    %822 = vmatpush1.bf16.msra.mxu0 %v817
    %823 = vmatprep.subr.bf16.mxu0 0
    %824 = vmatpush1.bf16.msra.mxu0 %v818
    %825 = vmatprep.subr.bf16.mxu0 0
    %826 = vmatpush1.bf16.msra.mxu0 0
    %827 = vmatprep.subr.bf16.mxu0 0
    %828 = vmatpush1.bf16.msra.mxu0 0
    %829 = vmatprep.subr.bf16.mxu0 0
    %830 = vmatpush1.bf16.msra.mxu0 0
    %831 = vmatprep.subr.bf16.mxu0 0
    %832 = vmatpush1.bf16.msra.mxu0 0
    %833 = vmatprep.subr.bf16.mxu0 0
    %834 = vmatpush1.bf16.msra.mxu0 0
    %835 = vmatprep.subr.bf16.mxu0 0
    %836 = vmatpush1.bf16.msra.mxu0 0
    %837 = vmatprep.subr.bf16.mxu0 0
    %838 = vmatpush1.bf16.msra.mxu0 0
    %839 = vmatprep.subr.bf16.mxu0 0
    %840 = vmatpush1.bf16.msra.mxu0 0
    %841 = vmatprep.subr.bf16.mxu0 0
    %842 = vmatpush1.bf16.msra.mxu0 0
    %843 = vmatprep.subr.bf16.mxu0 0
    %844 = vmatpush1.bf16.msra.mxu0 0
    %845 = vmatprep.subr.bf16.mxu0 0
    %846 = vmatpush1.bf16.msra.mxu0 0
    %847 = vmatprep.subr.bf16.mxu0 0
    %848 = vmatpush1.bf16.msra.mxu0 0
    %849 = vmatprep.subr.bf16.mxu0 0
    %850 = vmatpush1.bf16.msra.mxu0 0
    %851 = vmatprep.subr.bf16.mxu0 0
    %852 = vmatpush1.bf16.msra.mxu0 0
    %853 = vmatprep.mubr.bf16.mxu0 0
    %854 = vmatmul.mubr.bf16.gmra.mrb[0].mxu0 %v594
    %v855 = vpop.f32.mrb[0].mxu0
    %v856 = vadd.f32 %v807, %v855
    %v857 = vpop.f32.mrb[0].mxu0
    %v858 = vpop.f32.mrb[0].mxu0
    %v859 = vpop.f32.mrb[0].mxu0
    %860 = vdwg.mxu0
    %861 = vst.msk [vmem:[#allocation2 + $0x18] sm:$0xff] %vm562, %v856
    %v862 = vsel %vm562, %v856, 0.0
    %863 = vadd.xlane.f32.xlu0 %v862
    %v864 = vpop.xlane.xlu0 %863
    %v865 = vadd.f32 %v790, %v864
    %v866 = vmul.f32 %v856, %v856
    %v867 = vsel %vm562, %v866, 0.0
    %868 = vadd.xlane.f32.xlu0 %v867
    %v869 = vpop.xlane.xlu0 %868
    %v870 = vadd.f32 %v795, %v869
    %v871 = vmul.f32 %v865, 0.0078125
    %v872 = vmul.f32 %v870, 0.0078125
    %v873 = vmul.f32 %v871, %v871
    %v874 = vsub.f32 %v872, %v873
    %v875 = vmax.f32 %v874, 0.0
    %v876 = vadd.f32 %v875, 1e-05
    %v877 = vrsqrt.pop %v876
    %v878 = vld [vmem:[#allocation2] sm:$0xff]
    %v879 = vsub.f32 %v878, %v871
    %v880 = vmul.f32 %v879, %v877
    %v881 = vld [vmem:[#allocation13] sm:$0x1]
    %v883 = vlaneseq
    %v884 = vshrl.u32 %v883, 7
    %v885 = vsub.s32 0, %v884
    %v886 = vrot.slane %v881, %v885
    %v888 = vmul.f32 %v880, %v886
    %v889 = vld [vmem:[#allocation15] sm:$0x1]
    %v891 = vlaneseq
    %v892 = vshrl.u32 %v891, 7
    %v893 = vsub.s32 0, %v892
    %v894 = vrot.slane %v889, %v893
    %v896 = vadd.f32 %v888, %v894
    %v897 = vmul.f32 %v896, %v896
    %v898 = vsel %vm562, %v897, 0.0
    %899 = vadd.xlane.f32.xlu0 %v898
    %v900 = vpop.xlane.xlu0 %899
    %v901 = vmax.f32 %v900, 1e-24
    %v902 = vrsqrt.pop %v901
    %v903 = vmul.f32 %v896, %v902
    %v904 = vld [vmem:[#allocation16] sm:$0x1]
    %v906 = vlaneseq
    %v907 = vshrl.u32 %v906, 7
    %v908 = vsub.s32 0, %v907
    %v909 = vrot.slane %v904, %v908
    %v911 = vadd.f32 %v903, %v909
    %912 = vst.msk [vmem:[#allocation2] sm:$0xff] %vm562, %v911
    %v913 = vld [vmem:[#allocation2 + $0x8] sm:$0xff]
    %v914 = vsub.f32 %v913, %v871
    %v915 = vmul.f32 %v914, %v877
    %s916 = scalar_lea.vmem [#allocation13], 1
    %v917 = vld [vmem:[%s916] sm:$0x1]
    %v919 = vlaneseq
    %v920 = vshrl.u32 %v919, 7
    %v921 = vsub.s32 0, %v920
    %v922 = vrot.slane %v917, %v921
    %v924 = vmul.f32 %v915, %v922
    %s925 = scalar_lea.vmem [#allocation15], 1
    %v926 = vld [vmem:[%s925] sm:$0x1]
    %v928 = vlaneseq
    %v929 = vshrl.u32 %v928, 7
    %v930 = vsub.s32 0, %v929
    %v931 = vrot.slane %v926, %v930
    %v933 = vadd.f32 %v924, %v931
    %v934 = vmul.f32 %v933, %v933
    %v935 = vsel %vm562, %v934, 0.0
    %936 = vadd.xlane.f32.xlu0 %v935
    %v937 = vpop.xlane.xlu0 %936
    %v938 = vmax.f32 %v937, 1e-24
    %v939 = vrsqrt.pop %v938
    %v940 = vmul.f32 %v933, %v939
    %s941 = scalar_lea.vmem [#allocation16], 1
    %v942 = vld [vmem:[%s941] sm:$0x1]
    %v944 = vlaneseq
    %v945 = vshrl.u32 %v944, 7
    %v946 = vsub.s32 0, %v945
    %v947 = vrot.slane %v942, %v946
    %v949 = vadd.f32 %v940, %v947
    %950 = vst.msk [vmem:[#allocation2 + $0x8] sm:$0xff] %vm562, %v949
    %v951 = vld [vmem:[#allocation2 + $0x10] sm:$0xff]
    %v952 = vsub.f32 %v951, %v871
    %v953 = vmul.f32 %v952, %v877
    %s954 = scalar_lea.vmem [#allocation13], 2
    %v955 = vld [vmem:[%s954] sm:$0x1]
    %v957 = vlaneseq
    %v958 = vshrl.u32 %v957, 7
    %v959 = vsub.s32 0, %v958
    %v960 = vrot.slane %v955, %v959
    %v962 = vmul.f32 %v953, %v960
    %s963 = scalar_lea.vmem [#allocation15], 2
    %v964 = vld [vmem:[%s963] sm:$0x1]
    %v966 = vlaneseq
    %v967 = vshrl.u32 %v966, 7
    %v968 = vsub.s32 0, %v967
    %v969 = vrot.slane %v964, %v968
    %v971 = vadd.f32 %v962, %v969
    %v972 = vmul.f32 %v971, %v971
    %v973 = vsel %vm562, %v972, 0.0
    %974 = vadd.xlane.f32.xlu0 %v973
    %v975 = vpop.xlane.xlu0 %974
    %v976 = vmax.f32 %v975, 1e-24
    %v977 = vrsqrt.pop %v976
    %v978 = vmul.f32 %v971, %v977
    %s979 = scalar_lea.vmem [#allocation16], 2
    %v980 = vld [vmem:[%s979] sm:$0x1]
    %v982 = vlaneseq
    %v983 = vshrl.u32 %v982, 7
    %v984 = vsub.s32 0, %v983
    %v985 = vrot.slane %v980, %v984
    %v987 = vadd.f32 %v978, %v985
    %988 = vst.msk [vmem:[#allocation2 + $0x10] sm:$0xff] %vm562, %v987
    %v989 = vld [vmem:[#allocation2 + $0x18] sm:$0xff]
    %v990 = vsub.f32 %v989, %v871
    %v991 = vmul.f32 %v990, %v877
    %s992 = scalar_lea.vmem [#allocation13], 3
    %v993 = vld [vmem:[%s992] sm:$0x1]
    %v995 = vlaneseq
    %v996 = vshrl.u32 %v995, 7
    %v997 = vsub.s32 0, %v996
    %v998 = vrot.slane %v993, %v997
    %v1000 = vmul.f32 %v991, %v998
    %s1001 = scalar_lea.vmem [#allocation15], 3
    %v1002 = vld [vmem:[%s1001] sm:$0x1]
    %v1004 = vlaneseq
    %v1005 = vshrl.u32 %v1004, 7
    %v1006 = vsub.s32 0, %v1005
    %v1007 = vrot.slane %v1002, %v1006
    %v1009 = vadd.f32 %v1000, %v1007
    %v1010 = vmul.f32 %v1009, %v1009
    %v1011 = vsel %vm562, %v1010, 0.0
    %1012 = vadd.xlane.f32.xlu0 %v1011
    %v1013 = vpop.xlane.xlu0 %1012
    %v1014 = vmax.f32 %v1013, 1e-24
    %v1015 = vrsqrt.pop %v1014
    %v1016 = vmul.f32 %v1009, %v1015
    %s1017 = scalar_lea.vmem [#allocation16], 3
    %v1018 = vld [vmem:[%s1017] sm:$0x1]
    %v1020 = vlaneseq
    %v1021 = vshrl.u32 %v1020, 7
    %v1022 = vsub.s32 0, %v1021
    %v1023 = vrot.slane %v1018, %v1022
    %v1025 = vadd.f32 %v1016, %v1023
    %1026 = vst.msk [vmem:[#allocation2 + $0x18] sm:$0xff] %vm562, %v1025
    %v1027 = vld [vmem:[#allocation2] sm:$0xff]
    %v1028 = vld [vmem:[#allocation2 + $0x8] sm:$0xff]
    %v1029 = vld [vmem:[#allocation2 + $0x10] sm:$0xff]
    %v1030 = vld [vmem:[#allocation2 + $0x18] sm:$0xff]
    %v1031 = vld [vmem:[#allocation27] sm:$0xf]
    %v1032 = vld [vmem:[#allocation27 + $0x4] sm:$0xf]
    %v1033 = vld [vmem:[#allocation27 + $0x8] sm:$0xf]
    %v1034 = vld [vmem:[#allocation27 + $0xc] sm:$0xf]
    %v1035 = vld [vmem:[#allocation28] sm:$0x3]
    %v1036 = vmul.f32 %v1027, %v1027
    %v1037 = vmul.f32 %v1028, %v1028
    %v1038 = vmul.f32 %v1029, %v1029
    %v1039 = vmul.f32 %v1030, %v1030
    %v1040 = vsel %vm562, %v1036, 0.0
    %1041 = vadd.xlane.f32.xlu0 %v1040
    %v1042 = vpop.xlane.xlu0 %1041
    %v1043 = vsel %vm562, %v1037, 0.0
    %1044 = vadd.xlane.f32.xlu0 %v1043
    %v1045 = vpop.xlane.xlu0 %1044
    %v1046 = vsel %vm562, %v1038, 0.0
    %1047 = vadd.xlane.f32.xlu0 %v1046
    %v1048 = vpop.xlane.xlu0 %1047
    %v1049 = vsel %vm562, %v1039, 0.0
    %1050 = vadd.xlane.f32.xlu0 %v1049
    %v1051 = vpop.xlane.xlu0 %1050
    %v1052 = vmax.f32 %v1042, 1e-24
    %v1053 = vmax.f32 %v1045, 1e-24
    %v1054 = vmax.f32 %v1048, 1e-24
    %v1055 = vmax.f32 %v1051, 1e-24
    %v1056 = vrsqrt.pop %v1052
    %v1057 = vrsqrt.pop %v1053
    %v1058 = vrsqrt.pop %v1054
    %v1059 = vrsqrt.pop %v1055
    %v1060 = vmul.f32 %v1027, %v1056
    %v1061 = vmul.f32 %v1028, %v1057
    %v1062 = vmul.f32 %v1029, %v1058
    %v1063 = vmul.f32 %v1030, %v1059
    %v1064 = vld [vmem:[#allocation18] sm:$0xf]
    %v1065 = vld [vmem:[#allocation18 + $0x4] sm:$0xf]
    %v1066 = vld [vmem:[#allocation18 + $0x8] sm:$0xf]
    %v1067 = vld [vmem:[#allocation18 + $0xc] sm:$0xf]
    %v1068 = vpack.c.bf16 %v1061, %v1060
    %v1069 = vpack.c.bf16 %v1063, %v1062
    %v1070 = vld [vmem:[#allocation19] sm:$0x1]
    %v1072 = vlaneseq
    %v1073 = vshrl.u32 %v1072, 7
    %v1074 = vsub.s32 0, %v1073
    %v1075 = vrot.slane %v1070, %v1074
    %v1081 = vunpack.c.l.b16 %v1064
    %v1082 = vunpack.c.l.b16 %v1065
    %v1083 = vunpack.c.l.b16 %v1066
    %v1084 = vunpack.c.l.b16 %v1067
    %v1085 = vpack.c.b16 %v1082, %v1081
    %v1086 = vpack.c.b16 %v1084, %v1083
    %v1090 = vsel %vm562, %v1068, 0
    %v1093 = vsel %vm562, %v1069, 0
    %1095 = vmatprep.subr.bf16.mxu0 0
    %1096 = vmatpush1.bf16.msra.mxu0 %v1085
    %1097 = vmatprep.subr.bf16.mxu0 0
    %1098 = vmatpush1.bf16.msra.mxu0 %v1086
    %1099 = vmatprep.subr.bf16.mxu0 0
    %1100 = vmatpush1.bf16.msra.mxu0 0
    %1101 = vmatprep.subr.bf16.mxu0 0
    %1102 = vmatpush1.bf16.msra.mxu0 0
    %1103 = vmatprep.subr.bf16.mxu0 0
    %1104 = vmatpush1.bf16.msra.mxu0 0
    %1105 = vmatprep.subr.bf16.mxu0 0
    %1106 = vmatpush1.bf16.msra.mxu0 0
    %1107 = vmatprep.subr.bf16.mxu0 0
    %1108 = vmatpush1.bf16.msra.mxu0 0
    %1109 = vmatprep.subr.bf16.mxu0 0
    %1110 = vmatpush1.bf16.msra.mxu0 0
    %1111 = vmatprep.subr.bf16.mxu0 0
    %1112 = vmatpush1.bf16.msra.mxu0 0
    %1113 = vmatprep.subr.bf16.mxu0 0
    %1114 = vmatpush1.bf16.msra.mxu0 0
    %1115 = vmatprep.subr.bf16.mxu0 0
    %1116 = vmatpush1.bf16.msra.mxu0 0
    %1117 = vmatprep.subr.bf16.mxu0 0
    %1118 = vmatpush1.bf16.msra.mxu0 0
    %1119 = vmatprep.subr.bf16.mxu0 0
    %1120 = vmatpush1.bf16.msra.mxu0 0
    %1121 = vmatprep.subr.bf16.mxu0 0
    %1122 = vmatpush1.bf16.msra.mxu0 0
    %1123 = vmatprep.subr.bf16.mxu0 0
    %1124 = vmatpush1.bf16.msra.mxu0 0
    %1125 = vmatprep.subr.bf16.mxu0 0
    %1126 = vmatpush1.bf16.msra.mxu0 0
    %1127 = vmatprep.mubr.bf16.mxu0 0
    %1128 = vmatmul.mubr.bf16.gmra.mrb[0].mxu0 %v1090
    %v1129 = vpop.f32.mrb[0].mxu0
    %v1130 = vadd.f32 %v1075, %v1129
    %v1131 = vpop.f32.mrb[0].mxu0
    %v1132 = vpop.f32.mrb[0].mxu0
    %v1133 = vadd.f32 %v1075, %v1132
    %v1134 = vpop.f32.mrb[0].mxu0
    %1135 = vmatprep.mubr.bf16.mxu0 0
    %1136 = vmatmul.mubr.bf16.gmra.mrb[0].mxu0 %v1093
    %v1137 = vpop.f32.mrb[0].mxu0
    %v1138 = vadd.f32 %v1075, %v1137
    %v1139 = vpop.f32.mrb[0].mxu0
    %v1140 = vpop.f32.mrb[0].mxu0
    %v1141 = vadd.f32 %v1075, %v1140
    %v1142 = vpop.f32.mrb[0].mxu0
    %1143 = vdwg.mxu0
    %v1144 = vmul.f32 %v1130, 0.35355338
    %v1145 = vmul.f32 %v1133, 0.35355338
    %v1146 = vmul.f32 %v1138, 0.35355338
    %v1147 = vmul.f32 %v1141, 0.35355338
    %v1148 = vld [vmem:[#allocation21] sm:$0xf]
    %v1149 = vld [vmem:[#allocation21 + $0x4] sm:$0xf]
    %v1150 = vld [vmem:[#allocation21 + $0x8] sm:$0xf]
    %v1151 = vld [vmem:[#allocation21 + $0xc] sm:$0xf]
    %v1152 = vld [vmem:[#allocation22] sm:$0x1]
    %v1154 = vlaneseq
    %v1155 = vshrl.u32 %v1154, 7
    %v1156 = vsub.s32 0, %v1155
    %v1157 = vrot.slane %v1152, %v1156
    %v1163 = vunpack.c.l.b16 %v1148
    %v1164 = vunpack.c.l.b16 %v1149
    %v1165 = vunpack.c.l.b16 %v1150
    %v1166 = vunpack.c.l.b16 %v1151
    %v1167 = vpack.c.b16 %v1164, %v1163
    %v1168 = vpack.c.b16 %v1166, %v1165
    %1171 = vmatprep.subr.bf16.mxu0 0
    %1172 = vmatpush1.bf16.msra.mxu0 %v1167
    %1173 = vmatprep.subr.bf16.mxu0 0
    %1174 = vmatpush1.bf16.msra.mxu0 %v1168
    %1175 = vmatprep.subr.bf16.mxu0 0
    %1176 = vmatpush1.bf16.msra.mxu0 0
    %1177 = vmatprep.subr.bf16.mxu0 0
    %1178 = vmatpush1.bf16.msra.mxu0 0
    %1179 = vmatprep.subr.bf16.mxu0 0
    %1180 = vmatpush1.bf16.msra.mxu0 0
    %1181 = vmatprep.subr.bf16.mxu0 0
    %1182 = vmatpush1.bf16.msra.mxu0 0
    %1183 = vmatprep.subr.bf16.mxu0 0
    %1184 = vmatpush1.bf16.msra.mxu0 0
    %1185 = vmatprep.subr.bf16.mxu0 0
    %1186 = vmatpush1.bf16.msra.mxu0 0
    %1187 = vmatprep.subr.bf16.mxu0 0
    %1188 = vmatpush1.bf16.msra.mxu0 0
    %1189 = vmatprep.subr.bf16.mxu0 0
    %1190 = vmatpush1.bf16.msra.mxu0 0
    %1191 = vmatprep.subr.bf16.mxu0 0
    %1192 = vmatpush1.bf16.msra.mxu0 0
    %1193 = vmatprep.subr.bf16.mxu0 0
    %1194 = vmatpush1.bf16.msra.mxu0 0
    %1195 = vmatprep.subr.bf16.mxu0 0
    %1196 = vmatpush1.bf16.msra.mxu0 0
    %1197 = vmatprep.subr.bf16.mxu0 0
    %1198 = vmatpush1.bf16.msra.mxu0 0
    %1199 = vmatprep.subr.bf16.mxu0 0
    %1200 = vmatpush1.bf16.msra.mxu0 0
    %1201 = vmatprep.subr.bf16.mxu0 0
    %1202 = vmatpush1.bf16.msra.mxu0 0
    %1203 = vmatprep.mubr.bf16.mxu0 0
    %1204 = vmatmul.mubr.bf16.gmra.mrb[0].mxu0 %v1090
    %v1205 = vpop.f32.mrb[0].mxu0
    %v1206 = vadd.f32 %v1157, %v1205
    %v1207 = vpop.f32.mrb[0].mxu0
    %v1208 = vpop.f32.mrb[0].mxu0
    %v1209 = vadd.f32 %v1157, %v1208
    %v1210 = vpop.f32.mrb[0].mxu0
    %1211 = vmatprep.mubr.bf16.mxu0 0
    %1212 = vmatmul.mubr.bf16.gmra.mrb[0].mxu0 %v1093
    %v1213 = vpop.f32.mrb[0].mxu0
    %v1214 = vadd.f32 %v1157, %v1213
    %v1215 = vpop.f32.mrb[0].mxu0
    %v1216 = vpop.f32.mrb[0].mxu0
    %v1217 = vadd.f32 %v1157, %v1216
    %v1218 = vpop.f32.mrb[0].mxu0
    %1219 = vdwg.mxu0
    %v1220 = vld [vmem:[#allocation24] sm:$0xf]
    %v1221 = vld [vmem:[#allocation24 + $0x4] sm:$0xf]
    %v1222 = vld [vmem:[#allocation24 + $0x8] sm:$0xf]
    %v1223 = vld [vmem:[#allocation24 + $0xc] sm:$0xf]
    %v1224 = vld [vmem:[#allocation25] sm:$0x1]
    %v1226 = vlaneseq
    %v1227 = vshrl.u32 %v1226, 7
    %v1228 = vsub.s32 0, %v1227
    %v1229 = vrot.slane %v1224, %v1228
    %v1235 = vunpack.c.l.b16 %v1220
    %v1236 = vunpack.c.l.b16 %v1221
    %v1237 = vunpack.c.l.b16 %v1222
    %v1238 = vunpack.c.l.b16 %v1223
    %v1239 = vpack.c.b16 %v1236, %v1235
    %v1240 = vpack.c.b16 %v1238, %v1237
    %1243 = vmatprep.subr.bf16.mxu0 0
    %1244 = vmatpush1.bf16.msra.mxu0 %v1239
    %1245 = vmatprep.subr.bf16.mxu0 0
    %1246 = vmatpush1.bf16.msra.mxu0 %v1240
    %1247 = vmatprep.subr.bf16.mxu0 0
    %1248 = vmatpush1.bf16.msra.mxu0 0
    %1249 = vmatprep.subr.bf16.mxu0 0
    %1250 = vmatpush1.bf16.msra.mxu0 0
    %1251 = vmatprep.subr.bf16.mxu0 0
    %1252 = vmatpush1.bf16.msra.mxu0 0
    %1253 = vmatprep.subr.bf16.mxu0 0
    %1254 = vmatpush1.bf16.msra.mxu0 0
    %1255 = vmatprep.subr.bf16.mxu0 0
    %1256 = vmatpush1.bf16.msra.mxu0 0
    %1257 = vmatprep.subr.bf16.mxu0 0
    %1258 = vmatpush1.bf16.msra.mxu0 0
    %1259 = vmatprep.subr.bf16.mxu0 0
    %1260 = vmatpush1.bf16.msra.mxu0 0
    %1261 = vmatprep.subr.bf16.mxu0 0
    %1262 = vmatpush1.bf16.msra.mxu0 0
    %1263 = vmatprep.subr.bf16.mxu0 0
    %1264 = vmatpush1.bf16.msra.mxu0 0
    %1265 = vmatprep.subr.bf16.mxu0 0
    %1266 = vmatpush1.bf16.msra.mxu0 0
    %1267 = vmatprep.subr.bf16.mxu0 0
    %1268 = vmatpush1.bf16.msra.mxu0 0
    %1269 = vmatprep.subr.bf16.mxu0 0
    %1270 = vmatpush1.bf16.msra.mxu0 0
    %1271 = vmatprep.subr.bf16.mxu0 0
    %1272 = vmatpush1.bf16.msra.mxu0 0
    %1273 = vmatprep.subr.bf16.mxu0 0
    %1274 = vmatpush1.bf16.msra.mxu0 0
    %1275 = vmatprep.mubr.bf16.mxu0 0
    %1276 = vmatmul.mubr.bf16.gmra.mrb[0].mxu0 %v1090
    %v1277 = vpop.f32.mrb[0].mxu0
    %v1278 = vadd.f32 %v1229, %v1277
    %v1279 = vpop.f32.mrb[0].mxu0
    %v1280 = vpop.f32.mrb[0].mxu0
    %v1281 = vadd.f32 %v1229, %v1280
    %v1282 = vpop.f32.mrb[0].mxu0
    %1283 = vmatprep.mubr.bf16.mxu0 0
    %1284 = vmatmul.mubr.bf16.gmra.mrb[0].mxu0 %v1093
    %v1285 = vpop.f32.mrb[0].mxu0
    %v1286 = vadd.f32 %v1229, %v1285
    %v1287 = vpop.f32.mrb[0].mxu0
    %v1288 = vpop.f32.mrb[0].mxu0
    %v1289 = vadd.f32 %v1229, %v1288
    %v1290 = vpop.f32.mrb[0].mxu0
    %1291 = vdwg.mxu0
    %v1292 = vmul.f32 %v1206, %v1144
    %v1293 = vmul.f32 %v1209, %v1144
    %v1294 = vmul.f32 %v1214, %v1144
    %v1295 = vmul.f32 %v1217, %v1144
    %v1296 = vpack.c.bf16 %v1293, %v1292
    %v1297 = vpack.c.bf16 %v1295, %v1294
    %v1302 = vunpack.c.l.b16 %v1031
    %v1303 = vunpack.c.l.b16 %v1032
    %v1304 = vunpack.c.l.b16 %v1033
    %v1305 = vunpack.c.l.b16 %v1034
    %v1306 = vpack.c.b16 %v1303, %v1302
    %v1307 = vpack.c.b16 %v1305, %v1304
    %v1311 = vsel %vm562, %v1296, 0
    %v1314 = vsel %vm562, %v1297, 0
    %1316 = vmatprep.subr.bf16.mxu0 0
    %1317 = vmatpush1.bf16.msra.mxu0 %v1306
    %1318 = vmatprep.subr.bf16.mxu0 0
    %1319 = vmatpush1.bf16.msra.mxu0 %v1307
    %1320 = vmatprep.subr.bf16.mxu0 0
    %1321 = vmatpush1.bf16.msra.mxu0 0
    %1322 = vmatprep.subr.bf16.mxu0 0
    %1323 = vmatpush1.bf16.msra.mxu0 0
    %1324 = vmatprep.subr.bf16.mxu0 0
    %1325 = vmatpush1.bf16.msra.mxu0 0
    %1326 = vmatprep.subr.bf16.mxu0 0
    %1327 = vmatpush1.bf16.msra.mxu0 0
    %1328 = vmatprep.subr.bf16.mxu0 0
    %1329 = vmatpush1.bf16.msra.mxu0 0
    %1330 = vmatprep.subr.bf16.mxu0 0
    %1331 = vmatpush1.bf16.msra.mxu0 0
    %1332 = vmatprep.subr.bf16.mxu0 0
    %1333 = vmatpush1.bf16.msra.mxu0 0
    %1334 = vmatprep.subr.bf16.mxu0 0
    %1335 = vmatpush1.bf16.msra.mxu0 0
    %1336 = vmatprep.subr.bf16.mxu0 0
    %1337 = vmatpush1.bf16.msra.mxu0 0
    %1338 = vmatprep.subr.bf16.mxu0 0
    %1339 = vmatpush1.bf16.msra.mxu0 0
    %1340 = vmatprep.subr.bf16.mxu0 0
    %1341 = vmatpush1.bf16.msra.mxu0 0
    %1342 = vmatprep.subr.bf16.mxu0 0
    %1343 = vmatpush1.bf16.msra.mxu0 0
    %1344 = vmatprep.subr.bf16.mxu0 0
    %1345 = vmatpush1.bf16.msra.mxu0 0
    %1346 = vmatprep.subr.bf16.mxu0 0
    %1347 = vmatpush1.bf16.msra.mxu0 0
    %1348 = vmatprep.mubr.bf16.mxu0 0
    %1349 = vmatmul.mubr.bf16.gmra.mrb[0].mxu0 %v1311
    %v1350 = vpop.f32.mrb[0].mxu0
    %v1351 = vadd.f32 0.0, %v1350
    %v1352 = vpop.f32.mrb[0].mxu0
    %v1353 = vpop.f32.mrb[0].mxu0
    %v1354 = vadd.f32 0.0, %v1353
    %v1355 = vpop.f32.mrb[0].mxu0
    %1356 = vmatprep.mubr.bf16.mxu0 0
    %1357 = vmatmul.mubr.bf16.gmra.mrb[0].mxu0 %v1314
    %v1358 = vpop.f32.mrb[0].mxu0
    %v1359 = vadd.f32 0.0, %v1358
    %v1360 = vpop.f32.mrb[0].mxu0
    %v1361 = vpop.f32.mrb[0].mxu0
    %v1362 = vadd.f32 0.0, %v1361
    %v1363 = vpop.f32.mrb[0].mxu0
    %1364 = vdwg.mxu0
    %vm1365 = vcmask 31744
    %v1366 = vsel %vm1365, %v1351, -inf
    %v1367 = vsel %vm1365, %v1354, -inf
    %v1368 = vsel %vm1365, %v1359, -inf
    %v1369 = vsel %vm1365, %v1362, -inf
    %v1370 = vmax.f32 %v1366, %v1367
    %v1371 = vmax.f32 %v1368, %v1369
    %v1372 = vmax.f32 %v1370, %v1371
    %v1373 = vsub.f32 %v1351, %v1372
    %v1374 = vsub.f32 %v1354, %v1372
    %v1375 = vsub.f32 %v1359, %v1372
    %v1376 = vsub.f32 %v1362, %v1372
    %v1377 = vmul.f32 %v1373, 1.442695
    %v1378 = vpow.pop %v1377
    %v1379 = vmul.f32 %v1374, 1.442695
    %v1380 = vpow.pop %v1379
    %v1381 = vmul.f32 %v1375, 1.442695
    %v1382 = vpow.pop %v1381
    %v1383 = vmul.f32 %v1376, 1.442695
    %v1384 = vpow.pop %v1383
    %v1385 = vsel %vm1365, %v1378, 0.0
    %v1386 = vsel %vm1365, %v1380, 0.0
    %v1387 = vadd.f32 %v1385, %v1386
    %v1388 = vsel %vm1365, %v1382, 0.0
    %v1389 = vadd.f32 %v1387, %v1388
    %v1390 = vsel %vm1365, %v1384, 0.0
    %v1391 = vadd.f32 %v1389, %v1390
    %v1392 = vrcp.pop %v1391
    %v1393 = vmul.f32 %v1378, %v1392
    %v1394 = vmul.f32 %v1380, %v1392
    %v1395 = vmul.f32 %v1382, %v1392
    %v1396 = vmul.f32 %v1384, %v1392
    %v1397 = vpack.c.bf16 %v1394, %v1393
    %v1398 = vpack.c.bf16 %v1396, %v1395
    %v1400 = vsel %vm1365, %v1397, 0
    %v1403 = vsel %vm1365, %v1398, 0
    %vm1405 = vcmask 1041408
    %v1407 = vsel %vm1405, %v1035, 0
    %1409 = vmatprep.subr.bf16.mxu0 0
    %1410 = vmatpush1.bf16.msra.mxu0 %v1407
    %1411 = vmatprep.subr.bf16.mxu0 0
    %1412 = vmatpush1.bf16.msra.mxu0 0
    %1413 = vmatprep.subr.bf16.mxu0 0
    %1414 = vmatpush1.bf16.msra.mxu0 0
    %1415 = vmatprep.subr.bf16.mxu0 0
    %1416 = vmatpush1.bf16.msra.mxu0 0
    %1417 = vmatprep.subr.bf16.mxu0 0
    %1418 = vmatpush1.bf16.msra.mxu0 0
    %1419 = vmatprep.subr.bf16.mxu0 0
    %1420 = vmatpush1.bf16.msra.mxu0 0
    %1421 = vmatprep.subr.bf16.mxu0 0
    %1422 = vmatpush1.bf16.msra.mxu0 0
    %1423 = vmatprep.subr.bf16.mxu0 0
    %1424 = vmatpush1.bf16.msra.mxu0 0
    %1425 = vmatprep.subr.bf16.mxu0 0
    %1426 = vmatpush1.bf16.msra.mxu0 0
    %1427 = vmatprep.subr.bf16.mxu0 0
    %1428 = vmatpush1.bf16.msra.mxu0 0
    %1429 = vmatprep.subr.bf16.mxu0 0
    %1430 = vmatpush1.bf16.msra.mxu0 0
    %1431 = vmatprep.subr.bf16.mxu0 0
    %1432 = vmatpush1.bf16.msra.mxu0 0
    %1433 = vmatprep.subr.bf16.mxu0 0
    %1434 = vmatpush1.bf16.msra.mxu0 0
    %1435 = vmatprep.subr.bf16.mxu0 0
    %1436 = vmatpush1.bf16.msra.mxu0 0
    %1437 = vmatprep.subr.bf16.mxu0 0
    %1438 = vmatpush1.bf16.msra.mxu0 0
    %1439 = vmatprep.subr.bf16.mxu0 0
    %1440 = vmatpush1.bf16.msra.mxu0 0
    %1441 = vmatprep.mubr.bf16.mxu0 0
    %1442 = vmatmul.mubr.bf16.gmra.mrb[0].mxu0 %v1400
    %v1443 = vpop.f32.mrb[0].mxu0
    %v1444 = vadd.f32 0.0, %v1443
    %v1445 = vpop.f32.mrb[0].mxu0
    %v1446 = vpop.f32.mrb[0].mxu0
    %v1447 = vadd.f32 0.0, %v1446
    %v1448 = vpop.f32.mrb[0].mxu0
    %1449 = vmatprep.mubr.bf16.mxu0 0
    %1450 = vmatmul.mubr.bf16.gmra.mrb[0].mxu0 %v1403
    %v1451 = vpop.f32.mrb[0].mxu0
    %v1452 = vadd.f32 0.0, %v1451
    %v1453 = vpop.f32.mrb[0].mxu0
    %v1454 = vpop.f32.mrb[0].mxu0
    %v1455 = vadd.f32 0.0, %v1454
    %v1456 = vpop.f32.mrb[0].mxu0
    %1457 = vdwg.mxu0
    %v1458 = vmul.f32 %v1444, %v1278
    %v1459 = vmul.f32 %v1447, %v1281
    %v1460 = vmul.f32 %v1452, %v1286
    %v1461 = vmul.f32 %v1455, %v1289
    %v1462 = vsel %vm562, %v1458, 0.0
    %v1463 = vsel %vm562, %v1459, 0.0
    %v1464 = vadd.f32 %v1462, %v1463
    %v1465 = vsel %vm562, %v1460, 0.0
    %v1466 = vadd.f32 %v1464, %v1465
    %v1467 = vsel %vm562, %v1461, 0.0
    %v1468 = vadd.f32 %v1466, %v1467
    %1469 = vst.msk [vmem:[#allocation2] sm:$0xff] %vm562, %v1468
    %v1470 = vmul.f32 %v1206, %v1145
    %v1471 = vmul.f32 %v1209, %v1145
    %v1472 = vmul.f32 %v1214, %v1145
    %v1473 = vmul.f32 %v1217, %v1145
    %v1474 = vpack.c.bf16 %v1471, %v1470
    %v1475 = vpack.c.bf16 %v1473, %v1472
    %v1477 = vsel %vm562, %v1474, 0
    %v1480 = vsel %vm562, %v1475, 0
    %1482 = vmatprep.subr.bf16.mxu0 0
    %1483 = vmatpush1.bf16.msra.mxu0 %v1306
    %1484 = vmatprep.subr.bf16.mxu0 0
    %1485 = vmatpush1.bf16.msra.mxu0 %v1307
    %1486 = vmatprep.subr.bf16.mxu0 0
    %1487 = vmatpush1.bf16.msra.mxu0 0
    %1488 = vmatprep.subr.bf16.mxu0 0
    %1489 = vmatpush1.bf16.msra.mxu0 0
    %1490 = vmatprep.subr.bf16.mxu0 0
    %1491 = vmatpush1.bf16.msra.mxu0 0
    %1492 = vmatprep.subr.bf16.mxu0 0
    %1493 = vmatpush1.bf16.msra.mxu0 0
    %1494 = vmatprep.subr.bf16.mxu0 0
    %1495 = vmatpush1.bf16.msra.mxu0 0
    %1496 = vmatprep.subr.bf16.mxu0 0
    %1497 = vmatpush1.bf16.msra.mxu0 0
    %1498 = vmatprep.subr.bf16.mxu0 0
    %1499 = vmatpush1.bf16.msra.mxu0 0
    %1500 = vmatprep.subr.bf16.mxu0 0
    %1501 = vmatpush1.bf16.msra.mxu0 0
    %1502 = vmatprep.subr.bf16.mxu0 0
    %1503 = vmatpush1.bf16.msra.mxu0 0
    %1504 = vmatprep.subr.bf16.mxu0 0
    %1505 = vmatpush1.bf16.msra.mxu0 0
    %1506 = vmatprep.subr.bf16.mxu0 0
    %1507 = vmatpush1.bf16.msra.mxu0 0
    %1508 = vmatprep.subr.bf16.mxu0 0
    %1509 = vmatpush1.bf16.msra.mxu0 0
    %1510 = vmatprep.subr.bf16.mxu0 0
    %1511 = vmatpush1.bf16.msra.mxu0 0
    %1512 = vmatprep.subr.bf16.mxu0 0
    %1513 = vmatpush1.bf16.msra.mxu0 0
    %1514 = vmatprep.mubr.bf16.mxu0 0
    %1515 = vmatmul.mubr.bf16.gmra.mrb[0].mxu0 %v1477
    %v1516 = vpop.f32.mrb[0].mxu0
    %v1517 = vadd.f32 0.0, %v1516
    %v1518 = vpop.f32.mrb[0].mxu0
    %v1519 = vpop.f32.mrb[0].mxu0
    %v1520 = vadd.f32 0.0, %v1519
    %v1521 = vpop.f32.mrb[0].mxu0
    %1522 = vmatprep.mubr.bf16.mxu0 0
    %1523 = vmatmul.mubr.bf16.gmra.mrb[0].mxu0 %v1480
    %v1524 = vpop.f32.mrb[0].mxu0
    %v1525 = vadd.f32 0.0, %v1524
    %v1526 = vpop.f32.mrb[0].mxu0
    %v1527 = vpop.f32.mrb[0].mxu0
    %v1528 = vadd.f32 0.0, %v1527
    %v1529 = vpop.f32.mrb[0].mxu0
    %1530 = vdwg.mxu0
    %v1531 = vsel %vm1365, %v1517, -inf
    %v1532 = vsel %vm1365, %v1520, -inf
    %v1533 = vsel %vm1365, %v1525, -inf
    %v1534 = vsel %vm1365, %v1528, -inf
    %v1535 = vmax.f32 %v1531, %v1532
    %v1536 = vmax.f32 %v1533, %v1534
    %v1537 = vmax.f32 %v1535, %v1536
    %v1538 = vsub.f32 %v1517, %v1537
    %v1539 = vsub.f32 %v1520, %v1537
    %v1540 = vsub.f32 %v1525, %v1537
    %v1541 = vsub.f32 %v1528, %v1537
    %v1542 = vmul.f32 %v1538, 1.442695
    %v1543 = vpow.pop %v1542
    %v1544 = vmul.f32 %v1539, 1.442695
    %v1545 = vpow.pop %v1544
    %v1546 = vmul.f32 %v1540, 1.442695
    %v1547 = vpow.pop %v1546
    %v1548 = vmul.f32 %v1541, 1.442695
    %v1549 = vpow.pop %v1548
    %v1550 = vsel %vm1365, %v1543, 0.0
    %v1551 = vsel %vm1365, %v1545, 0.0
    %v1552 = vadd.f32 %v1550, %v1551
    %v1553 = vsel %vm1365, %v1547, 0.0
    %v1554 = vadd.f32 %v1552, %v1553
    %v1555 = vsel %vm1365, %v1549, 0.0
    %v1556 = vadd.f32 %v1554, %v1555
    %v1557 = vrcp.pop %v1556
    %v1558 = vmul.f32 %v1543, %v1557
    %v1559 = vmul.f32 %v1545, %v1557
    %v1560 = vmul.f32 %v1547, %v1557
    %v1561 = vmul.f32 %v1549, %v1557
    %v1562 = vpack.c.bf16 %v1559, %v1558
    %v1563 = vpack.c.bf16 %v1561, %v1560
    %v1565 = vsel %vm1365, %v1562, 0
    %v1568 = vsel %vm1365, %v1563, 0
    %1570 = vmatprep.subr.bf16.mxu0 0
    %1571 = vmatpush1.bf16.msra.mxu0 %v1407
    %1572 = vmatprep.subr.bf16.mxu0 0
    %1573 = vmatpush1.bf16.msra.mxu0 0
    %1574 = vmatprep.subr.bf16.mxu0 0
    %1575 = vmatpush1.bf16.msra.mxu0 0
    %1576 = vmatprep.subr.bf16.mxu0 0
    %1577 = vmatpush1.bf16.msra.mxu0 0
    %1578 = vmatprep.subr.bf16.mxu0 0
    %1579 = vmatpush1.bf16.msra.mxu0 0
    %1580 = vmatprep.subr.bf16.mxu0 0
    %1581 = vmatpush1.bf16.msra.mxu0 0
    %1582 = vmatprep.subr.bf16.mxu0 0
    %1583 = vmatpush1.bf16.msra.mxu0 0
    %1584 = vmatprep.subr.bf16.mxu0 0
    %1585 = vmatpush1.bf16.msra.mxu0 0
    %1586 = vmatprep.subr.bf16.mxu0 0
    %1587 = vmatpush1.bf16.msra.mxu0 0
    %1588 = vmatprep.subr.bf16.mxu0 0
    %1589 = vmatpush1.bf16.msra.mxu0 0
    %1590 = vmatprep.subr.bf16.mxu0 0
    %1591 = vmatpush1.bf16.msra.mxu0 0
    %1592 = vmatprep.subr.bf16.mxu0 0
    %1593 = vmatpush1.bf16.msra.mxu0 0
    %1594 = vmatprep.subr.bf16.mxu0 0
    %1595 = vmatpush1.bf16.msra.mxu0 0
    %1596 = vmatprep.subr.bf16.mxu0 0
    %1597 = vmatpush1.bf16.msra.mxu0 0
    %1598 = vmatprep.subr.bf16.mxu0 0
    %1599 = vmatpush1.bf16.msra.mxu0 0
    %1600 = vmatprep.subr.bf16.mxu0 0
    %1601 = vmatpush1.bf16.msra.mxu0 0
    %1602 = vmatprep.mubr.bf16.mxu0 0
    %1603 = vmatmul.mubr.bf16.gmra.mrb[0].mxu0 %v1565
    %v1604 = vpop.f32.mrb[0].mxu0
    %v1605 = vadd.f32 0.0, %v1604
    %v1606 = vpop.f32.mrb[0].mxu0
    %v1607 = vpop.f32.mrb[0].mxu0
    %v1608 = vadd.f32 0.0, %v1607
    %v1609 = vpop.f32.mrb[0].mxu0
    %1610 = vmatprep.mubr.bf16.mxu0 0
    %1611 = vmatmul.mubr.bf16.gmra.mrb[0].mxu0 %v1568
    %v1612 = vpop.f32.mrb[0].mxu0
    %v1613 = vadd.f32 0.0, %v1612
    %v1614 = vpop.f32.mrb[0].mxu0
    %v1615 = vpop.f32.mrb[0].mxu0
    %v1616 = vadd.f32 0.0, %v1615
    %v1617 = vpop.f32.mrb[0].mxu0
    %1618 = vdwg.mxu0
    %v1619 = vmul.f32 %v1605, %v1278
    %v1620 = vmul.f32 %v1608, %v1281
    %v1621 = vmul.f32 %v1613, %v1286
    %v1622 = vmul.f32 %v1616, %v1289
    %v1623 = vsel %vm562, %v1619, 0.0
    %v1624 = vsel %vm562, %v1620, 0.0
    %v1625 = vadd.f32 %v1623, %v1624
    %v1626 = vsel %vm562, %v1621, 0.0
    %v1627 = vadd.f32 %v1625, %v1626
    %v1628 = vsel %vm562, %v1622, 0.0
    %v1629 = vadd.f32 %v1627, %v1628
    %1630 = vst.msk [vmem:[#allocation2 + $0x8] sm:$0xff] %vm562, %v1629
    %v1631 = vmul.f32 %v1206, %v1146
    %v1632 = vmul.f32 %v1209, %v1146
    %v1633 = vmul.f32 %v1214, %v1146
    %v1634 = vmul.f32 %v1217, %v1146
    %v1635 = vpack.c.bf16 %v1632, %v1631
    %v1636 = vpack.c.bf16 %v1634, %v1633
    %v1638 = vsel %vm562, %v1635, 0
    %v1641 = vsel %vm562, %v1636, 0
    %1643 = vmatprep.subr.bf16.mxu0 0
    %1644 = vmatpush1.bf16.msra.mxu0 %v1306
    %1645 = vmatprep.subr.bf16.mxu0 0
    %1646 = vmatpush1.bf16.msra.mxu0 %v1307
    %1647 = vmatprep.subr.bf16.mxu0 0
    %1648 = vmatpush1.bf16.msra.mxu0 0
    %1649 = vmatprep.subr.bf16.mxu0 0
    %1650 = vmatpush1.bf16.msra.mxu0 0
    %1651 = vmatprep.subr.bf16.mxu0 0
    %1652 = vmatpush1.bf16.msra.mxu0 0
    %1653 = vmatprep.subr.bf16.mxu0 0
    %1654 = vmatpush1.bf16.msra.mxu0 0
    %1655 = vmatprep.subr.bf16.mxu0 0
    %1656 = vmatpush1.bf16.msra.mxu0 0
    %1657 = vmatprep.subr.bf16.mxu0 0
    %1658 = vmatpush1.bf16.msra.mxu0 0
    %1659 = vmatprep.subr.bf16.mxu0 0
    %1660 = vmatpush1.bf16.msra.mxu0 0
    %1661 = vmatprep.subr.bf16.mxu0 0
    %1662 = vmatpush1.bf16.msra.mxu0 0
    %1663 = vmatprep.subr.bf16.mxu0 0
    %1664 = vmatpush1.bf16.msra.mxu0 0
    %1665 = vmatprep.subr.bf16.mxu0 0
    %1666 = vmatpush1.bf16.msra.mxu0 0
    %1667 = vmatprep.subr.bf16.mxu0 0
    %1668 = vmatpush1.bf16.msra.mxu0 0
    %1669 = vmatprep.subr.bf16.mxu0 0
    %1670 = vmatpush1.bf16.msra.mxu0 0
    %1671 = vmatprep.subr.bf16.mxu0 0
    %1672 = vmatpush1.bf16.msra.mxu0 0
    %1673 = vmatprep.subr.bf16.mxu0 0
    %1674 = vmatpush1.bf16.msra.mxu0 0
    %1675 = vmatprep.mubr.bf16.mxu0 0
    %1676 = vmatmul.mubr.bf16.gmra.mrb[0].mxu0 %v1638
    %v1677 = vpop.f32.mrb[0].mxu0
    %v1678 = vadd.f32 0.0, %v1677
    %v1679 = vpop.f32.mrb[0].mxu0
    %v1680 = vpop.f32.mrb[0].mxu0
    %v1681 = vadd.f32 0.0, %v1680
    %v1682 = vpop.f32.mrb[0].mxu0
    %1683 = vmatprep.mubr.bf16.mxu0 0
    %1684 = vmatmul.mubr.bf16.gmra.mrb[0].mxu0 %v1641
    %v1685 = vpop.f32.mrb[0].mxu0
    %v1686 = vadd.f32 0.0, %v1685
    %v1687 = vpop.f32.mrb[0].mxu0
    %v1688 = vpop.f32.mrb[0].mxu0
    %v1689 = vadd.f32 0.0, %v1688
    %v1690 = vpop.f32.mrb[0].mxu0
    %1691 = vdwg.mxu0
    %v1692 = vsel %vm1365, %v1678, -inf
    %v1693 = vsel %vm1365, %v1681, -inf
    %v1694 = vsel %vm1365, %v1686, -inf
    %v1695 = vsel %vm1365, %v1689, -inf
    %v1696 = vmax.f32 %v1692, %v1693
    %v1697 = vmax.f32 %v1694, %v1695
    %v1698 = vmax.f32 %v1696, %v1697
    %v1699 = vsub.f32 %v1678, %v1698
    %v1700 = vsub.f32 %v1681, %v1698
    %v1701 = vsub.f32 %v1686, %v1698
    %v1702 = vsub.f32 %v1689, %v1698
    %v1703 = vmul.f32 %v1699, 1.442695
    %v1704 = vpow.pop %v1703
    %v1705 = vmul.f32 %v1700, 1.442695
    %v1706 = vpow.pop %v1705
    %v1707 = vmul.f32 %v1701, 1.442695
    %v1708 = vpow.pop %v1707
    %v1709 = vmul.f32 %v1702, 1.442695
    %v1710 = vpow.pop %v1709
    %v1711 = vsel %vm1365, %v1704, 0.0
    %v1712 = vsel %vm1365, %v1706, 0.0
    %v1713 = vadd.f32 %v1711, %v1712
    %v1714 = vsel %vm1365, %v1708, 0.0
    %v1715 = vadd.f32 %v1713, %v1714
    %v1716 = vsel %vm1365, %v1710, 0.0
    %v1717 = vadd.f32 %v1715, %v1716
    %v1718 = vrcp.pop %v1717
    %v1719 = vmul.f32 %v1704, %v1718
    %v1720 = vmul.f32 %v1706, %v1718
    %v1721 = vmul.f32 %v1708, %v1718
    %v1722 = vmul.f32 %v1710, %v1718
    %v1723 = vpack.c.bf16 %v1720, %v1719
    %v1724 = vpack.c.bf16 %v1722, %v1721
    %v1726 = vsel %vm1365, %v1723, 0
    %v1729 = vsel %vm1365, %v1724, 0
    %1731 = vmatprep.subr.bf16.mxu0 0
    %1732 = vmatpush1.bf16.msra.mxu0 %v1407
    %1733 = vmatprep.subr.bf16.mxu0 0
    %1734 = vmatpush1.bf16.msra.mxu0 0
    %1735 = vmatprep.subr.bf16.mxu0 0
    %1736 = vmatpush1.bf16.msra.mxu0 0
    %1737 = vmatprep.subr.bf16.mxu0 0
    %1738 = vmatpush1.bf16.msra.mxu0 0
    %1739 = vmatprep.subr.bf16.mxu0 0
    %1740 = vmatpush1.bf16.msra.mxu0 0
    %1741 = vmatprep.subr.bf16.mxu0 0
    %1742 = vmatpush1.bf16.msra.mxu0 0
    %1743 = vmatprep.subr.bf16.mxu0 0
    %1744 = vmatpush1.bf16.msra.mxu0 0
    %1745 = vmatprep.subr.bf16.mxu0 0
    %1746 = vmatpush1.bf16.msra.mxu0 0
    %1747 = vmatprep.subr.bf16.mxu0 0
    %1748 = vmatpush1.bf16.msra.mxu0 0
    %1749 = vmatprep.subr.bf16.mxu0 0
    %1750 = vmatpush1.bf16.msra.mxu0 0
    %1751 = vmatprep.subr.bf16.mxu0 0
    %1752 = vmatpush1.bf16.msra.mxu0 0
    %1753 = vmatprep.subr.bf16.mxu0 0
    %1754 = vmatpush1.bf16.msra.mxu0 0
    %1755 = vmatprep.subr.bf16.mxu0 0
    %1756 = vmatpush1.bf16.msra.mxu0 0
    %1757 = vmatprep.subr.bf16.mxu0 0
    %1758 = vmatpush1.bf16.msra.mxu0 0
    %1759 = vmatprep.subr.bf16.mxu0 0
    %1760 = vmatpush1.bf16.msra.mxu0 0
    %1761 = vmatprep.subr.bf16.mxu0 0
    %1762 = vmatpush1.bf16.msra.mxu0 0
    %1763 = vmatprep.mubr.bf16.mxu0 0
    %1764 = vmatmul.mubr.bf16.gmra.mrb[0].mxu0 %v1726
    %v1765 = vpop.f32.mrb[0].mxu0
    %v1766 = vadd.f32 0.0, %v1765
    %v1767 = vpop.f32.mrb[0].mxu0
    %v1768 = vpop.f32.mrb[0].mxu0
    %v1769 = vadd.f32 0.0, %v1768
    %v1770 = vpop.f32.mrb[0].mxu0
    %1771 = vmatprep.mubr.bf16.mxu0 0
    %1772 = vmatmul.mubr.bf16.gmra.mrb[0].mxu0 %v1729
    %v1773 = vpop.f32.mrb[0].mxu0
    %v1774 = vadd.f32 0.0, %v1773
    %v1775 = vpop.f32.mrb[0].mxu0
    %v1776 = vpop.f32.mrb[0].mxu0
    %v1777 = vadd.f32 0.0, %v1776
    %v1778 = vpop.f32.mrb[0].mxu0
    %1779 = vdwg.mxu0
    %v1780 = vmul.f32 %v1766, %v1278
    %v1781 = vmul.f32 %v1769, %v1281
    %v1782 = vmul.f32 %v1774, %v1286
    %v1783 = vmul.f32 %v1777, %v1289
    %v1784 = vsel %vm562, %v1780, 0.0
    %v1785 = vsel %vm562, %v1781, 0.0
    %v1786 = vadd.f32 %v1784, %v1785
    %v1787 = vsel %vm562, %v1782, 0.0
    %v1788 = vadd.f32 %v1786, %v1787
    %v1789 = vsel %vm562, %v1783, 0.0
    %v1790 = vadd.f32 %v1788, %v1789
    %1791 = vst.msk [vmem:[#allocation2 + $0x10] sm:$0xff] %vm562, %v1790
    %v1792 = vmul.f32 %v1206, %v1147
    %v1793 = vmul.f32 %v1209, %v1147
    %v1794 = vmul.f32 %v1214, %v1147
    %v1795 = vmul.f32 %v1217, %v1147
    %v1796 = vpack.c.bf16 %v1793, %v1792
    %v1797 = vpack.c.bf16 %v1795, %v1794
    %v1799 = vsel %vm562, %v1796, 0
    %v1802 = vsel %vm562, %v1797, 0
    %1804 = vmatprep.subr.bf16.mxu0 0
    %1805 = vmatpush1.bf16.msra.mxu0 %v1306
    %1806 = vmatprep.subr.bf16.mxu0 0
    %1807 = vmatpush1.bf16.msra.mxu0 %v1307
    %1808 = vmatprep.subr.bf16.mxu0 0
    %1809 = vmatpush1.bf16.msra.mxu0 0
    %1810 = vmatprep.subr.bf16.mxu0 0
    %1811 = vmatpush1.bf16.msra.mxu0 0
    %1812 = vmatprep.subr.bf16.mxu0 0
    %1813 = vmatpush1.bf16.msra.mxu0 0
    %1814 = vmatprep.subr.bf16.mxu0 0
    %1815 = vmatpush1.bf16.msra.mxu0 0
    %1816 = vmatprep.subr.bf16.mxu0 0
    %1817 = vmatpush1.bf16.msra.mxu0 0
    %1818 = vmatprep.subr.bf16.mxu0 0
    %1819 = vmatpush1.bf16.msra.mxu0 0
    %1820 = vmatprep.subr.bf16.mxu0 0
    %1821 = vmatpush1.bf16.msra.mxu0 0
    %1822 = vmatprep.subr.bf16.mxu0 0
    %1823 = vmatpush1.bf16.msra.mxu0 0
    %1824 = vmatprep.subr.bf16.mxu0 0
    %1825 = vmatpush1.bf16.msra.mxu0 0
    %1826 = vmatprep.subr.bf16.mxu0 0
    %1827 = vmatpush1.bf16.msra.mxu0 0
    %1828 = vmatprep.subr.bf16.mxu0 0
    %1829 = vmatpush1.bf16.msra.mxu0 0
    %1830 = vmatprep.subr.bf16.mxu0 0
    %1831 = vmatpush1.bf16.msra.mxu0 0
    %1832 = vmatprep.subr.bf16.mxu0 0
    %1833 = vmatpush1.bf16.msra.mxu0 0
    %1834 = vmatprep.subr.bf16.mxu0 0
    %1835 = vmatpush1.bf16.msra.mxu0 0
    %1836 = vmatprep.mubr.bf16.mxu0 0
    %1837 = vmatmul.mubr.bf16.gmra.mrb[0].mxu0 %v1799
    %v1838 = vpop.f32.mrb[0].mxu0
    %v1839 = vadd.f32 0.0, %v1838
    %v1840 = vpop.f32.mrb[0].mxu0
    %v1841 = vpop.f32.mrb[0].mxu0
    %v1842 = vadd.f32 0.0, %v1841
    %v1843 = vpop.f32.mrb[0].mxu0
    %1844 = vmatprep.mubr.bf16.mxu0 0
    %1845 = vmatmul.mubr.bf16.gmra.mrb[0].mxu0 %v1802
    %v1846 = vpop.f32.mrb[0].mxu0
    %v1847 = vadd.f32 0.0, %v1846
    %v1848 = vpop.f32.mrb[0].mxu0
    %v1849 = vpop.f32.mrb[0].mxu0
    %v1850 = vadd.f32 0.0, %v1849
    %v1851 = vpop.f32.mrb[0].mxu0
    %1852 = vdwg.mxu0
    %v1853 = vsel %vm1365, %v1839, -inf
    %v1854 = vsel %vm1365, %v1842, -inf
    %v1855 = vsel %vm1365, %v1847, -inf
    %v1856 = vsel %vm1365, %v1850, -inf
    %v1857 = vmax.f32 %v1853, %v1854
    %v1858 = vmax.f32 %v1855, %v1856
    %v1859 = vmax.f32 %v1857, %v1858
    %v1860 = vsub.f32 %v1839, %v1859
    %v1861 = vsub.f32 %v1842, %v1859
    %v1862 = vsub.f32 %v1847, %v1859
    %v1863 = vsub.f32 %v1850, %v1859
    %v1864 = vmul.f32 %v1860, 1.442695
    %v1865 = vpow.pop %v1864
    %v1866 = vmul.f32 %v1861, 1.442695
    %v1867 = vpow.pop %v1866
    %v1868 = vmul.f32 %v1862, 1.442695
    %v1869 = vpow.pop %v1868
    %v1870 = vmul.f32 %v1863, 1.442695
    %v1871 = vpow.pop %v1870
    %v1872 = vsel %vm1365, %v1865, 0.0
    %v1873 = vsel %vm1365, %v1867, 0.0
    %v1874 = vadd.f32 %v1872, %v1873
    %v1875 = vsel %vm1365, %v1869, 0.0
    %v1876 = vadd.f32 %v1874, %v1875
    %v1877 = vsel %vm1365, %v1871, 0.0
    %v1878 = vadd.f32 %v1876, %v1877
    %v1879 = vrcp.pop %v1878
    %v1880 = vmul.f32 %v1865, %v1879
    %v1881 = vmul.f32 %v1867, %v1879
    %v1882 = vmul.f32 %v1869, %v1879
    %v1883 = vmul.f32 %v1871, %v1879
    %v1884 = vpack.c.bf16 %v1881, %v1880
    %v1885 = vpack.c.bf16 %v1883, %v1882
    %v1887 = vsel %vm1365, %v1884, 0
    %v1890 = vsel %vm1365, %v1885, 0
    %1892 = vmatprep.subr.bf16.mxu0 0
    %1893 = vmatpush1.bf16.msra.mxu0 %v1407
    %1894 = vmatprep.subr.bf16.mxu0 0
    %1895 = vmatpush1.bf16.msra.mxu0 0
    %1896 = vmatprep.subr.bf16.mxu0 0
    %1897 = vmatpush1.bf16.msra.mxu0 0
    %1898 = vmatprep.subr.bf16.mxu0 0
    %1899 = vmatpush1.bf16.msra.mxu0 0
    %1900 = vmatprep.subr.bf16.mxu0 0
    %1901 = vmatpush1.bf16.msra.mxu0 0
    %1902 = vmatprep.subr.bf16.mxu0 0
    %1903 = vmatpush1.bf16.msra.mxu0 0
    %1904 = vmatprep.subr.bf16.mxu0 0
    %1905 = vmatpush1.bf16.msra.mxu0 0
    %1906 = vmatprep.subr.bf16.mxu0 0
    %1907 = vmatpush1.bf16.msra.mxu0 0
    %1908 = vmatprep.subr.bf16.mxu0 0
    %1909 = vmatpush1.bf16.msra.mxu0 0
    %1910 = vmatprep.subr.bf16.mxu0 0
    %1911 = vmatpush1.bf16.msra.mxu0 0
    %1912 = vmatprep.subr.bf16.mxu0 0
    %1913 = vmatpush1.bf16.msra.mxu0 0
    %1914 = vmatprep.subr.bf16.mxu0 0
    %1915 = vmatpush1.bf16.msra.mxu0 0
    %1916 = vmatprep.subr.bf16.mxu0 0
    %1917 = vmatpush1.bf16.msra.mxu0 0
    %1918 = vmatprep.subr.bf16.mxu0 0
    %1919 = vmatpush1.bf16.msra.mxu0 0
    %1920 = vmatprep.subr.bf16.mxu0 0
    %1921 = vmatpush1.bf16.msra.mxu0 0
    %1922 = vmatprep.subr.bf16.mxu0 0
    %1923 = vmatpush1.bf16.msra.mxu0 0
    %1924 = vmatprep.mubr.bf16.mxu0 0
    %1925 = vmatmul.mubr.bf16.gmra.mrb[0].mxu0 %v1887
    %v1926 = vpop.f32.mrb[0].mxu0
    %v1927 = vadd.f32 0.0, %v1926
    %v1928 = vpop.f32.mrb[0].mxu0
    %v1929 = vpop.f32.mrb[0].mxu0
    %v1930 = vadd.f32 0.0, %v1929
    %v1931 = vpop.f32.mrb[0].mxu0
    %1932 = vmatprep.mubr.bf16.mxu0 0
    %1933 = vmatmul.mubr.bf16.gmra.mrb[0].mxu0 %v1890
    %v1934 = vpop.f32.mrb[0].mxu0
    %v1935 = vadd.f32 0.0, %v1934
    %v1936 = vpop.f32.mrb[0].mxu0
    %v1937 = vpop.f32.mrb[0].mxu0
    %v1938 = vadd.f32 0.0, %v1937
    %v1939 = vpop.f32.mrb[0].mxu0
    %1940 = vdwg.mxu0
    %v1941 = vmul.f32 %v1927, %v1278
    %v1942 = vmul.f32 %v1930, %v1281
    %v1943 = vmul.f32 %v1935, %v1286
    %v1944 = vmul.f32 %v1938, %v1289
    %v1945 = vsel %vm562, %v1941, 0.0
    %v1946 = vsel %vm562, %v1942, 0.0
    %v1947 = vadd.f32 %v1945, %v1946
    %v1948 = vsel %vm562, %v1943, 0.0
    %v1949 = vadd.f32 %v1947, %v1948
    %v1950 = vsel %vm562, %v1944, 0.0
    %v1951 = vadd.f32 %v1949, %v1950
    %1952 = vst.msk [vmem:[#allocation2 + $0x18] sm:$0xff] %vm562, %v1951
    %v1953 = vld [vmem:[#allocation2] sm:$0xff]
    %v1954 = vld [vmem:[#allocation2 + $0x8] sm:$0xff]
    %v1955 = vld [vmem:[#allocation2 + $0x10] sm:$0xff]
    %v1956 = vld [vmem:[#allocation2 + $0x18] sm:$0xff]
    %v1957 = vld [vmem:[#allocation30] sm:$0xf]
    %v1958 = vld [vmem:[#allocation30 + $0x4] sm:$0xf]
    %v1959 = vld [vmem:[#allocation30 + $0x8] sm:$0xf]
    %v1960 = vld [vmem:[#allocation30 + $0xc] sm:$0xf]
    %v1961 = vpack.c.bf16 %v1954, %v1953
    %v1962 = vpack.c.bf16 %v1956, %v1955
    %v1963 = vld [vmem:[#allocation31] sm:$0x1]
    %v1965 = vlaneseq
    %v1966 = vshrl.u32 %v1965, 7
    %v1967 = vsub.s32 0, %v1966
    %v1968 = vrot.slane %v1963, %v1967
    %v1974 = vunpack.c.l.b16 %v1957
    %v1975 = vunpack.c.l.b16 %v1958
    %v1976 = vunpack.c.l.b16 %v1959
    %v1977 = vunpack.c.l.b16 %v1960
    %v1978 = vpack.c.b16 %v1975, %v1974
    %v1979 = vpack.c.b16 %v1977, %v1976
    %v1983 = vsel %vm562, %v1961, 0
    %v1986 = vsel %vm562, %v1962, 0
    %1988 = vmatprep.subr.bf16.mxu0 0
    %1989 = vmatpush1.bf16.msra.mxu0 %v1978
    %1990 = vmatprep.subr.bf16.mxu0 0
    %1991 = vmatpush1.bf16.msra.mxu0 %v1979
    %1992 = vmatprep.subr.bf16.mxu0 0
    %1993 = vmatpush1.bf16.msra.mxu0 0
    %1994 = vmatprep.subr.bf16.mxu0 0
    %1995 = vmatpush1.bf16.msra.mxu0 0
    %1996 = vmatprep.subr.bf16.mxu0 0
    %1997 = vmatpush1.bf16.msra.mxu0 0
    %1998 = vmatprep.subr.bf16.mxu0 0
    %1999 = vmatpush1.bf16.msra.mxu0 0
    %2000 = vmatprep.subr.bf16.mxu0 0
    %2001 = vmatpush1.bf16.msra.mxu0 0
    %2002 = vmatprep.subr.bf16.mxu0 0
    %2003 = vmatpush1.bf16.msra.mxu0 0
    %2004 = vmatprep.subr.bf16.mxu0 0
    %2005 = vmatpush1.bf16.msra.mxu0 0
    %2006 = vmatprep.subr.bf16.mxu0 0
    %2007 = vmatpush1.bf16.msra.mxu0 0
    %2008 = vmatprep.subr.bf16.mxu0 0
    %2009 = vmatpush1.bf16.msra.mxu0 0
    %2010 = vmatprep.subr.bf16.mxu0 0
    %2011 = vmatpush1.bf16.msra.mxu0 0
    %2012 = vmatprep.subr.bf16.mxu0 0
    %2013 = vmatpush1.bf16.msra.mxu0 0
    %2014 = vmatprep.subr.bf16.mxu0 0
    %2015 = vmatpush1.bf16.msra.mxu0 0
    %2016 = vmatprep.subr.bf16.mxu0 0
    %2017 = vmatpush1.bf16.msra.mxu0 0
    %2018 = vmatprep.subr.bf16.mxu0 0
    %2019 = vmatpush1.bf16.msra.mxu0 0
    %2020 = vmatprep.mubr.bf16.mxu0 0
    %2021 = vmatmul.mubr.bf16.gmra.mrb[0].mxu0 %v1983
    %v2022 = vpop.f32.mrb[0].mxu0
    %v2023 = vadd.f32 %v1968, %v2022
    %v2024 = vpop.f32.mrb[0].mxu0
    %v2025 = vpop.f32.mrb[0].mxu0
    %v2026 = vadd.f32 %v1968, %v2025
    %v2027 = vpop.f32.mrb[0].mxu0
    %2028 = vmatprep.mubr.bf16.mxu0 0
    %2029 = vmatmul.mubr.bf16.gmra.mrb[0].mxu0 %v1986
    %v2030 = vpop.f32.mrb[0].mxu0
    %v2031 = vadd.f32 %v1968, %v2030
    %v2032 = vpop.f32.mrb[0].mxu0
    %v2033 = vpop.f32.mrb[0].mxu0
    %v2034 = vadd.f32 %v1968, %v2033
    %v2035 = vpop.f32.mrb[0].mxu0
    %2036 = vdwg.mxu0
    %v2037 = vmul.f32 %v2023, %v2023
    %v2038 = vmul.f32 %v2026, %v2026
    %v2039 = vmul.f32 %v2031, %v2031
    %v2040 = vmul.f32 %v2034, %v2034
    %v2041 = vsel %vm562, %v2037, 0.0
    %2042 = vadd.xlane.f32.xlu0 %v2041
    %v2043 = vpop.xlane.xlu0 %2042
    %v2044 = vsel %vm562, %v2038, 0.0
    %2045 = vadd.xlane.f32.xlu0 %v2044
    %v2046 = vpop.xlane.xlu0 %2045
    %v2047 = vsel %vm562, %v2039, 0.0
    %2048 = vadd.xlane.f32.xlu0 %v2047
    %v2049 = vpop.xlane.xlu0 %2048
    %v2050 = vsel %vm562, %v2040, 0.0
    %2051 = vadd.xlane.f32.xlu0 %v2050
    %v2052 = vpop.xlane.xlu0 %2051
    %v2053 = vmax.f32 %v2043, 1e-24
    %v2054 = vmax.f32 %v2046, 1e-24
    %v2055 = vmax.f32 %v2049, 1e-24
    %v2056 = vmax.f32 %v2052, 1e-24
    %v2057 = vrsqrt.pop %v2053
    %v2058 = vrsqrt.pop %v2054
    %v2059 = vrsqrt.pop %v2055
    %v2060 = vrsqrt.pop %v2056
    %v2061 = vmul.f32 %v2023, %v2057
    %v2062 = vmul.f32 %v2026, %v2058
    %v2063 = vmul.f32 %v2031, %v2059
    %v2064 = vmul.f32 %v2034, %v2060
    %s2065 = sld [smem:[#allocation39]]
    %v2066 = vsub.f32 %v2061, %v1060
    %v2067 = vsub.f32 %v2062, %v1061
    %v2068 = vsub.f32 %v2063, %v1062
    %v2069 = vsub.f32 %v2064, %v1063
    %v2070 = vstv %s2065
    %v2071 = vmul.f32 %v2070, %v2066
    %v2072 = vmul.f32 %v2070, %v2067
    %v2073 = vmul.f32 %v2070, %v2068
    %v2074 = vmul.f32 %v2070, %v2069
    %v2075 = vadd.f32 %v1060, %v2071
    %v2076 = vadd.f32 %v1061, %v2072
    %v2077 = vadd.f32 %v1062, %v2073
    %v2078 = vadd.f32 %v1063, %v2074
    %v2079 = vmul.f32 %v2075, %v2075
    %v2080 = vmul.f32 %v2076, %v2076
    %v2081 = vmul.f32 %v2077, %v2077
    %v2082 = vmul.f32 %v2078, %v2078
    %v2083 = vsel %vm562, %v2079, 0.0
    %2084 = vadd.xlane.f32.xlu0 %v2083
    %v2085 = vpop.xlane.xlu0 %2084
    %v2086 = vsel %vm562, %v2080, 0.0
    %2087 = vadd.xlane.f32.xlu0 %v2086
    %v2088 = vpop.xlane.xlu0 %2087
    %v2089 = vsel %vm562, %v2081, 0.0
    %2090 = vadd.xlane.f32.xlu0 %v2089
    %v2091 = vpop.xlane.xlu0 %2090
    %v2092 = vsel %vm562, %v2082, 0.0
    %2093 = vadd.xlane.f32.xlu0 %v2092
    %v2094 = vpop.xlane.xlu0 %2093
    %v2095 = vmax.f32 %v2085, 1e-24
    %v2096 = vmax.f32 %v2088, 1e-24
    %v2097 = vmax.f32 %v2091, 1e-24
    %v2098 = vmax.f32 %v2094, 1e-24
    %v2099 = vrsqrt.pop %v2095
    %v2100 = vrsqrt.pop %v2096
    %v2101 = vrsqrt.pop %v2097
    %v2102 = vrsqrt.pop %v2098
    %v2103 = vmul.f32 %v2075, %v2099
    %v2104 = vmul.f32 %v2076, %v2100
    %v2105 = vmul.f32 %v2077, %v2101
    %v2106 = vmul.f32 %v2078, %v2102
    %v2107 = vld [vmem:[#allocation33] sm:$0xf]
    %v2108 = vld [vmem:[#allocation33 + $0x4] sm:$0xf]
    %v2109 = vld [vmem:[#allocation33 + $0x8] sm:$0xf]
    %v2110 = vld [vmem:[#allocation33 + $0xc] sm:$0xf]
    %v2111 = vpack.c.bf16 %v2104, %v2103
    %v2112 = vpack.c.bf16 %v2106, %v2105
    %v2113 = vld [vmem:[#allocation34] sm:$0x1]
    %v2115 = vlaneseq
    %v2116 = vshrl.u32 %v2115, 7
    %v2117 = vsub.s32 0, %v2116
    %v2118 = vrot.slane %v2113, %v2117
    %v2124 = vunpack.c.l.b16 %v2107
    %v2125 = vunpack.c.l.b16 %v2108
    %v2126 = vunpack.c.l.b16 %v2109
    %v2127 = vunpack.c.l.b16 %v2110
    %v2128 = vpack.c.b16 %v2125, %v2124
    %v2129 = vpack.c.b16 %v2127, %v2126
    %v2133 = vsel %vm562, %v2111, 0
    %v2136 = vsel %vm562, %v2112, 0
    %2138 = vmatprep.subr.bf16.mxu0 0
    %2139 = vmatpush1.bf16.msra.mxu0 %v2128
    %2140 = vmatprep.subr.bf16.mxu0 0
    %2141 = vmatpush1.bf16.msra.mxu0 %v2129
    %2142 = vmatprep.subr.bf16.mxu0 0
    %2143 = vmatpush1.bf16.msra.mxu0 0
    %2144 = vmatprep.subr.bf16.mxu0 0
    %2145 = vmatpush1.bf16.msra.mxu0 0
    %2146 = vmatprep.subr.bf16.mxu0 0
    %2147 = vmatpush1.bf16.msra.mxu0 0
    %2148 = vmatprep.subr.bf16.mxu0 0
    %2149 = vmatpush1.bf16.msra.mxu0 0
    %2150 = vmatprep.subr.bf16.mxu0 0
    %2151 = vmatpush1.bf16.msra.mxu0 0
    %2152 = vmatprep.subr.bf16.mxu0 0
    %2153 = vmatpush1.bf16.msra.mxu0 0
    %2154 = vmatprep.subr.bf16.mxu0 0
    %2155 = vmatpush1.bf16.msra.mxu0 0
    %2156 = vmatprep.subr.bf16.mxu0 0
    %2157 = vmatpush1.bf16.msra.mxu0 0
    %2158 = vmatprep.subr.bf16.mxu0 0
    %2159 = vmatpush1.bf16.msra.mxu0 0
    %2160 = vmatprep.subr.bf16.mxu0 0
    %2161 = vmatpush1.bf16.msra.mxu0 0
    %2162 = vmatprep.subr.bf16.mxu0 0
    %2163 = vmatpush1.bf16.msra.mxu0 0
    %2164 = vmatprep.subr.bf16.mxu0 0
    %2165 = vmatpush1.bf16.msra.mxu0 0
    %2166 = vmatprep.subr.bf16.mxu0 0
    %2167 = vmatpush1.bf16.msra.mxu0 0
    %2168 = vmatprep.subr.bf16.mxu0 0
    %2169 = vmatpush1.bf16.msra.mxu0 0
    %2170 = vmatprep.mubr.bf16.mxu0 0
    %2171 = vmatmul.mubr.bf16.gmra.mrb[0].mxu0 %v2133
    %v2172 = vpop.f32.mrb[0].mxu0
    %v2173 = vadd.f32 %v2118, %v2172
    %v2174 = vpop.f32.mrb[0].mxu0
    %v2175 = vpop.f32.mrb[0].mxu0
    %v2176 = vadd.f32 %v2118, %v2175
    %v2177 = vpop.f32.mrb[0].mxu0
    %2178 = vmatprep.mubr.bf16.mxu0 0
    %2179 = vmatmul.mubr.bf16.gmra.mrb[0].mxu0 %v2136
    %v2180 = vpop.f32.mrb[0].mxu0
    %v2181 = vadd.f32 %v2118, %v2180
    %v2182 = vpop.f32.mrb[0].mxu0
    %v2183 = vpop.f32.mrb[0].mxu0
    %v2184 = vadd.f32 %v2118, %v2183
    %v2185 = vpop.f32.mrb[0].mxu0
    %2186 = vdwg.mxu0
    %v2187 = vmax.f32 %v2173, 0.0
    %v2188 = vmax.f32 %v2176, 0.0
    %v2189 = vmax.f32 %v2181, 0.0
    %v2190 = vmax.f32 %v2184, 0.0
    %v2191 = vld [vmem:[#allocation36] sm:$0xf]
    %v2192 = vld [vmem:[#allocation36 + $0x4] sm:$0xf]
    %v2193 = vld [vmem:[#allocation36 + $0x8] sm:$0xf]
    %v2194 = vld [vmem:[#allocation36 + $0xc] sm:$0xf]
    %v2195 = vld [vmem:[#allocation36 + $0x10] sm:$0xf]
    %v2196 = vld [vmem:[#allocation36 + $0x14] sm:$0xf]
    %v2197 = vld [vmem:[#allocation36 + $0x18] sm:$0xf]
    %v2198 = vld [vmem:[#allocation36 + $0x1c] sm:$0xf]
    %v2199 = vpack.c.bf16 %v2188, %v2187
    %v2200 = vpack.c.bf16 %v2190, %v2189
    %v2201 = vld [vmem:[#allocation37] sm:$0x1]
    %v2203 = vlaneseq
    %v2204 = vshrl.u32 %v2203, 7
    %v2205 = vsub.s32 0, %v2204
    %v2206 = vrot.slane %v2201, %v2205
    %v2216 = vunpack.c.l.b16 %v2191
    %v2217 = vunpack.c.l.b16 %v2192
    %v2218 = vunpack.c.l.b16 %v2193
    %v2219 = vunpack.c.l.b16 %v2194
    %v2220 = vunpack.c.l.b16 %v2195
    %v2221 = vunpack.c.l.b16 %v2196
    %v2222 = vunpack.c.l.b16 %v2197
    %v2223 = vunpack.c.l.b16 %v2198
    %v2224 = vpack.c.b16 %v2217, %v2216
    %v2225 = vpack.c.b16 %v2219, %v2218
    %v2226 = vpack.c.b16 %v2221, %v2220
    %v2227 = vpack.c.b16 %v2223, %v2222
    %vm2232 = vcmask 523264
    %v2234 = vsel %vm2232, %v2199, 0
    %v2237 = vsel %vm2232, %v2200, 0
    %2239 = vmatprep.subr.bf16.mxu0 0
    %2240 = vmatpush1.bf16.msra.mxu0 %v2224
    %2241 = vmatprep.subr.bf16.mxu0 0
    %2242 = vmatpush1.bf16.msra.mxu0 %v2225
    %2243 = vmatprep.subr.bf16.mxu0 0
    %2244 = vmatpush1.bf16.msra.mxu0 %v2226
    %2245 = vmatprep.subr.bf16.mxu0 0
    %2246 = vmatpush1.bf16.msra.mxu0 %v2227
    %2247 = vmatprep.subr.bf16.mxu0 0
    %2248 = vmatpush1.bf16.msra.mxu0 0
    %2249 = vmatprep.subr.bf16.mxu0 0
    %2250 = vmatpush1.bf16.msra.mxu0 0
    %2251 = vmatprep.subr.bf16.mxu0 0
    %2252 = vmatpush1.bf16.msra.mxu0 0
    %2253 = vmatprep.subr.bf16.mxu0 0
    %2254 = vmatpush1.bf16.msra.mxu0 0
    %2255 = vmatprep.subr.bf16.mxu0 0
    %2256 = vmatpush1.bf16.msra.mxu0 0
    %2257 = vmatprep.subr.bf16.mxu0 0
    %2258 = vmatpush1.bf16.msra.mxu0 0
    %2259 = vmatprep.subr.bf16.mxu0 0
    %2260 = vmatpush1.bf16.msra.mxu0 0
    %2261 = vmatprep.subr.bf16.mxu0 0
    %2262 = vmatpush1.bf16.msra.mxu0 0
    %2263 = vmatprep.subr.bf16.mxu0 0
    %2264 = vmatpush1.bf16.msra.mxu0 0
    %2265 = vmatprep.subr.bf16.mxu0 0
    %2266 = vmatpush1.bf16.msra.mxu0 0
    %2267 = vmatprep.subr.bf16.mxu0 0
    %2268 = vmatpush1.bf16.msra.mxu0 0
    %2269 = vmatprep.subr.bf16.mxu0 0
    %2270 = vmatpush1.bf16.msra.mxu0 0
    %2271 = vmatprep.mubr.bf16.mxu0 0
    %2272 = vmatmul.mubr.bf16.gmra.mrb[0].mxu0 %v2234
    %v2273 = vpop.f32.mrb[0].mxu0
    %v2274 = vadd.f32 %v2206, %v2273
    %v2275 = vpop.f32.mrb[0].mxu0
    %v2276 = vpop.f32.mrb[0].mxu0
    %v2277 = vadd.f32 %v2206, %v2276
    %v2278 = vpop.f32.mrb[0].mxu0
    %2279 = vmatprep.mubr.bf16.mxu0 0
    %2280 = vmatmul.mubr.bf16.gmra.mrb[0].mxu0 %v2237
    %v2281 = vpop.f32.mrb[0].mxu0
    %v2282 = vadd.f32 %v2206, %v2281
    %v2283 = vpop.f32.mrb[0].mxu0
    %v2284 = vpop.f32.mrb[0].mxu0
    %v2285 = vadd.f32 %v2206, %v2284
    %v2286 = vpop.f32.mrb[0].mxu0
    %2287 = vdwg.mxu0
    %v2288 = vmul.f32 %v2274, %v2274
    %v2289 = vmul.f32 %v2277, %v2277
    %v2290 = vmul.f32 %v2282, %v2282
    %v2291 = vmul.f32 %v2285, %v2285
    %v2292 = vsel %vm562, %v2288, 0.0
    %2293 = vadd.xlane.f32.xlu0 %v2292
    %v2294 = vpop.xlane.xlu0 %2293
    %v2295 = vsel %vm562, %v2289, 0.0
    %2296 = vadd.xlane.f32.xlu0 %v2295
    %v2297 = vpop.xlane.xlu0 %2296
    %v2298 = vsel %vm562, %v2290, 0.0
    %2299 = vadd.xlane.f32.xlu0 %v2298
    %v2300 = vpop.xlane.xlu0 %2299
    %v2301 = vsel %vm562, %v2291, 0.0
    %2302 = vadd.xlane.f32.xlu0 %v2301
    %v2303 = vpop.xlane.xlu0 %2302
    %v2304 = vmax.f32 %v2294, 1e-24
    %v2305 = vmax.f32 %v2297, 1e-24
    %v2306 = vmax.f32 %v2300, 1e-24
    %v2307 = vmax.f32 %v2303, 1e-24
    %v2308 = vrsqrt.pop %v2304
    %v2309 = vrsqrt.pop %v2305
    %v2310 = vrsqrt.pop %v2306
    %v2311 = vrsqrt.pop %v2307
    %v2312 = vmul.f32 %v2274, %v2308
    %v2313 = vmul.f32 %v2277, %v2309
    %v2314 = vmul.f32 %v2282, %v2310
    %v2315 = vmul.f32 %v2285, %v2311
    %s2316 = sld [smem:[#allocation40]]
    %v2317 = vsub.f32 %v2312, %v2103
    %v2318 = vsub.f32 %v2313, %v2104
    %v2319 = vsub.f32 %v2314, %v2105
    %v2320 = vsub.f32 %v2315, %v2106
    %v2321 = vstv %s2316
    %v2322 = vmul.f32 %v2321, %v2317
    %v2323 = vmul.f32 %v2321, %v2318
    %v2324 = vmul.f32 %v2321, %v2319
    %v2325 = vmul.f32 %v2321, %v2320
    %v2326 = vadd.f32 %v2103, %v2322
    %v2327 = vadd.f32 %v2104, %v2323
    %v2328 = vadd.f32 %v2105, %v2324
    %v2329 = vadd.f32 %v2106, %v2325
    %v2330 = vmul.f32 %v2326, %v2326
    %v2331 = vmul.f32 %v2327, %v2327
    %v2332 = vmul.f32 %v2328, %v2328
    %v2333 = vmul.f32 %v2329, %v2329
    %v2334 = vsel %vm562, %v2330, 0.0
    %2335 = vadd.xlane.f32.xlu0 %v2334
    %v2336 = vpop.xlane.xlu0 %2335
    %v2337 = vsel %vm562, %v2331, 0.0
    %2338 = vadd.xlane.f32.xlu0 %v2337
    %v2339 = vpop.xlane.xlu0 %2338
    %v2340 = vsel %vm562, %v2332, 0.0
    %2341 = vadd.xlane.f32.xlu0 %v2340
    %v2342 = vpop.xlane.xlu0 %2341
    %v2343 = vsel %vm562, %v2333, 0.0
    %2344 = vadd.xlane.f32.xlu0 %v2343
    %v2345 = vpop.xlane.xlu0 %2344
    %v2346 = vmax.f32 %v2336, 1e-24
    %v2347 = vmax.f32 %v2339, 1e-24
    %v2348 = vmax.f32 %v2342, 1e-24
    %v2349 = vmax.f32 %v2345, 1e-24
    %v2350 = vrsqrt.pop %v2346
    %v2351 = vrsqrt.pop %v2347
    %v2352 = vrsqrt.pop %v2348
    %v2353 = vrsqrt.pop %v2349
    %v2354 = vmul.f32 %v2326, %v2350
    %v2355 = vmul.f32 %v2327, %v2351
    %v2356 = vmul.f32 %v2328, %v2352
    %v2357 = vmul.f32 %v2329, %v2353
    %v2358 = vmul.f32 %v2354, %v2354
    %v2359 = vmul.f32 %v2355, %v2355
    %v2360 = vmul.f32 %v2356, %v2356
    %v2361 = vmul.f32 %v2357, %v2357
    %v2362 = vsel %vm562, %v2358, 0.0
    %2363 = vadd.xlane.f32.xlu0 %v2362
    %v2364 = vpop.xlane.xlu0 %2363
    %v2365 = vsel %vm562, %v2359, 0.0
    %2366 = vadd.xlane.f32.xlu0 %v2365
    %v2367 = vpop.xlane.xlu0 %2366
    %v2368 = vsel %vm562, %v2360, 0.0
    %2369 = vadd.xlane.f32.xlu0 %v2368
    %v2370 = vpop.xlane.xlu0 %2369
    %v2371 = vsel %vm562, %v2361, 0.0
    %2372 = vadd.xlane.f32.xlu0 %v2371
    %v2373 = vpop.xlane.xlu0 %2372
    %v2374 = vmax.f32 %v2364, 1e-24
    %v2375 = vmax.f32 %v2367, 1e-24
    %v2376 = vmax.f32 %v2370, 1e-24
    %v2377 = vmax.f32 %v2373, 1e-24
    %v2378 = vrsqrt.pop %v2374
    %v2379 = vrsqrt.pop %v2375
    %v2380 = vrsqrt.pop %v2376
    %v2381 = vrsqrt.pop %v2377
    %v2382 = vmul.f32 %v2354, %v2378
    %v2383 = vmul.f32 %v2355, %v2379
    %v2384 = vmul.f32 %v2356, %v2380
    %v2385 = vmul.f32 %v2357, %v2381
    %s2386 = scalar_lea.vmem [#allocation18], 16
    %v2387 = vld [vmem:[%s2386] sm:$0xf]
    %v2388 = vld [vmem:[%s2386 + $0x4] sm:$0xf]
    %v2389 = vld [vmem:[%s2386 + $0x8] sm:$0xf]
    %v2390 = vld [vmem:[%s2386 + $0xc] sm:$0xf]
    %v2391 = vpack.c.bf16 %v2383, %v2382
    %v2392 = vpack.c.bf16 %v2385, %v2384
    %s2393 = scalar_lea.vmem [#allocation19], 1
    %v2394 = vld [vmem:[%s2393] sm:$0x1]
    %v2396 = vlaneseq
    %v2397 = vshrl.u32 %v2396, 7
    %v2398 = vsub.s32 0, %v2397
    %v2399 = vrot.slane %v2394, %v2398
    %v2405 = vunpack.c.l.b16 %v2387
    %v2406 = vunpack.c.l.b16 %v2388
    %v2407 = vunpack.c.l.b16 %v2389
    %v2408 = vunpack.c.l.b16 %v2390
    %v2409 = vpack.c.b16 %v2406, %v2405
    %v2410 = vpack.c.b16 %v2408, %v2407
    %v2414 = vsel %vm562, %v2391, 0
    %v2417 = vsel %vm562, %v2392, 0
    %2419 = vmatprep.subr.bf16.mxu0 0
    %2420 = vmatpush1.bf16.msra.mxu0 %v2409
    %2421 = vmatprep.subr.bf16.mxu0 0
    %2422 = vmatpush1.bf16.msra.mxu0 %v2410
    %2423 = vmatprep.subr.bf16.mxu0 0
    %2424 = vmatpush1.bf16.msra.mxu0 0
    %2425 = vmatprep.subr.bf16.mxu0 0
    %2426 = vmatpush1.bf16.msra.mxu0 0
    %2427 = vmatprep.subr.bf16.mxu0 0
    %2428 = vmatpush1.bf16.msra.mxu0 0
    %2429 = vmatprep.subr.bf16.mxu0 0
    %2430 = vmatpush1.bf16.msra.mxu0 0
    %2431 = vmatprep.subr.bf16.mxu0 0
    %2432 = vmatpush1.bf16.msra.mxu0 0
    %2433 = vmatprep.subr.bf16.mxu0 0
    %2434 = vmatpush1.bf16.msra.mxu0 0
    %2435 = vmatprep.subr.bf16.mxu0 0
    %2436 = vmatpush1.bf16.msra.mxu0 0
    %2437 = vmatprep.subr.bf16.mxu0 0
    %2438 = vmatpush1.bf16.msra.mxu0 0
    %2439 = vmatprep.subr.bf16.mxu0 0
    %2440 = vmatpush1.bf16.msra.mxu0 0
    %2441 = vmatprep.subr.bf16.mxu0 0
    %2442 = vmatpush1.bf16.msra.mxu0 0
    %2443 = vmatprep.subr.bf16.mxu0 0
    %2444 = vmatpush1.bf16.msra.mxu0 0
    %2445 = vmatprep.subr.bf16.mxu0 0
    %2446 = vmatpush1.bf16.msra.mxu0 0
    %2447 = vmatprep.subr.bf16.mxu0 0
    %2448 = vmatpush1.bf16.msra.mxu0 0
    %2449 = vmatprep.subr.bf16.mxu0 0
    %2450 = vmatpush1.bf16.msra.mxu0 0
    %2451 = vmatprep.mubr.bf16.mxu0 0
    %2452 = vmatmul.mubr.bf16.gmra.mrb[0].mxu0 %v2414
    %v2453 = vpop.f32.mrb[0].mxu0
    %v2454 = vadd.f32 %v2399, %v2453
    %v2455 = vpop.f32.mrb[0].mxu0
    %v2456 = vpop.f32.mrb[0].mxu0
    %v2457 = vadd.f32 %v2399, %v2456
    %v2458 = vpop.f32.mrb[0].mxu0
    %2459 = vmatprep.mubr.bf16.mxu0 0
    %2460 = vmatmul.mubr.bf16.gmra.mrb[0].mxu0 %v2417
    %v2461 = vpop.f32.mrb[0].mxu0
    %v2462 = vadd.f32 %v2399, %v2461
    %v2463 = vpop.f32.mrb[0].mxu0
    %v2464 = vpop.f32.mrb[0].mxu0
    %v2465 = vadd.f32 %v2399, %v2464
    %v2466 = vpop.f32.mrb[0].mxu0
    %2467 = vdwg.mxu0
    %v2468 = vmul.f32 %v2454, 0.35355338
    %v2469 = vmul.f32 %v2457, 0.35355338
    %v2470 = vmul.f32 %v2462, 0.35355338
    %v2471 = vmul.f32 %v2465, 0.35355338
    %s2472 = scalar_lea.vmem [#allocation21], 16
    %v2473 = vld [vmem:[%s2472] sm:$0xf]
    %v2474 = vld [vmem:[%s2472 + $0x4] sm:$0xf]
    %v2475 = vld [vmem:[%s2472 + $0x8] sm:$0xf]
    %v2476 = vld [vmem:[%s2472 + $0xc] sm:$0xf]
    %s2477 = scalar_lea.vmem [#allocation22], 1
    %v2478 = vld [vmem:[%s2477] sm:$0x1]
    %v2480 = vlaneseq
    %v2481 = vshrl.u32 %v2480, 7
    %v2482 = vsub.s32 0, %v2481
    %v2483 = vrot.slane %v2478, %v2482
    %v2489 = vunpack.c.l.b16 %v2473
    %v2490 = vunpack.c.l.b16 %v2474
    %v2491 = vunpack.c.l.b16 %v2475
    %v2492 = vunpack.c.l.b16 %v2476
    %v2493 = vpack.c.b16 %v2490, %v2489
    %v2494 = vpack.c.b16 %v2492, %v2491
    %2497 = vmatprep.subr.bf16.mxu0 0
    %2498 = vmatpush1.bf16.msra.mxu0 %v2493
    %2499 = vmatprep.subr.bf16.mxu0 0
    %2500 = vmatpush1.bf16.msra.mxu0 %v2494
    %2501 = vmatprep.subr.bf16.mxu0 0
    %2502 = vmatpush1.bf16.msra.mxu0 0
    %2503 = vmatprep.subr.bf16.mxu0 0
    %2504 = vmatpush1.bf16.msra.mxu0 0
    %2505 = vmatprep.subr.bf16.mxu0 0
    %2506 = vmatpush1.bf16.msra.mxu0 0
    %2507 = vmatprep.subr.bf16.mxu0 0
    %2508 = vmatpush1.bf16.msra.mxu0 0
    %2509 = vmatprep.subr.bf16.mxu0 0
    %2510 = vmatpush1.bf16.msra.mxu0 0
    %2511 = vmatprep.subr.bf16.mxu0 0
    %2512 = vmatpush1.bf16.msra.mxu0 0
    %2513 = vmatprep.subr.bf16.mxu0 0
    %2514 = vmatpush1.bf16.msra.mxu0 0
    %2515 = vmatprep.subr.bf16.mxu0 0
    %2516 = vmatpush1.bf16.msra.mxu0 0
    %2517 = vmatprep.subr.bf16.mxu0 0
    %2518 = vmatpush1.bf16.msra.mxu0 0
    %2519 = vmatprep.subr.bf16.mxu0 0
    %2520 = vmatpush1.bf16.msra.mxu0 0
    %2521 = vmatprep.subr.bf16.mxu0 0
    %2522 = vmatpush1.bf16.msra.mxu0 0
    %2523 = vmatprep.subr.bf16.mxu0 0
    %2524 = vmatpush1.bf16.msra.mxu0 0
    %2525 = vmatprep.subr.bf16.mxu0 0
    %2526 = vmatpush1.bf16.msra.mxu0 0
    %2527 = vmatprep.subr.bf16.mxu0 0
    %2528 = vmatpush1.bf16.msra.mxu0 0
    %2529 = vmatprep.mubr.bf16.mxu0 0
    %2530 = vmatmul.mubr.bf16.gmra.mrb[0].mxu0 %v2414
    %v2531 = vpop.f32.mrb[0].mxu0
    %v2532 = vadd.f32 %v2483, %v2531
    %v2533 = vpop.f32.mrb[0].mxu0
    %v2534 = vpop.f32.mrb[0].mxu0
    %v2535 = vadd.f32 %v2483, %v2534
    %v2536 = vpop.f32.mrb[0].mxu0
    %2537 = vmatprep.mubr.bf16.mxu0 0
    %2538 = vmatmul.mubr.bf16.gmra.mrb[0].mxu0 %v2417
    %v2539 = vpop.f32.mrb[0].mxu0
    %v2540 = vadd.f32 %v2483, %v2539
    %v2541 = vpop.f32.mrb[0].mxu0
    %v2542 = vpop.f32.mrb[0].mxu0
    %v2543 = vadd.f32 %v2483, %v2542
    %v2544 = vpop.f32.mrb[0].mxu0
    %2545 = vdwg.mxu0
    %s2546 = scalar_lea.vmem [#allocation24], 16
    %v2547 = vld [vmem:[%s2546] sm:$0xf]
    %v2548 = vld [vmem:[%s2546 + $0x4] sm:$0xf]
    %v2549 = vld [vmem:[%s2546 + $0x8] sm:$0xf]
    %v2550 = vld [vmem:[%s2546 + $0xc] sm:$0xf]
    %s2551 = scalar_lea.vmem [#allocation25], 1
    %v2552 = vld [vmem:[%s2551] sm:$0x1]
    %v2554 = vlaneseq
    %v2555 = vshrl.u32 %v2554, 7
    %v2556 = vsub.s32 0, %v2555
    %v2557 = vrot.slane %v2552, %v2556
    %v2563 = vunpack.c.l.b16 %v2547
    %v2564 = vunpack.c.l.b16 %v2548
    %v2565 = vunpack.c.l.b16 %v2549
    %v2566 = vunpack.c.l.b16 %v2550
    %v2567 = vpack.c.b16 %v2564, %v2563
    %v2568 = vpack.c.b16 %v2566, %v2565
    %2571 = vmatprep.subr.bf16.mxu0 0
    %2572 = vmatpush1.bf16.msra.mxu0 %v2567
    %2573 = vmatprep.subr.bf16.mxu0 0
    %2574 = vmatpush1.bf16.msra.mxu0 %v2568
    %2575 = vmatprep.subr.bf16.mxu0 0
    %2576 = vmatpush1.bf16.msra.mxu0 0
    %2577 = vmatprep.subr.bf16.mxu0 0
    %2578 = vmatpush1.bf16.msra.mxu0 0
    %2579 = vmatprep.subr.bf16.mxu0 0
    %2580 = vmatpush1.bf16.msra.mxu0 0
    %2581 = vmatprep.subr.bf16.mxu0 0
    %2582 = vmatpush1.bf16.msra.mxu0 0
    %2583 = vmatprep.subr.bf16.mxu0 0
    %2584 = vmatpush1.bf16.msra.mxu0 0
    %2585 = vmatprep.subr.bf16.mxu0 0
    %2586 = vmatpush1.bf16.msra.mxu0 0
    %2587 = vmatprep.subr.bf16.mxu0 0
    %2588 = vmatpush1.bf16.msra.mxu0 0
    %2589 = vmatprep.subr.bf16.mxu0 0
    %2590 = vmatpush1.bf16.msra.mxu0 0
    %2591 = vmatprep.subr.bf16.mxu0 0
    %2592 = vmatpush1.bf16.msra.mxu0 0
    %2593 = vmatprep.subr.bf16.mxu0 0
    %2594 = vmatpush1.bf16.msra.mxu0 0
    %2595 = vmatprep.subr.bf16.mxu0 0
    %2596 = vmatpush1.bf16.msra.mxu0 0
    %2597 = vmatprep.subr.bf16.mxu0 0
    %2598 = vmatpush1.bf16.msra.mxu0 0
    %2599 = vmatprep.subr.bf16.mxu0 0
    %2600 = vmatpush1.bf16.msra.mxu0 0
    %2601 = vmatprep.subr.bf16.mxu0 0
    %2602 = vmatpush1.bf16.msra.mxu0 0
    %2603 = vmatprep.mubr.bf16.mxu0 0
    %2604 = vmatmul.mubr.bf16.gmra.mrb[0].mxu0 %v2414
    %v2605 = vpop.f32.mrb[0].mxu0
    %v2606 = vadd.f32 %v2557, %v2605
    %v2607 = vpop.f32.mrb[0].mxu0
    %v2608 = vpop.f32.mrb[0].mxu0
    %v2609 = vadd.f32 %v2557, %v2608
    %v2610 = vpop.f32.mrb[0].mxu0
    %2611 = vmatprep.mubr.bf16.mxu0 0
    %2612 = vmatmul.mubr.bf16.gmra.mrb[0].mxu0 %v2417
    %v2613 = vpop.f32.mrb[0].mxu0
    %v2614 = vadd.f32 %v2557, %v2613
    %v2615 = vpop.f32.mrb[0].mxu0
    %v2616 = vpop.f32.mrb[0].mxu0
    %v2617 = vadd.f32 %v2557, %v2616
    %v2618 = vpop.f32.mrb[0].mxu0
    %2619 = vdwg.mxu0
    %v2620 = vmul.f32 %v2532, %v2468
    %v2621 = vmul.f32 %v2535, %v2468
    %v2622 = vmul.f32 %v2540, %v2468
    %v2623 = vmul.f32 %v2543, %v2468
    %v2624 = vpack.c.bf16 %v2621, %v2620
    %v2625 = vpack.c.bf16 %v2623, %v2622
    %v2627 = vsel %vm562, %v2624, 0
    %v2630 = vsel %vm562, %v2625, 0
    %2632 = vmatprep.subr.bf16.mxu0 0
    %2633 = vmatpush1.bf16.msra.mxu0 %v1306
    %2634 = vmatprep.subr.bf16.mxu0 0
    %2635 = vmatpush1.bf16.msra.mxu0 %v1307
    %2636 = vmatprep.subr.bf16.mxu0 0
    %2637 = vmatpush1.bf16.msra.mxu0 0
    %2638 = vmatprep.subr.bf16.mxu0 0
    %2639 = vmatpush1.bf16.msra.mxu0 0
    %2640 = vmatprep.subr.bf16.mxu0 0
    %2641 = vmatpush1.bf16.msra.mxu0 0
    %2642 = vmatprep.subr.bf16.mxu0 0
    %2643 = vmatpush1.bf16.msra.mxu0 0
    %2644 = vmatprep.subr.bf16.mxu0 0
    %2645 = vmatpush1.bf16.msra.mxu0 0
    %2646 = vmatprep.subr.bf16.mxu0 0
    %2647 = vmatpush1.bf16.msra.mxu0 0
    %2648 = vmatprep.subr.bf16.mxu0 0
    %2649 = vmatpush1.bf16.msra.mxu0 0
    %2650 = vmatprep.subr.bf16.mxu0 0
    %2651 = vmatpush1.bf16.msra.mxu0 0
    %2652 = vmatprep.subr.bf16.mxu0 0
    %2653 = vmatpush1.bf16.msra.mxu0 0
    %2654 = vmatprep.subr.bf16.mxu0 0
    %2655 = vmatpush1.bf16.msra.mxu0 0
    %2656 = vmatprep.subr.bf16.mxu0 0
    %2657 = vmatpush1.bf16.msra.mxu0 0
    %2658 = vmatprep.subr.bf16.mxu0 0
    %2659 = vmatpush1.bf16.msra.mxu0 0
    %2660 = vmatprep.subr.bf16.mxu0 0
    %2661 = vmatpush1.bf16.msra.mxu0 0
    %2662 = vmatprep.subr.bf16.mxu0 0
    %2663 = vmatpush1.bf16.msra.mxu0 0
    %2664 = vmatprep.mubr.bf16.mxu0 0
    %2665 = vmatmul.mubr.bf16.gmra.mrb[0].mxu0 %v2627
    %v2666 = vpop.f32.mrb[0].mxu0
    %v2667 = vadd.f32 0.0, %v2666
    %v2668 = vpop.f32.mrb[0].mxu0
    %v2669 = vpop.f32.mrb[0].mxu0
    %v2670 = vadd.f32 0.0, %v2669
    %v2671 = vpop.f32.mrb[0].mxu0
    %2672 = vmatprep.mubr.bf16.mxu0 0
    %2673 = vmatmul.mubr.bf16.gmra.mrb[0].mxu0 %v2630
    %v2674 = vpop.f32.mrb[0].mxu0
    %v2675 = vadd.f32 0.0, %v2674
    %v2676 = vpop.f32.mrb[0].mxu0
    %v2677 = vpop.f32.mrb[0].mxu0
    %v2678 = vadd.f32 0.0, %v2677
    %v2679 = vpop.f32.mrb[0].mxu0
    %2680 = vdwg.mxu0
    %v2681 = vsel %vm1365, %v2667, -inf
    %v2682 = vsel %vm1365, %v2670, -inf
    %v2683 = vsel %vm1365, %v2675, -inf
    %v2684 = vsel %vm1365, %v2678, -inf
    %v2685 = vmax.f32 %v2681, %v2682
    %v2686 = vmax.f32 %v2683, %v2684
    %v2687 = vmax.f32 %v2685, %v2686
    %v2688 = vsub.f32 %v2667, %v2687
    %v2689 = vsub.f32 %v2670, %v2687
    %v2690 = vsub.f32 %v2675, %v2687
    %v2691 = vsub.f32 %v2678, %v2687
    %v2692 = vmul.f32 %v2688, 1.442695
    %v2693 = vpow.pop %v2692
    %v2694 = vmul.f32 %v2689, 1.442695
    %v2695 = vpow.pop %v2694
    %v2696 = vmul.f32 %v2690, 1.442695
    %v2697 = vpow.pop %v2696
    %v2698 = vmul.f32 %v2691, 1.442695
    %v2699 = vpow.pop %v2698
    %v2700 = vsel %vm1365, %v2693, 0.0
    %v2701 = vsel %vm1365, %v2695, 0.0
    %v2702 = vadd.f32 %v2700, %v2701
    %v2703 = vsel %vm1365, %v2697, 0.0
    %v2704 = vadd.f32 %v2702, %v2703
    %v2705 = vsel %vm1365, %v2699, 0.0
    %v2706 = vadd.f32 %v2704, %v2705
    %v2707 = vrcp.pop %v2706
    %v2708 = vmul.f32 %v2693, %v2707
    %v2709 = vmul.f32 %v2695, %v2707
    %v2710 = vmul.f32 %v2697, %v2707
    %v2711 = vmul.f32 %v2699, %v2707
    %v2712 = vpack.c.bf16 %v2709, %v2708
    %v2713 = vpack.c.bf16 %v2711, %v2710
    %v2715 = vsel %vm1365, %v2712, 0
    %v2718 = vsel %vm1365, %v2713, 0
    %2720 = vmatprep.subr.bf16.mxu0 0
    %2721 = vmatpush1.bf16.msra.mxu0 %v1407
    %2722 = vmatprep.subr.bf16.mxu0 0
    %2723 = vmatpush1.bf16.msra.mxu0 0
    %2724 = vmatprep.subr.bf16.mxu0 0
    %2725 = vmatpush1.bf16.msra.mxu0 0
    %2726 = vmatprep.subr.bf16.mxu0 0
    %2727 = vmatpush1.bf16.msra.mxu0 0
    %2728 = vmatprep.subr.bf16.mxu0 0
    %2729 = vmatpush1.bf16.msra.mxu0 0
    %2730 = vmatprep.subr.bf16.mxu0 0
    %2731 = vmatpush1.bf16.msra.mxu0 0
    %2732 = vmatprep.subr.bf16.mxu0 0
    %2733 = vmatpush1.bf16.msra.mxu0 0
    %2734 = vmatprep.subr.bf16.mxu0 0
    %2735 = vmatpush1.bf16.msra.mxu0 0
    %2736 = vmatprep.subr.bf16.mxu0 0
    %2737 = vmatpush1.bf16.msra.mxu0 0
    %2738 = vmatprep.subr.bf16.mxu0 0
    %2739 = vmatpush1.bf16.msra.mxu0 0
    %2740 = vmatprep.subr.bf16.mxu0 0
    %2741 = vmatpush1.bf16.msra.mxu0 0
    %2742 = vmatprep.subr.bf16.mxu0 0
    %2743 = vmatpush1.bf16.msra.mxu0 0
    %2744 = vmatprep.subr.bf16.mxu0 0
    %2745 = vmatpush1.bf16.msra.mxu0 0
    %2746 = vmatprep.subr.bf16.mxu0 0
    %2747 = vmatpush1.bf16.msra.mxu0 0
    %2748 = vmatprep.subr.bf16.mxu0 0
    %2749 = vmatpush1.bf16.msra.mxu0 0
    %2750 = vmatprep.subr.bf16.mxu0 0
    %2751 = vmatpush1.bf16.msra.mxu0 0
    %2752 = vmatprep.mubr.bf16.mxu0 0
    %2753 = vmatmul.mubr.bf16.gmra.mrb[0].mxu0 %v2715
    %v2754 = vpop.f32.mrb[0].mxu0
    %v2755 = vadd.f32 0.0, %v2754
    %v2756 = vpop.f32.mrb[0].mxu0
    %v2757 = vpop.f32.mrb[0].mxu0
    %v2758 = vadd.f32 0.0, %v2757
    %v2759 = vpop.f32.mrb[0].mxu0
    %2760 = vmatprep.mubr.bf16.mxu0 0
    %2761 = vmatmul.mubr.bf16.gmra.mrb[0].mxu0 %v2718
    %v2762 = vpop.f32.mrb[0].mxu0
    %v2763 = vadd.f32 0.0, %v2762
    %v2764 = vpop.f32.mrb[0].mxu0
    %v2765 = vpop.f32.mrb[0].mxu0
    %v2766 = vadd.f32 0.0, %v2765
    %v2767 = vpop.f32.mrb[0].mxu0
    %2768 = vdwg.mxu0
    %v2769 = vmul.f32 %v2755, %v2606
    %v2770 = vmul.f32 %v2758, %v2609
    %v2771 = vmul.f32 %v2763, %v2614
    %v2772 = vmul.f32 %v2766, %v2617
    %v2773 = vsel %vm562, %v2769, 0.0
    %v2774 = vsel %vm562, %v2770, 0.0
    %v2775 = vadd.f32 %v2773, %v2774
    %v2776 = vsel %vm562, %v2771, 0.0
    %v2777 = vadd.f32 %v2775, %v2776
    %v2778 = vsel %vm562, %v2772, 0.0
    %v2779 = vadd.f32 %v2777, %v2778
    %2780 = vst.msk [vmem:[#allocation2] sm:$0xff] %vm562, %v2779
    %v2781 = vmul.f32 %v2532, %v2469
    %v2782 = vmul.f32 %v2535, %v2469
    %v2783 = vmul.f32 %v2540, %v2469
    %v2784 = vmul.f32 %v2543, %v2469
    %v2785 = vpack.c.bf16 %v2782, %v2781
    %v2786 = vpack.c.bf16 %v2784, %v2783
    %v2788 = vsel %vm562, %v2785, 0
    %v2791 = vsel %vm562, %v2786, 0
    %2793 = vmatprep.subr.bf16.mxu0 0
    %2794 = vmatpush1.bf16.msra.mxu0 %v1306
    %2795 = vmatprep.subr.bf16.mxu0 0
    %2796 = vmatpush1.bf16.msra.mxu0 %v1307
    %2797 = vmatprep.subr.bf16.mxu0 0
    %2798 = vmatpush1.bf16.msra.mxu0 0
    %2799 = vmatprep.subr.bf16.mxu0 0
    %2800 = vmatpush1.bf16.msra.mxu0 0
    %2801 = vmatprep.subr.bf16.mxu0 0
    %2802 = vmatpush1.bf16.msra.mxu0 0
    %2803 = vmatprep.subr.bf16.mxu0 0
    %2804 = vmatpush1.bf16.msra.mxu0 0
    %2805 = vmatprep.subr.bf16.mxu0 0
    %2806 = vmatpush1.bf16.msra.mxu0 0
    %2807 = vmatprep.subr.bf16.mxu0 0
    %2808 = vmatpush1.bf16.msra.mxu0 0
    %2809 = vmatprep.subr.bf16.mxu0 0
    %2810 = vmatpush1.bf16.msra.mxu0 0
    %2811 = vmatprep.subr.bf16.mxu0 0
    %2812 = vmatpush1.bf16.msra.mxu0 0
    %2813 = vmatprep.subr.bf16.mxu0 0
    %2814 = vmatpush1.bf16.msra.mxu0 0
    %2815 = vmatprep.subr.bf16.mxu0 0
    %2816 = vmatpush1.bf16.msra.mxu0 0
    %2817 = vmatprep.subr.bf16.mxu0 0
    %2818 = vmatpush1.bf16.msra.mxu0 0
    %2819 = vmatprep.subr.bf16.mxu0 0
    %2820 = vmatpush1.bf16.msra.mxu0 0
    %2821 = vmatprep.subr.bf16.mxu0 0
    %2822 = vmatpush1.bf16.msra.mxu0 0
    %2823 = vmatprep.subr.bf16.mxu0 0
    %2824 = vmatpush1.bf16.msra.mxu0 0
    %2825 = vmatprep.mubr.bf16.mxu0 0
    %2826 = vmatmul.mubr.bf16.gmra.mrb[0].mxu0 %v2788
    %v2827 = vpop.f32.mrb[0].mxu0
    %v2828 = vadd.f32 0.0, %v2827
    %v2829 = vpop.f32.mrb[0].mxu0
    %v2830 = vpop.f32.mrb[0].mxu0
    %v2831 = vadd.f32 0.0, %v2830
    %v2832 = vpop.f32.mrb[0].mxu0
    %2833 = vmatprep.mubr.bf16.mxu0 0
    %2834 = vmatmul.mubr.bf16.gmra.mrb[0].mxu0 %v2791
    %v2835 = vpop.f32.mrb[0].mxu0
    %v2836 = vadd.f32 0.0, %v2835
    %v2837 = vpop.f32.mrb[0].mxu0
    %v2838 = vpop.f32.mrb[0].mxu0
    %v2839 = vadd.f32 0.0, %v2838
    %v2840 = vpop.f32.mrb[0].mxu0
    %2841 = vdwg.mxu0
    %v2842 = vsel %vm1365, %v2828, -inf
    %v2843 = vsel %vm1365, %v2831, -inf
    %v2844 = vsel %vm1365, %v2836, -inf
    %v2845 = vsel %vm1365, %v2839, -inf
    %v2846 = vmax.f32 %v2842, %v2843
    %v2847 = vmax.f32 %v2844, %v2845
    %v2848 = vmax.f32 %v2846, %v2847
    %v2849 = vsub.f32 %v2828, %v2848
    %v2850 = vsub.f32 %v2831, %v2848
    %v2851 = vsub.f32 %v2836, %v2848
    %v2852 = vsub.f32 %v2839, %v2848
    %v2853 = vmul.f32 %v2849, 1.442695
    %v2854 = vpow.pop %v2853
    %v2855 = vmul.f32 %v2850, 1.442695
    %v2856 = vpow.pop %v2855
    %v2857 = vmul.f32 %v2851, 1.442695
    %v2858 = vpow.pop %v2857
    %v2859 = vmul.f32 %v2852, 1.442695
    %v2860 = vpow.pop %v2859
    %v2861 = vsel %vm1365, %v2854, 0.0
    %v2862 = vsel %vm1365, %v2856, 0.0
    %v2863 = vadd.f32 %v2861, %v2862
    %v2864 = vsel %vm1365, %v2858, 0.0
    %v2865 = vadd.f32 %v2863, %v2864
    %v2866 = vsel %vm1365, %v2860, 0.0
    %v2867 = vadd.f32 %v2865, %v2866
    %v2868 = vrcp.pop %v2867
    %v2869 = vmul.f32 %v2854, %v2868
    %v2870 = vmul.f32 %v2856, %v2868
    %v2871 = vmul.f32 %v2858, %v2868
    %v2872 = vmul.f32 %v2860, %v2868
    %v2873 = vpack.c.bf16 %v2870, %v2869
    %v2874 = vpack.c.bf16 %v2872, %v2871
    %v2876 = vsel %vm1365, %v2873, 0
    %v2879 = vsel %vm1365, %v2874, 0
    %2881 = vmatprep.subr.bf16.mxu0 0
    %2882 = vmatpush1.bf16.msra.mxu0 %v1407
    %2883 = vmatprep.subr.bf16.mxu0 0
    %2884 = vmatpush1.bf16.msra.mxu0 0
    %2885 = vmatprep.subr.bf16.mxu0 0
    %2886 = vmatpush1.bf16.msra.mxu0 0
    %2887 = vmatprep.subr.bf16.mxu0 0
    %2888 = vmatpush1.bf16.msra.mxu0 0
    %2889 = vmatprep.subr.bf16.mxu0 0
    %2890 = vmatpush1.bf16.msra.mxu0 0
    %2891 = vmatprep.subr.bf16.mxu0 0
    %2892 = vmatpush1.bf16.msra.mxu0 0
    %2893 = vmatprep.subr.bf16.mxu0 0
    %2894 = vmatpush1.bf16.msra.mxu0 0
    %2895 = vmatprep.subr.bf16.mxu0 0
    %2896 = vmatpush1.bf16.msra.mxu0 0
    %2897 = vmatprep.subr.bf16.mxu0 0
    %2898 = vmatpush1.bf16.msra.mxu0 0
    %2899 = vmatprep.subr.bf16.mxu0 0
    %2900 = vmatpush1.bf16.msra.mxu0 0
    %2901 = vmatprep.subr.bf16.mxu0 0
    %2902 = vmatpush1.bf16.msra.mxu0 0
    %2903 = vmatprep.subr.bf16.mxu0 0
    %2904 = vmatpush1.bf16.msra.mxu0 0
    %2905 = vmatprep.subr.bf16.mxu0 0
    %2906 = vmatpush1.bf16.msra.mxu0 0
    %2907 = vmatprep.subr.bf16.mxu0 0
    %2908 = vmatpush1.bf16.msra.mxu0 0
    %2909 = vmatprep.subr.bf16.mxu0 0
    %2910 = vmatpush1.bf16.msra.mxu0 0
    %2911 = vmatprep.subr.bf16.mxu0 0
    %2912 = vmatpush1.bf16.msra.mxu0 0
    %2913 = vmatprep.mubr.bf16.mxu0 0
    %2914 = vmatmul.mubr.bf16.gmra.mrb[0].mxu0 %v2876
    %v2915 = vpop.f32.mrb[0].mxu0
    %v2916 = vadd.f32 0.0, %v2915
    %v2917 = vpop.f32.mrb[0].mxu0
    %v2918 = vpop.f32.mrb[0].mxu0
    %v2919 = vadd.f32 0.0, %v2918
    %v2920 = vpop.f32.mrb[0].mxu0
    %2921 = vmatprep.mubr.bf16.mxu0 0
    %2922 = vmatmul.mubr.bf16.gmra.mrb[0].mxu0 %v2879
    %v2923 = vpop.f32.mrb[0].mxu0
    %v2924 = vadd.f32 0.0, %v2923
    %v2925 = vpop.f32.mrb[0].mxu0
    %v2926 = vpop.f32.mrb[0].mxu0
    %v2927 = vadd.f32 0.0, %v2926
    %v2928 = vpop.f32.mrb[0].mxu0
    %2929 = vdwg.mxu0
    %v2930 = vmul.f32 %v2916, %v2606
    %v2931 = vmul.f32 %v2919, %v2609
    %v2932 = vmul.f32 %v2924, %v2614
    %v2933 = vmul.f32 %v2927, %v2617
    %v2934 = vsel %vm562, %v2930, 0.0
    %v2935 = vsel %vm562, %v2931, 0.0
    %v2936 = vadd.f32 %v2934, %v2935
    %v2937 = vsel %vm562, %v2932, 0.0
    %v2938 = vadd.f32 %v2936, %v2937
    %v2939 = vsel %vm562, %v2933, 0.0
    %v2940 = vadd.f32 %v2938, %v2939
    %2941 = vst.msk [vmem:[#allocation2 + $0x8] sm:$0xff] %vm562, %v2940
    %v2942 = vmul.f32 %v2532, %v2470
    %v2943 = vmul.f32 %v2535, %v2470
    %v2944 = vmul.f32 %v2540, %v2470
    %v2945 = vmul.f32 %v2543, %v2470
    %v2946 = vpack.c.bf16 %v2943, %v2942
    %v2947 = vpack.c.bf16 %v2945, %v2944
    %v2949 = vsel %vm562, %v2946, 0
    %v2952 = vsel %vm562, %v2947, 0
    %2954 = vmatprep.subr.bf16.mxu0 0
    %2955 = vmatpush1.bf16.msra.mxu0 %v1306
    %2956 = vmatprep.subr.bf16.mxu0 0
    %2957 = vmatpush1.bf16.msra.mxu0 %v1307
    %2958 = vmatprep.subr.bf16.mxu0 0
    %2959 = vmatpush1.bf16.msra.mxu0 0
    %2960 = vmatprep.subr.bf16.mxu0 0
    %2961 = vmatpush1.bf16.msra.mxu0 0
    %2962 = vmatprep.subr.bf16.mxu0 0
    %2963 = vmatpush1.bf16.msra.mxu0 0
    %2964 = vmatprep.subr.bf16.mxu0 0
    %2965 = vmatpush1.bf16.msra.mxu0 0
    %2966 = vmatprep.subr.bf16.mxu0 0
    %2967 = vmatpush1.bf16.msra.mxu0 0
    %2968 = vmatprep.subr.bf16.mxu0 0
    %2969 = vmatpush1.bf16.msra.mxu0 0
    %2970 = vmatprep.subr.bf16.mxu0 0
    %2971 = vmatpush1.bf16.msra.mxu0 0
    %2972 = vmatprep.subr.bf16.mxu0 0
    %2973 = vmatpush1.bf16.msra.mxu0 0
    %2974 = vmatprep.subr.bf16.mxu0 0
    %2975 = vmatpush1.bf16.msra.mxu0 0
    %2976 = vmatprep.subr.bf16.mxu0 0
    %2977 = vmatpush1.bf16.msra.mxu0 0
    %2978 = vmatprep.subr.bf16.mxu0 0
    %2979 = vmatpush1.bf16.msra.mxu0 0
    %2980 = vmatprep.subr.bf16.mxu0 0
    %2981 = vmatpush1.bf16.msra.mxu0 0
    %2982 = vmatprep.subr.bf16.mxu0 0
    %2983 = vmatpush1.bf16.msra.mxu0 0
    %2984 = vmatprep.subr.bf16.mxu0 0
    %2985 = vmatpush1.bf16.msra.mxu0 0
    %2986 = vmatprep.mubr.bf16.mxu0 0
    %2987 = vmatmul.mubr.bf16.gmra.mrb[0].mxu0 %v2949
    %v2988 = vpop.f32.mrb[0].mxu0
    %v2989 = vadd.f32 0.0, %v2988
    %v2990 = vpop.f32.mrb[0].mxu0
    %v2991 = vpop.f32.mrb[0].mxu0
    %v2992 = vadd.f32 0.0, %v2991
    %v2993 = vpop.f32.mrb[0].mxu0
    %2994 = vmatprep.mubr.bf16.mxu0 0
    %2995 = vmatmul.mubr.bf16.gmra.mrb[0].mxu0 %v2952
    %v2996 = vpop.f32.mrb[0].mxu0
    %v2997 = vadd.f32 0.0, %v2996
    %v2998 = vpop.f32.mrb[0].mxu0
    %v2999 = vpop.f32.mrb[0].mxu0
    %v3000 = vadd.f32 0.0, %v2999
    %v3001 = vpop.f32.mrb[0].mxu0
    %3002 = vdwg.mxu0
    %v3003 = vsel %vm1365, %v2989, -inf
    %v3004 = vsel %vm1365, %v2992, -inf
    %v3005 = vsel %vm1365, %v2997, -inf
    %v3006 = vsel %vm1365, %v3000, -inf
    %v3007 = vmax.f32 %v3003, %v3004
    %v3008 = vmax.f32 %v3005, %v3006
    %v3009 = vmax.f32 %v3007, %v3008
    %v3010 = vsub.f32 %v2989, %v3009
    %v3011 = vsub.f32 %v2992, %v3009
    %v3012 = vsub.f32 %v2997, %v3009
    %v3013 = vsub.f32 %v3000, %v3009
    %v3014 = vmul.f32 %v3010, 1.442695
    %v3015 = vpow.pop %v3014
    %v3016 = vmul.f32 %v3011, 1.442695
    %v3017 = vpow.pop %v3016
    %v3018 = vmul.f32 %v3012, 1.442695
    %v3019 = vpow.pop %v3018
    %v3020 = vmul.f32 %v3013, 1.442695
    %v3021 = vpow.pop %v3020
    %v3022 = vsel %vm1365, %v3015, 0.0
    %v3023 = vsel %vm1365, %v3017, 0.0
    %v3024 = vadd.f32 %v3022, %v3023
    %v3025 = vsel %vm1365, %v3019, 0.0
    %v3026 = vadd.f32 %v3024, %v3025
    %v3027 = vsel %vm1365, %v3021, 0.0
    %v3028 = vadd.f32 %v3026, %v3027
    %v3029 = vrcp.pop %v3028
    %v3030 = vmul.f32 %v3015, %v3029
    %v3031 = vmul.f32 %v3017, %v3029
    %v3032 = vmul.f32 %v3019, %v3029
    %v3033 = vmul.f32 %v3021, %v3029
    %v3034 = vpack.c.bf16 %v3031, %v3030
    %v3035 = vpack.c.bf16 %v3033, %v3032
    %v3037 = vsel %vm1365, %v3034, 0
    %v3040 = vsel %vm1365, %v3035, 0
    %3042 = vmatprep.subr.bf16.mxu0 0
    %3043 = vmatpush1.bf16.msra.mxu0 %v1407
    %3044 = vmatprep.subr.bf16.mxu0 0
    %3045 = vmatpush1.bf16.msra.mxu0 0
    %3046 = vmatprep.subr.bf16.mxu0 0
    %3047 = vmatpush1.bf16.msra.mxu0 0
    %3048 = vmatprep.subr.bf16.mxu0 0
    %3049 = vmatpush1.bf16.msra.mxu0 0
    %3050 = vmatprep.subr.bf16.mxu0 0
    %3051 = vmatpush1.bf16.msra.mxu0 0
    %3052 = vmatprep.subr.bf16.mxu0 0
    %3053 = vmatpush1.bf16.msra.mxu0 0
    %3054 = vmatprep.subr.bf16.mxu0 0
    %3055 = vmatpush1.bf16.msra.mxu0 0
    %3056 = vmatprep.subr.bf16.mxu0 0
    %3057 = vmatpush1.bf16.msra.mxu0 0
    %3058 = vmatprep.subr.bf16.mxu0 0
    %3059 = vmatpush1.bf16.msra.mxu0 0
    %3060 = vmatprep.subr.bf16.mxu0 0
    %3061 = vmatpush1.bf16.msra.mxu0 0
    %3062 = vmatprep.subr.bf16.mxu0 0
    %3063 = vmatpush1.bf16.msra.mxu0 0
    %3064 = vmatprep.subr.bf16.mxu0 0
    %3065 = vmatpush1.bf16.msra.mxu0 0
    %3066 = vmatprep.subr.bf16.mxu0 0
    %3067 = vmatpush1.bf16.msra.mxu0 0
    %3068 = vmatprep.subr.bf16.mxu0 0
    %3069 = vmatpush1.bf16.msra.mxu0 0
    %3070 = vmatprep.subr.bf16.mxu0 0
    %3071 = vmatpush1.bf16.msra.mxu0 0
    %3072 = vmatprep.subr.bf16.mxu0 0
    %3073 = vmatpush1.bf16.msra.mxu0 0
    %3074 = vmatprep.mubr.bf16.mxu0 0
    %3075 = vmatmul.mubr.bf16.gmra.mrb[0].mxu0 %v3037
    %v3076 = vpop.f32.mrb[0].mxu0
    %v3077 = vadd.f32 0.0, %v3076
    %v3078 = vpop.f32.mrb[0].mxu0
    %v3079 = vpop.f32.mrb[0].mxu0
    %v3080 = vadd.f32 0.0, %v3079
    %v3081 = vpop.f32.mrb[0].mxu0
    %3082 = vmatprep.mubr.bf16.mxu0 0
    %3083 = vmatmul.mubr.bf16.gmra.mrb[0].mxu0 %v3040
    %v3084 = vpop.f32.mrb[0].mxu0
    %v3085 = vadd.f32 0.0, %v3084
    %v3086 = vpop.f32.mrb[0].mxu0
    %v3087 = vpop.f32.mrb[0].mxu0
    %v3088 = vadd.f32 0.0, %v3087
    %v3089 = vpop.f32.mrb[0].mxu0
    %3090 = vdwg.mxu0
    %v3091 = vmul.f32 %v3077, %v2606
    %v3092 = vmul.f32 %v3080, %v2609
    %v3093 = vmul.f32 %v3085, %v2614
    %v3094 = vmul.f32 %v3088, %v2617
    %v3095 = vsel %vm562, %v3091, 0.0
    %v3096 = vsel %vm562, %v3092, 0.0
    %v3097 = vadd.f32 %v3095, %v3096
    %v3098 = vsel %vm562, %v3093, 0.0
    %v3099 = vadd.f32 %v3097, %v3098
    %v3100 = vsel %vm562, %v3094, 0.0
    %v3101 = vadd.f32 %v3099, %v3100
    %3102 = vst.msk [vmem:[#allocation2 + $0x10] sm:$0xff] %vm562, %v3101
    %v3103 = vmul.f32 %v2532, %v2471
    %v3104 = vmul.f32 %v2535, %v2471
    %v3105 = vmul.f32 %v2540, %v2471
    %v3106 = vmul.f32 %v2543, %v2471
    %v3107 = vpack.c.bf16 %v3104, %v3103
    %v3108 = vpack.c.bf16 %v3106, %v3105
    %v3110 = vsel %vm562, %v3107, 0
    %v3113 = vsel %vm562, %v3108, 0
    %3115 = vmatprep.subr.bf16.mxu0 0
    %3116 = vmatpush1.bf16.msra.mxu0 %v1306
    %3117 = vmatprep.subr.bf16.mxu0 0
    %3118 = vmatpush1.bf16.msra.mxu0 %v1307
    %3119 = vmatprep.subr.bf16.mxu0 0
    %3120 = vmatpush1.bf16.msra.mxu0 0
    %3121 = vmatprep.subr.bf16.mxu0 0
    %3122 = vmatpush1.bf16.msra.mxu0 0
    %3123 = vmatprep.subr.bf16.mxu0 0
    %3124 = vmatpush1.bf16.msra.mxu0 0
    %3125 = vmatprep.subr.bf16.mxu0 0
    %3126 = vmatpush1.bf16.msra.mxu0 0
    %3127 = vmatprep.subr.bf16.mxu0 0
    %3128 = vmatpush1.bf16.msra.mxu0 0
    %3129 = vmatprep.subr.bf16.mxu0 0
    %3130 = vmatpush1.bf16.msra.mxu0 0
    %3131 = vmatprep.subr.bf16.mxu0 0
    %3132 = vmatpush1.bf16.msra.mxu0 0
    %3133 = vmatprep.subr.bf16.mxu0 0
    %3134 = vmatpush1.bf16.msra.mxu0 0
    %3135 = vmatprep.subr.bf16.mxu0 0
    %3136 = vmatpush1.bf16.msra.mxu0 0
    %3137 = vmatprep.subr.bf16.mxu0 0
    %3138 = vmatpush1.bf16.msra.mxu0 0
    %3139 = vmatprep.subr.bf16.mxu0 0
    %3140 = vmatpush1.bf16.msra.mxu0 0
    %3141 = vmatprep.subr.bf16.mxu0 0
    %3142 = vmatpush1.bf16.msra.mxu0 0
    %3143 = vmatprep.subr.bf16.mxu0 0
    %3144 = vmatpush1.bf16.msra.mxu0 0
    %3145 = vmatprep.subr.bf16.mxu0 0
    %3146 = vmatpush1.bf16.msra.mxu0 0
    %3147 = vmatprep.mubr.bf16.mxu0 0
    %3148 = vmatmul.mubr.bf16.gmra.mrb[0].mxu0 %v3110
    %v3149 = vpop.f32.mrb[0].mxu0
    %v3150 = vadd.f32 0.0, %v3149
    %v3151 = vpop.f32.mrb[0].mxu0
    %v3152 = vpop.f32.mrb[0].mxu0
    %v3153 = vadd.f32 0.0, %v3152
    %v3154 = vpop.f32.mrb[0].mxu0
    %3155 = vmatprep.mubr.bf16.mxu0 0
    %3156 = vmatmul.mubr.bf16.gmra.mrb[0].mxu0 %v3113
    %v3157 = vpop.f32.mrb[0].mxu0
    %v3158 = vadd.f32 0.0, %v3157
    %v3159 = vpop.f32.mrb[0].mxu0
    %v3160 = vpop.f32.mrb[0].mxu0
    %v3161 = vadd.f32 0.0, %v3160
    %v3162 = vpop.f32.mrb[0].mxu0
    %3163 = vdwg.mxu0
    %v3164 = vsel %vm1365, %v3150, -inf
    %v3165 = vsel %vm1365, %v3153, -inf
    %v3166 = vsel %vm1365, %v3158, -inf
    %v3167 = vsel %vm1365, %v3161, -inf
    %v3168 = vmax.f32 %v3164, %v3165
    %v3169 = vmax.f32 %v3166, %v3167
    %v3170 = vmax.f32 %v3168, %v3169
    %v3171 = vsub.f32 %v3150, %v3170
    %v3172 = vsub.f32 %v3153, %v3170
    %v3173 = vsub.f32 %v3158, %v3170
    %v3174 = vsub.f32 %v3161, %v3170
    %v3175 = vmul.f32 %v3171, 1.442695
    %v3176 = vpow.pop %v3175
    %v3177 = vmul.f32 %v3172, 1.442695
    %v3178 = vpow.pop %v3177
    %v3179 = vmul.f32 %v3173, 1.442695
    %v3180 = vpow.pop %v3179
    %v3181 = vmul.f32 %v3174, 1.442695
    %v3182 = vpow.pop %v3181
    %v3183 = vsel %vm1365, %v3176, 0.0
    %v3184 = vsel %vm1365, %v3178, 0.0
    %v3185 = vadd.f32 %v3183, %v3184
    %v3186 = vsel %vm1365, %v3180, 0.0
    %v3187 = vadd.f32 %v3185, %v3186
    %v3188 = vsel %vm1365, %v3182, 0.0
    %v3189 = vadd.f32 %v3187, %v3188
    %v3190 = vrcp.pop %v3189
    %v3191 = vmul.f32 %v3176, %v3190
    %v3192 = vmul.f32 %v3178, %v3190
    %v3193 = vmul.f32 %v3180, %v3190
    %v3194 = vmul.f32 %v3182, %v3190
    %v3195 = vpack.c.bf16 %v3192, %v3191
    %v3196 = vpack.c.bf16 %v3194, %v3193
    %v3198 = vsel %vm1365, %v3195, 0
    %v3201 = vsel %vm1365, %v3196, 0
    %3203 = vmatprep.subr.bf16.mxu0 0
    %3204 = vmatpush1.bf16.msra.mxu0 %v1407
    %3205 = vmatprep.subr.bf16.mxu0 0
    %3206 = vmatpush1.bf16.msra.mxu0 0
    %3207 = vmatprep.subr.bf16.mxu0 0
    %3208 = vmatpush1.bf16.msra.mxu0 0
    %3209 = vmatprep.subr.bf16.mxu0 0
    %3210 = vmatpush1.bf16.msra.mxu0 0
    %3211 = vmatprep.subr.bf16.mxu0 0
    %3212 = vmatpush1.bf16.msra.mxu0 0
    %3213 = vmatprep.subr.bf16.mxu0 0
    %3214 = vmatpush1.bf16.msra.mxu0 0
    %3215 = vmatprep.subr.bf16.mxu0 0
    %3216 = vmatpush1.bf16.msra.mxu0 0
    %3217 = vmatprep.subr.bf16.mxu0 0
    %3218 = vmatpush1.bf16.msra.mxu0 0
    %3219 = vmatprep.subr.bf16.mxu0 0
    %3220 = vmatpush1.bf16.msra.mxu0 0
    %3221 = vmatprep.subr.bf16.mxu0 0
    %3222 = vmatpush1.bf16.msra.mxu0 0
    %3223 = vmatprep.subr.bf16.mxu0 0
    %3224 = vmatpush1.bf16.msra.mxu0 0
    %3225 = vmatprep.subr.bf16.mxu0 0
    %3226 = vmatpush1.bf16.msra.mxu0 0
    %3227 = vmatprep.subr.bf16.mxu0 0
    %3228 = vmatpush1.bf16.msra.mxu0 0
    %3229 = vmatprep.subr.bf16.mxu0 0
    %3230 = vmatpush1.bf16.msra.mxu0 0
    %3231 = vmatprep.subr.bf16.mxu0 0
    %3232 = vmatpush1.bf16.msra.mxu0 0
    %3233 = vmatprep.subr.bf16.mxu0 0
    %3234 = vmatpush1.bf16.msra.mxu0 0
    %3235 = vmatprep.mubr.bf16.mxu0 0
    %3236 = vmatmul.mubr.bf16.gmra.mrb[0].mxu0 %v3198
    %v3237 = vpop.f32.mrb[0].mxu0
    %v3238 = vadd.f32 0.0, %v3237
    %v3239 = vpop.f32.mrb[0].mxu0
    %v3240 = vpop.f32.mrb[0].mxu0
    %v3241 = vadd.f32 0.0, %v3240
    %v3242 = vpop.f32.mrb[0].mxu0
    %3243 = vmatprep.mubr.bf16.mxu0 0
    %3244 = vmatmul.mubr.bf16.gmra.mrb[0].mxu0 %v3201
    %v3245 = vpop.f32.mrb[0].mxu0
    %v3246 = vadd.f32 0.0, %v3245
    %v3247 = vpop.f32.mrb[0].mxu0
    %v3248 = vpop.f32.mrb[0].mxu0
    %v3249 = vadd.f32 0.0, %v3248
    %v3250 = vpop.f32.mrb[0].mxu0
    %3251 = vdwg.mxu0
    %v3252 = vmul.f32 %v3238, %v2606
    %v3253 = vmul.f32 %v3241, %v2609
    %v3254 = vmul.f32 %v3246, %v2614
    %v3255 = vmul.f32 %v3249, %v2617
    %v3256 = vsel %vm562, %v3252, 0.0
    %v3257 = vsel %vm562, %v3253, 0.0
    %v3258 = vadd.f32 %v3256, %v3257
    %v3259 = vsel %vm562, %v3254, 0.0
    %v3260 = vadd.f32 %v3258, %v3259
    %v3261 = vsel %vm562, %v3255, 0.0
    %v3262 = vadd.f32 %v3260, %v3261
    %3263 = vst.msk [vmem:[#allocation2 + $0x18] sm:$0xff] %vm562, %v3262
    %v3264 = vld [vmem:[#allocation2] sm:$0xff]
    %v3265 = vld [vmem:[#allocation2 + $0x8] sm:$0xff]
    %v3266 = vld [vmem:[#allocation2 + $0x10] sm:$0xff]
    %v3267 = vld [vmem:[#allocation2 + $0x18] sm:$0xff]
    %s3268 = scalar_lea.vmem [#allocation30], 16
    %v3269 = vld [vmem:[%s3268] sm:$0xf]
    %v3270 = vld [vmem:[%s3268 + $0x4] sm:$0xf]
    %v3271 = vld [vmem:[%s3268 + $0x8] sm:$0xf]
    %v3272 = vld [vmem:[%s3268 + $0xc] sm:$0xf]
    %v3273 = vpack.c.bf16 %v3265, %v3264
    %v3274 = vpack.c.bf16 %v3267, %v3266
    %s3275 = scalar_lea.vmem [#allocation31], 1
    %v3276 = vld [vmem:[%s3275] sm:$0x1]
    %v3278 = vlaneseq
    %v3279 = vshrl.u32 %v3278, 7
    %v3280 = vsub.s32 0, %v3279
    %v3281 = vrot.slane %v3276, %v3280
    %v3287 = vunpack.c.l.b16 %v3269
    %v3288 = vunpack.c.l.b16 %v3270
    %v3289 = vunpack.c.l.b16 %v3271
    %v3290 = vunpack.c.l.b16 %v3272
    %v3291 = vpack.c.b16 %v3288, %v3287
    %v3292 = vpack.c.b16 %v3290, %v3289
    %v3296 = vsel %vm562, %v3273, 0
    %v3299 = vsel %vm562, %v3274, 0
    %3301 = vmatprep.subr.bf16.mxu0 0
    %3302 = vmatpush1.bf16.msra.mxu0 %v3291
    %3303 = vmatprep.subr.bf16.mxu0 0
    %3304 = vmatpush1.bf16.msra.mxu0 %v3292
    %3305 = vmatprep.subr.bf16.mxu0 0
    %3306 = vmatpush1.bf16.msra.mxu0 0
    %3307 = vmatprep.subr.bf16.mxu0 0
    %3308 = vmatpush1.bf16.msra.mxu0 0
    %3309 = vmatprep.subr.bf16.mxu0 0
    %3310 = vmatpush1.bf16.msra.mxu0 0
    %3311 = vmatprep.subr.bf16.mxu0 0
    %3312 = vmatpush1.bf16.msra.mxu0 0
    %3313 = vmatprep.subr.bf16.mxu0 0
    %3314 = vmatpush1.bf16.msra.mxu0 0
    %3315 = vmatprep.subr.bf16.mxu0 0
    %3316 = vmatpush1.bf16.msra.mxu0 0
    %3317 = vmatprep.subr.bf16.mxu0 0
    %3318 = vmatpush1.bf16.msra.mxu0 0
    %3319 = vmatprep.subr.bf16.mxu0 0
    %3320 = vmatpush1.bf16.msra.mxu0 0
    %3321 = vmatprep.subr.bf16.mxu0 0
    %3322 = vmatpush1.bf16.msra.mxu0 0
    %3323 = vmatprep.subr.bf16.mxu0 0
    %3324 = vmatpush1.bf16.msra.mxu0 0
    %3325 = vmatprep.subr.bf16.mxu0 0
    %3326 = vmatpush1.bf16.msra.mxu0 0
    %3327 = vmatprep.subr.bf16.mxu0 0
    %3328 = vmatpush1.bf16.msra.mxu0 0
    %3329 = vmatprep.subr.bf16.mxu0 0
    %3330 = vmatpush1.bf16.msra.mxu0 0
    %3331 = vmatprep.subr.bf16.mxu0 0
    %3332 = vmatpush1.bf16.msra.mxu0 0
    %3333 = vmatprep.mubr.bf16.mxu0 0
    %3334 = vmatmul.mubr.bf16.gmra.mrb[0].mxu0 %v3296
    %v3335 = vpop.f32.mrb[0].mxu0
    %v3336 = vadd.f32 %v3281, %v3335
    %v3337 = vpop.f32.mrb[0].mxu0
    %v3338 = vpop.f32.mrb[0].mxu0
    %v3339 = vadd.f32 %v3281, %v3338
    %v3340 = vpop.f32.mrb[0].mxu0
    %3341 = vmatprep.mubr.bf16.mxu0 0
    %3342 = vmatmul.mubr.bf16.gmra.mrb[0].mxu0 %v3299
    %v3343 = vpop.f32.mrb[0].mxu0
    %v3344 = vadd.f32 %v3281, %v3343
    %v3345 = vpop.f32.mrb[0].mxu0
    %v3346 = vpop.f32.mrb[0].mxu0
    %v3347 = vadd.f32 %v3281, %v3346
    %v3348 = vpop.f32.mrb[0].mxu0
    %3349 = vdwg.mxu0
    %v3350 = vmul.f32 %v3336, %v3336
    %v3351 = vmul.f32 %v3339, %v3339
    %v3352 = vmul.f32 %v3344, %v3344
    %v3353 = vmul.f32 %v3347, %v3347
    %v3354 = vsel %vm562, %v3350, 0.0
    %3355 = vadd.xlane.f32.xlu0 %v3354
    %v3356 = vpop.xlane.xlu0 %3355
    %v3357 = vsel %vm562, %v3351, 0.0
    %3358 = vadd.xlane.f32.xlu0 %v3357
    %v3359 = vpop.xlane.xlu0 %3358
    %v3360 = vsel %vm562, %v3352, 0.0
    %3361 = vadd.xlane.f32.xlu0 %v3360
    %v3362 = vpop.xlane.xlu0 %3361
    %v3363 = vsel %vm562, %v3353, 0.0
    %3364 = vadd.xlane.f32.xlu0 %v3363
    %v3365 = vpop.xlane.xlu0 %3364
    %v3366 = vmax.f32 %v3356, 1e-24
    %v3367 = vmax.f32 %v3359, 1e-24
    %v3368 = vmax.f32 %v3362, 1e-24
    %v3369 = vmax.f32 %v3365, 1e-24
    %v3370 = vrsqrt.pop %v3366
    %v3371 = vrsqrt.pop %v3367
    %v3372 = vrsqrt.pop %v3368
    %v3373 = vrsqrt.pop %v3369
    %v3374 = vmul.f32 %v3336, %v3370
    %v3375 = vmul.f32 %v3339, %v3371
    %v3376 = vmul.f32 %v3344, %v3372
    %v3377 = vmul.f32 %v3347, %v3373
    %s3378 = sld [smem:[#allocation39 + $0x1]]
    %v3379 = vsub.f32 %v3374, %v2382
    %v3380 = vsub.f32 %v3375, %v2383
    %v3381 = vsub.f32 %v3376, %v2384
    %v3382 = vsub.f32 %v3377, %v2385
    %v3383 = vstv %s3378
    %v3384 = vmul.f32 %v3383, %v3379
    %v3385 = vmul.f32 %v3383, %v3380
    %v3386 = vmul.f32 %v3383, %v3381
    %v3387 = vmul.f32 %v3383, %v3382
    %v3388 = vadd.f32 %v2382, %v3384
    %v3389 = vadd.f32 %v2383, %v3385
    %v3390 = vadd.f32 %v2384, %v3386
    %v3391 = vadd.f32 %v2385, %v3387
    %v3392 = vmul.f32 %v3388, %v3388
    %v3393 = vmul.f32 %v3389, %v3389
    %v3394 = vmul.f32 %v3390, %v3390
    %v3395 = vmul.f32 %v3391, %v3391
    %v3396 = vsel %vm562, %v3392, 0.0
    %3397 = vadd.xlane.f32.xlu0 %v3396
    %v3398 = vpop.xlane.xlu0 %3397
    %v3399 = vsel %vm562, %v3393, 0.0
    %3400 = vadd.xlane.f32.xlu0 %v3399
    %v3401 = vpop.xlane.xlu0 %3400
    %v3402 = vsel %vm562, %v3394, 0.0
    %3403 = vadd.xlane.f32.xlu0 %v3402
    %v3404 = vpop.xlane.xlu0 %3403
    %v3405 = vsel %vm562, %v3395, 0.0
    %3406 = vadd.xlane.f32.xlu0 %v3405
    %v3407 = vpop.xlane.xlu0 %3406
    %v3408 = vmax.f32 %v3398, 1e-24
    %v3409 = vmax.f32 %v3401, 1e-24
    %v3410 = vmax.f32 %v3404, 1e-24
    %v3411 = vmax.f32 %v3407, 1e-24
    %v3412 = vrsqrt.pop %v3408
    %v3413 = vrsqrt.pop %v3409
    %v3414 = vrsqrt.pop %v3410
    %v3415 = vrsqrt.pop %v3411
    %v3416 = vmul.f32 %v3388, %v3412
    %v3417 = vmul.f32 %v3389, %v3413
    %v3418 = vmul.f32 %v3390, %v3414
    %v3419 = vmul.f32 %v3391, %v3415
    %s3420 = scalar_lea.vmem [#allocation33], 16
    %v3421 = vld [vmem:[%s3420] sm:$0xf]
    %v3422 = vld [vmem:[%s3420 + $0x4] sm:$0xf]
    %v3423 = vld [vmem:[%s3420 + $0x8] sm:$0xf]
    %v3424 = vld [vmem:[%s3420 + $0xc] sm:$0xf]
    %v3425 = vpack.c.bf16 %v3417, %v3416
    %v3426 = vpack.c.bf16 %v3419, %v3418
    %s3427 = scalar_lea.vmem [#allocation34], 1
    %v3428 = vld [vmem:[%s3427] sm:$0x1]
    %v3430 = vlaneseq
    %v3431 = vshrl.u32 %v3430, 7
    %v3432 = vsub.s32 0, %v3431
    %v3433 = vrot.slane %v3428, %v3432
    %v3439 = vunpack.c.l.b16 %v3421
    %v3440 = vunpack.c.l.b16 %v3422
    %v3441 = vunpack.c.l.b16 %v3423
    %v3442 = vunpack.c.l.b16 %v3424
    %v3443 = vpack.c.b16 %v3440, %v3439
    %v3444 = vpack.c.b16 %v3442, %v3441
    %v3448 = vsel %vm562, %v3425, 0
    %v3451 = vsel %vm562, %v3426, 0
    %3453 = vmatprep.subr.bf16.mxu0 0
    %3454 = vmatpush1.bf16.msra.mxu0 %v3443
    %3455 = vmatprep.subr.bf16.mxu0 0
    %3456 = vmatpush1.bf16.msra.mxu0 %v3444
    %3457 = vmatprep.subr.bf16.mxu0 0
    %3458 = vmatpush1.bf16.msra.mxu0 0
    %3459 = vmatprep.subr.bf16.mxu0 0
    %3460 = vmatpush1.bf16.msra.mxu0 0
    %3461 = vmatprep.subr.bf16.mxu0 0
    %3462 = vmatpush1.bf16.msra.mxu0 0
    %3463 = vmatprep.subr.bf16.mxu0 0
    %3464 = vmatpush1.bf16.msra.mxu0 0
    %3465 = vmatprep.subr.bf16.mxu0 0
    %3466 = vmatpush1.bf16.msra.mxu0 0
    %3467 = vmatprep.subr.bf16.mxu0 0
    %3468 = vmatpush1.bf16.msra.mxu0 0
    %3469 = vmatprep.subr.bf16.mxu0 0
    %3470 = vmatpush1.bf16.msra.mxu0 0
    %3471 = vmatprep.subr.bf16.mxu0 0
    %3472 = vmatpush1.bf16.msra.mxu0 0
    %3473 = vmatprep.subr.bf16.mxu0 0
    %3474 = vmatpush1.bf16.msra.mxu0 0
    %3475 = vmatprep.subr.bf16.mxu0 0
    %3476 = vmatpush1.bf16.msra.mxu0 0
    %3477 = vmatprep.subr.bf16.mxu0 0
    %3478 = vmatpush1.bf16.msra.mxu0 0
    %3479 = vmatprep.subr.bf16.mxu0 0
    %3480 = vmatpush1.bf16.msra.mxu0 0
    %3481 = vmatprep.subr.bf16.mxu0 0
    %3482 = vmatpush1.bf16.msra.mxu0 0
    %3483 = vmatprep.subr.bf16.mxu0 0
    %3484 = vmatpush1.bf16.msra.mxu0 0
    %3485 = vmatprep.mubr.bf16.mxu0 0
    %3486 = vmatmul.mubr.bf16.gmra.mrb[0].mxu0 %v3448
    %v3487 = vpop.f32.mrb[0].mxu0
    %v3488 = vadd.f32 %v3433, %v3487
    %v3489 = vpop.f32.mrb[0].mxu0
    %v3490 = vpop.f32.mrb[0].mxu0
    %v3491 = vadd.f32 %v3433, %v3490
    %v3492 = vpop.f32.mrb[0].mxu0
    %3493 = vmatprep.mubr.bf16.mxu0 0
    %3494 = vmatmul.mubr.bf16.gmra.mrb[0].mxu0 %v3451
    %v3495 = vpop.f32.mrb[0].mxu0
    %v3496 = vadd.f32 %v3433, %v3495
    %v3497 = vpop.f32.mrb[0].mxu0
    %v3498 = vpop.f32.mrb[0].mxu0
    %v3499 = vadd.f32 %v3433, %v3498
    %v3500 = vpop.f32.mrb[0].mxu0
    %3501 = vdwg.mxu0
    %v3502 = vmax.f32 %v3488, 0.0
    %v3503 = vmax.f32 %v3491, 0.0
    %v3504 = vmax.f32 %v3496, 0.0
    %v3505 = vmax.f32 %v3499, 0.0
    %s3506 = scalar_lea.vmem [#allocation36], 32
    %v3507 = vld [vmem:[%s3506] sm:$0xf]
    %v3508 = vld [vmem:[%s3506 + $0x4] sm:$0xf]
    %v3509 = vld [vmem:[%s3506 + $0x8] sm:$0xf]
    %v3510 = vld [vmem:[%s3506 + $0xc] sm:$0xf]
    %v3511 = vld [vmem:[%s3506 + $0x10] sm:$0xf]
    %v3512 = vld [vmem:[%s3506 + $0x14] sm:$0xf]
    %v3513 = vld [vmem:[%s3506 + $0x18] sm:$0xf]
    %v3514 = vld [vmem:[%s3506 + $0x1c] sm:$0xf]
    %v3515 = vpack.c.bf16 %v3503, %v3502
    %v3516 = vpack.c.bf16 %v3505, %v3504
    %s3517 = scalar_lea.vmem [#allocation37], 1
    %v3518 = vld [vmem:[%s3517] sm:$0x1]
    %v3520 = vlaneseq
    %v3521 = vshrl.u32 %v3520, 7
    %v3522 = vsub.s32 0, %v3521
    %v3523 = vrot.slane %v3518, %v3522
    %v3533 = vunpack.c.l.b16 %v3507
    %v3534 = vunpack.c.l.b16 %v3508
    %v3535 = vunpack.c.l.b16 %v3509
    %v3536 = vunpack.c.l.b16 %v3510
    %v3537 = vunpack.c.l.b16 %v3511
    %v3538 = vunpack.c.l.b16 %v3512
    %v3539 = vunpack.c.l.b16 %v3513
    %v3540 = vunpack.c.l.b16 %v3514
    %v3541 = vpack.c.b16 %v3534, %v3533
    %v3542 = vpack.c.b16 %v3536, %v3535
    %v3543 = vpack.c.b16 %v3538, %v3537
    %v3544 = vpack.c.b16 %v3540, %v3539
    %v3550 = vsel %vm2232, %v3515, 0
    %v3553 = vsel %vm2232, %v3516, 0
    %3555 = vmatprep.subr.bf16.mxu0 0
    %3556 = vmatpush1.bf16.msra.mxu0 %v3541
    %3557 = vmatprep.subr.bf16.mxu0 0
    %3558 = vmatpush1.bf16.msra.mxu0 %v3542
    %3559 = vmatprep.subr.bf16.mxu0 0
    %3560 = vmatpush1.bf16.msra.mxu0 %v3543
    %3561 = vmatprep.subr.bf16.mxu0 0
    %3562 = vmatpush1.bf16.msra.mxu0 %v3544
    %3563 = vmatprep.subr.bf16.mxu0 0
    %3564 = vmatpush1.bf16.msra.mxu0 0
    %3565 = vmatprep.subr.bf16.mxu0 0
    %3566 = vmatpush1.bf16.msra.mxu0 0
    %3567 = vmatprep.subr.bf16.mxu0 0
    %3568 = vmatpush1.bf16.msra.mxu0 0
    %3569 = vmatprep.subr.bf16.mxu0 0
    %3570 = vmatpush1.bf16.msra.mxu0 0
    %3571 = vmatprep.subr.bf16.mxu0 0
    %3572 = vmatpush1.bf16.msra.mxu0 0
    %3573 = vmatprep.subr.bf16.mxu0 0
    %3574 = vmatpush1.bf16.msra.mxu0 0
    %3575 = vmatprep.subr.bf16.mxu0 0
    %3576 = vmatpush1.bf16.msra.mxu0 0
    %3577 = vmatprep.subr.bf16.mxu0 0
    %3578 = vmatpush1.bf16.msra.mxu0 0
    %3579 = vmatprep.subr.bf16.mxu0 0
    %3580 = vmatpush1.bf16.msra.mxu0 0
    %3581 = vmatprep.subr.bf16.mxu0 0
    %3582 = vmatpush1.bf16.msra.mxu0 0
    %3583 = vmatprep.subr.bf16.mxu0 0
    %3584 = vmatpush1.bf16.msra.mxu0 0
    %3585 = vmatprep.subr.bf16.mxu0 0
    %3586 = vmatpush1.bf16.msra.mxu0 0
    %3587 = vmatprep.mubr.bf16.mxu0 0
    %3588 = vmatmul.mubr.bf16.gmra.mrb[0].mxu0 %v3550
    %v3589 = vpop.f32.mrb[0].mxu0
    %v3590 = vadd.f32 %v3523, %v3589
    %v3591 = vpop.f32.mrb[0].mxu0
    %v3592 = vpop.f32.mrb[0].mxu0
    %v3593 = vadd.f32 %v3523, %v3592
    %v3594 = vpop.f32.mrb[0].mxu0
    %3595 = vmatprep.mubr.bf16.mxu0 0
    %3596 = vmatmul.mubr.bf16.gmra.mrb[0].mxu0 %v3553
    %v3597 = vpop.f32.mrb[0].mxu0
    %v3598 = vadd.f32 %v3523, %v3597
    %v3599 = vpop.f32.mrb[0].mxu0
    %v3600 = vpop.f32.mrb[0].mxu0
    %v3601 = vadd.f32 %v3523, %v3600
    %v3602 = vpop.f32.mrb[0].mxu0
    %3603 = vdwg.mxu0
    %v3604 = vmul.f32 %v3590, %v3590
    %v3605 = vmul.f32 %v3593, %v3593
    %v3606 = vmul.f32 %v3598, %v3598
    %v3607 = vmul.f32 %v3601, %v3601
    %v3608 = vsel %vm562, %v3604, 0.0
    %3609 = vadd.xlane.f32.xlu0 %v3608
    %v3610 = vpop.xlane.xlu0 %3609
    %v3611 = vsel %vm562, %v3605, 0.0
    %3612 = vadd.xlane.f32.xlu0 %v3611
    %v3613 = vpop.xlane.xlu0 %3612
    %v3614 = vsel %vm562, %v3606, 0.0
    %3615 = vadd.xlane.f32.xlu0 %v3614
    %v3616 = vpop.xlane.xlu0 %3615
    %v3617 = vsel %vm562, %v3607, 0.0
    %3618 = vadd.xlane.f32.xlu0 %v3617
    %v3619 = vpop.xlane.xlu0 %3618
    %v3620 = vmax.f32 %v3610, 1e-24
    %v3621 = vmax.f32 %v3613, 1e-24
    %v3622 = vmax.f32 %v3616, 1e-24
    %v3623 = vmax.f32 %v3619, 1e-24
    %v3624 = vrsqrt.pop %v3620
    %v3625 = vrsqrt.pop %v3621
    %v3626 = vrsqrt.pop %v3622
    %v3627 = vrsqrt.pop %v3623
    %v3628 = vmul.f32 %v3590, %v3624
    %v3629 = vmul.f32 %v3593, %v3625
    %v3630 = vmul.f32 %v3598, %v3626
    %v3631 = vmul.f32 %v3601, %v3627
    %s3632 = sld [smem:[#allocation40 + $0x1]]
    %v3633 = vsub.f32 %v3628, %v3416
    %v3634 = vsub.f32 %v3629, %v3417
    %v3635 = vsub.f32 %v3630, %v3418
    %v3636 = vsub.f32 %v3631, %v3419
    %v3637 = vstv %s3632
    %v3638 = vmul.f32 %v3637, %v3633
    %v3639 = vmul.f32 %v3637, %v3634
    %v3640 = vmul.f32 %v3637, %v3635
    %v3641 = vmul.f32 %v3637, %v3636
    %v3642 = vadd.f32 %v3416, %v3638
    %v3643 = vadd.f32 %v3417, %v3639
    %v3644 = vadd.f32 %v3418, %v3640
    %v3645 = vadd.f32 %v3419, %v3641
    %v3646 = vmul.f32 %v3642, %v3642
    %v3647 = vmul.f32 %v3643, %v3643
    %v3648 = vmul.f32 %v3644, %v3644
    %v3649 = vmul.f32 %v3645, %v3645
    %v3650 = vsel %vm562, %v3646, 0.0
    %3651 = vadd.xlane.f32.xlu0 %v3650
    %v3652 = vpop.xlane.xlu0 %3651
    %v3653 = vsel %vm562, %v3647, 0.0
    %3654 = vadd.xlane.f32.xlu0 %v3653
    %v3655 = vpop.xlane.xlu0 %3654
    %v3656 = vsel %vm562, %v3648, 0.0
    %3657 = vadd.xlane.f32.xlu0 %v3656
    %v3658 = vpop.xlane.xlu0 %3657
    %v3659 = vsel %vm562, %v3649, 0.0
    %3660 = vadd.xlane.f32.xlu0 %v3659
    %v3661 = vpop.xlane.xlu0 %3660
    %v3662 = vmax.f32 %v3652, 1e-24
    %v3663 = vmax.f32 %v3655, 1e-24
    %v3664 = vmax.f32 %v3658, 1e-24
    %v3665 = vmax.f32 %v3661, 1e-24
    %v3666 = vrsqrt.pop %v3662
    %v3667 = vrsqrt.pop %v3663
    %v3668 = vrsqrt.pop %v3664
    %v3669 = vrsqrt.pop %v3665
    %v3670 = vmul.f32 %v3642, %v3666
    %v3671 = vmul.f32 %v3643, %v3667
    %v3672 = vmul.f32 %v3644, %v3668
    %v3673 = vmul.f32 %v3645, %v3669
    %v3674 = vsel %vm562, %v3670, 0.0
    %v3675 = vsel %vm562, %v3671, 0.0
    %v3676 = vadd.f32 %v3674, %v3675
    %v3677 = vsel %vm562, %v3672, 0.0
    %v3678 = vadd.f32 %v3676, %v3677
    %v3679 = vsel %vm562, %v3673, 0.0
    %v3680 = vadd.f32 %v3678, %v3679
    %v3681 = vmul.f32 %v3680, 0.25
    %v3682 = vld [vmem:[#allocation45] sm:$0xf]
    %v3683 = vld [vmem:[#allocation45 + $0x4] sm:$0xf]
    %v3684 = vld [vmem:[#allocation45 + $0x8] sm:$0xf]
    %v3685 = vld [vmem:[#allocation45 + $0xc] sm:$0xf]
    %v3686 = vpack.c.bf16 %v3681, %v3681
    %v3687 = vld [vmem:[#allocation46] sm:$0x1]
    %v3689 = vlaneseq
    %v3690 = vshrl.u32 %v3689, 7
    %v3691 = vsub.s32 0, %v3690
    %v3692 = vrot.slane %v3687, %v3691
    %v3698 = vunpack.c.l.b16 %v3682
    %v3699 = vunpack.c.l.b16 %v3683
    %v3700 = vunpack.c.l.b16 %v3684
    %v3701 = vunpack.c.l.b16 %v3685
    %v3702 = vpack.c.b16 %v3699, %v3698
    %v3703 = vpack.c.b16 %v3701, %v3700
    %v3707 = vsel %vm562, %v3686, 0
    %3709 = vmatprep.subr.bf16.mxu0 0
    %3710 = vmatpush1.bf16.msra.mxu0 %v3702
    %3711 = vmatprep.subr.bf16.mxu0 0
    %3712 = vmatpush1.bf16.msra.mxu0 %v3703
    %3713 = vmatprep.subr.bf16.mxu0 0
    %3714 = vmatpush1.bf16.msra.mxu0 0
    %3715 = vmatprep.subr.bf16.mxu0 0
    %3716 = vmatpush1.bf16.msra.mxu0 0
    %3717 = vmatprep.subr.bf16.mxu0 0
    %3718 = vmatpush1.bf16.msra.mxu0 0
    %3719 = vmatprep.subr.bf16.mxu0 0
    %3720 = vmatpush1.bf16.msra.mxu0 0
    %3721 = vmatprep.subr.bf16.mxu0 0
    %3722 = vmatpush1.bf16.msra.mxu0 0
    %3723 = vmatprep.subr.bf16.mxu0 0
    %3724 = vmatpush1.bf16.msra.mxu0 0
    %3725 = vmatprep.subr.bf16.mxu0 0
    %3726 = vmatpush1.bf16.msra.mxu0 0
    %3727 = vmatprep.subr.bf16.mxu0 0
    %3728 = vmatpush1.bf16.msra.mxu0 0
    %3729 = vmatprep.subr.bf16.mxu0 0
    %3730 = vmatpush1.bf16.msra.mxu0 0
    %3731 = vmatprep.subr.bf16.mxu0 0
    %3732 = vmatpush1.bf16.msra.mxu0 0
    %3733 = vmatprep.subr.bf16.mxu0 0
    %3734 = vmatpush1.bf16.msra.mxu0 0
    %3735 = vmatprep.subr.bf16.mxu0 0
    %3736 = vmatpush1.bf16.msra.mxu0 0
    %3737 = vmatprep.subr.bf16.mxu0 0
    %3738 = vmatpush1.bf16.msra.mxu0 0
    %3739 = vmatprep.subr.bf16.mxu0 0
    %3740 = vmatpush1.bf16.msra.mxu0 0
    %3741 = vmatprep.mubr.bf16.mxu0 0
    %3742 = vmatmul.mubr.bf16.gmra.mrb[0].mxu0 %v3707
    %v3743 = vpop.f32.mrb[0].mxu0
    %v3744 = vadd.f32 %v3692, %v3743
    %v3745 = vpop.f32.mrb[0].mxu0
    %v3746 = vpop.f32.mrb[0].mxu0
    %v3747 = vpop.f32.mrb[0].mxu0
    %3748 = vdwg.mxu0
    %v3749 = vmax.f32 %v3744, 0.0
    %v3750 = vld [vmem:[#allocation42] sm:$0xf]
    %v3751 = vld [vmem:[#allocation42 + $0x4] sm:$0xf]
    %v3752 = vld [vmem:[#allocation42 + $0x8] sm:$0xf]
    %v3753 = vld [vmem:[#allocation42 + $0xc] sm:$0xf]
    %v3754 = vld [vmem:[#allocation48] sm:$0xf]
    %v3755 = vld [vmem:[#allocation48 + $0x4] sm:$0xf]
    %v3756 = vld [vmem:[#allocation48 + $0x8] sm:$0xf]
    %v3757 = vld [vmem:[#allocation48 + $0xc] sm:$0xf]
    %v3758 = vpack.c.bf16 %v3749, %v3749
    %v3763 = vunpack.c.l.b16 %v3754
    %v3764 = vunpack.c.l.b16 %v3755
    %v3765 = vunpack.c.l.b16 %v3756
    %v3766 = vunpack.c.l.b16 %v3757
    %v3767 = vpack.c.b16 %v3764, %v3763
    %v3768 = vpack.c.b16 %v3766, %v3765
    %v3772 = vsel %vm562, %v3758, 0
    %3774 = vmatprep.subr.bf16.mxu0 0
    %3775 = vmatpush1.bf16.msra.mxu0 %v3767
    %3776 = vmatprep.subr.bf16.mxu0 0
    %3777 = vmatpush1.bf16.msra.mxu0 %v3768
    %3778 = vmatprep.subr.bf16.mxu0 0
    %3779 = vmatpush1.bf16.msra.mxu0 0
    %3780 = vmatprep.subr.bf16.mxu0 0
    %3781 = vmatpush1.bf16.msra.mxu0 0
    %3782 = vmatprep.subr.bf16.mxu0 0
    %3783 = vmatpush1.bf16.msra.mxu0 0
    %3784 = vmatprep.subr.bf16.mxu0 0
    %3785 = vmatpush1.bf16.msra.mxu0 0
    %3786 = vmatprep.subr.bf16.mxu0 0
    %3787 = vmatpush1.bf16.msra.mxu0 0
    %3788 = vmatprep.subr.bf16.mxu0 0
    %3789 = vmatpush1.bf16.msra.mxu0 0
    %3790 = vmatprep.subr.bf16.mxu0 0
    %3791 = vmatpush1.bf16.msra.mxu0 0
    %3792 = vmatprep.subr.bf16.mxu0 0
    %3793 = vmatpush1.bf16.msra.mxu0 0
    %3794 = vmatprep.subr.bf16.mxu0 0
    %3795 = vmatpush1.bf16.msra.mxu0 0
    %3796 = vmatprep.subr.bf16.mxu0 0
    %3797 = vmatpush1.bf16.msra.mxu0 0
    %3798 = vmatprep.subr.bf16.mxu0 0
    %3799 = vmatpush1.bf16.msra.mxu0 0
    %3800 = vmatprep.subr.bf16.mxu0 0
    %3801 = vmatpush1.bf16.msra.mxu0 0
    %3802 = vmatprep.subr.bf16.mxu0 0
    %3803 = vmatpush1.bf16.msra.mxu0 0
    %3804 = vmatprep.subr.bf16.mxu0 0
    %3805 = vmatpush1.bf16.msra.mxu0 0
    %3806 = vmatprep.mubr.bf16.mxu0 0
    %3807 = vmatmul.mubr.bf16.gmra.mrb[0].mxu0 %v3772
    %v3808 = vpop.f32.mrb[0].mxu0
    %v3809 = vadd.f32 0.0, %v3808
    %v3810 = vpop.f32.mrb[0].mxu0
    %v3811 = vpop.f32.mrb[0].mxu0
    %v3812 = vpop.f32.mrb[0].mxu0
    %3813 = vdwg.mxu0
    %v3818 = vunpack.c.l.b16 %v3750
    %v3819 = vunpack.c.l.b16 %v3751
    %v3820 = vunpack.c.l.b16 %v3752
    %v3821 = vunpack.c.l.b16 %v3753
    %v3822 = vpack.c.b16 %v3819, %v3818
    %v3823 = vpack.c.b16 %v3821, %v3820
    %3826 = vmatprep.subr.bf16.mxu0 0
    %3827 = vmatpush1.bf16.msra.mxu0 %v3822
    %3828 = vmatprep.subr.bf16.mxu0 0
    %3829 = vmatpush1.bf16.msra.mxu0 %v3823
    %3830 = vmatprep.subr.bf16.mxu0 0
    %3831 = vmatpush1.bf16.msra.mxu0 0
    %3832 = vmatprep.subr.bf16.mxu0 0
    %3833 = vmatpush1.bf16.msra.mxu0 0
    %3834 = vmatprep.subr.bf16.mxu0 0
    %3835 = vmatpush1.bf16.msra.mxu0 0
    %3836 = vmatprep.subr.bf16.mxu0 0
    %3837 = vmatpush1.bf16.msra.mxu0 0
    %3838 = vmatprep.subr.bf16.mxu0 0
    %3839 = vmatpush1.bf16.msra.mxu0 0
    %3840 = vmatprep.subr.bf16.mxu0 0
    %3841 = vmatpush1.bf16.msra.mxu0 0
    %3842 = vmatprep.subr.bf16.mxu0 0
    %3843 = vmatpush1.bf16.msra.mxu0 0
    %3844 = vmatprep.subr.bf16.mxu0 0
    %3845 = vmatpush1.bf16.msra.mxu0 0
    %3846 = vmatprep.subr.bf16.mxu0 0
    %3847 = vmatpush1.bf16.msra.mxu0 0
    %3848 = vmatprep.subr.bf16.mxu0 0
    %3849 = vmatpush1.bf16.msra.mxu0 0
    %3850 = vmatprep.subr.bf16.mxu0 0
    %3851 = vmatpush1.bf16.msra.mxu0 0
    %3852 = vmatprep.subr.bf16.mxu0 0
    %3853 = vmatpush1.bf16.msra.mxu0 0
    %3854 = vmatprep.subr.bf16.mxu0 0
    %3855 = vmatpush1.bf16.msra.mxu0 0
    %3856 = vmatprep.subr.bf16.mxu0 0
    %3857 = vmatpush1.bf16.msra.mxu0 0
    %3858 = vmatprep.mubr.bf16.mxu0 0
    %3859 = vmatmul.mubr.bf16.gmra.mrb[0].mxu0 %v3707
    %v3860 = vpop.f32.mrb[0].mxu0
    %v3861 = vadd.f32 %v3809, %v3860
    %v3862 = vpop.f32.mrb[0].mxu0
    %v3863 = vpop.f32.mrb[0].mxu0
    %v3864 = vpop.f32.mrb[0].mxu0
    %3865 = vdwg.mxu0
    %v3866 = vld [vmem:[#allocation43] sm:$0x1]
    %v3868 = vlaneseq
    %v3869 = vshrl.u32 %v3868, 7
    %v3870 = vsub.s32 0, %v3869
    %v3871 = vrot.slane %v3866, %v3870
    %v3873 = vadd.f32 %v3861, %v3871
    %3874 = vst [vmem:[#allocation49] sm:$0xff] %v3873
    // Predicated region
    $region234: #{tpu_custom_call.1} parent=1 // pred_check
      _
    $region235: #{tpu_custom_call.1} parent=1 // pred_check_branch
      %3876 = sbr.rel (0) target = $region237
    $region236: #{tpu_custom_call.1} parent=1 // pred_region
      %s3878 = ssub.s32 128, 128
      %3879 = vsyncadd [#allocation5], %s3878
      %s3881 = sshll.u32 [#allocation49], 4
      %s3882 = int_to_ptr.vmem [resolvable:$true] %s3881
      %3884 = dma.vmem_to_hbm [thread:$0]  %s3882, 128, %s59, [#allocation5]
    $region237: #{tpu_custom_call.1} parent=1 // pred_fallthru
      _
    // Predicated region
    $region238: #{tpu_custom_call.1} parent=1 // pred_check
      _
    $region239: #{tpu_custom_call.1} parent=1 // pred_check_branch
      %3886 = sbr.rel (0) target = $region241
    $region240: #{tpu_custom_call.1} parent=1 // pred_region
      %3887 = dma.done [#allocation5], 128
    $region241: #{tpu_custom_call.1} parent=1 // pred_fallthru
      _
    %3888 = vsyncpa [#allocation4], 1
    %3889 = vsyncpa [#allocation8], 1
    %3890 = vsyncpa [#allocation11], 1
    %3891 = vsyncpa [#allocation14], 1
    %3892 = vsyncpa [#allocation17], 1
    %3893 = vsyncpa [#allocation20], 1
    %3894 = vsyncpa [#allocation23], 1
    %3895 = vsyncpa [#allocation26], 1
    %3896 = vsyncpa [#allocation29], 1
    %3897 = vsyncpa [#allocation32], 1
    %3898 = vsyncpa [#allocation35], 1
    %3899 = vsyncpa [#allocation38], 1
    %3900 = vsyncpa [#allocation44], 1
    %3901 = vsyncpa [#allocation47], 1
    %3902 = vsyncpa [#allocation5], 1
    %3903 = vsyncpa [#allocation6], 1
    %3904 = vsyncpa [#allocation41], 1

</llo_original>
